<compile_context>
chip_gen: v7x
topology: tpu7x:2x2x1
jax: 0.10.0
libtpu: 0.0.40
codegen_flags: <defaults>
</compile_context>

<pallas_src>
import math

import numpy as np
import jax
import jax.numpy as jnp
from jax.experimental import pallas as pl
from jax.experimental.pallas import tpu as pltpu

# ---------------- model config (small, satisfies num_patches > 16) ----------
IMAGE_SIZE = 16
PATCH_SIZE = 2
CHANNELS = 3
EMBED_DIM = 32
DEPTH = 2
HEADS = 4
MLP_DIM = 64
BATCH = 2

NUM_PATCHES = (IMAGE_SIZE // PATCH_SIZE) ** 2      # 64 (> MIN_NUM_PATCHES = 16)
PATCH_DIM = CHANNELS * PATCH_SIZE ** 2             # 12
SEQ = NUM_PATCHES + 1                              # 65 (cls token + patches)
HEAD_DIM = EMBED_DIM // HEADS                      # 8
LN_EPS = 1e-5                                      # torch.nn.LayerNorm default
SCALE = EMBED_DIM ** (-0.5)                        # note: torch code scales by full dim


# ---------------- shared math helpers (used inside kernel & reference) ------
def _layernorm(x, g, b):
    mu = jnp.mean(x, axis=-1, keepdims=True)
    var = jnp.mean((x - mu) ** 2, axis=-1, keepdims=True)
    return (x - mu) * jax.lax.rsqrt(var + LN_EPS) * g + b


def _erf_f32(x):
    # f32 rational approximation of erf (same form/coefficients as XLA's
    # ErfImpl32); only uses mul/add/div so it lowers cleanly in Mosaic.
    x = jnp.clip(x, -4.0, 4.0)
    z = x * x
    a = jnp.float32(-2.72614225801306e-10)
    a = a * z + jnp.float32(2.77068142495902e-08)
    a = a * z + jnp.float32(-2.10102402082508e-06)
    a = a * z + jnp.float32(-5.69250639462346e-05)
    a = a * z + jnp.float32(-7.34990630326855e-04)
    a = a * z + jnp.float32(-2.95459980854025e-03)
    a = a * z + jnp.float32(-1.60960333262415e-02)
    d = jnp.float32(-1.45660718464996e-05)
    d = d * z + jnp.float32(-2.13374055278905e-04)
    d = d * z + jnp.float32(-1.68282697438203e-03)
    d = d * z + jnp.float32(-7.37332916720468e-03)
    d = d * z + jnp.float32(-1.42647390514189e-02)
    return x * a / d


def _gelu(x):
    # exact (erf-based) GELU, matching torch.nn.GELU() default
    return 0.5 * x * (1.0 + _erf_f32(x * (1.0 / math.sqrt(2.0))))


# ---------------- fused Pallas kernel ----------------------------------------
def vit_kernel(patch_ref, wp_ref, bp_ref, pos_ref,
               ln1g_ref, ln1b_ref, wq_ref, wk_ref, wv_ref, wo_ref, bo_ref,
               ln2g_ref, ln2b_ref, w1_ref, b1_ref, w2_ref, b2_ref,
               o_ref):
    # One batch element per grid step; the whole forward stays in VMEM.
    # patch_ref: (1, SEQ, PATCH_DIM)   row 0 is zeros (cls slot)
    # pos_ref:   (SEQ, D)              pos[0] already carries cls - b_patch
    # wq/wk/wv:  (DEPTH, HEADS, D, HEAD_DIM)     wo: (DEPTH, HEADS, HEAD_DIM, D)

    # ---- patch embedding + positional embedding (+ folded cls token) ----
    x = jnp.dot(patch_ref[0], wp_ref[...],
                preferred_element_type=jnp.float32)
    x = x + bp_ref[...] + pos_ref[...]                      # (SEQ, D)

    for l in range(DEPTH):                                  # unrolled (DEPTH=2)
        # ---- Residual(PreNorm(Attention)) ----
        y = _layernorm(x, ln1g_ref[l], ln1b_ref[l])         # (SEQ, D)
        yh = jnp.broadcast_to(y[None], (HEADS, SEQ, EMBED_DIM))
        q = jnp.einsum('hsd,hde->hse', yh, wq_ref[l],
                       preferred_element_type=jnp.float32)  # (H, SEQ, HD)
        k = jnp.einsum('hsd,hde->hse', yh, wk_ref[l],
                       preferred_element_type=jnp.float32)
        v = jnp.einsum('hsd,hde->hse', yh, wv_ref[l],
                       preferred_element_type=jnp.float32)

        dots = jnp.einsum('hie,hje->hij', q, k,
                          preferred_element_type=jnp.float32) * SCALE
        m = jnp.max(dots, axis=-1, keepdims=True)           # (H, SEQ, 1)
        p = jnp.exp(dots - m)                               # unnormalized probs
        s = jnp.sum(p, axis=-1, keepdims=True)              # (H, SEQ, 1)

        o = jnp.einsum('hij,hje->hie', p, v,
                       preferred_element_type=jnp.float32)  # (H, SEQ, HD)
        # deferred softmax normalization on the small head output
        o = o * pl.reciprocal(s, approx=True)

        proj = jnp.einsum('hie,hed->hid', o, wo_ref[l],
                          preferred_element_type=jnp.float32)   # (H, SEQ, D)
        x = x + jnp.sum(proj, axis=0) + bo_ref[l]

        # ---- Residual(PreNorm(FeedForward)) ----
        y = _layernorm(x, ln2g_ref[l], ln2b_ref[l])
        h1 = jnp.dot(y, w1_ref[l],
                     preferred_element_type=jnp.float32) + b1_ref[l]
        h1 = _gelu(h1)
        h2 = jnp.dot(h1, w2_ref[l],
                     preferred_element_type=jnp.float32) + b2_ref[l]
        x = x + h2

    o_ref[0] = x


# ---------------- pallas_call wrapper -----------------------------------------
def _full_spec(shape):
    nd = len(shape)
    return pl.BlockSpec(tuple(shape), lambda *args, nd=nd: (0,) * nd)


def img_to_patches(img):
    # rearrange 'b c (h p1) (w p2) -> b (h w) (p1 p2 c)'
    b, c, H, W = img.shape
    p = PATCH_SIZE
    h, w = H // p, W // p
    x = img.reshape(b, c, h, p, w, p)
    x = jnp.transpose(x, (0, 2, 4, 3, 5, 1))       # b h w p1 p2 c
    return x.reshape(b, h * w, p * p * c)


def vit_forward(img, params):
    B = img.shape[0]
    patches = img_to_patches(img)                  # (B, NUM_PATCHES, PATCH_DIM)
    # prepend an all-zero "patch" row for the cls slot -> single aligned matmul
    patches_ext = jnp.concatenate(
        [jnp.zeros((B, 1, PATCH_DIM), jnp.float32), patches], axis=1)
    # fold the cls token into the positional embedding (row 0):
    #   0 @ w_patch + b_patch + (pos[0] + cls - b_patch) == cls + pos[0]
    pos_eff = params["pos"].at[0:1].add(params["cls"] - params["b_patch"])

    L = params["layers"]
    ln1g = jnp.stack([l["ln1_g"] for l in L])                          # (DEPTH,1,D)
    ln1b = jnp.stack([l["ln1_b"] for l in L])
    wq = jnp.stack([l["wq"].reshape(EMBED_DIM, HEADS, HEAD_DIM).transpose(1, 0, 2)
                    for l in L])                                       # (DEPTH,H,D,HD)
    wk = jnp.stack([l["wk"].reshape(EMBED_DIM, HEADS, HEAD_DIM).transpose(1, 0, 2)
                    for l in L])
    wv = jnp.stack([l["wv"].reshape(EMBED_DIM, HEADS, HEAD_DIM).transpose(1, 0, 2)
                    for l in L])
    wo = jnp.stack([l["wo"].reshape(HEADS, HEAD_DIM, EMBED_DIM) for l in L])
    bo = jnp.stack([l["bo"] for l in L])
    ln2g = jnp.stack([l["ln2_g"] for l in L])
    ln2b = jnp.stack([l["ln2_b"] for l in L])
    w1 = jnp.stack([l["w1"] for l in L])                               # (DEPTH,D,MLP)
    b1 = jnp.stack([l["b1"] for l in L])
    w2 = jnp.stack([l["w2"] for l in L])                               # (DEPTH,MLP,D)
    b2 = jnp.stack([l["b2"] for l in L])

    seq_spec = pl.BlockSpec((1, SEQ, EMBED_DIM), lambda i: (i, 0, 0))
    out = pl.pallas_call(
        vit_kernel,
        out_shape=jax.ShapeDtypeStruct((B, SEQ, EMBED_DIM), jnp.float32),
        grid=(B,),
        in_specs=[pl.BlockSpec((1, SEQ, PATCH_DIM), lambda i: (i, 0, 0)),
                  _full_spec((PATCH_DIM, EMBED_DIM)),
                  _full_spec((1, EMBED_DIM)),
                  _full_spec((SEQ, EMBED_DIM)),
                  _full_spec((DEPTH, 1, EMBED_DIM)),
                  _full_spec((DEPTH, 1, EMBED_DIM)),
                  _full_spec((DEPTH, HEADS, EMBED_DIM, HEAD_DIM)),
                  _full_spec((DEPTH, HEADS, EMBED_DIM, HEAD_DIM)),
                  _full_spec((DEPTH, HEADS, EMBED_DIM, HEAD_DIM)),
                  _full_spec((DEPTH, HEADS, HEAD_DIM, EMBED_DIM)),
                  _full_spec((DEPTH, 1, EMBED_DIM)),
                  _full_spec((DEPTH, 1, EMBED_DIM)),
                  _full_spec((DEPTH, 1, EMBED_DIM)),
                  _full_spec((DEPTH, EMBED_DIM, MLP_DIM)),
                  _full_spec((DEPTH, 1, MLP_DIM)),
                  _full_spec((DEPTH, MLP_DIM, EMBED_DIM)),
                  _full_spec((DEPTH, 1, EMBED_DIM))],
        out_specs=seq_spec,
        compiler_params=pltpu.CompilerParams(
            dimension_semantics=("parallel",)),
    )(patches_ext, params["w_patch"], params["b_patch"], pos_eff,
      ln1g, ln1b, wq, wk, wv, wo, bo, ln2g, ln2b, w1, b1, w2, b2)
    return out[:, 1:, :]                           # to_cls_token(x[:, 1:, :])


# ---------------- pure-JAX reference (for correctness check) -----------------
def vit_reference(img, params):
    x = img_to_patches(img)
    x = x @ params["w_patch"] + params["b_patch"]
    B = x.shape[0]
    cls = jnp.broadcast_to(params["cls"], (B, 1, EMBED_DIM))
    x = jnp.concatenate([cls, x], axis=1) + params["pos"][None]
    for layer in params["layers"]:
        y = _layernorm(x, layer["ln1_g"], layer["ln1_b"])
        q = (y @ layer["wq"]).reshape(B, SEQ, HEADS, HEAD_DIM).transpose(0, 2, 1, 3)
        k = (y @ layer["wk"]).reshape(B, SEQ, HEADS, HEAD_DIM).transpose(0, 2, 1, 3)
        v = (y @ layer["wv"]).reshape(B, SEQ, HEADS, HEAD_DIM).transpose(0, 2, 1, 3)
        dots = jnp.einsum("bhid,bhjd->bhij", q, k) * SCALE
        attn = jax.nn.softmax(dots, axis=-1)
        o = jnp.einsum("bhij,bhjd->bhid", attn, v)
        o = o.transpose(0, 2, 1, 3).reshape(B, SEQ, EMBED_DIM)
        x = o @ layer["wo"] + layer["bo"] + x
        y = _layernorm(x, layer["ln2_g"], layer["ln2_b"])
        h = _gelu(y @ layer["w1"] + layer["b1"])
        x = h @ layer["w2"] + layer["b2"] + x
    return x[:, 1:, :]


# ---------------- deterministic parameter init -------------------------------
def init_params(key):
    keys = iter(jax.random.split(key, 8 + DEPTH * 16))

    def nrm(shape, scale=1.0):
        return (scale * jax.random.normal(next(keys), shape, jnp.float32))

    params = {
        "w_patch": nrm((PATCH_DIM, EMBED_DIM), PATCH_DIM ** -0.5),
        "b_patch": nrm((1, EMBED_DIM), 0.02),
        "cls": nrm((1, EMBED_DIM)),               # cls_token ~ randn
        "pos": nrm((SEQ, EMBED_DIM)),             # pos_embedding ~ randn
        "layers": [],
    }
    for _ in range(DEPTH):
        params["layers"].append({
            "ln1_g": jnp.ones((1, EMBED_DIM), jnp.float32),
            "ln1_b": jnp.zeros((1, EMBED_DIM), jnp.float32),
            "wq": nrm((EMBED_DIM, EMBED_DIM), EMBED_DIM ** -0.5),
            "wk": nrm((EMBED_DIM, EMBED_DIM), EMBED_DIM ** -0.5),
            "wv": nrm((EMBED_DIM, EMBED_DIM), EMBED_DIM ** -0.5),
            "wo": nrm((EMBED_DIM, EMBED_DIM), EMBED_DIM ** -0.5),
            "bo": nrm((1, EMBED_DIM), 0.02),
            "ln2_g": jnp.ones((1, EMBED_DIM), jnp.float32),
            "ln2_b": jnp.zeros((1, EMBED_DIM), jnp.float32),
            "w1": nrm((EMBED_DIM, MLP_DIM), EMBED_DIM ** -0.5),
            "b1": nrm((1, MLP_DIM), 0.02),
            "w2": nrm((MLP_DIM, EMBED_DIM), MLP_DIM ** -0.5),
            "b2": nrm((1, EMBED_DIM), 0.02),
        })
    return params


if __name__ == "__main__":
    key = jax.random.PRNGKey(0)
    k_img, k_par = jax.random.split(key)
    img = jax.random.normal(
        k_img, (BATCH, CHANNELS, IMAGE_SIZE, IMAGE_SIZE), jnp.float32)
    params = init_params(k_par)

    fwd = jax.jit(vit_forward)
    out = jax.block_until_ready(fwd(img, params))
    assert out.shape == (BATCH, NUM_PATCHES, EMBED_DIM), out.shape

    # Gold reference at high matmul precision; the kernel runs single-pass bf16
    # MXU matmuls (f32 accumulation), so compare at a correspondingly looser
    # tolerance.
    with jax.default_matmul_precision("highest"):
        ref = jax.block_until_ready(vit_reference(img, params))
    np.testing.assert_allclose(np.asarray(out), np.asarray(ref),
                               rtol=2e-2, atol=5e-2)
    print("KERNEL_OK")
</pallas_src>

<mosaic_0001>
module attributes {stable_mosaic.version = 11 : i64} {
  func.func @vit_kernel(%arg0: i32, %arg1: memref<1x65x12xf32, #tpu.memory_space<vmem>>, %arg2: memref<12x32xf32, #tpu.memory_space<vmem>>, %arg3: memref<1x32xf32, #tpu.memory_space<vmem>>, %arg4: memref<65x32xf32, #tpu.memory_space<vmem>>, %arg5: memref<2x1x32xf32, #tpu.memory_space<vmem>>, %arg6: memref<2x1x32xf32, #tpu.memory_space<vmem>>, %arg7: memref<2x4x32x8xf32, #tpu.memory_space<vmem>>, %arg8: memref<2x4x32x8xf32, #tpu.memory_space<vmem>>, %arg9: memref<2x4x32x8xf32, #tpu.memory_space<vmem>>, %arg10: memref<2x4x8x32xf32, #tpu.memory_space<vmem>>, %arg11: memref<2x1x32xf32, #tpu.memory_space<vmem>>, %arg12: memref<2x1x32xf32, #tpu.memory_space<vmem>>, %arg13: memref<2x1x32xf32, #tpu.memory_space<vmem>>, %arg14: memref<2x32x64xf32, #tpu.memory_space<vmem>>, %arg15: memref<2x1x64xf32, #tpu.memory_space<vmem>>, %arg16: memref<2x64x32xf32, #tpu.memory_space<vmem>>, %arg17: memref<2x1x32xf32, #tpu.memory_space<vmem>>, %arg18: memref<1x65x32xf32, #tpu.memory_space<vmem>>) attributes {dimension_semantics = [#tpu.dimension_semantics<parallel>], iteration_bounds = array<i64: 2>, scalar_prefetch = 0 : i64, scratch_operands = 0 : i64, tpu.core_type = #tpu.core_type<tc>, window_params = [{transform_indices = @transform_0, window_bounds = array<i64: 1, 65, 12>}, {pipeline_mode = #tpu.pipeline_mode<synchronous>, transform_indices = @transform_1, window_bounds = array<i64: 12, 32>}, {pipeline_mode = #tpu.pipeline_mode<synchronous>, transform_indices = @transform_2, window_bounds = array<i64: 1, 32>}, {pipeline_mode = #tpu.pipeline_mode<synchronous>, transform_indices = @transform_3, window_bounds = array<i64: 65, 32>}, {pipeline_mode = #tpu.pipeline_mode<synchronous>, transform_indices = @transform_4, window_bounds = array<i64: 2, 1, 32>}, {pipeline_mode = #tpu.pipeline_mode<synchronous>, transform_indices = @transform_5, window_bounds = array<i64: 2, 1, 32>}, {pipeline_mode = #tpu.pipeline_mode<synchronous>, transform_indices = @transform_6, window_bounds = array<i64: 2, 4, 32, 8>}, {pipeline_mode = #tpu.pipeline_mode<synchronous>, transform_indices = @transform_7, window_bounds = array<i64: 2, 4, 32, 8>}, {pipeline_mode = #tpu.pipeline_mode<synchronous>, transform_indices = @transform_8, window_bounds = array<i64: 2, 4, 32, 8>}, {pipeline_mode = #tpu.pipeline_mode<synchronous>, transform_indices = @transform_9, window_bounds = array<i64: 2, 4, 8, 32>}, {pipeline_mode = #tpu.pipeline_mode<synchronous>, transform_indices = @transform_10, window_bounds = array<i64: 2, 1, 32>}, {pipeline_mode = #tpu.pipeline_mode<synchronous>, transform_indices = @transform_11, window_bounds = array<i64: 2, 1, 32>}, {pipeline_mode = #tpu.pipeline_mode<synchronous>, transform_indices = @transform_12, window_bounds = array<i64: 2, 1, 32>}, {pipeline_mode = #tpu.pipeline_mode<synchronous>, transform_indices = @transform_13, window_bounds = array<i64: 2, 32, 64>}, {pipeline_mode = #tpu.pipeline_mode<synchronous>, transform_indices = @transform_14, window_bounds = array<i64: 2, 1, 64>}, {pipeline_mode = #tpu.pipeline_mode<synchronous>, transform_indices = @transform_15, window_bounds = array<i64: 2, 64, 32>}, {pipeline_mode = #tpu.pipeline_mode<synchronous>, transform_indices = @transform_16, window_bounds = array<i64: 2, 1, 32>}, {transform_indices = @transform_17, window_bounds = array<i64: 1, 65, 32>}]} {
    %c0 = arith.constant 0 : index
    %c0_0 = arith.constant 0 : index
    %c0_1 = arith.constant 0 : index
    %0 = vector.load %arg1[%c0, %c0_0, %c0_1] : memref<1x65x12xf32, #tpu.memory_space<vmem>>, vector<1x65x12xf32>
    %1 = vector.shape_cast %0 : vector<1x65x12xf32> to vector<65x12xf32>
    %c0_2 = arith.constant 0 : index
    %c0_3 = arith.constant 0 : index
    %2 = vector.load %arg2[%c0_2, %c0_3] : memref<12x32xf32, #tpu.memory_space<vmem>>, vector<12x32xf32>
    %cst = arith.constant dense<0.000000e+00> : vector<65x32xf32>
    %3 = tpu.matmul %1, %2, %cst {dimension_numbers = #tpu.dot_dimension_numbers<[1], [0], [0], [1], [0, 0, 1, 1], [], []>} : vector<65x12xf32>, vector<12x32xf32>, vector<65x32xf32> -> vector<65x32xf32>
    %c0_4 = arith.constant 0 : index
    %c0_5 = arith.constant 0 : index
    %4 = vector.load %arg3[%c0_4, %c0_5] : memref<1x32xf32, #tpu.memory_space<vmem>>, vector<1x32xf32>
    %5 = vector.broadcast %4 : vector<1x32xf32> to vector<65x32xf32>
    %6 = arith.addf %3, %5 : vector<65x32xf32>
    %c0_6 = arith.constant 0 : index
    %c0_7 = arith.constant 0 : index
    %7 = vector.load %arg4[%c0_6, %c0_7] : memref<65x32xf32, #tpu.memory_space<vmem>>, vector<65x32xf32>
    %8 = arith.addf %6, %7 : vector<65x32xf32>
    %c0_8 = arith.constant 0 : index
    %c0_9 = arith.constant 0 : index
    %c0_10 = arith.constant 0 : index
    %9 = vector.load %arg5[%c0_8, %c0_9, %c0_10] : memref<2x1x32xf32, #tpu.memory_space<vmem>>, vector<1x1x32xf32>
    %10 = vector.shape_cast %9 : vector<1x1x32xf32> to vector<1x32xf32>
    %c0_11 = arith.constant 0 : index
    %c0_12 = arith.constant 0 : index
    %c0_13 = arith.constant 0 : index
    %11 = vector.load %arg6[%c0_11, %c0_12, %c0_13] : memref<2x1x32xf32, #tpu.memory_space<vmem>>, vector<1x1x32xf32>
    %12 = vector.shape_cast %11 : vector<1x1x32xf32> to vector<1x32xf32>
    %cst_14 = arith.constant dense<0.000000e+00> : vector<65xf32>
    %13 = vector.multi_reduction <add>, %8, %cst_14 [1] : vector<65x32xf32> to vector<65xf32>
    %14 = vector.shape_cast %13 : vector<65xf32> to vector<65x1xf32>
    %cst_15 = arith.constant 3.200000e+01 : f32
    %15 = vector.broadcast %cst_15 : f32 to vector<65x1xf32>
    %16 = arith.divf %14, %15 : vector<65x1xf32>
    %17 = vector.broadcast %16 : vector<65x1xf32> to vector<65x32xf32>
    %18 = arith.subf %8, %17 : vector<65x32xf32>
    %19 = arith.mulf %18, %18 : vector<65x32xf32>
    %cst_16 = arith.constant dense<0.000000e+00> : vector<65xf32>
    %20 = vector.multi_reduction <add>, %19, %cst_16 [1] : vector<65x32xf32> to vector<65xf32>
    %21 = vector.shape_cast %20 : vector<65xf32> to vector<65x1xf32>
    %cst_17 = arith.constant 3.200000e+01 : f32
    %22 = vector.broadcast %cst_17 : f32 to vector<65x1xf32>
    %23 = arith.divf %21, %22 : vector<65x1xf32>
    %24 = vector.broadcast %16 : vector<65x1xf32> to vector<65x32xf32>
    %25 = arith.subf %8, %24 : vector<65x32xf32>
    %cst_18 = arith.constant 9.99999974E-6 : f32
    %26 = vector.broadcast %cst_18 : f32 to vector<65x1xf32>
    %27 = arith.addf %23, %26 : vector<65x1xf32>
    %28 = math.rsqrt %27 : vector<65x1xf32>
    %29 = vector.broadcast %28 : vector<65x1xf32> to vector<65x32xf32>
    %30 = arith.mulf %25, %29 : vector<65x32xf32>
    %31 = vector.broadcast %10 : vector<1x32xf32> to vector<65x32xf32>
    %32 = arith.mulf %30, %31 : vector<65x32xf32>
    %33 = vector.broadcast %12 : vector<1x32xf32> to vector<65x32xf32>
    %34 = arith.addf %32, %33 : vector<65x32xf32>
    %35 = vector.shape_cast %34 : vector<65x32xf32> to vector<1x65x32xf32>
    %36 = vector.shape_cast %35 : vector<1x65x32xf32> to vector<1x65x32xf32>
    %37 = vector.broadcast %36 : vector<1x65x32xf32> to vector<4x65x32xf32>
    %c0_19 = arith.constant 0 : index
    %c0_20 = arith.constant 0 : index
    %c0_21 = arith.constant 0 : index
    %c0_22 = arith.constant 0 : index
    %38 = vector.load %arg7[%c0_19, %c0_20, %c0_21, %c0_22] : memref<2x4x32x8xf32, #tpu.memory_space<vmem>>, vector<1x4x32x8xf32>
    %39 = vector.shape_cast %38 : vector<1x4x32x8xf32> to vector<4x32x8xf32>
    "tpu.trace_start"() <{level = 10 : i32, message = "hsd,hde->hse"}> : () -> ()
    %cst_23 = arith.constant dense<0.000000e+00> : vector<4x65x8xf32>
    %40 = tpu.matmul %37, %39, %cst_23 {dimension_numbers = #tpu.dot_dimension_numbers<[2], [1], [1], [2], [0, 0, 0, 1, 1, 2], [0], [0]>} : vector<4x65x32xf32>, vector<4x32x8xf32>, vector<4x65x8xf32> -> vector<4x65x8xf32>
    "tpu.trace_stop"() : () -> ()
    %c0_24 = arith.constant 0 : index
    %c0_25 = arith.constant 0 : index
    %c0_26 = arith.constant 0 : index
    %c0_27 = arith.constant 0 : index
    %41 = vector.load %arg8[%c0_24, %c0_25, %c0_26, %c0_27] : memref<2x4x32x8xf32, #tpu.memory_space<vmem>>, vector<1x4x32x8xf32>
    %42 = vector.shape_cast %41 : vector<1x4x32x8xf32> to vector<4x32x8xf32>
    "tpu.trace_start"() <{level = 10 : i32, message = "hsd,hde->hse"}> : () -> ()
    %cst_28 = arith.constant dense<0.000000e+00> : vector<4x65x8xf32>
    %43 = tpu.matmul %37, %42, %cst_28 {dimension_numbers = #tpu.dot_dimension_numbers<[2], [1], [1], [2], [0, 0, 0, 1, 1, 2], [0], [0]>} : vector<4x65x32xf32>, vector<4x32x8xf32>, vector<4x65x8xf32> -> vector<4x65x8xf32>
    "tpu.trace_stop"() : () -> ()
    %c0_29 = arith.constant 0 : index
    %c0_30 = arith.constant 0 : index
    %c0_31 = arith.constant 0 : index
    %c0_32 = arith.constant 0 : index
    %44 = vector.load %arg9[%c0_29, %c0_30, %c0_31, %c0_32] : memref<2x4x32x8xf32, #tpu.memory_space<vmem>>, vector<1x4x32x8xf32>
    %45 = vector.shape_cast %44 : vector<1x4x32x8xf32> to vector<4x32x8xf32>
    "tpu.trace_start"() <{level = 10 : i32, message = "hsd,hde->hse"}> : () -> ()
    %cst_33 = arith.constant dense<0.000000e+00> : vector<4x65x8xf32>
    %46 = tpu.matmul %37, %45, %cst_33 {dimension_numbers = #tpu.dot_dimension_numbers<[2], [1], [1], [2], [0, 0, 0, 1, 1, 2], [0], [0]>} : vector<4x65x32xf32>, vector<4x32x8xf32>, vector<4x65x8xf32> -> vector<4x65x8xf32>
    "tpu.trace_stop"() : () -> ()
    "tpu.trace_start"() <{level = 10 : i32, message = "hie,hje->hij"}> : () -> ()
    %cst_34 = arith.constant dense<0.000000e+00> : vector<4x65x65xf32>
    %47 = tpu.matmul %40, %43, %cst_34 {dimension_numbers = #tpu.dot_dimension_numbers<[2], [2], [1], [1], [0, 0, 0, 1, 1, 1], [0], [0]>} : vector<4x65x8xf32>, vector<4x65x8xf32>, vector<4x65x65xf32> -> vector<4x65x65xf32>
    "tpu.trace_stop"() : () -> ()
    %cst_35 = arith.constant 0.176776692 : f32
    %48 = vector.broadcast %cst_35 : f32 to vector<4x65x65xf32>
    %49 = arith.mulf %47, %48 : vector<4x65x65xf32>
    %cst_36 = arith.constant dense<0xFF800000> : vector<4x65xf32>
    %50 = vector.multi_reduction <maximumf>, %49, %cst_36 [2] : vector<4x65x65xf32> to vector<4x65xf32>
    %51 = vector.shape_cast %50 : vector<4x65xf32> to vector<4x65x1xf32>
    %52 = vector.broadcast %51 : vector<4x65x1xf32> to vector<4x65x65xf32>
    %53 = arith.subf %49, %52 : vector<4x65x65xf32>
    %54 = math.exp %53 : vector<4x65x65xf32>
    %cst_37 = arith.constant dense<0.000000e+00> : vector<4x65xf32>
    %55 = vector.multi_reduction <add>, %54, %cst_37 [2] : vector<4x65x65xf32> to vector<4x65xf32>
    %56 = vector.shape_cast %55 : vector<4x65xf32> to vector<4x65x1xf32>
    "tpu.trace_start"() <{level = 10 : i32, message = "hij,hje->hie"}> : () -> ()
    %cst_38 = arith.constant dense<0.000000e+00> : vector<4x65x8xf32>
    %57 = tpu.matmul %54, %46, %cst_38 {dimension_numbers = #tpu.dot_dimension_numbers<[2], [1], [1], [2], [0, 0, 0, 1, 1, 2], [0], [0]>} : vector<4x65x65xf32>, vector<4x65x8xf32>, vector<4x65x8xf32> -> vector<4x65x8xf32>
    "tpu.trace_stop"() : () -> ()
    %58 = tpu.reciprocal %56 {approx = true} : vector<4x65x1xf32> -> vector<4x65x1xf32>
    %59 = vector.broadcast %58 : vector<4x65x1xf32> to vector<4x65x8xf32>
    %60 = arith.mulf %57, %59 : vector<4x65x8xf32>
    %c0_39 = arith.constant 0 : index
    %c0_40 = arith.constant 0 : index
    %c0_41 = arith.constant 0 : index
    %c0_42 = arith.constant 0 : index
    %61 = vector.load %arg10[%c0_39, %c0_40, %c0_41, %c0_42] : memref<2x4x8x32xf32, #tpu.memory_space<vmem>>, vector<1x4x8x32xf32>
    %62 = vector.shape_cast %61 : vector<1x4x8x32xf32> to vector<4x8x32xf32>
    "tpu.trace_start"() <{level = 10 : i32, message = "hie,hed->hid"}> : () -> ()
    %cst_43 = arith.constant dense<0.000000e+00> : vector<4x65x32xf32>
    %63 = tpu.matmul %60, %62, %cst_43 {dimension_numbers = #tpu.dot_dimension_numbers<[2], [1], [1], [2], [0, 0, 0, 1, 1, 2], [0], [0]>} : vector<4x65x8xf32>, vector<4x8x32xf32>, vector<4x65x32xf32> -> vector<4x65x32xf32>
    "tpu.trace_stop"() : () -> ()
    %cst_44 = arith.constant dense<0.000000e+00> : vector<65x32xf32>
    %64 = vector.multi_reduction <add>, %63, %cst_44 [0] : vector<4x65x32xf32> to vector<65x32xf32>
    %65 = arith.addf %8, %64 : vector<65x32xf32>
    %c0_45 = arith.constant 0 : index
    %c0_46 = arith.constant 0 : index
    %c0_47 = arith.constant 0 : index
    %66 = vector.load %arg11[%c0_45, %c0_46, %c0_47] : memref<2x1x32xf32, #tpu.memory_space<vmem>>, vector<1x1x32xf32>
    %67 = vector.shape_cast %66 : vector<1x1x32xf32> to vector<1x32xf32>
    %68 = vector.broadcast %67 : vector<1x32xf32> to vector<65x32xf32>
    %69 = arith.addf %65, %68 : vector<65x32xf32>
    %c0_48 = arith.constant 0 : index
    %c0_49 = arith.constant 0 : index
    %c0_50 = arith.constant 0 : index
    %70 = vector.load %arg12[%c0_48, %c0_49, %c0_50] : memref<2x1x32xf32, #tpu.memory_space<vmem>>, vector<1x1x32xf32>
    %71 = vector.shape_cast %70 : vector<1x1x32xf32> to vector<1x32xf32>
    %c0_51 = arith.constant 0 : index
    %c0_52 = arith.constant 0 : index
    %c0_53 = arith.constant 0 : index
    %72 = vector.load %arg13[%c0_51, %c0_52, %c0_53] : memref<2x1x32xf32, #tpu.memory_space<vmem>>, vector<1x1x32xf32>
    %73 = vector.shape_cast %72 : vector<1x1x32xf32> to vector<1x32xf32>
    %cst_54 = arith.constant dense<0.000000e+00> : vector<65xf32>
    %74 = vector.multi_reduction <add>, %69, %cst_54 [1] : vector<65x32xf32> to vector<65xf32>
    %75 = vector.shape_cast %74 : vector<65xf32> to vector<65x1xf32>
    %cst_55 = arith.constant 3.200000e+01 : f32
    %76 = vector.broadcast %cst_55 : f32 to vector<65x1xf32>
    %77 = arith.divf %75, %76 : vector<65x1xf32>
    %78 = vector.broadcast %77 : vector<65x1xf32> to vector<65x32xf32>
    %79 = arith.subf %69, %78 : vector<65x32xf32>
    %80 = arith.mulf %79, %79 : vector<65x32xf32>
    %cst_56 = arith.constant dense<0.000000e+00> : vector<65xf32>
    %81 = vector.multi_reduction <add>, %80, %cst_56 [1] : vector<65x32xf32> to vector<65xf32>
    %82 = vector.shape_cast %81 : vector<65xf32> to vector<65x1xf32>
    %cst_57 = arith.constant 3.200000e+01 : f32
    %83 = vector.broadcast %cst_57 : f32 to vector<65x1xf32>
    %84 = arith.divf %82, %83 : vector<65x1xf32>
    %85 = vector.broadcast %77 : vector<65x1xf32> to vector<65x32xf32>
    %86 = arith.subf %69, %85 : vector<65x32xf32>
    %cst_58 = arith.constant 9.99999974E-6 : f32
    %87 = vector.broadcast %cst_58 : f32 to vector<65x1xf32>
    %88 = arith.addf %84, %87 : vector<65x1xf32>
    %89 = math.rsqrt %88 : vector<65x1xf32>
    %90 = vector.broadcast %89 : vector<65x1xf32> to vector<65x32xf32>
    %91 = arith.mulf %86, %90 : vector<65x32xf32>
    %92 = vector.broadcast %71 : vector<1x32xf32> to vector<65x32xf32>
    %93 = arith.mulf %91, %92 : vector<65x32xf32>
    %94 = vector.broadcast %73 : vector<1x32xf32> to vector<65x32xf32>
    %95 = arith.addf %93, %94 : vector<65x32xf32>
    %c0_59 = arith.constant 0 : index
    %c0_60 = arith.constant 0 : index
    %c0_61 = arith.constant 0 : index
    %96 = vector.load %arg14[%c0_59, %c0_60, %c0_61] : memref<2x32x64xf32, #tpu.memory_space<vmem>>, vector<1x32x64xf32>
    %97 = vector.shape_cast %96 : vector<1x32x64xf32> to vector<32x64xf32>
    %cst_62 = arith.constant dense<0.000000e+00> : vector<65x64xf32>
    %98 = tpu.matmul %95, %97, %cst_62 {dimension_numbers = #tpu.dot_dimension_numbers<[1], [0], [0], [1], [0, 0, 1, 1], [], []>} : vector<65x32xf32>, vector<32x64xf32>, vector<65x64xf32> -> vector<65x64xf32>
    %c0_63 = arith.constant 0 : index
    %c0_64 = arith.constant 0 : index
    %c0_65 = arith.constant 0 : index
    %99 = vector.load %arg15[%c0_63, %c0_64, %c0_65] : memref<2x1x64xf32, #tpu.memory_space<vmem>>, vector<1x1x64xf32>
    %100 = vector.shape_cast %99 : vector<1x1x64xf32> to vector<1x64xf32>
    %101 = vector.broadcast %100 : vector<1x64xf32> to vector<65x64xf32>
    %102 = arith.addf %98, %101 : vector<65x64xf32>
    %cst_66 = arith.constant 5.000000e-01 : f32
    %103 = vector.broadcast %cst_66 : f32 to vector<65x64xf32>
    %104 = arith.mulf %103, %102 : vector<65x64xf32>
    %cst_67 = arith.constant 0.707106769 : f32
    %105 = vector.broadcast %cst_67 : f32 to vector<65x64xf32>
    %106 = arith.mulf %102, %105 : vector<65x64xf32>
    %cst_68 = arith.constant -4.000000e+00 : f32
    %cst_69 = arith.constant 4.000000e+00 : f32
    %107 = vector.broadcast %cst_68 : f32 to vector<65x64xf32>
    %108 = arith.maximumf %107, %106 : vector<65x64xf32>
    %109 = vector.broadcast %cst_69 : f32 to vector<65x64xf32>
    %110 = arith.minimumf %109, %108 : vector<65x64xf32>
    %111 = arith.mulf %110, %110 : vector<65x64xf32>
    %cst_70 = arith.constant -2.72614237E-10 : f32
    %112 = vector.broadcast %cst_70 : f32 to vector<65x64xf32>
    %113 = arith.mulf %112, %111 : vector<65x64xf32>
    %cst_71 = arith.constant 2.77068146E-8 : f32
    %114 = vector.broadcast %cst_71 : f32 to vector<65x64xf32>
    %115 = arith.addf %113, %114 : vector<65x64xf32>
    %116 = arith.mulf %115, %111 : vector<65x64xf32>
    %cst_72 = arith.constant -2.10102394E-6 : f32
    %117 = vector.broadcast %cst_72 : f32 to vector<65x64xf32>
    %118 = arith.addf %116, %117 : vector<65x64xf32>
    %119 = arith.mulf %118, %111 : vector<65x64xf32>
    %cst_73 = arith.constant -5.69250624E-5 : f32
    %120 = vector.broadcast %cst_73 : f32 to vector<65x64xf32>
    %121 = arith.addf %119, %120 : vector<65x64xf32>
    %122 = arith.mulf %121, %111 : vector<65x64xf32>
    %cst_74 = arith.constant -7.34990637E-4 : f32
    %123 = vector.broadcast %cst_74 : f32 to vector<65x64xf32>
    %124 = arith.addf %122, %123 : vector<65x64xf32>
    %125 = arith.mulf %124, %111 : vector<65x64xf32>
    %cst_75 = arith.constant -2.954600e-03 : f32
    %126 = vector.broadcast %cst_75 : f32 to vector<65x64xf32>
    %127 = arith.addf %125, %126 : vector<65x64xf32>
    %128 = arith.mulf %127, %111 : vector<65x64xf32>
    %cst_76 = arith.constant -0.0160960332 : f32
    %129 = vector.broadcast %cst_76 : f32 to vector<65x64xf32>
    %130 = arith.addf %128, %129 : vector<65x64xf32>
    %cst_77 = arith.constant -1.45660715E-5 : f32
    %131 = vector.broadcast %cst_77 : f32 to vector<65x64xf32>
    %132 = arith.mulf %131, %111 : vector<65x64xf32>
    %cst_78 = arith.constant -2.13374049E-4 : f32
    %133 = vector.broadcast %cst_78 : f32 to vector<65x64xf32>
    %134 = arith.addf %132, %133 : vector<65x64xf32>
    %135 = arith.mulf %134, %111 : vector<65x64xf32>
    %cst_79 = arith.constant -0.00168282702 : f32
    %136 = vector.broadcast %cst_79 : f32 to vector<65x64xf32>
    %137 = arith.addf %135, %136 : vector<65x64xf32>
    %138 = arith.mulf %137, %111 : vector<65x64xf32>
    %cst_80 = arith.constant -0.00737332925 : f32
    %139 = vector.broadcast %cst_80 : f32 to vector<65x64xf32>
    %140 = arith.addf %138, %139 : vector<65x64xf32>
    %141 = arith.mulf %140, %111 : vector<65x64xf32>
    %cst_81 = arith.constant -0.0142647391 : f32
    %142 = vector.broadcast %cst_81 : f32 to vector<65x64xf32>
    %143 = arith.addf %141, %142 : vector<65x64xf32>
    %144 = arith.mulf %110, %130 : vector<65x64xf32>
    %145 = arith.divf %144, %143 : vector<65x64xf32>
    %cst_82 = arith.constant 1.000000e+00 : f32
    %146 = vector.broadcast %cst_82 : f32 to vector<65x64xf32>
    %147 = arith.addf %146, %145 : vector<65x64xf32>
    %148 = arith.mulf %104, %147 : vector<65x64xf32>
    %c0_83 = arith.constant 0 : index
    %c0_84 = arith.constant 0 : index
    %c0_85 = arith.constant 0 : index
    %149 = vector.load %arg16[%c0_83, %c0_84, %c0_85] : memref<2x64x32xf32, #tpu.memory_space<vmem>>, vector<1x64x32xf32>
    %150 = vector.shape_cast %149 : vector<1x64x32xf32> to vector<64x32xf32>
    %cst_86 = arith.constant dense<0.000000e+00> : vector<65x32xf32>
    %151 = tpu.matmul %148, %150, %cst_86 {dimension_numbers = #tpu.dot_dimension_numbers<[1], [0], [0], [1], [0, 0, 1, 1], [], []>} : vector<65x64xf32>, vector<64x32xf32>, vector<65x32xf32> -> vector<65x32xf32>
    %c0_87 = arith.constant 0 : index
    %c0_88 = arith.constant 0 : index
    %c0_89 = arith.constant 0 : index
    %152 = vector.load %arg17[%c0_87, %c0_88, %c0_89] : memref<2x1x32xf32, #tpu.memory_space<vmem>>, vector<1x1x32xf32>
    %153 = vector.shape_cast %152 : vector<1x1x32xf32> to vector<1x32xf32>
    %154 = vector.broadcast %153 : vector<1x32xf32> to vector<65x32xf32>
    %155 = arith.addf %151, %154 : vector<65x32xf32>
    %156 = arith.addf %69, %155 : vector<65x32xf32>
    %c1 = arith.constant 1 : index
    %c0_90 = arith.constant 0 : index
    %c0_91 = arith.constant 0 : index
    %157 = vector.load %arg5[%c1, %c0_90, %c0_91] : memref<2x1x32xf32, #tpu.memory_space<vmem>>, vector<1x1x32xf32>
    %158 = vector.shape_cast %157 : vector<1x1x32xf32> to vector<1x32xf32>
    %c1_92 = arith.constant 1 : index
    %c0_93 = arith.constant 0 : index
    %c0_94 = arith.constant 0 : index
    %159 = vector.load %arg6[%c1_92, %c0_93, %c0_94] : memref<2x1x32xf32, #tpu.memory_space<vmem>>, vector<1x1x32xf32>
    %160 = vector.shape_cast %159 : vector<1x1x32xf32> to vector<1x32xf32>
    %cst_95 = arith.constant dense<0.000000e+00> : vector<65xf32>
    %161 = vector.multi_reduction <add>, %156, %cst_95 [1] : vector<65x32xf32> to vector<65xf32>
    %162 = vector.shape_cast %161 : vector<65xf32> to vector<65x1xf32>
    %cst_96 = arith.constant 3.200000e+01 : f32
    %163 = vector.broadcast %cst_96 : f32 to vector<65x1xf32>
    %164 = arith.divf %162, %163 : vector<65x1xf32>
    %165 = vector.broadcast %164 : vector<65x1xf32> to vector<65x32xf32>
    %166 = arith.subf %156, %165 : vector<65x32xf32>
    %167 = arith.mulf %166, %166 : vector<65x32xf32>
    %cst_97 = arith.constant dense<0.000000e+00> : vector<65xf32>
    %168 = vector.multi_reduction <add>, %167, %cst_97 [1] : vector<65x32xf32> to vector<65xf32>
    %169 = vector.shape_cast %168 : vector<65xf32> to vector<65x1xf32>
    %cst_98 = arith.constant 3.200000e+01 : f32
    %170 = vector.broadcast %cst_98 : f32 to vector<65x1xf32>
    %171 = arith.divf %169, %170 : vector<65x1xf32>
    %172 = vector.broadcast %164 : vector<65x1xf32> to vector<65x32xf32>
    %173 = arith.subf %156, %172 : vector<65x32xf32>
    %cst_99 = arith.constant 9.99999974E-6 : f32
    %174 = vector.broadcast %cst_99 : f32 to vector<65x1xf32>
    %175 = arith.addf %171, %174 : vector<65x1xf32>
    %176 = math.rsqrt %175 : vector<65x1xf32>
    %177 = vector.broadcast %176 : vector<65x1xf32> to vector<65x32xf32>
    %178 = arith.mulf %173, %177 : vector<65x32xf32>
    %179 = vector.broadcast %158 : vector<1x32xf32> to vector<65x32xf32>
    %180 = arith.mulf %178, %179 : vector<65x32xf32>
    %181 = vector.broadcast %160 : vector<1x32xf32> to vector<65x32xf32>
    %182 = arith.addf %180, %181 : vector<65x32xf32>
    %183 = vector.shape_cast %182 : vector<65x32xf32> to vector<1x65x32xf32>
    %184 = vector.shape_cast %183 : vector<1x65x32xf32> to vector<1x65x32xf32>
    %185 = vector.broadcast %184 : vector<1x65x32xf32> to vector<4x65x32xf32>
    %c1_100 = arith.constant 1 : index
    %c0_101 = arith.constant 0 : index
    %c0_102 = arith.constant 0 : index
    %c0_103 = arith.constant 0 : index
    %186 = vector.load %arg7[%c1_100, %c0_101, %c0_102, %c0_103] : memref<2x4x32x8xf32, #tpu.memory_space<vmem>>, vector<1x4x32x8xf32>
    %187 = vector.shape_cast %186 : vector<1x4x32x8xf32> to vector<4x32x8xf32>
    "tpu.trace_start"() <{level = 10 : i32, message = "hsd,hde->hse"}> : () -> ()
    %cst_104 = arith.constant dense<0.000000e+00> : vector<4x65x8xf32>
    %188 = tpu.matmul %185, %187, %cst_104 {dimension_numbers = #tpu.dot_dimension_numbers<[2], [1], [1], [2], [0, 0, 0, 1, 1, 2], [0], [0]>} : vector<4x65x32xf32>, vector<4x32x8xf32>, vector<4x65x8xf32> -> vector<4x65x8xf32>
    "tpu.trace_stop"() : () -> ()
    %c1_105 = arith.constant 1 : index
    %c0_106 = arith.constant 0 : index
    %c0_107 = arith.constant 0 : index
    %c0_108 = arith.constant 0 : index
    %189 = vector.load %arg8[%c1_105, %c0_106, %c0_107, %c0_108] : memref<2x4x32x8xf32, #tpu.memory_space<vmem>>, vector<1x4x32x8xf32>
    %190 = vector.shape_cast %189 : vector<1x4x32x8xf32> to vector<4x32x8xf32>
    "tpu.trace_start"() <{level = 10 : i32, message = "hsd,hde->hse"}> : () -> ()
    %cst_109 = arith.constant dense<0.000000e+00> : vector<4x65x8xf32>
    %191 = tpu.matmul %185, %190, %cst_109 {dimension_numbers = #tpu.dot_dimension_numbers<[2], [1], [1], [2], [0, 0, 0, 1, 1, 2], [0], [0]>} : vector<4x65x32xf32>, vector<4x32x8xf32>, vector<4x65x8xf32> -> vector<4x65x8xf32>
    "tpu.trace_stop"() : () -> ()
    %c1_110 = arith.constant 1 : index
    %c0_111 = arith.constant 0 : index
    %c0_112 = arith.constant 0 : index
    %c0_113 = arith.constant 0 : index
    %192 = vector.load %arg9[%c1_110, %c0_111, %c0_112, %c0_113] : memref<2x4x32x8xf32, #tpu.memory_space<vmem>>, vector<1x4x32x8xf32>
    %193 = vector.shape_cast %192 : vector<1x4x32x8xf32> to vector<4x32x8xf32>
    "tpu.trace_start"() <{level = 10 : i32, message = "hsd,hde->hse"}> : () -> ()
    %cst_114 = arith.constant dense<0.000000e+00> : vector<4x65x8xf32>
    %194 = tpu.matmul %185, %193, %cst_114 {dimension_numbers = #tpu.dot_dimension_numbers<[2], [1], [1], [2], [0, 0, 0, 1, 1, 2], [0], [0]>} : vector<4x65x32xf32>, vector<4x32x8xf32>, vector<4x65x8xf32> -> vector<4x65x8xf32>
    "tpu.trace_stop"() : () -> ()
    "tpu.trace_start"() <{level = 10 : i32, message = "hie,hje->hij"}> : () -> ()
    %cst_115 = arith.constant dense<0.000000e+00> : vector<4x65x65xf32>
    %195 = tpu.matmul %188, %191, %cst_115 {dimension_numbers = #tpu.dot_dimension_numbers<[2], [2], [1], [1], [0, 0, 0, 1, 1, 1], [0], [0]>} : vector<4x65x8xf32>, vector<4x65x8xf32>, vector<4x65x65xf32> -> vector<4x65x65xf32>
    "tpu.trace_stop"() : () -> ()
    %cst_116 = arith.constant 0.176776692 : f32
    %196 = vector.broadcast %cst_116 : f32 to vector<4x65x65xf32>
    %197 = arith.mulf %195, %196 : vector<4x65x65xf32>
    %cst_117 = arith.constant dense<0xFF800000> : vector<4x65xf32>
    %198 = vector.multi_reduction <maximumf>, %197, %cst_117 [2] : vector<4x65x65xf32> to vector<4x65xf32>
    %199 = vector.shape_cast %198 : vector<4x65xf32> to vector<4x65x1xf32>
    %200 = vector.broadcast %199 : vector<4x65x1xf32> to vector<4x65x65xf32>
    %201 = arith.subf %197, %200 : vector<4x65x65xf32>
    %202 = math.exp %201 : vector<4x65x65xf32>
    %cst_118 = arith.constant dense<0.000000e+00> : vector<4x65xf32>
    %203 = vector.multi_reduction <add>, %202, %cst_118 [2] : vector<4x65x65xf32> to vector<4x65xf32>
    %204 = vector.shape_cast %203 : vector<4x65xf32> to vector<4x65x1xf32>
    "tpu.trace_start"() <{level = 10 : i32, message = "hij,hje->hie"}> : () -> ()
    %cst_119 = arith.constant dense<0.000000e+00> : vector<4x65x8xf32>
    %205 = tpu.matmul %202, %194, %cst_119 {dimension_numbers = #tpu.dot_dimension_numbers<[2], [1], [1], [2], [0, 0, 0, 1, 1, 2], [0], [0]>} : vector<4x65x65xf32>, vector<4x65x8xf32>, vector<4x65x8xf32> -> vector<4x65x8xf32>
    "tpu.trace_stop"() : () -> ()
    %206 = tpu.reciprocal %204 {approx = true} : vector<4x65x1xf32> -> vector<4x65x1xf32>
    %207 = vector.broadcast %206 : vector<4x65x1xf32> to vector<4x65x8xf32>
    %208 = arith.mulf %205, %207 : vector<4x65x8xf32>
    %c1_120 = arith.constant 1 : index
    %c0_121 = arith.constant 0 : index
    %c0_122 = arith.constant 0 : index
    %c0_123 = arith.constant 0 : index
    %209 = vector.load %arg10[%c1_120, %c0_121, %c0_122, %c0_123] : memref<2x4x8x32xf32, #tpu.memory_space<vmem>>, vector<1x4x8x32xf32>
    %210 = vector.shape_cast %209 : vector<1x4x8x32xf32> to vector<4x8x32xf32>
    "tpu.trace_start"() <{level = 10 : i32, message = "hie,hed->hid"}> : () -> ()
    %cst_124 = arith.constant dense<0.000000e+00> : vector<4x65x32xf32>
    %211 = tpu.matmul %208, %210, %cst_124 {dimension_numbers = #tpu.dot_dimension_numbers<[2], [1], [1], [2], [0, 0, 0, 1, 1, 2], [0], [0]>} : vector<4x65x8xf32>, vector<4x8x32xf32>, vector<4x65x32xf32> -> vector<4x65x32xf32>
    "tpu.trace_stop"() : () -> ()
    %cst_125 = arith.constant dense<0.000000e+00> : vector<65x32xf32>
    %212 = vector.multi_reduction <add>, %211, %cst_125 [0] : vector<4x65x32xf32> to vector<65x32xf32>
    %213 = arith.addf %156, %212 : vector<65x32xf32>
    %c1_126 = arith.constant 1 : index
    %c0_127 = arith.constant 0 : index
    %c0_128 = arith.constant 0 : index
    %214 = vector.load %arg11[%c1_126, %c0_127, %c0_128] : memref<2x1x32xf32, #tpu.memory_space<vmem>>, vector<1x1x32xf32>
    %215 = vector.shape_cast %214 : vector<1x1x32xf32> to vector<1x32xf32>
    %216 = vector.broadcast %215 : vector<1x32xf32> to vector<65x32xf32>
    %217 = arith.addf %213, %216 : vector<65x32xf32>
    %c1_129 = arith.constant 1 : index
    %c0_130 = arith.constant 0 : index
    %c0_131 = arith.constant 0 : index
    %218 = vector.load %arg12[%c1_129, %c0_130, %c0_131] : memref<2x1x32xf32, #tpu.memory_space<vmem>>, vector<1x1x32xf32>
    %219 = vector.shape_cast %218 : vector<1x1x32xf32> to vector<1x32xf32>
    %c1_132 = arith.constant 1 : index
    %c0_133 = arith.constant 0 : index
    %c0_134 = arith.constant 0 : index
    %220 = vector.load %arg13[%c1_132, %c0_133, %c0_134] : memref<2x1x32xf32, #tpu.memory_space<vmem>>, vector<1x1x32xf32>
    %221 = vector.shape_cast %220 : vector<1x1x32xf32> to vector<1x32xf32>
    %cst_135 = arith.constant dense<0.000000e+00> : vector<65xf32>
    %222 = vector.multi_reduction <add>, %217, %cst_135 [1] : vector<65x32xf32> to vector<65xf32>
    %223 = vector.shape_cast %222 : vector<65xf32> to vector<65x1xf32>
    %cst_136 = arith.constant 3.200000e+01 : f32
    %224 = vector.broadcast %cst_136 : f32 to vector<65x1xf32>
    %225 = arith.divf %223, %224 : vector<65x1xf32>
    %226 = vector.broadcast %225 : vector<65x1xf32> to vector<65x32xf32>
    %227 = arith.subf %217, %226 : vector<65x32xf32>
    %228 = arith.mulf %227, %227 : vector<65x32xf32>
    %cst_137 = arith.constant dense<0.000000e+00> : vector<65xf32>
    %229 = vector.multi_reduction <add>, %228, %cst_137 [1] : vector<65x32xf32> to vector<65xf32>
    %230 = vector.shape_cast %229 : vector<65xf32> to vector<65x1xf32>
    %cst_138 = arith.constant 3.200000e+01 : f32
    %231 = vector.broadcast %cst_138 : f32 to vector<65x1xf32>
    %232 = arith.divf %230, %231 : vector<65x1xf32>
    %233 = vector.broadcast %225 : vector<65x1xf32> to vector<65x32xf32>
    %234 = arith.subf %217, %233 : vector<65x32xf32>
    %cst_139 = arith.constant 9.99999974E-6 : f32
    %235 = vector.broadcast %cst_139 : f32 to vector<65x1xf32>
    %236 = arith.addf %232, %235 : vector<65x1xf32>
    %237 = math.rsqrt %236 : vector<65x1xf32>
    %238 = vector.broadcast %237 : vector<65x1xf32> to vector<65x32xf32>
    %239 = arith.mulf %234, %238 : vector<65x32xf32>
    %240 = vector.broadcast %219 : vector<1x32xf32> to vector<65x32xf32>
    %241 = arith.mulf %239, %240 : vector<65x32xf32>
    %242 = vector.broadcast %221 : vector<1x32xf32> to vector<65x32xf32>
    %243 = arith.addf %241, %242 : vector<65x32xf32>
    %c1_140 = arith.constant 1 : index
    %c0_141 = arith.constant 0 : index
    %c0_142 = arith.constant 0 : index
    %244 = vector.load %arg14[%c1_140, %c0_141, %c0_142] : memref<2x32x64xf32, #tpu.memory_space<vmem>>, vector<1x32x64xf32>
    %245 = vector.shape_cast %244 : vector<1x32x64xf32> to vector<32x64xf32>
    %cst_143 = arith.constant dense<0.000000e+00> : vector<65x64xf32>
    %246 = tpu.matmul %243, %245, %cst_143 {dimension_numbers = #tpu.dot_dimension_numbers<[1], [0], [0], [1], [0, 0, 1, 1], [], []>} : vector<65x32xf32>, vector<32x64xf32>, vector<65x64xf32> -> vector<65x64xf32>
    %c1_144 = arith.constant 1 : index
    %c0_145 = arith.constant 0 : index
    %c0_146 = arith.constant 0 : index
    %247 = vector.load %arg15[%c1_144, %c0_145, %c0_146] : memref<2x1x64xf32, #tpu.memory_space<vmem>>, vector<1x1x64xf32>
    %248 = vector.shape_cast %247 : vector<1x1x64xf32> to vector<1x64xf32>
    %249 = vector.broadcast %248 : vector<1x64xf32> to vector<65x64xf32>
    %250 = arith.addf %246, %249 : vector<65x64xf32>
    %cst_147 = arith.constant 5.000000e-01 : f32
    %251 = vector.broadcast %cst_147 : f32 to vector<65x64xf32>
    %252 = arith.mulf %251, %250 : vector<65x64xf32>
    %cst_148 = arith.constant 0.707106769 : f32
    %253 = vector.broadcast %cst_148 : f32 to vector<65x64xf32>
    %254 = arith.mulf %250, %253 : vector<65x64xf32>
    %cst_149 = arith.constant -4.000000e+00 : f32
    %cst_150 = arith.constant 4.000000e+00 : f32
    %255 = vector.broadcast %cst_149 : f32 to vector<65x64xf32>
    %256 = arith.maximumf %255, %254 : vector<65x64xf32>
    %257 = vector.broadcast %cst_150 : f32 to vector<65x64xf32>
    %258 = arith.minimumf %257, %256 : vector<65x64xf32>
    %259 = arith.mulf %258, %258 : vector<65x64xf32>
    %cst_151 = arith.constant -2.72614237E-10 : f32
    %260 = vector.broadcast %cst_151 : f32 to vector<65x64xf32>
    %261 = arith.mulf %260, %259 : vector<65x64xf32>
    %cst_152 = arith.constant 2.77068146E-8 : f32
    %262 = vector.broadcast %cst_152 : f32 to vector<65x64xf32>
    %263 = arith.addf %261, %262 : vector<65x64xf32>
    %264 = arith.mulf %263, %259 : vector<65x64xf32>
    %cst_153 = arith.constant -2.10102394E-6 : f32
    %265 = vector.broadcast %cst_153 : f32 to vector<65x64xf32>
    %266 = arith.addf %264, %265 : vector<65x64xf32>
    %267 = arith.mulf %266, %259 : vector<65x64xf32>
    %cst_154 = arith.constant -5.69250624E-5 : f32
    %268 = vector.broadcast %cst_154 : f32 to vector<65x64xf32>
    %269 = arith.addf %267, %268 : vector<65x64xf32>
    %270 = arith.mulf %269, %259 : vector<65x64xf32>
    %cst_155 = arith.constant -7.34990637E-4 : f32
    %271 = vector.broadcast %cst_155 : f32 to vector<65x64xf32>
    %272 = arith.addf %270, %271 : vector<65x64xf32>
    %273 = arith.mulf %272, %259 : vector<65x64xf32>
    %cst_156 = arith.constant -2.954600e-03 : f32
    %274 = vector.broadcast %cst_156 : f32 to vector<65x64xf32>
    %275 = arith.addf %273, %274 : vector<65x64xf32>
    %276 = arith.mulf %275, %259 : vector<65x64xf32>
    %cst_157 = arith.constant -0.0160960332 : f32
    %277 = vector.broadcast %cst_157 : f32 to vector<65x64xf32>
    %278 = arith.addf %276, %277 : vector<65x64xf32>
    %cst_158 = arith.constant -1.45660715E-5 : f32
    %279 = vector.broadcast %cst_158 : f32 to vector<65x64xf32>
    %280 = arith.mulf %279, %259 : vector<65x64xf32>
    %cst_159 = arith.constant -2.13374049E-4 : f32
    %281 = vector.broadcast %cst_159 : f32 to vector<65x64xf32>
    %282 = arith.addf %280, %281 : vector<65x64xf32>
    %283 = arith.mulf %282, %259 : vector<65x64xf32>
    %cst_160 = arith.constant -0.00168282702 : f32
    %284 = vector.broadcast %cst_160 : f32 to vector<65x64xf32>
    %285 = arith.addf %283, %284 : vector<65x64xf32>
    %286 = arith.mulf %285, %259 : vector<65x64xf32>
    %cst_161 = arith.constant -0.00737332925 : f32
    %287 = vector.broadcast %cst_161 : f32 to vector<65x64xf32>
    %288 = arith.addf %286, %287 : vector<65x64xf32>
    %289 = arith.mulf %288, %259 : vector<65x64xf32>
    %cst_162 = arith.constant -0.0142647391 : f32
    %290 = vector.broadcast %cst_162 : f32 to vector<65x64xf32>
    %291 = arith.addf %289, %290 : vector<65x64xf32>
    %292 = arith.mulf %258, %278 : vector<65x64xf32>
    %293 = arith.divf %292, %291 : vector<65x64xf32>
    %cst_163 = arith.constant 1.000000e+00 : f32
    %294 = vector.broadcast %cst_163 : f32 to vector<65x64xf32>
    %295 = arith.addf %294, %293 : vector<65x64xf32>
    %296 = arith.mulf %252, %295 : vector<65x64xf32>
    %c1_164 = arith.constant 1 : index
    %c0_165 = arith.constant 0 : index
    %c0_166 = arith.constant 0 : index
    %297 = vector.load %arg16[%c1_164, %c0_165, %c0_166] : memref<2x64x32xf32, #tpu.memory_space<vmem>>, vector<1x64x32xf32>
    %298 = vector.shape_cast %297 : vector<1x64x32xf32> to vector<64x32xf32>
    %cst_167 = arith.constant dense<0.000000e+00> : vector<65x32xf32>
    %299 = tpu.matmul %296, %298, %cst_167 {dimension_numbers = #tpu.dot_dimension_numbers<[1], [0], [0], [1], [0, 0, 1, 1], [], []>} : vector<65x64xf32>, vector<64x32xf32>, vector<65x32xf32> -> vector<65x32xf32>
    %c1_168 = arith.constant 1 : index
    %c0_169 = arith.constant 0 : index
    %c0_170 = arith.constant 0 : index
    %300 = vector.load %arg17[%c1_168, %c0_169, %c0_170] : memref<2x1x32xf32, #tpu.memory_space<vmem>>, vector<1x1x32xf32>
    %301 = vector.shape_cast %300 : vector<1x1x32xf32> to vector<1x32xf32>
    %302 = vector.broadcast %301 : vector<1x32xf32> to vector<65x32xf32>
    %303 = arith.addf %299, %302 : vector<65x32xf32>
    %304 = arith.addf %217, %303 : vector<65x32xf32>
    %c0_171 = arith.constant 0 : index
    %c0_172 = arith.constant 0 : index
    %c0_173 = arith.constant 0 : index
    %305 = vector.load %arg18[%c0_171, %c0_172, %c0_173] : memref<1x65x32xf32, #tpu.memory_space<vmem>>, vector<1x65x32xf32>
    %306 = vector.shape_cast %305 : vector<1x65x32xf32> to vector<65x32xf32>
    %307 = vector.shape_cast %304 : vector<65x32xf32> to vector<1x65x32xf32>
    tpu.vector_store %arg18[%c0_171, %c0_172, %c0_173], %307 {strides = array<i32>} : memref<1x65x32xf32, #tpu.memory_space<vmem>>, vector<1x65x32xf32>,
    return
  }
  func.func @transform_0(%arg0: i32) -> (i32, i32, i32) {
    %c0_i32 = arith.constant 0 : i32
    %c0_i32_0 = arith.constant 0 : i32
    %c0_i32_1 = arith.constant 0 : i32
    return %arg0, %c0_i32, %c0_i32_0 : i32, i32, i32
  }
  func.func @transform_1(%arg0: i32) -> (i32, i32) {
    %c0_i32 = arith.constant 0 : i32
    %c0_i32_0 = arith.constant 0 : i32
    %c0_i32_1 = arith.constant 0 : i32
    return %c0_i32, %c0_i32_0 : i32, i32
  }
  func.func @transform_2(%arg0: i32) -> (i32, i32) {
    %c0_i32 = arith.constant 0 : i32
    %c0_i32_0 = arith.constant 0 : i32
    %c0_i32_1 = arith.constant 0 : i32
    return %c0_i32, %c0_i32_0 : i32, i32
  }
  func.func @transform_3(%arg0: i32) -> (i32, i32) {
    %c0_i32 = arith.constant 0 : i32
    %c0_i32_0 = arith.constant 0 : i32
    %c0_i32_1 = arith.constant 0 : i32
    return %c0_i32, %c0_i32_0 : i32, i32
  }
  func.func @transform_4(%arg0: i32) -> (i32, i32, i32) {
    %c0_i32 = arith.constant 0 : i32
    %c0_i32_0 = arith.constant 0 : i32
    %c0_i32_1 = arith.constant 0 : i32
    %c0_i32_2 = arith.constant 0 : i32
    return %c0_i32, %c0_i32_0, %c0_i32_1 : i32, i32, i32
  }
  func.func @transform_5(%arg0: i32) -> (i32, i32, i32) {
    %c0_i32 = arith.constant 0 : i32
    %c0_i32_0 = arith.constant 0 : i32
    %c0_i32_1 = arith.constant 0 : i32
    %c0_i32_2 = arith.constant 0 : i32
    return %c0_i32, %c0_i32_0, %c0_i32_1 : i32, i32, i32
  }
  func.func @transform_6(%arg0: i32) -> (i32, i32, i32, i32) {
    %c0_i32 = arith.constant 0 : i32
    %c0_i32_0 = arith.constant 0 : i32
    %c0_i32_1 = arith.constant 0 : i32
    %c0_i32_2 = arith.constant 0 : i32
    %c0_i32_3 = arith.constant 0 : i32
    return %c0_i32, %c0_i32_0, %c0_i32_1, %c0_i32_2 : i32, i32, i32, i32
  }
  func.func @transform_7(%arg0: i32) -> (i32, i32, i32, i32) {
    %c0_i32 = arith.constant 0 : i32
    %c0_i32_0 = arith.constant 0 : i32
    %c0_i32_1 = arith.constant 0 : i32
    %c0_i32_2 = arith.constant 0 : i32
    %c0_i32_3 = arith.constant 0 : i32
    return %c0_i32, %c0_i32_0, %c0_i32_1, %c0_i32_2 : i32, i32, i32, i32
  }
  func.func @transform_8(%arg0: i32) -> (i32, i32, i32, i32) {
    %c0_i32 = arith.constant 0 : i32
    %c0_i32_0 = arith.constant 0 : i32
    %c0_i32_1 = arith.constant 0 : i32
    %c0_i32_2 = arith.constant 0 : i32
    %c0_i32_3 = arith.constant 0 : i32
    return %c0_i32, %c0_i32_0, %c0_i32_1, %c0_i32_2 : i32, i32, i32, i32
  }
  func.func @transform_9(%arg0: i32) -> (i32, i32, i32, i32) {
    %c0_i32 = arith.constant 0 : i32
    %c0_i32_0 = arith.constant 0 : i32
    %c0_i32_1 = arith.constant 0 : i32
    %c0_i32_2 = arith.constant 0 : i32
    %c0_i32_3 = arith.constant 0 : i32
    return %c0_i32, %c0_i32_0, %c0_i32_1, %c0_i32_2 : i32, i32, i32, i32
  }
  func.func @transform_10(%arg0: i32) -> (i32, i32, i32) {
    %c0_i32 = arith.constant 0 : i32
    %c0_i32_0 = arith.constant 0 : i32
    %c0_i32_1 = arith.constant 0 : i32
    %c0_i32_2 = arith.constant 0 : i32
    return %c0_i32, %c0_i32_0, %c0_i32_1 : i32, i32, i32
  }
  func.func @transform_11(%arg0: i32) -> (i32, i32, i32) {
    %c0_i32 = arith.constant 0 : i32
    %c0_i32_0 = arith.constant 0 : i32
    %c0_i32_1 = arith.constant 0 : i32
    %c0_i32_2 = arith.constant 0 : i32
    return %c0_i32, %c0_i32_0, %c0_i32_1 : i32, i32, i32
  }
  func.func @transform_12(%arg0: i32) -> (i32, i32, i32) {
    %c0_i32 = arith.constant 0 : i32
    %c0_i32_0 = arith.constant 0 : i32
    %c0_i32_1 = arith.constant 0 : i32
    %c0_i32_2 = arith.constant 0 : i32
    return %c0_i32, %c0_i32_0, %c0_i32_1 : i32, i32, i32
  }
  func.func @transform_13(%arg0: i32) -> (i32, i32, i32) {
    %c0_i32 = arith.constant 0 : i32
    %c0_i32_0 = arith.constant 0 : i32
    %c0_i32_1 = arith.constant 0 : i32
    %c0_i32_2 = arith.constant 0 : i32
    return %c0_i32, %c0_i32_0, %c0_i32_1 : i32, i32, i32
  }
  func.func @transform_14(%arg0: i32) -> (i32, i32, i32) {
    %c0_i32 = arith.constant 0 : i32
    %c0_i32_0 = arith.constant 0 : i32
    %c0_i32_1 = arith.constant 0 : i32
    %c0_i32_2 = arith.constant 0 : i32
    return %c0_i32, %c0_i32_0, %c0_i32_1 : i32, i32, i32
  }
  func.func @transform_15(%arg0: i32) -> (i32, i32, i32) {
    %c0_i32 = arith.constant 0 : i32
    %c0_i32_0 = arith.constant 0 : i32
    %c0_i32_1 = arith.constant 0 : i32
    %c0_i32_2 = arith.constant 0 : i32
    return %c0_i32, %c0_i32_0, %c0_i32_1 : i32, i32, i32
  }
  func.func @transform_16(%arg0: i32) -> (i32, i32, i32) {
    %c0_i32 = arith.constant 0 : i32
    %c0_i32_0 = arith.constant 0 : i32
    %c0_i32_1 = arith.constant 0 : i32
    %c0_i32_2 = arith.constant 0 : i32
    return %c0_i32, %c0_i32_0, %c0_i32_1 : i32, i32, i32
  }
  func.func @transform_17(%arg0: i32) -> (i32, i32, i32) {
    %c0_i32 = arith.constant 0 : i32
    %c0_i32_0 = arith.constant 0 : i32
    %c0_i32_1 = arith.constant 0 : i32
    return %arg0, %c0_i32, %c0_i32_0 : i32, i32, i32
  }
}

</mosaic_0001>

<llo_original>
// kernel: vit_forward.1
$region0: #{vit_forward.1}
  #allocation0 [shape = 'u32[]', space=smem, size = 0x4, offset = 0x4, fixed_abs, tag = 'smem constant byte address 0x4 - core index']
  #allocation1 [shape = 'u32[144,128]{1,0:T(1,128)}', space=vmem, size = 0x12000, scoped, tag = 'internal scratch']
  %s0 = inlined_call_operand.vmem [shape: f32[2,65,12], index: 0, kind: input, shape index: {}]
  %s1 = inlined_call_operand.vmem [shape: f32[12,32], index: 1, kind: input, shape index: {}]
  %s2 = inlined_call_operand.vmem [shape: f32[1,32], index: 2, kind: input, shape index: {}]
  %s3 = inlined_call_operand.vmem [shape: f32[65,32], index: 3, kind: input, shape index: {}]
  %s4 = inlined_call_operand.vmem [shape: f32[2,1,32], index: 4, kind: input, shape index: {}]
  %s5 = inlined_call_operand.vmem [shape: f32[2,1,32], index: 5, kind: input, shape index: {}]
  %s6 = inlined_call_operand.vmem [shape: f32[2,4,32,8], index: 6, kind: input, shape index: {}]
  %s7 = inlined_call_operand.vmem [shape: f32[2,4,32,8], index: 7, kind: input, shape index: {}]
  %s8 = inlined_call_operand.vmem [shape: f32[2,4,32,8], index: 8, kind: input, shape index: {}]
  %s9 = inlined_call_operand.vmem [shape: f32[2,4,8,32], index: 9, kind: input, shape index: {}]
  %s10 = inlined_call_operand.vmem [shape: f32[2,1,32], index: 10, kind: input, shape index: {}]
  %s11 = inlined_call_operand.vmem [shape: f32[2,1,32], index: 11, kind: input, shape index: {}]
  %s12 = inlined_call_operand.vmem [shape: f32[2,1,32], index: 12, kind: input, shape index: {}]
  %s13 = inlined_call_operand.vmem [shape: f32[2,32,64], index: 13, kind: input, shape index: {}]
  %s14 = inlined_call_operand.vmem [shape: f32[2,1,64], index: 14, kind: input, shape index: {}]
  %s15 = inlined_call_operand.vmem [shape: f32[2,64,32], index: 15, kind: input, shape index: {}]
  %s16 = inlined_call_operand.vmem [shape: f32[2,1,32], index: 16, kind: input, shape index: {}]
  %s17 = inlined_call_operand.vmem [shape: f32[2,65,32], index: 17, kind: output, shape index: {}]
  %s18 = sld [smem:[#allocation0]]
  $region101: #{vit_forward.1} parent=0
    _
  %s20 = ssub.s32 1, %s18
  %s21 = scalar_select 0, %s20, %s18
  loop: start=0, step=1, limit=4
  $region2: #{vit_forward.1} parent=0 // loop_pre_header
    _
  $region3: #{vit_forward.1} parent=0 // loop_header
    %s23 = sphi 0, %s27
    %p24 = scmp.ge.s32.totalorder %s23, 4
    %s33 = sphi 0, %s35
    %s36 = sphi 0, %s33
    %s37 = sphi 0, %s36
    %s53 = sphi 0, %s37
    %s57 = sphi 0, %s57
    %s59 = sphi 0, %s57
    %s60 = sphi 0, %s59
    %s74 = sphi 0, %s60
    %s78 = sphi 0, %s78
    %s80 = sphi 0, %s78
    %s81 = sphi 0, %s80
    %s95 = sphi 0, %s81
    %s99 = sphi 0, %s99
    %s101 = sphi 0, %s99
    %s102 = sphi 0, %s101
    %s116 = sphi 0, %s102
    %s120 = sphi 0, %s120
    %s122 = sphi 0, %s120
    %s123 = sphi 0, %s122
    %s137 = sphi 0, %s123
    %s141 = sphi 0, %s141
    %s143 = sphi 0, %s141
    %s144 = sphi 0, %s143
    %s158 = sphi 0, %s144
    %s162 = sphi 0, %s162
    %s164 = sphi 0, %s162
    %s165 = sphi 0, %s164
    %s179 = sphi 0, %s165
    %s183 = sphi 0, %s183
    %s185 = sphi 0, %s183
    %s186 = sphi 0, %s185
    %s200 = sphi 0, %s186
    %s204 = sphi 0, %s204
    %s206 = sphi 0, %s204
    %s207 = sphi 0, %s206
    %s221 = sphi 0, %s207
    %s225 = sphi 0, %s225
    %s227 = sphi 0, %s225
    %s228 = sphi 0, %s227
    %s242 = sphi 0, %s228
    %s246 = sphi 0, %s246
    %s248 = sphi 0, %s246
    %s249 = sphi 0, %s248
    %s263 = sphi 0, %s249
    %s267 = sphi 0, %s267
    %s269 = sphi 0, %s267
    %s270 = sphi 0, %s269
    %s284 = sphi 0, %s270
    %s288 = sphi 0, %s288
    %s290 = sphi 0, %s288
    %s291 = sphi 0, %s290
    %s305 = sphi 0, %s291
    %s309 = sphi 0, %s309
    %s311 = sphi 0, %s309
    %s312 = sphi 0, %s311
    %s326 = sphi 0, %s312
    %s330 = sphi 0, %s330
    %s332 = sphi 0, %s330
    %s333 = sphi 0, %s332
    %s347 = sphi 0, %s333
    %s351 = sphi 0, %s351
    %s353 = sphi 0, %s351
    %s354 = sphi 0, %s353
    %s368 = sphi 0, %s354
    %s372 = sphi 0, %s372
    %s374 = sphi 0, %s372
    %s375 = sphi 0, %s374
    %s389 = sphi 0, %s375
    %s395 = sphi 0, %s397
    %s398 = sphi 0, %s395
    %s399 = sphi 0, %s398
    %s415 = sphi 0, %s399
  $region4: #{vit_forward.1} parent=0 // loop_header_branch
    %26 = sbr.rel (%p24) target = $region8
  $region5: #{vit_forward.1} parent=0 // loop_body
    %s28 = ssub.s32 %s23, 1
    %s29 = ssub.s32 %s23, 2
    %s30 = sadd.s32 %s23, 1
    %s31 = ssub.s32 %s23, %s30
    %p32 = scmp.eq.s32.totalorder %s31, 0
    %s34 = sadd.s32 %s33, 1
    %s35 = scalar_select %p32, %s33, %s34
    %p38 = pneg %p32
    %p39 = scmp.eq.s32.totalorder %s23, 1
    %p40 = por %p38, %p39
    %p41 = scmp.ne.s32.totalorder %s33, %s36
    %p42 = scmp.eq.s32.totalorder %s23, 0
    %p43 = por %p41, %p42
    %p44 = scmp.ne.s32.totalorder %s33, %s36
    %p45 = scmp.eq.s32.totalorder %s28, 1
    %p46 = por %p44, %p45
    %p47 = scmp.ne.s32.totalorder %s36, %s37
    %p48 = scmp.eq.s32.totalorder %s28, 0
    %p49 = por %p47, %p48
    %p50 = scmp.ne.s32.totalorder %s36, %s37
    %p51 = scmp.eq.s32.totalorder %s29, 1
    %p52 = por %p50, %p51
    %p54 = scmp.ne.s32.totalorder %s37, %s53
    %p55 = scmp.eq.s32.totalorder %s29, 0
    %p56 = por %p54, %p55
    %s58 = sadd.s32 %s57, 1
    %p61 = scmp.eq.s32.totalorder %s23, 1
    %p62 = scmp.ne.s32.totalorder %s57, %s59
    %p63 = scmp.eq.s32.totalorder %s23, 0
    %p64 = por %p62, %p63
    %p65 = scmp.ne.s32.totalorder %s57, %s59
    %p66 = scmp.eq.s32.totalorder %s28, 1
    %p67 = por %p65, %p66
    %p68 = scmp.ne.s32.totalorder %s59, %s60
    %p69 = scmp.eq.s32.totalorder %s28, 0
    %p70 = por %p68, %p69
    %p71 = scmp.ne.s32.totalorder %s59, %s60
    %p72 = scmp.eq.s32.totalorder %s29, 1
    %p73 = por %p71, %p72
    %p75 = scmp.ne.s32.totalorder %s60, %s74
    %p76 = scmp.eq.s32.totalorder %s29, 0
    %p77 = por %p75, %p76
    %s79 = sadd.s32 %s78, 1
    %p82 = scmp.eq.s32.totalorder %s23, 1
    %p83 = scmp.ne.s32.totalorder %s78, %s80
    %p84 = scmp.eq.s32.totalorder %s23, 0
    %p85 = por %p83, %p84
    %p86 = scmp.ne.s32.totalorder %s78, %s80
    %p87 = scmp.eq.s32.totalorder %s28, 1
    %p88 = por %p86, %p87
    %p89 = scmp.ne.s32.totalorder %s80, %s81
    %p90 = scmp.eq.s32.totalorder %s28, 0
    %p91 = por %p89, %p90
    %p92 = scmp.ne.s32.totalorder %s80, %s81
    %p93 = scmp.eq.s32.totalorder %s29, 1
    %p94 = por %p92, %p93
    %p96 = scmp.ne.s32.totalorder %s81, %s95
    %p97 = scmp.eq.s32.totalorder %s29, 0
    %p98 = por %p96, %p97
    %s100 = sadd.s32 %s99, 1
    %p103 = scmp.eq.s32.totalorder %s23, 1
    %p104 = scmp.ne.s32.totalorder %s99, %s101
    %p105 = scmp.eq.s32.totalorder %s23, 0
    %p106 = por %p104, %p105
    %p107 = scmp.ne.s32.totalorder %s99, %s101
    %p108 = scmp.eq.s32.totalorder %s28, 1
    %p109 = por %p107, %p108
    %p110 = scmp.ne.s32.totalorder %s101, %s102
    %p111 = scmp.eq.s32.totalorder %s28, 0
    %p112 = por %p110, %p111
    %p113 = scmp.ne.s32.totalorder %s101, %s102
    %p114 = scmp.eq.s32.totalorder %s29, 1
    %p115 = por %p113, %p114
    %p117 = scmp.ne.s32.totalorder %s102, %s116
    %p118 = scmp.eq.s32.totalorder %s29, 0
    %p119 = por %p117, %p118
    %s121 = sadd.s32 %s120, 1
    %p124 = scmp.eq.s32.totalorder %s23, 1
    %p125 = scmp.ne.s32.totalorder %s120, %s122
    %p126 = scmp.eq.s32.totalorder %s23, 0
    %p127 = por %p125, %p126
    %p128 = scmp.ne.s32.totalorder %s120, %s122
    %p129 = scmp.eq.s32.totalorder %s28, 1
    %p130 = por %p128, %p129
    %p131 = scmp.ne.s32.totalorder %s122, %s123
    %p132 = scmp.eq.s32.totalorder %s28, 0
    %p133 = por %p131, %p132
    %p134 = scmp.ne.s32.totalorder %s122, %s123
    %p135 = scmp.eq.s32.totalorder %s29, 1
    %p136 = por %p134, %p135
    %p138 = scmp.ne.s32.totalorder %s123, %s137
    %p139 = scmp.eq.s32.totalorder %s29, 0
    %p140 = por %p138, %p139
    %s142 = sadd.s32 %s141, 1
    %p145 = scmp.eq.s32.totalorder %s23, 1
    %p146 = scmp.ne.s32.totalorder %s141, %s143
    %p147 = scmp.eq.s32.totalorder %s23, 0
    %p148 = por %p146, %p147
    %p149 = scmp.ne.s32.totalorder %s141, %s143
    %p150 = scmp.eq.s32.totalorder %s28, 1
    %p151 = por %p149, %p150
    %p152 = scmp.ne.s32.totalorder %s143, %s144
    %p153 = scmp.eq.s32.totalorder %s28, 0
    %p154 = por %p152, %p153
    %p155 = scmp.ne.s32.totalorder %s143, %s144
    %p156 = scmp.eq.s32.totalorder %s29, 1
    %p157 = por %p155, %p156
    %p159 = scmp.ne.s32.totalorder %s144, %s158
    %p160 = scmp.eq.s32.totalorder %s29, 0
    %p161 = por %p159, %p160
    %s163 = sadd.s32 %s162, 1
    %p166 = scmp.eq.s32.totalorder %s23, 1
    %p167 = scmp.ne.s32.totalorder %s162, %s164
    %p168 = scmp.eq.s32.totalorder %s23, 0
    %p169 = por %p167, %p168
    %p170 = scmp.ne.s32.totalorder %s162, %s164
    %p171 = scmp.eq.s32.totalorder %s28, 1
    %p172 = por %p170, %p171
    %p173 = scmp.ne.s32.totalorder %s164, %s165
    %p174 = scmp.eq.s32.totalorder %s28, 0
    %p175 = por %p173, %p174
    %p176 = scmp.ne.s32.totalorder %s164, %s165
    %p177 = scmp.eq.s32.totalorder %s29, 1
    %p178 = por %p176, %p177
    %p180 = scmp.ne.s32.totalorder %s165, %s179
    %p181 = scmp.eq.s32.totalorder %s29, 0
    %p182 = por %p180, %p181
    %s184 = sadd.s32 %s183, 1
    %p187 = scmp.eq.s32.totalorder %s23, 1
    %p188 = scmp.ne.s32.totalorder %s183, %s185
    %p189 = scmp.eq.s32.totalorder %s23, 0
    %p190 = por %p188, %p189
    %p191 = scmp.ne.s32.totalorder %s183, %s185
    %p192 = scmp.eq.s32.totalorder %s28, 1
    %p193 = por %p191, %p192
    %p194 = scmp.ne.s32.totalorder %s185, %s186
    %p195 = scmp.eq.s32.totalorder %s28, 0
    %p196 = por %p194, %p195
    %p197 = scmp.ne.s32.totalorder %s185, %s186
    %p198 = scmp.eq.s32.totalorder %s29, 1
    %p199 = por %p197, %p198
    %p201 = scmp.ne.s32.totalorder %s186, %s200
    %p202 = scmp.eq.s32.totalorder %s29, 0
    %p203 = por %p201, %p202
    %s205 = sadd.s32 %s204, 1
    %p208 = scmp.eq.s32.totalorder %s23, 1
    %p209 = scmp.ne.s32.totalorder %s204, %s206
    %p210 = scmp.eq.s32.totalorder %s23, 0
    %p211 = por %p209, %p210
    %p212 = scmp.ne.s32.totalorder %s204, %s206
    %p213 = scmp.eq.s32.totalorder %s28, 1
    %p214 = por %p212, %p213
    %p215 = scmp.ne.s32.totalorder %s206, %s207
    %p216 = scmp.eq.s32.totalorder %s28, 0
    %p217 = por %p215, %p216
    %p218 = scmp.ne.s32.totalorder %s206, %s207
    %p219 = scmp.eq.s32.totalorder %s29, 1
    %p220 = por %p218, %p219
    %p222 = scmp.ne.s32.totalorder %s207, %s221
    %p223 = scmp.eq.s32.totalorder %s29, 0
    %p224 = por %p222, %p223
    %s226 = sadd.s32 %s225, 1
    %p229 = scmp.eq.s32.totalorder %s23, 1
    %p230 = scmp.ne.s32.totalorder %s225, %s227
    %p231 = scmp.eq.s32.totalorder %s23, 0
    %p232 = por %p230, %p231
    %p233 = scmp.ne.s32.totalorder %s225, %s227
    %p234 = scmp.eq.s32.totalorder %s28, 1
    %p235 = por %p233, %p234
    %p236 = scmp.ne.s32.totalorder %s227, %s228
    %p237 = scmp.eq.s32.totalorder %s28, 0
    %p238 = por %p236, %p237
    %p239 = scmp.ne.s32.totalorder %s227, %s228
    %p240 = scmp.eq.s32.totalorder %s29, 1
    %p241 = por %p239, %p240
    %p243 = scmp.ne.s32.totalorder %s228, %s242
    %p244 = scmp.eq.s32.totalorder %s29, 0
    %p245 = por %p243, %p244
    %s247 = sadd.s32 %s246, 1
    %p250 = scmp.eq.s32.totalorder %s23, 1
    %p251 = scmp.ne.s32.totalorder %s246, %s248
    %p252 = scmp.eq.s32.totalorder %s23, 0
    %p253 = por %p251, %p252
    %p254 = scmp.ne.s32.totalorder %s246, %s248
    %p255 = scmp.eq.s32.totalorder %s28, 1
    %p256 = por %p254, %p255
    %p257 = scmp.ne.s32.totalorder %s248, %s249
    %p258 = scmp.eq.s32.totalorder %s28, 0
    %p259 = por %p257, %p258
    %p260 = scmp.ne.s32.totalorder %s248, %s249
    %p261 = scmp.eq.s32.totalorder %s29, 1
    %p262 = por %p260, %p261
    %p264 = scmp.ne.s32.totalorder %s249, %s263
    %p265 = scmp.eq.s32.totalorder %s29, 0
    %p266 = por %p264, %p265
    %s268 = sadd.s32 %s267, 1
    %p271 = scmp.eq.s32.totalorder %s23, 1
    %p272 = scmp.ne.s32.totalorder %s267, %s269
    %p273 = scmp.eq.s32.totalorder %s23, 0
    %p274 = por %p272, %p273
    %p275 = scmp.ne.s32.totalorder %s267, %s269
    %p276 = scmp.eq.s32.totalorder %s28, 1
    %p277 = por %p275, %p276
    %p278 = scmp.ne.s32.totalorder %s269, %s270
    %p279 = scmp.eq.s32.totalorder %s28, 0
    %p280 = por %p278, %p279
    %p281 = scmp.ne.s32.totalorder %s269, %s270
    %p282 = scmp.eq.s32.totalorder %s29, 1
    %p283 = por %p281, %p282
    %p285 = scmp.ne.s32.totalorder %s270, %s284
    %p286 = scmp.eq.s32.totalorder %s29, 0
    %p287 = por %p285, %p286
    %s289 = sadd.s32 %s288, 1
    %p292 = scmp.eq.s32.totalorder %s23, 1
    %p293 = scmp.ne.s32.totalorder %s288, %s290
    %p294 = scmp.eq.s32.totalorder %s23, 0
    %p295 = por %p293, %p294
    %p296 = scmp.ne.s32.totalorder %s288, %s290
    %p297 = scmp.eq.s32.totalorder %s28, 1
    %p298 = por %p296, %p297
    %p299 = scmp.ne.s32.totalorder %s290, %s291
    %p300 = scmp.eq.s32.totalorder %s28, 0
    %p301 = por %p299, %p300
    %p302 = scmp.ne.s32.totalorder %s290, %s291
    %p303 = scmp.eq.s32.totalorder %s29, 1
    %p304 = por %p302, %p303
    %p306 = scmp.ne.s32.totalorder %s291, %s305
    %p307 = scmp.eq.s32.totalorder %s29, 0
    %p308 = por %p306, %p307
    %s310 = sadd.s32 %s309, 1
    %p313 = scmp.eq.s32.totalorder %s23, 1
    %p314 = scmp.ne.s32.totalorder %s309, %s311
    %p315 = scmp.eq.s32.totalorder %s23, 0
    %p316 = por %p314, %p315
    %p317 = scmp.ne.s32.totalorder %s309, %s311
    %p318 = scmp.eq.s32.totalorder %s28, 1
    %p319 = por %p317, %p318
    %p320 = scmp.ne.s32.totalorder %s311, %s312
    %p321 = scmp.eq.s32.totalorder %s28, 0
    %p322 = por %p320, %p321
    %p323 = scmp.ne.s32.totalorder %s311, %s312
    %p324 = scmp.eq.s32.totalorder %s29, 1
    %p325 = por %p323, %p324
    %p327 = scmp.ne.s32.totalorder %s312, %s326
    %p328 = scmp.eq.s32.totalorder %s29, 0
    %p329 = por %p327, %p328
    %s331 = sadd.s32 %s330, 1
    %p334 = scmp.eq.s32.totalorder %s23, 1
    %p335 = scmp.ne.s32.totalorder %s330, %s332
    %p336 = scmp.eq.s32.totalorder %s23, 0
    %p337 = por %p335, %p336
    %p338 = scmp.ne.s32.totalorder %s330, %s332
    %p339 = scmp.eq.s32.totalorder %s28, 1
    %p340 = por %p338, %p339
    %p341 = scmp.ne.s32.totalorder %s332, %s333
    %p342 = scmp.eq.s32.totalorder %s28, 0
    %p343 = por %p341, %p342
    %p344 = scmp.ne.s32.totalorder %s332, %s333
    %p345 = scmp.eq.s32.totalorder %s29, 1
    %p346 = por %p344, %p345
    %p348 = scmp.ne.s32.totalorder %s333, %s347
    %p349 = scmp.eq.s32.totalorder %s29, 0
    %p350 = por %p348, %p349
    %s352 = sadd.s32 %s351, 1
    %p355 = scmp.eq.s32.totalorder %s23, 1
    %p356 = scmp.ne.s32.totalorder %s351, %s353
    %p357 = scmp.eq.s32.totalorder %s23, 0
    %p358 = por %p356, %p357
    %p359 = scmp.ne.s32.totalorder %s351, %s353
    %p360 = scmp.eq.s32.totalorder %s28, 1
    %p361 = por %p359, %p360
    %p362 = scmp.ne.s32.totalorder %s353, %s354
    %p363 = scmp.eq.s32.totalorder %s28, 0
    %p364 = por %p362, %p363
    %p365 = scmp.ne.s32.totalorder %s353, %s354
    %p366 = scmp.eq.s32.totalorder %s29, 1
    %p367 = por %p365, %p366
    %p369 = scmp.ne.s32.totalorder %s354, %s368
    %p370 = scmp.eq.s32.totalorder %s29, 0
    %p371 = por %p369, %p370
    %s373 = sadd.s32 %s372, 1
    %p376 = scmp.eq.s32.totalorder %s23, 1
    %p377 = scmp.ne.s32.totalorder %s372, %s374
    %p378 = scmp.eq.s32.totalorder %s23, 0
    %p379 = por %p377, %p378
    %p380 = scmp.ne.s32.totalorder %s372, %s374
    %p381 = scmp.eq.s32.totalorder %s28, 1
    %p382 = por %p380, %p381
    %p383 = scmp.ne.s32.totalorder %s374, %s375
    %p384 = scmp.eq.s32.totalorder %s28, 0
    %p385 = por %p383, %p384
    %p386 = scmp.ne.s32.totalorder %s374, %s375
    %p387 = scmp.eq.s32.totalorder %s29, 1
    %p388 = por %p386, %p387
    %p390 = scmp.ne.s32.totalorder %s375, %s389
    %p391 = scmp.eq.s32.totalorder %s29, 0
    %p392 = por %p390, %p391
    %s393 = ssub.s32 %s23, %s30
    %p394 = scmp.eq.s32.totalorder %s393, 0
    %s396 = sadd.s32 %s395, 1
    %s397 = scalar_select %p394, %s395, %s396
    %p400 = pneg %p394
    %p401 = scmp.eq.s32.totalorder %s23, 1
    %p402 = por %p400, %p401
    %p403 = scmp.ne.s32.totalorder %s395, %s398
    %p404 = scmp.eq.s32.totalorder %s23, 0
    %p405 = por %p403, %p404
    %p406 = scmp.ne.s32.totalorder %s395, %s398
    %p407 = scmp.eq.s32.totalorder %s28, 1
    %p408 = por %p406, %p407
    %p409 = scmp.ne.s32.totalorder %s398, %s399
    %p410 = scmp.eq.s32.totalorder %s28, 0
    %p411 = por %p409, %p410
    %p412 = scmp.ne.s32.totalorder %s398, %s399
    %p413 = scmp.eq.s32.totalorder %s29, 1
    %p414 = por %p412, %p413
    %p416 = scmp.ne.s32.totalorder %s399, %s415
    %p417 = scmp.eq.s32.totalorder %s29, 0
    %p418 = por %p416, %p417
    %p419 = scmp.le.s32.totalorder 1, %s23
    %p420 = scmp.lt.s32.totalorder %s23, 3
    %p421 = pnand %p419, %p420
    %p422 = pneg %p421
    // Predicated region
    $region9: #{vit_forward.1} parent=5 // pred_check
      _
    $region10: #{vit_forward.1} parent=5 // pred_check_branch
      %424 = sbr.rel (%p421) target = $region12
    $region11: #{vit_forward.1} parent=5 // pred_region
      %s425 = ssub.s32 %s23, 1
      // Predicated region
      $region13: #{vit_forward.1} parent=11 // pred_check
        %p426 = pneg %p70
      $region14: #{vit_forward.1} parent=11 // pred_check_branch
        %428 = sbr.rel (%p426) target = $region16
      $region15: #{vit_forward.1} parent=11 // pred_region
        _
      $region16: #{vit_forward.1} parent=11 // pred_fallthru
        _
      // Predicated region
      $region17: #{vit_forward.1} parent=11 // pred_check
        %p429 = pneg %p91
      $region18: #{vit_forward.1} parent=11 // pred_check_branch
        %431 = sbr.rel (%p429) target = $region20
      $region19: #{vit_forward.1} parent=11 // pred_region
        _
      $region20: #{vit_forward.1} parent=11 // pred_fallthru
        _
      // Predicated region
      $region21: #{vit_forward.1} parent=11 // pred_check
        %p432 = pneg %p112
      $region22: #{vit_forward.1} parent=11 // pred_check_branch
        %434 = sbr.rel (%p432) target = $region24
      $region23: #{vit_forward.1} parent=11 // pred_region
        _
      $region24: #{vit_forward.1} parent=11 // pred_fallthru
        _
      // Predicated region
      $region25: #{vit_forward.1} parent=11 // pred_check
        %p435 = pneg %p133
      $region26: #{vit_forward.1} parent=11 // pred_check_branch
        %437 = sbr.rel (%p435) target = $region28
      $region27: #{vit_forward.1} parent=11 // pred_region
        _
      $region28: #{vit_forward.1} parent=11 // pred_fallthru
        _
      // Predicated region
      $region29: #{vit_forward.1} parent=11 // pred_check
        %p438 = pneg %p154
      $region30: #{vit_forward.1} parent=11 // pred_check_branch
        %440 = sbr.rel (%p438) target = $region32
      $region31: #{vit_forward.1} parent=11 // pred_region
        _
      $region32: #{vit_forward.1} parent=11 // pred_fallthru
        _
      // Predicated region
      $region33: #{vit_forward.1} parent=11 // pred_check
        %p441 = pneg %p175
      $region34: #{vit_forward.1} parent=11 // pred_check_branch
        %443 = sbr.rel (%p441) target = $region36
      $region35: #{vit_forward.1} parent=11 // pred_region
        _
      $region36: #{vit_forward.1} parent=11 // pred_fallthru
        _
      // Predicated region
      $region37: #{vit_forward.1} parent=11 // pred_check
        %p444 = pneg %p196
      $region38: #{vit_forward.1} parent=11 // pred_check_branch
        %446 = sbr.rel (%p444) target = $region40
      $region39: #{vit_forward.1} parent=11 // pred_region
        _
      $region40: #{vit_forward.1} parent=11 // pred_fallthru
        _
      // Predicated region
      $region41: #{vit_forward.1} parent=11 // pred_check
        %p447 = pneg %p217
      $region42: #{vit_forward.1} parent=11 // pred_check_branch
        %449 = sbr.rel (%p447) target = $region44
      $region43: #{vit_forward.1} parent=11 // pred_region
        _
      $region44: #{vit_forward.1} parent=11 // pred_fallthru
        _
      // Predicated region
      $region45: #{vit_forward.1} parent=11 // pred_check
        %p450 = pneg %p238
      $region46: #{vit_forward.1} parent=11 // pred_check_branch
        %452 = sbr.rel (%p450) target = $region48
      $region47: #{vit_forward.1} parent=11 // pred_region
        _
      $region48: #{vit_forward.1} parent=11 // pred_fallthru
        _
      // Predicated region
      $region49: #{vit_forward.1} parent=11 // pred_check
        %p453 = pneg %p259
      $region50: #{vit_forward.1} parent=11 // pred_check_branch
        %455 = sbr.rel (%p453) target = $region52
      $region51: #{vit_forward.1} parent=11 // pred_region
        _
      $region52: #{vit_forward.1} parent=11 // pred_fallthru
        _
      // Predicated region
      $region53: #{vit_forward.1} parent=11 // pred_check
        %p456 = pneg %p280
      $region54: #{vit_forward.1} parent=11 // pred_check_branch
        %458 = sbr.rel (%p456) target = $region56
      $region55: #{vit_forward.1} parent=11 // pred_region
        _
      $region56: #{vit_forward.1} parent=11 // pred_fallthru
        _
      // Predicated region
      $region57: #{vit_forward.1} parent=11 // pred_check
        %p459 = pneg %p301
      $region58: #{vit_forward.1} parent=11 // pred_check_branch
        %461 = sbr.rel (%p459) target = $region60
      $region59: #{vit_forward.1} parent=11 // pred_region
        _
      $region60: #{vit_forward.1} parent=11 // pred_fallthru
        _
      // Predicated region
      $region61: #{vit_forward.1} parent=11 // pred_check
        %p462 = pneg %p322
      $region62: #{vit_forward.1} parent=11 // pred_check_branch
        %464 = sbr.rel (%p462) target = $region64
      $region63: #{vit_forward.1} parent=11 // pred_region
        _
      $region64: #{vit_forward.1} parent=11 // pred_fallthru
        _
      // Predicated region
      $region65: #{vit_forward.1} parent=11 // pred_check
        %p465 = pneg %p343
      $region66: #{vit_forward.1} parent=11 // pred_check_branch
        %467 = sbr.rel (%p465) target = $region68
      $region67: #{vit_forward.1} parent=11 // pred_region
        _
      $region68: #{vit_forward.1} parent=11 // pred_fallthru
        _
      // Predicated region
      $region69: #{vit_forward.1} parent=11 // pred_check
        %p468 = pneg %p364
      $region70: #{vit_forward.1} parent=11 // pred_check_branch
        %470 = sbr.rel (%p468) target = $region72
      $region71: #{vit_forward.1} parent=11 // pred_region
        _
      $region72: #{vit_forward.1} parent=11 // pred_fallthru
        _
      // Predicated region
      $region73: #{vit_forward.1} parent=11 // pred_check
        %p471 = pneg %p385
      $region74: #{vit_forward.1} parent=11 // pred_check_branch
        %473 = sbr.rel (%p471) target = $region76
      $region75: #{vit_forward.1} parent=11 // pred_region
        _
      $region76: #{vit_forward.1} parent=11 // pred_fallthru
        _
    $region12: #{vit_forward.1} parent=5 // pred_fallthru
      _
    %p474 = scmp.lt.s32.totalorder %s23, 2
    // Predicated region
    $region77: #{vit_forward.1} parent=5 // pred_check
      %p475 = pneg %p474
    $region78: #{vit_forward.1} parent=5 // pred_check_branch
      %477 = sbr.rel (%p475) target = $region80
    $region79: #{vit_forward.1} parent=5 // pred_region
      // Predicated region
      $region81: #{vit_forward.1} parent=79 // pred_check
        %p478 = pneg %p43
      $region82: #{vit_forward.1} parent=79 // pred_check_branch
        %480 = sbr.rel (%p478) target = $region84
      $region83: #{vit_forward.1} parent=79 // pred_region
        %p481 = scmp.lt.s32.totalorder %s23, 1
        %s482 = scalar_select %p481, %s23, 1
        %s483 = smul.addr %s482, 9
        %s484 = smul.addr %s483, 8
        %s485 = scalar_lea.vmem %s0, %s484
      $region84: #{vit_forward.1} parent=79 // pred_fallthru
        _
    $region80: #{vit_forward.1} parent=5 // pred_fallthru
      _
    %p486 = scmp.le.s32.totalorder 1, %s23
    %p487 = scmp.lt.s32.totalorder %s23, 3
    %p488 = pnand %p486, %p487
    %p489 = pneg %p488
    // Predicated region
    $region85: #{vit_forward.1} parent=5 // pred_check
      _
    $region86: #{vit_forward.1} parent=5 // pred_check_branch
      %491 = sbr.rel (%p488) target = $region88
    $region87: #{vit_forward.1} parent=5 // pred_region
      %s492 = ssub.s32 %s23, 1
      %p493 = scmp.lt.s32.totalorder %s28, 1
      %s494 = scalar_select %p493, %s28, 1
      %s495 = smul.addr %s494, 9
      %s496 = smul.addr %s495, 8
      %s497 = scalar_lea.vmem %s0, %s496
      %p498 = pneg %p49
      %p499 = pneg %p46
      %p500 = pneg %p70
      %p501 = pneg %p67
      %p502 = pneg %p91
      %p503 = pneg %p88
      %p504 = pneg %p112
      %p505 = pneg %p109
      %p506 = pneg %p133
      %p507 = pneg %p130
      %p508 = pneg %p154
      %p509 = pneg %p151
      %p510 = pneg %p175
      %p511 = pneg %p172
      %p512 = pneg %p196
      %p513 = pneg %p193
      %p514 = pneg %p217
      %p515 = pneg %p214
      %p516 = pneg %p238
      %p517 = pneg %p235
      %p518 = pneg %p259
      %p519 = pneg %p256
      %p520 = pneg %p280
      %p521 = pneg %p277
      %p522 = pneg %p301
      %p523 = pneg %p298
      %p524 = pneg %p322
      %p525 = pneg %p319
      %p526 = pneg %p343
      %p527 = pneg %p340
      %p528 = pneg %p364
      %p529 = pneg %p361
      %p530 = pneg %p385
      %p531 = pneg %p382
      %p532 = pneg %p411
      %p533 = pneg %p408
      %p534 = scmp.lt.s32.totalorder %s28, 1
      %s535 = scalar_select %p534, %s28, 1
      %s536 = smul.addr %s535, 9
      %s537 = smul.addr %s536, 8
      %s538 = scalar_lea.vmem %s17, %s537
      %p539 = scmp.lt.s32.totalorder %s28, 1
      %s540 = scalar_select %p539, %s28, 1
      %s541 = smul.addr %s540, 9
      %s542 = smul.addr %s541, 8
      %s543 = scalar_lea.vmem %s0, %s542
      %p544 = scmp.lt.s32.totalorder %s28, 1
      %s545 = scalar_select %p544, %s28, 1
      %s546 = smul.addr %s545, 9
      %s547 = smul.addr %s546, 8
      %s548 = scalar_lea.vmem %s17, %s547
      %v549 = vld [vmem:[%s543] sm:$0xff]
      %v550 = vld [vmem:[%s543 + $0x8] sm:$0xff]
      %v551 = vld [vmem:[%s543 + $0x10] sm:$0xff]
      %v552 = vld [vmem:[%s543 + $0x18] sm:$0xff]
      %v553 = vld [vmem:[%s543 + $0x20] sm:$0xff]
      %v554 = vld [vmem:[%s543 + $0x28] sm:$0xff]
      %v555 = vld [vmem:[%s543 + $0x30] sm:$0xff]
      %v556 = vld [vmem:[%s543 + $0x38] sm:$0xff]
      %v557 = vld [vmem:[%s543 + $0x40] sm:$0x1]
      %v558 = vld [vmem:[%s1] sm:$0xff]
      %v559 = vld [vmem:[%s1 + $0x8] sm:$0xf]
      %v560 = vld [vmem:[%s2] sm:$0x1]
      %v562 = vlaneseq
      %v563 = vshrl.u32 %v562, 7
      %v564 = vsub.s32 0, %v563
      %v565 = vrot.slane %v560, %v564
      %vm567 = vcmask 97280
      %v569 = vsel %vm567, %v549, 0
      %v572 = vsel %vm567, %v550, 0
      %v575 = vsel %vm567, %v551, 0
      %v578 = vsel %vm567, %v552, 0
      %v581 = vsel %vm567, %v553, 0
      %v584 = vsel %vm567, %v554, 0
      %v587 = vsel %vm567, %v555, 0
      %v590 = vsel %vm567, %v556, 0
      %v593 = vsel %vm567, %v557, 0
      %vm595 = vcmask 1043456
      %v597 = vsel %vm595, %v559, 0
      %599 = vmatprep.subr.mxu0 0.0
      %600 = vmatpush1.msra.mxu0 %v558
      %601 = vmatprep.subr.mxu0 0.0
      %602 = vmatpush1.msra.mxu0 %v597
      %603 = vmatprep.subr.mxu0 0.0
      %604 = vmatpush1.msra.mxu0 0.0
      %605 = vmatprep.subr.mxu0 0.0
      %606 = vmatpush1.msra.mxu0 0.0
      %607 = vmatprep.subr.mxu0 0.0
      %608 = vmatpush1.msra.mxu0 0.0
      %609 = vmatprep.subr.mxu0 0.0
      %610 = vmatpush1.msra.mxu0 0.0
      %611 = vmatprep.subr.mxu0 0.0
      %612 = vmatpush1.msra.mxu0 0.0
      %613 = vmatprep.subr.mxu0 0.0
      %614 = vmatpush1.msra.mxu0 0.0
      %615 = vmatprep.subr.mxu0 0.0
      %616 = vmatpush1.msra.mxu0 0.0
      %617 = vmatprep.subr.mxu0 0.0
      %618 = vmatpush1.msra.mxu0 0.0
      %619 = vmatprep.subr.mxu0 0.0
      %620 = vmatpush1.msra.mxu0 0.0
      %621 = vmatprep.subr.mxu0 0.0
      %622 = vmatpush1.msra.mxu0 0.0
      %623 = vmatprep.subr.mxu0 0.0
      %624 = vmatpush1.msra.mxu0 0.0
      %625 = vmatprep.subr.mxu0 0.0
      %626 = vmatpush1.msra.mxu0 0.0
      %627 = vmatprep.subr.mxu0 0.0
      %628 = vmatpush1.msra.mxu0 0.0
      %629 = vmatprep.subr.mxu0 0.0
      %630 = vmatpush1.msra.mxu0 0.0
      %631 = vmatprep.subr.mxu0 0.0
      %632 = vmatpush1.msra.mxu0 0.0
      %633 = vmatprep.subr.mxu0 0.0
      %634 = vmatpush1.msra.mxu0 0.0
      %635 = vmatprep.subr.mxu0 0.0
      %636 = vmatpush1.msra.mxu0 0.0
      %637 = vmatprep.subr.mxu0 0.0
      %638 = vmatpush1.msra.mxu0 0.0
      %639 = vmatprep.subr.mxu0 0.0
      %640 = vmatpush1.msra.mxu0 0.0
      %641 = vmatprep.subr.mxu0 0.0
      %642 = vmatpush1.msra.mxu0 0.0
      %643 = vmatprep.subr.mxu0 0.0
      %644 = vmatpush1.msra.mxu0 0.0
      %645 = vmatprep.subr.mxu0 0.0
      %646 = vmatpush1.msra.mxu0 0.0
      %647 = vmatprep.subr.mxu0 0.0
      %648 = vmatpush1.msra.mxu0 0.0
      %649 = vmatprep.subr.mxu0 0.0
      %650 = vmatpush1.msra.mxu0 0.0
      %651 = vmatprep.subr.mxu0 0.0
      %652 = vmatpush1.msra.mxu0 0.0
      %653 = vmatprep.subr.mxu0 0.0
      %654 = vmatpush1.msra.mxu0 0.0
      %655 = vmatprep.subr.mxu0 0.0
      %656 = vmatpush1.msra.mxu0 0.0
      %657 = vmatprep.subr.mxu0 0.0
      %658 = vmatpush1.msra.mxu0 0.0
      %659 = vmatprep.subr.mxu0 0.0
      %660 = vmatpush1.msra.mxu0 0.0
      %661 = vmatprep.subr.mxu0 0.0
      %662 = vmatpush1.msra.mxu0 0.0
      %663 = vmatprep.mubr.f32.mxu0 0.0
      %664 = vmatmul.mubr.f32.gmra.mrb[0].mxu0 %v569
      %v665 = vpop.f32.mrb[0].mxu0
      %v666 = vadd.f32 %v565, %v665
      %v667 = vpop.f32.mrb[0].mxu0
      %668 = vmatprep.mubr.f32.mxu0 0.0
      %669 = vmatmul.mubr.f32.gmra.mrb[0].mxu0 %v572
      %v670 = vpop.f32.mrb[0].mxu0
      %v671 = vadd.f32 %v565, %v670
      %v672 = vpop.f32.mrb[0].mxu0
      %673 = vmatprep.mubr.f32.mxu0 0.0
      %674 = vmatmul.mubr.f32.gmra.mrb[0].mxu0 %v575
      %v675 = vpop.f32.mrb[0].mxu0
      %v676 = vadd.f32 %v565, %v675
      %v677 = vpop.f32.mrb[0].mxu0
      %678 = vmatprep.mubr.f32.mxu0 0.0
      %679 = vmatmul.mubr.f32.gmra.mrb[0].mxu0 %v578
      %v680 = vpop.f32.mrb[0].mxu0
      %v681 = vadd.f32 %v565, %v680
      %v682 = vpop.f32.mrb[0].mxu0
      %683 = vmatprep.mubr.f32.mxu0 0.0
      %684 = vmatmul.mubr.f32.gmra.mrb[0].mxu0 %v581
      %v685 = vpop.f32.mrb[0].mxu0
      %v686 = vadd.f32 %v565, %v685
      %v687 = vpop.f32.mrb[0].mxu0
      %688 = vmatprep.mubr.f32.mxu0 0.0
      %689 = vmatmul.mubr.f32.gmra.mrb[0].mxu0 %v584
      %v690 = vpop.f32.mrb[0].mxu0
      %v691 = vadd.f32 %v565, %v690
      %v692 = vpop.f32.mrb[0].mxu0
      %693 = vmatprep.mubr.f32.mxu0 0.0
      %694 = vmatmul.mubr.f32.gmra.mrb[0].mxu0 %v587
      %v695 = vpop.f32.mrb[0].mxu0
      %v696 = vadd.f32 %v565, %v695
      %v697 = vpop.f32.mrb[0].mxu0
      %698 = vmatprep.mubr.f32.mxu0 0.0
      %699 = vmatmul.mubr.f32.gmra.mrb[0].mxu0 %v590
      %v700 = vpop.f32.mrb[0].mxu0
      %v701 = vadd.f32 %v565, %v700
      %v702 = vpop.f32.mrb[0].mxu0
      %703 = vmatprep.mubr.f32.mxu0 0.0
      %704 = vmatmul.mubr.f32.gmra.mrb[0].mxu0 %v593
      %v705 = vpop.f32.mrb[0].mxu0
      %v706 = vadd.f32 %v565, %v705
      %v707 = vpop.f32.mrb[0].mxu0
      %708 = vdwg.mxu0
      %v709 = vld [vmem:[%s3] sm:$0xff]
      %v710 = vld [vmem:[%s3 + $0x8] sm:$0xff]
      %v711 = vld [vmem:[%s3 + $0x10] sm:$0xff]
      %v712 = vld [vmem:[%s3 + $0x18] sm:$0xff]
      %v713 = vld [vmem:[%s3 + $0x20] sm:$0xff]
      %v714 = vld [vmem:[%s3 + $0x28] sm:$0xff]
      %v715 = vld [vmem:[%s3 + $0x30] sm:$0xff]
      %v716 = vld [vmem:[%s3 + $0x38] sm:$0xff]
      %v717 = vld [vmem:[%s3 + $0x40] sm:$0x1]
      %v718 = vadd.f32 %v666, %v709
      %v719 = vadd.f32 %v671, %v710
      %v720 = vadd.f32 %v676, %v711
      %v721 = vadd.f32 %v681, %v712
      %v722 = vadd.f32 %v686, %v713
      %v723 = vadd.f32 %v691, %v714
      %v724 = vadd.f32 %v696, %v715
      %v725 = vadd.f32 %v701, %v716
      %v726 = vadd.f32 %v706, %v717
      %v727 = vld [vmem:[%s4] sm:$0x1]
      %v728 = vld [vmem:[%s5] sm:$0x1]
      %vm729 = vcmask 261120
      %v730 = vsel %vm729, %v718, 0.0
      %731 = vadd.xlane.f32.xlu0 %v730
      %v732 = vpop.xlane.xlu0 %731
      %v733 = vsel %vm729, %v719, 0.0
      %734 = vadd.xlane.f32.xlu0 %v733
      %v735 = vpop.xlane.xlu0 %734
      %v736 = vsel %vm729, %v720, 0.0
      %737 = vadd.xlane.f32.xlu0 %v736
      %v738 = vpop.xlane.xlu0 %737
      %v739 = vsel %vm729, %v721, 0.0
      %740 = vadd.xlane.f32.xlu0 %v739
      %v741 = vpop.xlane.xlu0 %740
      %v742 = vsel %vm729, %v722, 0.0
      %743 = vadd.xlane.f32.xlu0 %v742
      %v744 = vpop.xlane.xlu0 %743
      %v745 = vsel %vm729, %v723, 0.0
      %746 = vadd.xlane.f32.xlu0 %v745
      %v747 = vpop.xlane.xlu0 %746
      %v748 = vsel %vm729, %v724, 0.0
      %749 = vadd.xlane.f32.xlu0 %v748
      %v750 = vpop.xlane.xlu0 %749
      %v751 = vsel %vm729, %v725, 0.0
      %752 = vadd.xlane.f32.xlu0 %v751
      %v753 = vpop.xlane.xlu0 %752
      %vm754 = vcmask 253952
      %v755 = vsel %vm754, %v726, 0.0
      %756 = vadd.xlane.f32.xlu0 %v755
      %v757 = vpop.xlane.xlu0 %756
      %v758 = vrcp.pop 32.0
      %v759 = vmul.f32 %v732, %v758
      %v760 = vmul.f32 %v735, %v758
      %v761 = vmul.f32 %v738, %v758
      %v762 = vmul.f32 %v741, %v758
      %v763 = vmul.f32 %v744, %v758
      %v764 = vmul.f32 %v747, %v758
      %v765 = vmul.f32 %v750, %v758
      %v766 = vmul.f32 %v753, %v758
      %v767 = vmul.f32 %v757, %v758
      %v768 = vsub.f32 %v718, %v759
      %v769 = vsub.f32 %v719, %v760
      %v770 = vsub.f32 %v720, %v761
      %v771 = vsub.f32 %v721, %v762
      %v772 = vsub.f32 %v722, %v763
      %v773 = vsub.f32 %v723, %v764
      %v774 = vsub.f32 %v724, %v765
      %v775 = vsub.f32 %v725, %v766
      %v776 = vsub.f32 %v726, %v767
      %v777 = vmul.f32 %v768, %v768
      %v778 = vmul.f32 %v769, %v769
      %v779 = vmul.f32 %v770, %v770
      %v780 = vmul.f32 %v771, %v771
      %v781 = vmul.f32 %v772, %v772
      %v782 = vmul.f32 %v773, %v773
      %v783 = vmul.f32 %v774, %v774
      %v784 = vmul.f32 %v775, %v775
      %v785 = vmul.f32 %v776, %v776
      %v786 = vsel %vm729, %v777, 0.0
      %787 = vadd.xlane.f32.xlu0 %v786
      %v788 = vpop.xlane.xlu0 %787
      %v789 = vsel %vm729, %v778, 0.0
      %790 = vadd.xlane.f32.xlu0 %v789
      %v791 = vpop.xlane.xlu0 %790
      %v792 = vsel %vm729, %v779, 0.0
      %793 = vadd.xlane.f32.xlu0 %v792
      %v794 = vpop.xlane.xlu0 %793
      %v795 = vsel %vm729, %v780, 0.0
      %796 = vadd.xlane.f32.xlu0 %v795
      %v797 = vpop.xlane.xlu0 %796
      %v798 = vsel %vm729, %v781, 0.0
      %799 = vadd.xlane.f32.xlu0 %v798
      %v800 = vpop.xlane.xlu0 %799
      %v801 = vsel %vm729, %v782, 0.0
      %802 = vadd.xlane.f32.xlu0 %v801
      %v803 = vpop.xlane.xlu0 %802
      %v804 = vsel %vm729, %v783, 0.0
      %805 = vadd.xlane.f32.xlu0 %v804
      %v806 = vpop.xlane.xlu0 %805
      %v807 = vsel %vm729, %v784, 0.0
      %808 = vadd.xlane.f32.xlu0 %v807
      %v809 = vpop.xlane.xlu0 %808
      %v810 = vsel %vm754, %v785, 0.0
      %811 = vadd.xlane.f32.xlu0 %v810
      %v812 = vpop.xlane.xlu0 %811
      %v813 = vmul.f32 %v788, %v758
      %v814 = vmul.f32 %v791, %v758
      %v815 = vmul.f32 %v794, %v758
      %v816 = vmul.f32 %v797, %v758
      %v817 = vmul.f32 %v800, %v758
      %v818 = vmul.f32 %v803, %v758
      %v819 = vmul.f32 %v806, %v758
      %v820 = vmul.f32 %v809, %v758
      %v821 = vmul.f32 %v812, %v758
      %v822 = vadd.f32 %v813, 1e-05
      %v823 = vadd.f32 %v814, 1e-05
      %v824 = vadd.f32 %v815, 1e-05
      %v825 = vadd.f32 %v816, 1e-05
      %v826 = vadd.f32 %v817, 1e-05
      %v827 = vadd.f32 %v818, 1e-05
      %v828 = vadd.f32 %v819, 1e-05
      %v829 = vadd.f32 %v820, 1e-05
      %v830 = vadd.f32 %v821, 1e-05
      %v831 = vrsqrt.pop %v822
      %v832 = vrsqrt.pop %v823
      %v833 = vrsqrt.pop %v824
      %v834 = vrsqrt.pop %v825
      %v835 = vrsqrt.pop %v826
      %v836 = vrsqrt.pop %v827
      %v837 = vrsqrt.pop %v828
      %v838 = vrsqrt.pop %v829
      %v839 = vrsqrt.pop %v830
      %v840 = vmul.f32 %v768, %v831
      %v841 = vmul.f32 %v769, %v832
      %v842 = vmul.f32 %v770, %v833
      %v843 = vmul.f32 %v771, %v834
      %v844 = vmul.f32 %v772, %v835
      %v845 = vmul.f32 %v773, %v836
      %v846 = vmul.f32 %v774, %v837
      %v847 = vmul.f32 %v775, %v838
      %v848 = vmul.f32 %v776, %v839
      %v850 = vlaneseq
      %v851 = vshrl.u32 %v850, 7
      %v852 = vsub.s32 0, %v851
      %v853 = vrot.slane %v727, %v852
      %v855 = vmul.f32 %v840, %v853
      %v856 = vmul.f32 %v841, %v853
      %v857 = vmul.f32 %v842, %v853
      %v858 = vmul.f32 %v843, %v853
      %v859 = vmul.f32 %v844, %v853
      %v860 = vmul.f32 %v845, %v853
      %v861 = vmul.f32 %v846, %v853
      %v862 = vmul.f32 %v847, %v853
      %v863 = vmul.f32 %v848, %v853
      %v865 = vlaneseq
      %v866 = vshrl.u32 %v865, 7
      %v867 = vsub.s32 0, %v866
      %v868 = vrot.slane %v728, %v867
      %v870 = vadd.f32 %v855, %v868
      %v871 = vadd.f32 %v856, %v868
      %v872 = vadd.f32 %v857, %v868
      %v873 = vadd.f32 %v858, %v868
      %v874 = vadd.f32 %v859, %v868
      %v875 = vadd.f32 %v860, %v868
      %v876 = vadd.f32 %v861, %v868
      %v877 = vadd.f32 %v862, %v868
      %v878 = vadd.f32 %v863, %v868
      %v879 = vld [vmem:[%s6] sm:$0xff]
      %v880 = vld [vmem:[%s6 + $0x8] sm:$0xff]
      %v881 = vld [vmem:[%s6 + $0x10] sm:$0xff]
      %v882 = vld [vmem:[%s6 + $0x18] sm:$0xff]
      %v883 = vld [vmem:[%s6 + $0x20] sm:$0xff]
      %v884 = vld [vmem:[%s6 + $0x28] sm:$0xff]
      %v885 = vld [vmem:[%s6 + $0x30] sm:$0xff]
      %v886 = vld [vmem:[%s6 + $0x38] sm:$0xff]
      %v887 = vld [vmem:[%s6 + $0x40] sm:$0xff]
      %v888 = vld [vmem:[%s6 + $0x48] sm:$0xff]
      %v889 = vld [vmem:[%s6 + $0x50] sm:$0xff]
      %v890 = vld [vmem:[%s6 + $0x58] sm:$0xff]
      %v891 = vld [vmem:[%s6 + $0x60] sm:$0xff]
      %v892 = vld [vmem:[%s6 + $0x68] sm:$0xff]
      %v893 = vld [vmem:[%s6 + $0x70] sm:$0xff]
      %v894 = vld [vmem:[%s6 + $0x78] sm:$0xff]
      %v896 = vsel %vm729, %v870, 0
      %v899 = vsel %vm729, %v871, 0
      %v902 = vsel %vm729, %v872, 0
      %v905 = vsel %vm729, %v873, 0
      %v908 = vsel %vm729, %v874, 0
      %v911 = vsel %vm729, %v875, 0
      %v914 = vsel %vm729, %v876, 0
      %v917 = vsel %vm729, %v877, 0
      %v920 = vsel %vm729, %v878, 0
      %922 = vmatprep.subr.mxu0 0.0
      %923 = vmatpush1.msra.mxu0 %v879
      %924 = vmatprep.subr.mxu0 0.0
      %925 = vmatpush1.msra.mxu0 %v880
      %926 = vmatprep.subr.mxu0 0.0
      %927 = vmatpush1.msra.mxu0 %v881
      %928 = vmatprep.subr.mxu0 0.0
      %929 = vmatpush1.msra.mxu0 %v882
      %930 = vmatprep.subr.mxu0 0.0
      %931 = vmatpush1.msra.mxu0 0.0
      %932 = vmatprep.subr.mxu0 0.0
      %933 = vmatpush1.msra.mxu0 0.0
      %934 = vmatprep.subr.mxu0 0.0
      %935 = vmatpush1.msra.mxu0 0.0
      %936 = vmatprep.subr.mxu0 0.0
      %937 = vmatpush1.msra.mxu0 0.0
      %938 = vmatprep.subr.mxu0 0.0
      %939 = vmatpush1.msra.mxu0 0.0
      %940 = vmatprep.subr.mxu0 0.0
      %941 = vmatpush1.msra.mxu0 0.0
      %942 = vmatprep.subr.mxu0 0.0
      %943 = vmatpush1.msra.mxu0 0.0
      %944 = vmatprep.subr.mxu0 0.0
      %945 = vmatpush1.msra.mxu0 0.0
      %946 = vmatprep.subr.mxu0 0.0
      %947 = vmatpush1.msra.mxu0 0.0
      %948 = vmatprep.subr.mxu0 0.0
      %949 = vmatpush1.msra.mxu0 0.0
      %950 = vmatprep.subr.mxu0 0.0
      %951 = vmatpush1.msra.mxu0 0.0
      %952 = vmatprep.subr.mxu0 0.0
      %953 = vmatpush1.msra.mxu0 0.0
      %954 = vmatprep.subr.mxu0 0.0
      %955 = vmatpush1.msra.mxu0 0.0
      %956 = vmatprep.subr.mxu0 0.0
      %957 = vmatpush1.msra.mxu0 0.0
      %958 = vmatprep.subr.mxu0 0.0
      %959 = vmatpush1.msra.mxu0 0.0
      %960 = vmatprep.subr.mxu0 0.0
      %961 = vmatpush1.msra.mxu0 0.0
      %962 = vmatprep.subr.mxu0 0.0
      %963 = vmatpush1.msra.mxu0 0.0
      %964 = vmatprep.subr.mxu0 0.0
      %965 = vmatpush1.msra.mxu0 0.0
      %966 = vmatprep.subr.mxu0 0.0
      %967 = vmatpush1.msra.mxu0 0.0
      %968 = vmatprep.subr.mxu0 0.0
      %969 = vmatpush1.msra.mxu0 0.0
      %970 = vmatprep.subr.mxu0 0.0
      %971 = vmatpush1.msra.mxu0 0.0
      %972 = vmatprep.subr.mxu0 0.0
      %973 = vmatpush1.msra.mxu0 0.0
      %974 = vmatprep.subr.mxu0 0.0
      %975 = vmatpush1.msra.mxu0 0.0
      %976 = vmatprep.subr.mxu0 0.0
      %977 = vmatpush1.msra.mxu0 0.0
      %978 = vmatprep.subr.mxu0 0.0
      %979 = vmatpush1.msra.mxu0 0.0
      %980 = vmatprep.subr.mxu0 0.0
      %981 = vmatpush1.msra.mxu0 0.0
      %982 = vmatprep.subr.mxu0 0.0
      %983 = vmatpush1.msra.mxu0 0.0
      %984 = vmatprep.subr.mxu0 0.0
      %985 = vmatpush1.msra.mxu0 0.0
      %986 = vmatprep.mubr.f32.mxu0 0.0
      %987 = vmatmul.mubr.f32.gmra.mrb[0].mxu0 %v896
      %v988 = vpop.f32.mrb[0].mxu0
      %v989 = vadd.f32 0.0, %v988
      %v990 = vpop.f32.mrb[0].mxu0
      %991 = vmatprep.mubr.f32.mxu0 0.0
      %992 = vmatmul.mubr.f32.gmra.mrb[0].mxu0 %v899
      %v993 = vpop.f32.mrb[0].mxu0
      %v994 = vadd.f32 0.0, %v993
      %v995 = vpop.f32.mrb[0].mxu0
      %996 = vmatprep.mubr.f32.mxu0 0.0
      %997 = vmatmul.mubr.f32.gmra.mrb[0].mxu0 %v902
      %v998 = vpop.f32.mrb[0].mxu0
      %v999 = vadd.f32 0.0, %v998
      %v1000 = vpop.f32.mrb[0].mxu0
      %1001 = vmatprep.mubr.f32.mxu0 0.0
      %1002 = vmatmul.mubr.f32.gmra.mrb[0].mxu0 %v905
      %v1003 = vpop.f32.mrb[0].mxu0
      %v1004 = vadd.f32 0.0, %v1003
      %v1005 = vpop.f32.mrb[0].mxu0
      %1006 = vmatprep.mubr.f32.mxu0 0.0
      %1007 = vmatmul.mubr.f32.gmra.mrb[0].mxu0 %v908
      %v1008 = vpop.f32.mrb[0].mxu0
      %v1009 = vadd.f32 0.0, %v1008
      %v1010 = vpop.f32.mrb[0].mxu0
      %1011 = vmatprep.mubr.f32.mxu0 0.0
      %1012 = vmatmul.mubr.f32.gmra.mrb[0].mxu0 %v911
      %v1013 = vpop.f32.mrb[0].mxu0
      %v1014 = vadd.f32 0.0, %v1013
      %v1015 = vpop.f32.mrb[0].mxu0
      %1016 = vmatprep.mubr.f32.mxu0 0.0
      %1017 = vmatmul.mubr.f32.gmra.mrb[0].mxu0 %v914
      %v1018 = vpop.f32.mrb[0].mxu0
      %v1019 = vadd.f32 0.0, %v1018
      %v1020 = vpop.f32.mrb[0].mxu0
      %1021 = vmatprep.mubr.f32.mxu0 0.0
      %1022 = vmatmul.mubr.f32.gmra.mrb[0].mxu0 %v917
      %v1023 = vpop.f32.mrb[0].mxu0
      %v1024 = vadd.f32 0.0, %v1023
      %v1025 = vpop.f32.mrb[0].mxu0
      %1026 = vmatprep.mubr.f32.mxu0 0.0
      %1027 = vmatmul.mubr.f32.gmra.mrb[0].mxu0 %v920
      %v1028 = vpop.f32.mrb[0].mxu0
      %v1029 = vadd.f32 0.0, %v1028
      %v1030 = vpop.f32.mrb[0].mxu0
      %1031 = vdwg.mxu0
      %1032 = vmatprep.subr.mxu0 0.0
      %1033 = vmatpush1.msra.mxu0 %v883
      %1034 = vmatprep.subr.mxu0 0.0
      %1035 = vmatpush1.msra.mxu0 %v884
      %1036 = vmatprep.subr.mxu0 0.0
      %1037 = vmatpush1.msra.mxu0 %v885
      %1038 = vmatprep.subr.mxu0 0.0
      %1039 = vmatpush1.msra.mxu0 %v886
      %1040 = vmatprep.subr.mxu0 0.0
      %1041 = vmatpush1.msra.mxu0 0.0
      %1042 = vmatprep.subr.mxu0 0.0
      %1043 = vmatpush1.msra.mxu0 0.0
      %1044 = vmatprep.subr.mxu0 0.0
      %1045 = vmatpush1.msra.mxu0 0.0
      %1046 = vmatprep.subr.mxu0 0.0
      %1047 = vmatpush1.msra.mxu0 0.0
      %1048 = vmatprep.subr.mxu0 0.0
      %1049 = vmatpush1.msra.mxu0 0.0
      %1050 = vmatprep.subr.mxu0 0.0
      %1051 = vmatpush1.msra.mxu0 0.0
      %1052 = vmatprep.subr.mxu0 0.0
      %1053 = vmatpush1.msra.mxu0 0.0
      %1054 = vmatprep.subr.mxu0 0.0
      %1055 = vmatpush1.msra.mxu0 0.0
      %1056 = vmatprep.subr.mxu0 0.0
      %1057 = vmatpush1.msra.mxu0 0.0
      %1058 = vmatprep.subr.mxu0 0.0
      %1059 = vmatpush1.msra.mxu0 0.0
      %1060 = vmatprep.subr.mxu0 0.0
      %1061 = vmatpush1.msra.mxu0 0.0
      %1062 = vmatprep.subr.mxu0 0.0
      %1063 = vmatpush1.msra.mxu0 0.0
      %1064 = vmatprep.subr.mxu0 0.0
      %1065 = vmatpush1.msra.mxu0 0.0
      %1066 = vmatprep.subr.mxu0 0.0
      %1067 = vmatpush1.msra.mxu0 0.0
      %1068 = vmatprep.subr.mxu0 0.0
      %1069 = vmatpush1.msra.mxu0 0.0
      %1070 = vmatprep.subr.mxu0 0.0
      %1071 = vmatpush1.msra.mxu0 0.0
      %1072 = vmatprep.subr.mxu0 0.0
      %1073 = vmatpush1.msra.mxu0 0.0
      %1074 = vmatprep.subr.mxu0 0.0
      %1075 = vmatpush1.msra.mxu0 0.0
      %1076 = vmatprep.subr.mxu0 0.0
      %1077 = vmatpush1.msra.mxu0 0.0
      %1078 = vmatprep.subr.mxu0 0.0
      %1079 = vmatpush1.msra.mxu0 0.0
      %1080 = vmatprep.subr.mxu0 0.0
      %1081 = vmatpush1.msra.mxu0 0.0
      %1082 = vmatprep.subr.mxu0 0.0
      %1083 = vmatpush1.msra.mxu0 0.0
      %1084 = vmatprep.subr.mxu0 0.0
      %1085 = vmatpush1.msra.mxu0 0.0
      %1086 = vmatprep.subr.mxu0 0.0
      %1087 = vmatpush1.msra.mxu0 0.0
      %1088 = vmatprep.subr.mxu0 0.0
      %1089 = vmatpush1.msra.mxu0 0.0
      %1090 = vmatprep.subr.mxu0 0.0
      %1091 = vmatpush1.msra.mxu0 0.0
      %1092 = vmatprep.subr.mxu0 0.0
      %1093 = vmatpush1.msra.mxu0 0.0
      %1094 = vmatprep.subr.mxu0 0.0
      %1095 = vmatpush1.msra.mxu0 0.0
      %1096 = vmatprep.mubr.f32.mxu0 0.0
      %1097 = vmatmul.mubr.f32.gmra.mrb[0].mxu0 %v896
      %v1098 = vpop.f32.mrb[0].mxu0
      %v1099 = vadd.f32 0.0, %v1098
      %v1100 = vpop.f32.mrb[0].mxu0
      %1101 = vmatprep.mubr.f32.mxu0 0.0
      %1102 = vmatmul.mubr.f32.gmra.mrb[0].mxu0 %v899
      %v1103 = vpop.f32.mrb[0].mxu0
      %v1104 = vadd.f32 0.0, %v1103
      %v1105 = vpop.f32.mrb[0].mxu0
      %1106 = vmatprep.mubr.f32.mxu0 0.0
      %1107 = vmatmul.mubr.f32.gmra.mrb[0].mxu0 %v902
      %v1108 = vpop.f32.mrb[0].mxu0
      %v1109 = vadd.f32 0.0, %v1108
      %v1110 = vpop.f32.mrb[0].mxu0
      %1111 = vmatprep.mubr.f32.mxu0 0.0
      %1112 = vmatmul.mubr.f32.gmra.mrb[0].mxu0 %v905
      %v1113 = vpop.f32.mrb[0].mxu0
      %v1114 = vadd.f32 0.0, %v1113
      %v1115 = vpop.f32.mrb[0].mxu0
      %1116 = vmatprep.mubr.f32.mxu0 0.0
      %1117 = vmatmul.mubr.f32.gmra.mrb[0].mxu0 %v908
      %v1118 = vpop.f32.mrb[0].mxu0
      %v1119 = vadd.f32 0.0, %v1118
      %v1120 = vpop.f32.mrb[0].mxu0
      %1121 = vmatprep.mubr.f32.mxu0 0.0
      %1122 = vmatmul.mubr.f32.gmra.mrb[0].mxu0 %v911
      %v1123 = vpop.f32.mrb[0].mxu0
      %v1124 = vadd.f32 0.0, %v1123
      %v1125 = vpop.f32.mrb[0].mxu0
      %1126 = vmatprep.mubr.f32.mxu0 0.0
      %1127 = vmatmul.mubr.f32.gmra.mrb[0].mxu0 %v914
      %v1128 = vpop.f32.mrb[0].mxu0
      %v1129 = vadd.f32 0.0, %v1128
      %v1130 = vpop.f32.mrb[0].mxu0
      %1131 = vmatprep.mubr.f32.mxu0 0.0
      %1132 = vmatmul.mubr.f32.gmra.mrb[0].mxu0 %v917
      %v1133 = vpop.f32.mrb[0].mxu0
      %v1134 = vadd.f32 0.0, %v1133
      %v1135 = vpop.f32.mrb[0].mxu0
      %1136 = vmatprep.mubr.f32.mxu0 0.0
      %1137 = vmatmul.mubr.f32.gmra.mrb[0].mxu0 %v920
      %v1138 = vpop.f32.mrb[0].mxu0
      %v1139 = vadd.f32 0.0, %v1138
      %v1140 = vpop.f32.mrb[0].mxu0
      %1141 = vdwg.mxu0
      %1142 = vmatprep.subr.mxu0 0.0
      %1143 = vmatpush1.msra.mxu0 %v887
      %1144 = vmatprep.subr.mxu0 0.0
      %1145 = vmatpush1.msra.mxu0 %v888
      %1146 = vmatprep.subr.mxu0 0.0
      %1147 = vmatpush1.msra.mxu0 %v889
      %1148 = vmatprep.subr.mxu0 0.0
      %1149 = vmatpush1.msra.mxu0 %v890
      %1150 = vmatprep.subr.mxu0 0.0
      %1151 = vmatpush1.msra.mxu0 0.0
      %1152 = vmatprep.subr.mxu0 0.0
      %1153 = vmatpush1.msra.mxu0 0.0
      %1154 = vmatprep.subr.mxu0 0.0
      %1155 = vmatpush1.msra.mxu0 0.0
      %1156 = vmatprep.subr.mxu0 0.0
      %1157 = vmatpush1.msra.mxu0 0.0
      %1158 = vmatprep.subr.mxu0 0.0
      %1159 = vmatpush1.msra.mxu0 0.0
      %1160 = vmatprep.subr.mxu0 0.0
      %1161 = vmatpush1.msra.mxu0 0.0
      %1162 = vmatprep.subr.mxu0 0.0
      %1163 = vmatpush1.msra.mxu0 0.0
      %1164 = vmatprep.subr.mxu0 0.0
      %1165 = vmatpush1.msra.mxu0 0.0
      %1166 = vmatprep.subr.mxu0 0.0
      %1167 = vmatpush1.msra.mxu0 0.0
      %1168 = vmatprep.subr.mxu0 0.0
      %1169 = vmatpush1.msra.mxu0 0.0
      %1170 = vmatprep.subr.mxu0 0.0
      %1171 = vmatpush1.msra.mxu0 0.0
      %1172 = vmatprep.subr.mxu0 0.0
      %1173 = vmatpush1.msra.mxu0 0.0
      %1174 = vmatprep.subr.mxu0 0.0
      %1175 = vmatpush1.msra.mxu0 0.0
      %1176 = vmatprep.subr.mxu0 0.0
      %1177 = vmatpush1.msra.mxu0 0.0
      %1178 = vmatprep.subr.mxu0 0.0
      %1179 = vmatpush1.msra.mxu0 0.0
      %1180 = vmatprep.subr.mxu0 0.0
      %1181 = vmatpush1.msra.mxu0 0.0
      %1182 = vmatprep.subr.mxu0 0.0
      %1183 = vmatpush1.msra.mxu0 0.0
      %1184 = vmatprep.subr.mxu0 0.0
      %1185 = vmatpush1.msra.mxu0 0.0
      %1186 = vmatprep.subr.mxu0 0.0
      %1187 = vmatpush1.msra.mxu0 0.0
      %1188 = vmatprep.subr.mxu0 0.0
      %1189 = vmatpush1.msra.mxu0 0.0
      %1190 = vmatprep.subr.mxu0 0.0
      %1191 = vmatpush1.msra.mxu0 0.0
      %1192 = vmatprep.subr.mxu0 0.0
      %1193 = vmatpush1.msra.mxu0 0.0
      %1194 = vmatprep.subr.mxu0 0.0
      %1195 = vmatpush1.msra.mxu0 0.0
      %1196 = vmatprep.subr.mxu0 0.0
      %1197 = vmatpush1.msra.mxu0 0.0
      %1198 = vmatprep.subr.mxu0 0.0
      %1199 = vmatpush1.msra.mxu0 0.0
      %1200 = vmatprep.subr.mxu0 0.0
      %1201 = vmatpush1.msra.mxu0 0.0
      %1202 = vmatprep.subr.mxu0 0.0
      %1203 = vmatpush1.msra.mxu0 0.0
      %1204 = vmatprep.subr.mxu0 0.0
      %1205 = vmatpush1.msra.mxu0 0.0
      %1206 = vmatprep.mubr.f32.mxu0 0.0
      %1207 = vmatmul.mubr.f32.gmra.mrb[0].mxu0 %v896
      %v1208 = vpop.f32.mrb[0].mxu0
      %v1209 = vadd.f32 0.0, %v1208
      %v1210 = vpop.f32.mrb[0].mxu0
      %1211 = vmatprep.mubr.f32.mxu0 0.0
      %1212 = vmatmul.mubr.f32.gmra.mrb[0].mxu0 %v899
      %v1213 = vpop.f32.mrb[0].mxu0
      %v1214 = vadd.f32 0.0, %v1213
      %v1215 = vpop.f32.mrb[0].mxu0
      %1216 = vmatprep.mubr.f32.mxu0 0.0
      %1217 = vmatmul.mubr.f32.gmra.mrb[0].mxu0 %v902
      %v1218 = vpop.f32.mrb[0].mxu0
      %v1219 = vadd.f32 0.0, %v1218
      %v1220 = vpop.f32.mrb[0].mxu0
      %1221 = vmatprep.mubr.f32.mxu0 0.0
      %1222 = vmatmul.mubr.f32.gmra.mrb[0].mxu0 %v905
      %v1223 = vpop.f32.mrb[0].mxu0
      %v1224 = vadd.f32 0.0, %v1223
      %v1225 = vpop.f32.mrb[0].mxu0
      %1226 = vmatprep.mubr.f32.mxu0 0.0
      %1227 = vmatmul.mubr.f32.gmra.mrb[0].mxu0 %v908
      %v1228 = vpop.f32.mrb[0].mxu0
      %v1229 = vadd.f32 0.0, %v1228
      %v1230 = vpop.f32.mrb[0].mxu0
      %1231 = vmatprep.mubr.f32.mxu0 0.0
      %1232 = vmatmul.mubr.f32.gmra.mrb[0].mxu0 %v911
      %v1233 = vpop.f32.mrb[0].mxu0
      %v1234 = vadd.f32 0.0, %v1233
      %v1235 = vpop.f32.mrb[0].mxu0
      %1236 = vmatprep.mubr.f32.mxu0 0.0
      %1237 = vmatmul.mubr.f32.gmra.mrb[0].mxu0 %v914
      %v1238 = vpop.f32.mrb[0].mxu0
      %v1239 = vadd.f32 0.0, %v1238
      %v1240 = vpop.f32.mrb[0].mxu0
      %1241 = vmatprep.mubr.f32.mxu0 0.0
      %1242 = vmatmul.mubr.f32.gmra.mrb[0].mxu0 %v917
      %v1243 = vpop.f32.mrb[0].mxu0
      %v1244 = vadd.f32 0.0, %v1243
      %v1245 = vpop.f32.mrb[0].mxu0
      %1246 = vmatprep.mubr.f32.mxu0 0.0
      %1247 = vmatmul.mubr.f32.gmra.mrb[0].mxu0 %v920
      %v1248 = vpop.f32.mrb[0].mxu0
      %v1249 = vadd.f32 0.0, %v1248
      %v1250 = vpop.f32.mrb[0].mxu0
      %1251 = vdwg.mxu0
      %1252 = vmatprep.subr.mxu0 0.0
      %1253 = vmatpush1.msra.mxu0 %v891
      %1254 = vmatprep.subr.mxu0 0.0
      %1255 = vmatpush1.msra.mxu0 %v892
      %1256 = vmatprep.subr.mxu0 0.0
      %1257 = vmatpush1.msra.mxu0 %v893
      %1258 = vmatprep.subr.mxu0 0.0
      %1259 = vmatpush1.msra.mxu0 %v894
      %1260 = vmatprep.subr.mxu0 0.0
      %1261 = vmatpush1.msra.mxu0 0.0
      %1262 = vmatprep.subr.mxu0 0.0
      %1263 = vmatpush1.msra.mxu0 0.0
      %1264 = vmatprep.subr.mxu0 0.0
      %1265 = vmatpush1.msra.mxu0 0.0
      %1266 = vmatprep.subr.mxu0 0.0
      %1267 = vmatpush1.msra.mxu0 0.0
      %1268 = vmatprep.subr.mxu0 0.0
      %1269 = vmatpush1.msra.mxu0 0.0
      %1270 = vmatprep.subr.mxu0 0.0
      %1271 = vmatpush1.msra.mxu0 0.0
      %1272 = vmatprep.subr.mxu0 0.0
      %1273 = vmatpush1.msra.mxu0 0.0
      %1274 = vmatprep.subr.mxu0 0.0
      %1275 = vmatpush1.msra.mxu0 0.0
      %1276 = vmatprep.subr.mxu0 0.0
      %1277 = vmatpush1.msra.mxu0 0.0
      %1278 = vmatprep.subr.mxu0 0.0
      %1279 = vmatpush1.msra.mxu0 0.0
      %1280 = vmatprep.subr.mxu0 0.0
      %1281 = vmatpush1.msra.mxu0 0.0
      %1282 = vmatprep.subr.mxu0 0.0
      %1283 = vmatpush1.msra.mxu0 0.0
      %1284 = vmatprep.subr.mxu0 0.0
      %1285 = vmatpush1.msra.mxu0 0.0
      %1286 = vmatprep.subr.mxu0 0.0
      %1287 = vmatpush1.msra.mxu0 0.0
      %1288 = vmatprep.subr.mxu0 0.0
      %1289 = vmatpush1.msra.mxu0 0.0
      %1290 = vmatprep.subr.mxu0 0.0
      %1291 = vmatpush1.msra.mxu0 0.0
      %1292 = vmatprep.subr.mxu0 0.0
      %1293 = vmatpush1.msra.mxu0 0.0
      %1294 = vmatprep.subr.mxu0 0.0
      %1295 = vmatpush1.msra.mxu0 0.0
      %1296 = vmatprep.subr.mxu0 0.0
      %1297 = vmatpush1.msra.mxu0 0.0
      %1298 = vmatprep.subr.mxu0 0.0
      %1299 = vmatpush1.msra.mxu0 0.0
      %1300 = vmatprep.subr.mxu0 0.0
      %1301 = vmatpush1.msra.mxu0 0.0
      %1302 = vmatprep.subr.mxu0 0.0
      %1303 = vmatpush1.msra.mxu0 0.0
      %1304 = vmatprep.subr.mxu0 0.0
      %1305 = vmatpush1.msra.mxu0 0.0
      %1306 = vmatprep.subr.mxu0 0.0
      %1307 = vmatpush1.msra.mxu0 0.0
      %1308 = vmatprep.subr.mxu0 0.0
      %1309 = vmatpush1.msra.mxu0 0.0
      %1310 = vmatprep.subr.mxu0 0.0
      %1311 = vmatpush1.msra.mxu0 0.0
      %1312 = vmatprep.subr.mxu0 0.0
      %1313 = vmatpush1.msra.mxu0 0.0
      %1314 = vmatprep.subr.mxu0 0.0
      %1315 = vmatpush1.msra.mxu0 0.0
      %1316 = vmatprep.mubr.f32.mxu0 0.0
      %1317 = vmatmul.mubr.f32.gmra.mrb[0].mxu0 %v896
      %v1318 = vpop.f32.mrb[0].mxu0
      %v1319 = vadd.f32 0.0, %v1318
      %v1320 = vpop.f32.mrb[0].mxu0
      %1321 = vmatprep.mubr.f32.mxu0 0.0
      %1322 = vmatmul.mubr.f32.gmra.mrb[0].mxu0 %v899
      %v1323 = vpop.f32.mrb[0].mxu0
      %v1324 = vadd.f32 0.0, %v1323
      %v1325 = vpop.f32.mrb[0].mxu0
      %1326 = vmatprep.mubr.f32.mxu0 0.0
      %1327 = vmatmul.mubr.f32.gmra.mrb[0].mxu0 %v902
      %v1328 = vpop.f32.mrb[0].mxu0
      %v1329 = vadd.f32 0.0, %v1328
      %v1330 = vpop.f32.mrb[0].mxu0
      %1331 = vmatprep.mubr.f32.mxu0 0.0
      %1332 = vmatmul.mubr.f32.gmra.mrb[0].mxu0 %v905
      %v1333 = vpop.f32.mrb[0].mxu0
      %v1334 = vadd.f32 0.0, %v1333
      %v1335 = vpop.f32.mrb[0].mxu0
      %1336 = vmatprep.mubr.f32.mxu0 0.0
      %1337 = vmatmul.mubr.f32.gmra.mrb[0].mxu0 %v908
      %v1338 = vpop.f32.mrb[0].mxu0
      %v1339 = vadd.f32 0.0, %v1338
      %v1340 = vpop.f32.mrb[0].mxu0
      %1341 = vmatprep.mubr.f32.mxu0 0.0
      %1342 = vmatmul.mubr.f32.gmra.mrb[0].mxu0 %v911
      %v1343 = vpop.f32.mrb[0].mxu0
      %v1344 = vadd.f32 0.0, %v1343
      %v1345 = vpop.f32.mrb[0].mxu0
      %1346 = vmatprep.mubr.f32.mxu0 0.0
      %1347 = vmatmul.mubr.f32.gmra.mrb[0].mxu0 %v914
      %v1348 = vpop.f32.mrb[0].mxu0
      %v1349 = vadd.f32 0.0, %v1348
      %v1350 = vpop.f32.mrb[0].mxu0
      %1351 = vmatprep.mubr.f32.mxu0 0.0
      %1352 = vmatmul.mubr.f32.gmra.mrb[0].mxu0 %v917
      %v1353 = vpop.f32.mrb[0].mxu0
      %v1354 = vadd.f32 0.0, %v1353
      %v1355 = vpop.f32.mrb[0].mxu0
      %1356 = vmatprep.mubr.f32.mxu0 0.0
      %1357 = vmatmul.mubr.f32.gmra.mrb[0].mxu0 %v920
      %v1358 = vpop.f32.mrb[0].mxu0
      %v1359 = vadd.f32 0.0, %v1358
      %v1360 = vpop.f32.mrb[0].mxu0
      %1361 = vdwg.mxu0
      %v1362 = vld [vmem:[%s7] sm:$0xff]
      %v1363 = vld [vmem:[%s7 + $0x8] sm:$0xff]
      %v1364 = vld [vmem:[%s7 + $0x10] sm:$0xff]
      %v1365 = vld [vmem:[%s7 + $0x18] sm:$0xff]
      %v1366 = vld [vmem:[%s7 + $0x20] sm:$0xff]
      %v1367 = vld [vmem:[%s7 + $0x28] sm:$0xff]
      %v1368 = vld [vmem:[%s7 + $0x30] sm:$0xff]
      %v1369 = vld [vmem:[%s7 + $0x38] sm:$0xff]
      %v1370 = vld [vmem:[%s7 + $0x40] sm:$0xff]
      %v1371 = vld [vmem:[%s7 + $0x48] sm:$0xff]
      %v1372 = vld [vmem:[%s7 + $0x50] sm:$0xff]
      %v1373 = vld [vmem:[%s7 + $0x58] sm:$0xff]
      %v1374 = vld [vmem:[%s7 + $0x60] sm:$0xff]
      %v1375 = vld [vmem:[%s7 + $0x68] sm:$0xff]
      %v1376 = vld [vmem:[%s7 + $0x70] sm:$0xff]
      %v1377 = vld [vmem:[%s7 + $0x78] sm:$0xff]
      %1378 = vmatprep.subr.mxu0 0.0
      %1379 = vmatpush1.msra.mxu0 %v1362
      %1380 = vmatprep.subr.mxu0 0.0
      %1381 = vmatpush1.msra.mxu0 %v1363
      %1382 = vmatprep.subr.mxu0 0.0
      %1383 = vmatpush1.msra.mxu0 %v1364
      %1384 = vmatprep.subr.mxu0 0.0
      %1385 = vmatpush1.msra.mxu0 %v1365
      %1386 = vmatprep.subr.mxu0 0.0
      %1387 = vmatpush1.msra.mxu0 0.0
      %1388 = vmatprep.subr.mxu0 0.0
      %1389 = vmatpush1.msra.mxu0 0.0
      %1390 = vmatprep.subr.mxu0 0.0
      %1391 = vmatpush1.msra.mxu0 0.0
      %1392 = vmatprep.subr.mxu0 0.0
      %1393 = vmatpush1.msra.mxu0 0.0
      %1394 = vmatprep.subr.mxu0 0.0
      %1395 = vmatpush1.msra.mxu0 0.0
      %1396 = vmatprep.subr.mxu0 0.0
      %1397 = vmatpush1.msra.mxu0 0.0
      %1398 = vmatprep.subr.mxu0 0.0
      %1399 = vmatpush1.msra.mxu0 0.0
      %1400 = vmatprep.subr.mxu0 0.0
      %1401 = vmatpush1.msra.mxu0 0.0
      %1402 = vmatprep.subr.mxu0 0.0
      %1403 = vmatpush1.msra.mxu0 0.0
      %1404 = vmatprep.subr.mxu0 0.0
      %1405 = vmatpush1.msra.mxu0 0.0
      %1406 = vmatprep.subr.mxu0 0.0
      %1407 = vmatpush1.msra.mxu0 0.0
      %1408 = vmatprep.subr.mxu0 0.0
      %1409 = vmatpush1.msra.mxu0 0.0
      %1410 = vmatprep.subr.mxu0 0.0
      %1411 = vmatpush1.msra.mxu0 0.0
      %1412 = vmatprep.subr.mxu0 0.0
      %1413 = vmatpush1.msra.mxu0 0.0
      %1414 = vmatprep.subr.mxu0 0.0
      %1415 = vmatpush1.msra.mxu0 0.0
      %1416 = vmatprep.subr.mxu0 0.0
      %1417 = vmatpush1.msra.mxu0 0.0
      %1418 = vmatprep.subr.mxu0 0.0
      %1419 = vmatpush1.msra.mxu0 0.0
      %1420 = vmatprep.subr.mxu0 0.0
      %1421 = vmatpush1.msra.mxu0 0.0
      %1422 = vmatprep.subr.mxu0 0.0
      %1423 = vmatpush1.msra.mxu0 0.0
      %1424 = vmatprep.subr.mxu0 0.0
      %1425 = vmatpush1.msra.mxu0 0.0
      %1426 = vmatprep.subr.mxu0 0.0
      %1427 = vmatpush1.msra.mxu0 0.0
      %1428 = vmatprep.subr.mxu0 0.0
      %1429 = vmatpush1.msra.mxu0 0.0
      %1430 = vmatprep.subr.mxu0 0.0
      %1431 = vmatpush1.msra.mxu0 0.0
      %1432 = vmatprep.subr.mxu0 0.0
      %1433 = vmatpush1.msra.mxu0 0.0
      %1434 = vmatprep.subr.mxu0 0.0
      %1435 = vmatpush1.msra.mxu0 0.0
      %1436 = vmatprep.subr.mxu0 0.0
      %1437 = vmatpush1.msra.mxu0 0.0
      %1438 = vmatprep.subr.mxu0 0.0
      %1439 = vmatpush1.msra.mxu0 0.0
      %1440 = vmatprep.subr.mxu0 0.0
      %1441 = vmatpush1.msra.mxu0 0.0
      %1442 = vmatprep.mubr.f32.mxu0 0.0
      %1443 = vmatmul.mubr.f32.gmra.mrb[0].mxu0 %v896
      %v1444 = vpop.f32.mrb[0].mxu0
      %v1445 = vadd.f32 0.0, %v1444
      %v1446 = vpop.f32.mrb[0].mxu0
      %1447 = vmatprep.mubr.f32.mxu0 0.0
      %1448 = vmatmul.mubr.f32.gmra.mrb[0].mxu0 %v899
      %v1449 = vpop.f32.mrb[0].mxu0
      %v1450 = vadd.f32 0.0, %v1449
      %v1451 = vpop.f32.mrb[0].mxu0
      %1452 = vmatprep.mubr.f32.mxu0 0.0
      %1453 = vmatmul.mubr.f32.gmra.mrb[0].mxu0 %v902
      %v1454 = vpop.f32.mrb[0].mxu0
      %v1455 = vadd.f32 0.0, %v1454
      %v1456 = vpop.f32.mrb[0].mxu0
      %1457 = vmatprep.mubr.f32.mxu0 0.0
      %1458 = vmatmul.mubr.f32.gmra.mrb[0].mxu0 %v905
      %v1459 = vpop.f32.mrb[0].mxu0
      %v1460 = vadd.f32 0.0, %v1459
      %v1461 = vpop.f32.mrb[0].mxu0
      %1462 = vmatprep.mubr.f32.mxu0 0.0
      %1463 = vmatmul.mubr.f32.gmra.mrb[0].mxu0 %v908
      %v1464 = vpop.f32.mrb[0].mxu0
      %v1465 = vadd.f32 0.0, %v1464
      %v1466 = vpop.f32.mrb[0].mxu0
      %1467 = vmatprep.mubr.f32.mxu0 0.0
      %1468 = vmatmul.mubr.f32.gmra.mrb[0].mxu0 %v911
      %v1469 = vpop.f32.mrb[0].mxu0
      %v1470 = vadd.f32 0.0, %v1469
      %v1471 = vpop.f32.mrb[0].mxu0
      %1472 = vmatprep.mubr.f32.mxu0 0.0
      %1473 = vmatmul.mubr.f32.gmra.mrb[0].mxu0 %v914
      %v1474 = vpop.f32.mrb[0].mxu0
      %v1475 = vadd.f32 0.0, %v1474
      %v1476 = vpop.f32.mrb[0].mxu0
      %1477 = vmatprep.mubr.f32.mxu0 0.0
      %1478 = vmatmul.mubr.f32.gmra.mrb[0].mxu0 %v917
      %v1479 = vpop.f32.mrb[0].mxu0
      %v1480 = vadd.f32 0.0, %v1479
      %v1481 = vpop.f32.mrb[0].mxu0
      %1482 = vmatprep.mubr.f32.mxu0 0.0
      %1483 = vmatmul.mubr.f32.gmra.mrb[0].mxu0 %v920
      %v1484 = vpop.f32.mrb[0].mxu0
      %v1485 = vadd.f32 0.0, %v1484
      %v1486 = vpop.f32.mrb[0].mxu0
      %1487 = vdwg.mxu0
      %1488 = vmatprep.subr.mxu0 0.0
      %1489 = vmatpush1.msra.mxu0 %v1366
      %1490 = vmatprep.subr.mxu0 0.0
      %1491 = vmatpush1.msra.mxu0 %v1367
      %1492 = vmatprep.subr.mxu0 0.0
      %1493 = vmatpush1.msra.mxu0 %v1368
      %1494 = vmatprep.subr.mxu0 0.0
      %1495 = vmatpush1.msra.mxu0 %v1369
      %1496 = vmatprep.subr.mxu0 0.0
      %1497 = vmatpush1.msra.mxu0 0.0
      %1498 = vmatprep.subr.mxu0 0.0
      %1499 = vmatpush1.msra.mxu0 0.0
      %1500 = vmatprep.subr.mxu0 0.0
      %1501 = vmatpush1.msra.mxu0 0.0
      %1502 = vmatprep.subr.mxu0 0.0
      %1503 = vmatpush1.msra.mxu0 0.0
      %1504 = vmatprep.subr.mxu0 0.0
      %1505 = vmatpush1.msra.mxu0 0.0
      %1506 = vmatprep.subr.mxu0 0.0
      %1507 = vmatpush1.msra.mxu0 0.0
      %1508 = vmatprep.subr.mxu0 0.0
      %1509 = vmatpush1.msra.mxu0 0.0
      %1510 = vmatprep.subr.mxu0 0.0
      %1511 = vmatpush1.msra.mxu0 0.0
      %1512 = vmatprep.subr.mxu0 0.0
      %1513 = vmatpush1.msra.mxu0 0.0
      %1514 = vmatprep.subr.mxu0 0.0
      %1515 = vmatpush1.msra.mxu0 0.0
      %1516 = vmatprep.subr.mxu0 0.0
      %1517 = vmatpush1.msra.mxu0 0.0
      %1518 = vmatprep.subr.mxu0 0.0
      %1519 = vmatpush1.msra.mxu0 0.0
      %1520 = vmatprep.subr.mxu0 0.0
      %1521 = vmatpush1.msra.mxu0 0.0
      %1522 = vmatprep.subr.mxu0 0.0
      %1523 = vmatpush1.msra.mxu0 0.0
      %1524 = vmatprep.subr.mxu0 0.0
      %1525 = vmatpush1.msra.mxu0 0.0
      %1526 = vmatprep.subr.mxu0 0.0
      %1527 = vmatpush1.msra.mxu0 0.0
      %1528 = vmatprep.subr.mxu0 0.0
      %1529 = vmatpush1.msra.mxu0 0.0
      %1530 = vmatprep.subr.mxu0 0.0
      %1531 = vmatpush1.msra.mxu0 0.0
      %1532 = vmatprep.subr.mxu0 0.0
      %1533 = vmatpush1.msra.mxu0 0.0
      %1534 = vmatprep.subr.mxu0 0.0
      %1535 = vmatpush1.msra.mxu0 0.0
      %1536 = vmatprep.subr.mxu0 0.0
      %1537 = vmatpush1.msra.mxu0 0.0
      %1538 = vmatprep.subr.mxu0 0.0
      %1539 = vmatpush1.msra.mxu0 0.0
      %1540 = vmatprep.subr.mxu0 0.0
      %1541 = vmatpush1.msra.mxu0 0.0
      %1542 = vmatprep.subr.mxu0 0.0
      %1543 = vmatpush1.msra.mxu0 0.0
      %1544 = vmatprep.subr.mxu0 0.0
      %1545 = vmatpush1.msra.mxu0 0.0
      %1546 = vmatprep.subr.mxu0 0.0
      %1547 = vmatpush1.msra.mxu0 0.0
      %1548 = vmatprep.subr.mxu0 0.0
      %1549 = vmatpush1.msra.mxu0 0.0
      %1550 = vmatprep.subr.mxu0 0.0
      %1551 = vmatpush1.msra.mxu0 0.0
      %1552 = vmatprep.mubr.f32.mxu0 0.0
      %1553 = vmatmul.mubr.f32.gmra.mrb[0].mxu0 %v896
      %v1554 = vpop.f32.mrb[0].mxu0
      %v1555 = vadd.f32 0.0, %v1554
      %v1556 = vpop.f32.mrb[0].mxu0
      %1557 = vmatprep.mubr.f32.mxu0 0.0
      %1558 = vmatmul.mubr.f32.gmra.mrb[0].mxu0 %v899
      %v1559 = vpop.f32.mrb[0].mxu0
      %v1560 = vadd.f32 0.0, %v1559
      %v1561 = vpop.f32.mrb[0].mxu0
      %1562 = vmatprep.mubr.f32.mxu0 0.0
      %1563 = vmatmul.mubr.f32.gmra.mrb[0].mxu0 %v902
      %v1564 = vpop.f32.mrb[0].mxu0
      %v1565 = vadd.f32 0.0, %v1564
      %v1566 = vpop.f32.mrb[0].mxu0
      %1567 = vmatprep.mubr.f32.mxu0 0.0
      %1568 = vmatmul.mubr.f32.gmra.mrb[0].mxu0 %v905
      %v1569 = vpop.f32.mrb[0].mxu0
      %v1570 = vadd.f32 0.0, %v1569
      %v1571 = vpop.f32.mrb[0].mxu0
      %1572 = vmatprep.mubr.f32.mxu0 0.0
      %1573 = vmatmul.mubr.f32.gmra.mrb[0].mxu0 %v908
      %v1574 = vpop.f32.mrb[0].mxu0
      %v1575 = vadd.f32 0.0, %v1574
      %v1576 = vpop.f32.mrb[0].mxu0
      %1577 = vmatprep.mubr.f32.mxu0 0.0
      %1578 = vmatmul.mubr.f32.gmra.mrb[0].mxu0 %v911
      %v1579 = vpop.f32.mrb[0].mxu0
      %v1580 = vadd.f32 0.0, %v1579
      %v1581 = vpop.f32.mrb[0].mxu0
      %1582 = vmatprep.mubr.f32.mxu0 0.0
      %1583 = vmatmul.mubr.f32.gmra.mrb[0].mxu0 %v914
      %v1584 = vpop.f32.mrb[0].mxu0
      %v1585 = vadd.f32 0.0, %v1584
      %v1586 = vpop.f32.mrb[0].mxu0
      %1587 = vmatprep.mubr.f32.mxu0 0.0
      %1588 = vmatmul.mubr.f32.gmra.mrb[0].mxu0 %v917
      %v1589 = vpop.f32.mrb[0].mxu0
      %v1590 = vadd.f32 0.0, %v1589
      %v1591 = vpop.f32.mrb[0].mxu0
      %1592 = vmatprep.mubr.f32.mxu0 0.0
      %1593 = vmatmul.mubr.f32.gmra.mrb[0].mxu0 %v920
      %v1594 = vpop.f32.mrb[0].mxu0
      %v1595 = vadd.f32 0.0, %v1594
      %v1596 = vpop.f32.mrb[0].mxu0
      %1597 = vdwg.mxu0
      %1598 = vmatprep.subr.mxu0 0.0
      %1599 = vmatpush1.msra.mxu0 %v1370
      %1600 = vmatprep.subr.mxu0 0.0
      %1601 = vmatpush1.msra.mxu0 %v1371
      %1602 = vmatprep.subr.mxu0 0.0
      %1603 = vmatpush1.msra.mxu0 %v1372
      %1604 = vmatprep.subr.mxu0 0.0
      %1605 = vmatpush1.msra.mxu0 %v1373
      %1606 = vmatprep.subr.mxu0 0.0
      %1607 = vmatpush1.msra.mxu0 0.0
      %1608 = vmatprep.subr.mxu0 0.0
      %1609 = vmatpush1.msra.mxu0 0.0
      %1610 = vmatprep.subr.mxu0 0.0
      %1611 = vmatpush1.msra.mxu0 0.0
      %1612 = vmatprep.subr.mxu0 0.0
      %1613 = vmatpush1.msra.mxu0 0.0
      %1614 = vmatprep.subr.mxu0 0.0
      %1615 = vmatpush1.msra.mxu0 0.0
      %1616 = vmatprep.subr.mxu0 0.0
      %1617 = vmatpush1.msra.mxu0 0.0
      %1618 = vmatprep.subr.mxu0 0.0
      %1619 = vmatpush1.msra.mxu0 0.0
      %1620 = vmatprep.subr.mxu0 0.0
      %1621 = vmatpush1.msra.mxu0 0.0
      %1622 = vmatprep.subr.mxu0 0.0
      %1623 = vmatpush1.msra.mxu0 0.0
      %1624 = vmatprep.subr.mxu0 0.0
      %1625 = vmatpush1.msra.mxu0 0.0
      %1626 = vmatprep.subr.mxu0 0.0
      %1627 = vmatpush1.msra.mxu0 0.0
      %1628 = vmatprep.subr.mxu0 0.0
      %1629 = vmatpush1.msra.mxu0 0.0
      %1630 = vmatprep.subr.mxu0 0.0
      %1631 = vmatpush1.msra.mxu0 0.0
      %1632 = vmatprep.subr.mxu0 0.0
      %1633 = vmatpush1.msra.mxu0 0.0
      %1634 = vmatprep.subr.mxu0 0.0
      %1635 = vmatpush1.msra.mxu0 0.0
      %1636 = vmatprep.subr.mxu0 0.0
      %1637 = vmatpush1.msra.mxu0 0.0
      %1638 = vmatprep.subr.mxu0 0.0
      %1639 = vmatpush1.msra.mxu0 0.0
      %1640 = vmatprep.subr.mxu0 0.0
      %1641 = vmatpush1.msra.mxu0 0.0
      %1642 = vmatprep.subr.mxu0 0.0
      %1643 = vmatpush1.msra.mxu0 0.0
      %1644 = vmatprep.subr.mxu0 0.0
      %1645 = vmatpush1.msra.mxu0 0.0
      %1646 = vmatprep.subr.mxu0 0.0
      %1647 = vmatpush1.msra.mxu0 0.0
      %1648 = vmatprep.subr.mxu0 0.0
      %1649 = vmatpush1.msra.mxu0 0.0
      %1650 = vmatprep.subr.mxu0 0.0
      %1651 = vmatpush1.msra.mxu0 0.0
      %1652 = vmatprep.subr.mxu0 0.0
      %1653 = vmatpush1.msra.mxu0 0.0
      %1654 = vmatprep.subr.mxu0 0.0
      %1655 = vmatpush1.msra.mxu0 0.0
      %1656 = vmatprep.subr.mxu0 0.0
      %1657 = vmatpush1.msra.mxu0 0.0
      %1658 = vmatprep.subr.mxu0 0.0
      %1659 = vmatpush1.msra.mxu0 0.0
      %1660 = vmatprep.subr.mxu0 0.0
      %1661 = vmatpush1.msra.mxu0 0.0
      %1662 = vmatprep.mubr.f32.mxu0 0.0
      %1663 = vmatmul.mubr.f32.gmra.mrb[0].mxu0 %v896
      %v1664 = vpop.f32.mrb[0].mxu0
      %v1665 = vadd.f32 0.0, %v1664
      %v1666 = vpop.f32.mrb[0].mxu0
      %1667 = vmatprep.mubr.f32.mxu0 0.0
      %1668 = vmatmul.mubr.f32.gmra.mrb[0].mxu0 %v899
      %v1669 = vpop.f32.mrb[0].mxu0
      %v1670 = vadd.f32 0.0, %v1669
      %v1671 = vpop.f32.mrb[0].mxu0
      %1672 = vmatprep.mubr.f32.mxu0 0.0
      %1673 = vmatmul.mubr.f32.gmra.mrb[0].mxu0 %v902
      %v1674 = vpop.f32.mrb[0].mxu0
      %v1675 = vadd.f32 0.0, %v1674
      %v1676 = vpop.f32.mrb[0].mxu0
      %1677 = vmatprep.mubr.f32.mxu0 0.0
      %1678 = vmatmul.mubr.f32.gmra.mrb[0].mxu0 %v905
      %v1679 = vpop.f32.mrb[0].mxu0
      %v1680 = vadd.f32 0.0, %v1679
      %v1681 = vpop.f32.mrb[0].mxu0
      %1682 = vmatprep.mubr.f32.mxu0 0.0
      %1683 = vmatmul.mubr.f32.gmra.mrb[0].mxu0 %v908
      %v1684 = vpop.f32.mrb[0].mxu0
      %v1685 = vadd.f32 0.0, %v1684
      %v1686 = vpop.f32.mrb[0].mxu0
      %1687 = vmatprep.mubr.f32.mxu0 0.0
      %1688 = vmatmul.mubr.f32.gmra.mrb[0].mxu0 %v911
      %v1689 = vpop.f32.mrb[0].mxu0
      %v1690 = vadd.f32 0.0, %v1689
      %v1691 = vpop.f32.mrb[0].mxu0
      %1692 = vmatprep.mubr.f32.mxu0 0.0
      %1693 = vmatmul.mubr.f32.gmra.mrb[0].mxu0 %v914
      %v1694 = vpop.f32.mrb[0].mxu0
      %v1695 = vadd.f32 0.0, %v1694
      %v1696 = vpop.f32.mrb[0].mxu0
      %1697 = vmatprep.mubr.f32.mxu0 0.0
      %1698 = vmatmul.mubr.f32.gmra.mrb[0].mxu0 %v917
      %v1699 = vpop.f32.mrb[0].mxu0
      %v1700 = vadd.f32 0.0, %v1699
      %v1701 = vpop.f32.mrb[0].mxu0
      %1702 = vmatprep.mubr.f32.mxu0 0.0
      %1703 = vmatmul.mubr.f32.gmra.mrb[0].mxu0 %v920
      %v1704 = vpop.f32.mrb[0].mxu0
      %v1705 = vadd.f32 0.0, %v1704
      %v1706 = vpop.f32.mrb[0].mxu0
      %1707 = vdwg.mxu0
      %1708 = vmatprep.subr.mxu0 0.0
      %1709 = vmatpush1.msra.mxu0 %v1374
      %1710 = vmatprep.subr.mxu0 0.0
      %1711 = vmatpush1.msra.mxu0 %v1375
      %1712 = vmatprep.subr.mxu0 0.0
      %1713 = vmatpush1.msra.mxu0 %v1376
      %1714 = vmatprep.subr.mxu0 0.0
      %1715 = vmatpush1.msra.mxu0 %v1377
      %1716 = vmatprep.subr.mxu0 0.0
      %1717 = vmatpush1.msra.mxu0 0.0
      %1718 = vmatprep.subr.mxu0 0.0
      %1719 = vmatpush1.msra.mxu0 0.0
      %1720 = vmatprep.subr.mxu0 0.0
      %1721 = vmatpush1.msra.mxu0 0.0
      %1722 = vmatprep.subr.mxu0 0.0
      %1723 = vmatpush1.msra.mxu0 0.0
      %1724 = vmatprep.subr.mxu0 0.0
      %1725 = vmatpush1.msra.mxu0 0.0
      %1726 = vmatprep.subr.mxu0 0.0
      %1727 = vmatpush1.msra.mxu0 0.0
      %1728 = vmatprep.subr.mxu0 0.0
      %1729 = vmatpush1.msra.mxu0 0.0
      %1730 = vmatprep.subr.mxu0 0.0
      %1731 = vmatpush1.msra.mxu0 0.0
      %1732 = vmatprep.subr.mxu0 0.0
      %1733 = vmatpush1.msra.mxu0 0.0
      %1734 = vmatprep.subr.mxu0 0.0
      %1735 = vmatpush1.msra.mxu0 0.0
      %1736 = vmatprep.subr.mxu0 0.0
      %1737 = vmatpush1.msra.mxu0 0.0
      %1738 = vmatprep.subr.mxu0 0.0
      %1739 = vmatpush1.msra.mxu0 0.0
      %1740 = vmatprep.subr.mxu0 0.0
      %1741 = vmatpush1.msra.mxu0 0.0
      %1742 = vmatprep.subr.mxu0 0.0
      %1743 = vmatpush1.msra.mxu0 0.0
      %1744 = vmatprep.subr.mxu0 0.0
      %1745 = vmatpush1.msra.mxu0 0.0
      %1746 = vmatprep.subr.mxu0 0.0
      %1747 = vmatpush1.msra.mxu0 0.0
      %1748 = vmatprep.subr.mxu0 0.0
      %1749 = vmatpush1.msra.mxu0 0.0
      %1750 = vmatprep.subr.mxu0 0.0
      %1751 = vmatpush1.msra.mxu0 0.0
      %1752 = vmatprep.subr.mxu0 0.0
      %1753 = vmatpush1.msra.mxu0 0.0
      %1754 = vmatprep.subr.mxu0 0.0
      %1755 = vmatpush1.msra.mxu0 0.0
      %1756 = vmatprep.subr.mxu0 0.0
      %1757 = vmatpush1.msra.mxu0 0.0
      %1758 = vmatprep.subr.mxu0 0.0
      %1759 = vmatpush1.msra.mxu0 0.0
      %1760 = vmatprep.subr.mxu0 0.0
      %1761 = vmatpush1.msra.mxu0 0.0
      %1762 = vmatprep.subr.mxu0 0.0
      %1763 = vmatpush1.msra.mxu0 0.0
      %1764 = vmatprep.subr.mxu0 0.0
      %1765 = vmatpush1.msra.mxu0 0.0
      %1766 = vmatprep.subr.mxu0 0.0
      %1767 = vmatpush1.msra.mxu0 0.0
      %1768 = vmatprep.subr.mxu0 0.0
      %1769 = vmatpush1.msra.mxu0 0.0
      %1770 = vmatprep.subr.mxu0 0.0
      %1771 = vmatpush1.msra.mxu0 0.0
      %1772 = vmatprep.mubr.f32.mxu0 0.0
      %1773 = vmatmul.mubr.f32.gmra.mrb[0].mxu0 %v896
      %v1774 = vpop.f32.mrb[0].mxu0
      %v1775 = vadd.f32 0.0, %v1774
      %v1776 = vpop.f32.mrb[0].mxu0
      %1777 = vmatprep.mubr.f32.mxu0 0.0
      %1778 = vmatmul.mubr.f32.gmra.mrb[0].mxu0 %v899
      %v1779 = vpop.f32.mrb[0].mxu0
      %v1780 = vadd.f32 0.0, %v1779
      %v1781 = vpop.f32.mrb[0].mxu0
      %1782 = vmatprep.mubr.f32.mxu0 0.0
      %1783 = vmatmul.mubr.f32.gmra.mrb[0].mxu0 %v902
      %v1784 = vpop.f32.mrb[0].mxu0
      %v1785 = vadd.f32 0.0, %v1784
      %v1786 = vpop.f32.mrb[0].mxu0
      %1787 = vmatprep.mubr.f32.mxu0 0.0
      %1788 = vmatmul.mubr.f32.gmra.mrb[0].mxu0 %v905
      %v1789 = vpop.f32.mrb[0].mxu0
      %v1790 = vadd.f32 0.0, %v1789
      %v1791 = vpop.f32.mrb[0].mxu0
      %1792 = vmatprep.mubr.f32.mxu0 0.0
      %1793 = vmatmul.mubr.f32.gmra.mrb[0].mxu0 %v908
      %v1794 = vpop.f32.mrb[0].mxu0
      %v1795 = vadd.f32 0.0, %v1794
      %v1796 = vpop.f32.mrb[0].mxu0
      %1797 = vmatprep.mubr.f32.mxu0 0.0
      %1798 = vmatmul.mubr.f32.gmra.mrb[0].mxu0 %v911
      %v1799 = vpop.f32.mrb[0].mxu0
      %v1800 = vadd.f32 0.0, %v1799
      %v1801 = vpop.f32.mrb[0].mxu0
      %1802 = vmatprep.mubr.f32.mxu0 0.0
      %1803 = vmatmul.mubr.f32.gmra.mrb[0].mxu0 %v914
      %v1804 = vpop.f32.mrb[0].mxu0
      %v1805 = vadd.f32 0.0, %v1804
      %v1806 = vpop.f32.mrb[0].mxu0
      %1807 = vmatprep.mubr.f32.mxu0 0.0
      %1808 = vmatmul.mubr.f32.gmra.mrb[0].mxu0 %v917
      %v1809 = vpop.f32.mrb[0].mxu0
      %v1810 = vadd.f32 0.0, %v1809
      %v1811 = vpop.f32.mrb[0].mxu0
      %1812 = vmatprep.mubr.f32.mxu0 0.0
      %1813 = vmatmul.mubr.f32.gmra.mrb[0].mxu0 %v920
      %v1814 = vpop.f32.mrb[0].mxu0
      %v1815 = vadd.f32 0.0, %v1814
      %v1816 = vpop.f32.mrb[0].mxu0
      %1817 = vdwg.mxu0
      %v1818 = vld [vmem:[%s8] sm:$0xff]
      %v1819 = vld [vmem:[%s8 + $0x8] sm:$0xff]
      %v1820 = vld [vmem:[%s8 + $0x10] sm:$0xff]
      %v1821 = vld [vmem:[%s8 + $0x18] sm:$0xff]
      %v1822 = vld [vmem:[%s8 + $0x20] sm:$0xff]
      %v1823 = vld [vmem:[%s8 + $0x28] sm:$0xff]
      %v1824 = vld [vmem:[%s8 + $0x30] sm:$0xff]
      %v1825 = vld [vmem:[%s8 + $0x38] sm:$0xff]
      %v1826 = vld [vmem:[%s8 + $0x40] sm:$0xff]
      %v1827 = vld [vmem:[%s8 + $0x48] sm:$0xff]
      %v1828 = vld [vmem:[%s8 + $0x50] sm:$0xff]
      %v1829 = vld [vmem:[%s8 + $0x58] sm:$0xff]
      %v1830 = vld [vmem:[%s8 + $0x60] sm:$0xff]
      %v1831 = vld [vmem:[%s8 + $0x68] sm:$0xff]
      %v1832 = vld [vmem:[%s8 + $0x70] sm:$0xff]
      %v1833 = vld [vmem:[%s8 + $0x78] sm:$0xff]
      %1834 = vmatprep.subr.mxu0 0.0
      %1835 = vmatpush1.msra.mxu0 %v1818
      %1836 = vmatprep.subr.mxu0 0.0
      %1837 = vmatpush1.msra.mxu0 %v1819
      %1838 = vmatprep.subr.mxu0 0.0
      %1839 = vmatpush1.msra.mxu0 %v1820
      %1840 = vmatprep.subr.mxu0 0.0
      %1841 = vmatpush1.msra.mxu0 %v1821
      %1842 = vmatprep.subr.mxu0 0.0
      %1843 = vmatpush1.msra.mxu0 0.0
      %1844 = vmatprep.subr.mxu0 0.0
      %1845 = vmatpush1.msra.mxu0 0.0
      %1846 = vmatprep.subr.mxu0 0.0
      %1847 = vmatpush1.msra.mxu0 0.0
      %1848 = vmatprep.subr.mxu0 0.0
      %1849 = vmatpush1.msra.mxu0 0.0
      %1850 = vmatprep.subr.mxu0 0.0
      %1851 = vmatpush1.msra.mxu0 0.0
      %1852 = vmatprep.subr.mxu0 0.0
      %1853 = vmatpush1.msra.mxu0 0.0
      %1854 = vmatprep.subr.mxu0 0.0
      %1855 = vmatpush1.msra.mxu0 0.0
      %1856 = vmatprep.subr.mxu0 0.0
      %1857 = vmatpush1.msra.mxu0 0.0
      %1858 = vmatprep.subr.mxu0 0.0
      %1859 = vmatpush1.msra.mxu0 0.0
      %1860 = vmatprep.subr.mxu0 0.0
      %1861 = vmatpush1.msra.mxu0 0.0
      %1862 = vmatprep.subr.mxu0 0.0
      %1863 = vmatpush1.msra.mxu0 0.0
      %1864 = vmatprep.subr.mxu0 0.0
      %1865 = vmatpush1.msra.mxu0 0.0
      %1866 = vmatprep.subr.mxu0 0.0
      %1867 = vmatpush1.msra.mxu0 0.0
      %1868 = vmatprep.subr.mxu0 0.0
      %1869 = vmatpush1.msra.mxu0 0.0
      %1870 = vmatprep.subr.mxu0 0.0
      %1871 = vmatpush1.msra.mxu0 0.0
      %1872 = vmatprep.subr.mxu0 0.0
      %1873 = vmatpush1.msra.mxu0 0.0
      %1874 = vmatprep.subr.mxu0 0.0
      %1875 = vmatpush1.msra.mxu0 0.0
      %1876 = vmatprep.subr.mxu0 0.0
      %1877 = vmatpush1.msra.mxu0 0.0
      %1878 = vmatprep.subr.mxu0 0.0
      %1879 = vmatpush1.msra.mxu0 0.0
      %1880 = vmatprep.subr.mxu0 0.0
      %1881 = vmatpush1.msra.mxu0 0.0
      %1882 = vmatprep.subr.mxu0 0.0
      %1883 = vmatpush1.msra.mxu0 0.0
      %1884 = vmatprep.subr.mxu0 0.0
      %1885 = vmatpush1.msra.mxu0 0.0
      %1886 = vmatprep.subr.mxu0 0.0
      %1887 = vmatpush1.msra.mxu0 0.0
      %1888 = vmatprep.subr.mxu0 0.0
      %1889 = vmatpush1.msra.mxu0 0.0
      %1890 = vmatprep.subr.mxu0 0.0
      %1891 = vmatpush1.msra.mxu0 0.0
      %1892 = vmatprep.subr.mxu0 0.0
      %1893 = vmatpush1.msra.mxu0 0.0
      %1894 = vmatprep.subr.mxu0 0.0
      %1895 = vmatpush1.msra.mxu0 0.0
      %1896 = vmatprep.subr.mxu0 0.0
      %1897 = vmatpush1.msra.mxu0 0.0
      %1898 = vmatprep.mubr.f32.mxu0 0.0
      %1899 = vmatmul.mubr.f32.gmra.mrb[0].mxu0 %v896
      %v1900 = vpop.f32.mrb[0].mxu0
      %v1901 = vadd.f32 0.0, %v1900
      %v1902 = vpop.f32.mrb[0].mxu0
      %1903 = vmatprep.mubr.f32.mxu0 0.0
      %1904 = vmatmul.mubr.f32.gmra.mrb[0].mxu0 %v899
      %v1905 = vpop.f32.mrb[0].mxu0
      %v1906 = vadd.f32 0.0, %v1905
      %v1907 = vpop.f32.mrb[0].mxu0
      %1908 = vmatprep.mubr.f32.mxu0 0.0
      %1909 = vmatmul.mubr.f32.gmra.mrb[0].mxu0 %v902
      %v1910 = vpop.f32.mrb[0].mxu0
      %v1911 = vadd.f32 0.0, %v1910
      %v1912 = vpop.f32.mrb[0].mxu0
      %1913 = vmatprep.mubr.f32.mxu0 0.0
      %1914 = vmatmul.mubr.f32.gmra.mrb[0].mxu0 %v905
      %v1915 = vpop.f32.mrb[0].mxu0
      %v1916 = vadd.f32 0.0, %v1915
      %v1917 = vpop.f32.mrb[0].mxu0
      %1918 = vmatprep.mubr.f32.mxu0 0.0
      %1919 = vmatmul.mubr.f32.gmra.mrb[0].mxu0 %v908
      %v1920 = vpop.f32.mrb[0].mxu0
      %v1921 = vadd.f32 0.0, %v1920
      %v1922 = vpop.f32.mrb[0].mxu0
      %1923 = vmatprep.mubr.f32.mxu0 0.0
      %1924 = vmatmul.mubr.f32.gmra.mrb[0].mxu0 %v911
      %v1925 = vpop.f32.mrb[0].mxu0
      %v1926 = vadd.f32 0.0, %v1925
      %v1927 = vpop.f32.mrb[0].mxu0
      %1928 = vmatprep.mubr.f32.mxu0 0.0
      %1929 = vmatmul.mubr.f32.gmra.mrb[0].mxu0 %v914
      %v1930 = vpop.f32.mrb[0].mxu0
      %v1931 = vadd.f32 0.0, %v1930
      %v1932 = vpop.f32.mrb[0].mxu0
      %1933 = vmatprep.mubr.f32.mxu0 0.0
      %1934 = vmatmul.mubr.f32.gmra.mrb[0].mxu0 %v917
      %v1935 = vpop.f32.mrb[0].mxu0
      %v1936 = vadd.f32 0.0, %v1935
      %v1937 = vpop.f32.mrb[0].mxu0
      %1938 = vmatprep.mubr.f32.mxu0 0.0
      %1939 = vmatmul.mubr.f32.gmra.mrb[0].mxu0 %v920
      %v1940 = vpop.f32.mrb[0].mxu0
      %v1941 = vadd.f32 0.0, %v1940
      %v1942 = vpop.f32.mrb[0].mxu0
      %1943 = vdwg.mxu0
      %1944 = vmatprep.subr.mxu0 0.0
      %1945 = vmatpush1.msra.mxu0 %v1822
      %1946 = vmatprep.subr.mxu0 0.0
      %1947 = vmatpush1.msra.mxu0 %v1823
      %1948 = vmatprep.subr.mxu0 0.0
      %1949 = vmatpush1.msra.mxu0 %v1824
      %1950 = vmatprep.subr.mxu0 0.0
      %1951 = vmatpush1.msra.mxu0 %v1825
      %1952 = vmatprep.subr.mxu0 0.0
      %1953 = vmatpush1.msra.mxu0 0.0
      %1954 = vmatprep.subr.mxu0 0.0
      %1955 = vmatpush1.msra.mxu0 0.0
      %1956 = vmatprep.subr.mxu0 0.0
      %1957 = vmatpush1.msra.mxu0 0.0
      %1958 = vmatprep.subr.mxu0 0.0
      %1959 = vmatpush1.msra.mxu0 0.0
      %1960 = vmatprep.subr.mxu0 0.0
      %1961 = vmatpush1.msra.mxu0 0.0
      %1962 = vmatprep.subr.mxu0 0.0
      %1963 = vmatpush1.msra.mxu0 0.0
      %1964 = vmatprep.subr.mxu0 0.0
      %1965 = vmatpush1.msra.mxu0 0.0
      %1966 = vmatprep.subr.mxu0 0.0
      %1967 = vmatpush1.msra.mxu0 0.0
      %1968 = vmatprep.subr.mxu0 0.0
      %1969 = vmatpush1.msra.mxu0 0.0
      %1970 = vmatprep.subr.mxu0 0.0
      %1971 = vmatpush1.msra.mxu0 0.0
      %1972 = vmatprep.subr.mxu0 0.0
      %1973 = vmatpush1.msra.mxu0 0.0
      %1974 = vmatprep.subr.mxu0 0.0
      %1975 = vmatpush1.msra.mxu0 0.0
      %1976 = vmatprep.subr.mxu0 0.0
      %1977 = vmatpush1.msra.mxu0 0.0
      %1978 = vmatprep.subr.mxu0 0.0
      %1979 = vmatpush1.msra.mxu0 0.0
      %1980 = vmatprep.subr.mxu0 0.0
      %1981 = vmatpush1.msra.mxu0 0.0
      %1982 = vmatprep.subr.mxu0 0.0
      %1983 = vmatpush1.msra.mxu0 0.0
      %1984 = vmatprep.subr.mxu0 0.0
      %1985 = vmatpush1.msra.mxu0 0.0
      %1986 = vmatprep.subr.mxu0 0.0
      %1987 = vmatpush1.msra.mxu0 0.0
      %1988 = vmatprep.subr.mxu0 0.0
      %1989 = vmatpush1.msra.mxu0 0.0
      %1990 = vmatprep.subr.mxu0 0.0
      %1991 = vmatpush1.msra.mxu0 0.0
      %1992 = vmatprep.subr.mxu0 0.0
      %1993 = vmatpush1.msra.mxu0 0.0
      %1994 = vmatprep.subr.mxu0 0.0
      %1995 = vmatpush1.msra.mxu0 0.0
      %1996 = vmatprep.subr.mxu0 0.0
      %1997 = vmatpush1.msra.mxu0 0.0
      %1998 = vmatprep.subr.mxu0 0.0
      %1999 = vmatpush1.msra.mxu0 0.0
      %2000 = vmatprep.subr.mxu0 0.0
      %2001 = vmatpush1.msra.mxu0 0.0
      %2002 = vmatprep.subr.mxu0 0.0
      %2003 = vmatpush1.msra.mxu0 0.0
      %2004 = vmatprep.subr.mxu0 0.0
      %2005 = vmatpush1.msra.mxu0 0.0
      %2006 = vmatprep.subr.mxu0 0.0
      %2007 = vmatpush1.msra.mxu0 0.0
      %2008 = vmatprep.mubr.f32.mxu0 0.0
      %2009 = vmatmul.mubr.f32.gmra.mrb[0].mxu0 %v896
      %v2010 = vpop.f32.mrb[0].mxu0
      %v2011 = vadd.f32 0.0, %v2010
      %v2012 = vpop.f32.mrb[0].mxu0
      %2013 = vmatprep.mubr.f32.mxu0 0.0
      %2014 = vmatmul.mubr.f32.gmra.mrb[0].mxu0 %v899
      %v2015 = vpop.f32.mrb[0].mxu0
      %v2016 = vadd.f32 0.0, %v2015
      %v2017 = vpop.f32.mrb[0].mxu0
      %2018 = vmatprep.mubr.f32.mxu0 0.0
      %2019 = vmatmul.mubr.f32.gmra.mrb[0].mxu0 %v902
      %v2020 = vpop.f32.mrb[0].mxu0
      %v2021 = vadd.f32 0.0, %v2020
      %v2022 = vpop.f32.mrb[0].mxu0
      %2023 = vmatprep.mubr.f32.mxu0 0.0
      %2024 = vmatmul.mubr.f32.gmra.mrb[0].mxu0 %v905
      %v2025 = vpop.f32.mrb[0].mxu0
      %v2026 = vadd.f32 0.0, %v2025
      %v2027 = vpop.f32.mrb[0].mxu0
      %2028 = vmatprep.mubr.f32.mxu0 0.0
      %2029 = vmatmul.mubr.f32.gmra.mrb[0].mxu0 %v908
      %v2030 = vpop.f32.mrb[0].mxu0
      %v2031 = vadd.f32 0.0, %v2030
      %v2032 = vpop.f32.mrb[0].mxu0
      %2033 = vmatprep.mubr.f32.mxu0 0.0
      %2034 = vmatmul.mubr.f32.gmra.mrb[0].mxu0 %v911
      %v2035 = vpop.f32.mrb[0].mxu0
      %v2036 = vadd.f32 0.0, %v2035
      %v2037 = vpop.f32.mrb[0].mxu0
      %2038 = vmatprep.mubr.f32.mxu0 0.0
      %2039 = vmatmul.mubr.f32.gmra.mrb[0].mxu0 %v914
      %v2040 = vpop.f32.mrb[0].mxu0
      %v2041 = vadd.f32 0.0, %v2040
      %v2042 = vpop.f32.mrb[0].mxu0
      %2043 = vmatprep.mubr.f32.mxu0 0.0
      %2044 = vmatmul.mubr.f32.gmra.mrb[0].mxu0 %v917
      %v2045 = vpop.f32.mrb[0].mxu0
      %v2046 = vadd.f32 0.0, %v2045
      %v2047 = vpop.f32.mrb[0].mxu0
      %2048 = vmatprep.mubr.f32.mxu0 0.0
      %2049 = vmatmul.mubr.f32.gmra.mrb[0].mxu0 %v920
      %v2050 = vpop.f32.mrb[0].mxu0
      %v2051 = vadd.f32 0.0, %v2050
      %v2052 = vpop.f32.mrb[0].mxu0
      %2053 = vdwg.mxu0
      %2054 = vmatprep.subr.mxu0 0.0
      %2055 = vmatpush1.msra.mxu0 %v1826
      %2056 = vmatprep.subr.mxu0 0.0
      %2057 = vmatpush1.msra.mxu0 %v1827
      %2058 = vmatprep.subr.mxu0 0.0
      %2059 = vmatpush1.msra.mxu0 %v1828
      %2060 = vmatprep.subr.mxu0 0.0
      %2061 = vmatpush1.msra.mxu0 %v1829
      %2062 = vmatprep.subr.mxu0 0.0
      %2063 = vmatpush1.msra.mxu0 0.0
      %2064 = vmatprep.subr.mxu0 0.0
      %2065 = vmatpush1.msra.mxu0 0.0
      %2066 = vmatprep.subr.mxu0 0.0
      %2067 = vmatpush1.msra.mxu0 0.0
      %2068 = vmatprep.subr.mxu0 0.0
      %2069 = vmatpush1.msra.mxu0 0.0
      %2070 = vmatprep.subr.mxu0 0.0
      %2071 = vmatpush1.msra.mxu0 0.0
      %2072 = vmatprep.subr.mxu0 0.0
      %2073 = vmatpush1.msra.mxu0 0.0
      %2074 = vmatprep.subr.mxu0 0.0
      %2075 = vmatpush1.msra.mxu0 0.0
      %2076 = vmatprep.subr.mxu0 0.0
      %2077 = vmatpush1.msra.mxu0 0.0
      %2078 = vmatprep.subr.mxu0 0.0
      %2079 = vmatpush1.msra.mxu0 0.0
      %2080 = vmatprep.subr.mxu0 0.0
      %2081 = vmatpush1.msra.mxu0 0.0
      %2082 = vmatprep.subr.mxu0 0.0
      %2083 = vmatpush1.msra.mxu0 0.0
      %2084 = vmatprep.subr.mxu0 0.0
      %2085 = vmatpush1.msra.mxu0 0.0
      %2086 = vmatprep.subr.mxu0 0.0
      %2087 = vmatpush1.msra.mxu0 0.0
      %2088 = vmatprep.subr.mxu0 0.0
      %2089 = vmatpush1.msra.mxu0 0.0
      %2090 = vmatprep.subr.mxu0 0.0
      %2091 = vmatpush1.msra.mxu0 0.0
      %2092 = vmatprep.subr.mxu0 0.0
      %2093 = vmatpush1.msra.mxu0 0.0
      %2094 = vmatprep.subr.mxu0 0.0
      %2095 = vmatpush1.msra.mxu0 0.0
      %2096 = vmatprep.subr.mxu0 0.0
      %2097 = vmatpush1.msra.mxu0 0.0
      %2098 = vmatprep.subr.mxu0 0.0
      %2099 = vmatpush1.msra.mxu0 0.0
      %2100 = vmatprep.subr.mxu0 0.0
      %2101 = vmatpush1.msra.mxu0 0.0
      %2102 = vmatprep.subr.mxu0 0.0
      %2103 = vmatpush1.msra.mxu0 0.0
      %2104 = vmatprep.subr.mxu0 0.0
      %2105 = vmatpush1.msra.mxu0 0.0
      %2106 = vmatprep.subr.mxu0 0.0
      %2107 = vmatpush1.msra.mxu0 0.0
      %2108 = vmatprep.subr.mxu0 0.0
      %2109 = vmatpush1.msra.mxu0 0.0
      %2110 = vmatprep.subr.mxu0 0.0
      %2111 = vmatpush1.msra.mxu0 0.0
      %2112 = vmatprep.subr.mxu0 0.0
      %2113 = vmatpush1.msra.mxu0 0.0
      %2114 = vmatprep.subr.mxu0 0.0
      %2115 = vmatpush1.msra.mxu0 0.0
      %2116 = vmatprep.subr.mxu0 0.0
      %2117 = vmatpush1.msra.mxu0 0.0
      %2118 = vmatprep.mubr.f32.mxu0 0.0
      %2119 = vmatmul.mubr.f32.gmra.mrb[0].mxu0 %v896
      %v2120 = vpop.f32.mrb[0].mxu0
      %v2121 = vadd.f32 0.0, %v2120
      %v2122 = vpop.f32.mrb[0].mxu0
      %2123 = vmatprep.mubr.f32.mxu0 0.0
      %2124 = vmatmul.mubr.f32.gmra.mrb[0].mxu0 %v899
      %v2125 = vpop.f32.mrb[0].mxu0
      %v2126 = vadd.f32 0.0, %v2125
      %v2127 = vpop.f32.mrb[0].mxu0
      %2128 = vmatprep.mubr.f32.mxu0 0.0
      %2129 = vmatmul.mubr.f32.gmra.mrb[0].mxu0 %v902
      %v2130 = vpop.f32.mrb[0].mxu0
      %v2131 = vadd.f32 0.0, %v2130
      %v2132 = vpop.f32.mrb[0].mxu0
      %2133 = vmatprep.mubr.f32.mxu0 0.0
      %2134 = vmatmul.mubr.f32.gmra.mrb[0].mxu0 %v905
      %v2135 = vpop.f32.mrb[0].mxu0
      %v2136 = vadd.f32 0.0, %v2135
      %v2137 = vpop.f32.mrb[0].mxu0
      %2138 = vmatprep.mubr.f32.mxu0 0.0
      %2139 = vmatmul.mubr.f32.gmra.mrb[0].mxu0 %v908
      %v2140 = vpop.f32.mrb[0].mxu0
      %v2141 = vadd.f32 0.0, %v2140
      %v2142 = vpop.f32.mrb[0].mxu0
      %2143 = vmatprep.mubr.f32.mxu0 0.0
      %2144 = vmatmul.mubr.f32.gmra.mrb[0].mxu0 %v911
      %v2145 = vpop.f32.mrb[0].mxu0
      %v2146 = vadd.f32 0.0, %v2145
      %v2147 = vpop.f32.mrb[0].mxu0
      %2148 = vmatprep.mubr.f32.mxu0 0.0
      %2149 = vmatmul.mubr.f32.gmra.mrb[0].mxu0 %v914
      %v2150 = vpop.f32.mrb[0].mxu0
      %v2151 = vadd.f32 0.0, %v2150
      %v2152 = vpop.f32.mrb[0].mxu0
      %2153 = vmatprep.mubr.f32.mxu0 0.0
      %2154 = vmatmul.mubr.f32.gmra.mrb[0].mxu0 %v917
      %v2155 = vpop.f32.mrb[0].mxu0
      %v2156 = vadd.f32 0.0, %v2155
      %v2157 = vpop.f32.mrb[0].mxu0
      %2158 = vmatprep.mubr.f32.mxu0 0.0
      %2159 = vmatmul.mubr.f32.gmra.mrb[0].mxu0 %v920
      %v2160 = vpop.f32.mrb[0].mxu0
      %v2161 = vadd.f32 0.0, %v2160
      %v2162 = vpop.f32.mrb[0].mxu0
      %2163 = vdwg.mxu0
      %2164 = vmatprep.subr.mxu0 0.0
      %2165 = vmatpush1.msra.mxu0 %v1830
      %2166 = vmatprep.subr.mxu0 0.0
      %2167 = vmatpush1.msra.mxu0 %v1831
      %2168 = vmatprep.subr.mxu0 0.0
      %2169 = vmatpush1.msra.mxu0 %v1832
      %2170 = vmatprep.subr.mxu0 0.0
      %2171 = vmatpush1.msra.mxu0 %v1833
      %2172 = vmatprep.subr.mxu0 0.0
      %2173 = vmatpush1.msra.mxu0 0.0
      %2174 = vmatprep.subr.mxu0 0.0
      %2175 = vmatpush1.msra.mxu0 0.0
      %2176 = vmatprep.subr.mxu0 0.0
      %2177 = vmatpush1.msra.mxu0 0.0
      %2178 = vmatprep.subr.mxu0 0.0
      %2179 = vmatpush1.msra.mxu0 0.0
      %2180 = vmatprep.subr.mxu0 0.0
      %2181 = vmatpush1.msra.mxu0 0.0
      %2182 = vmatprep.subr.mxu0 0.0
      %2183 = vmatpush1.msra.mxu0 0.0
      %2184 = vmatprep.subr.mxu0 0.0
      %2185 = vmatpush1.msra.mxu0 0.0
      %2186 = vmatprep.subr.mxu0 0.0
      %2187 = vmatpush1.msra.mxu0 0.0
      %2188 = vmatprep.subr.mxu0 0.0
      %2189 = vmatpush1.msra.mxu0 0.0
      %2190 = vmatprep.subr.mxu0 0.0
      %2191 = vmatpush1.msra.mxu0 0.0
      %2192 = vmatprep.subr.mxu0 0.0
      %2193 = vmatpush1.msra.mxu0 0.0
      %2194 = vmatprep.subr.mxu0 0.0
      %2195 = vmatpush1.msra.mxu0 0.0
      %2196 = vmatprep.subr.mxu0 0.0
      %2197 = vmatpush1.msra.mxu0 0.0
      %2198 = vmatprep.subr.mxu0 0.0
      %2199 = vmatpush1.msra.mxu0 0.0
      %2200 = vmatprep.subr.mxu0 0.0
      %2201 = vmatpush1.msra.mxu0 0.0
      %2202 = vmatprep.subr.mxu0 0.0
      %2203 = vmatpush1.msra.mxu0 0.0
      %2204 = vmatprep.subr.mxu0 0.0
      %2205 = vmatpush1.msra.mxu0 0.0
      %2206 = vmatprep.subr.mxu0 0.0
      %2207 = vmatpush1.msra.mxu0 0.0
      %2208 = vmatprep.subr.mxu0 0.0
      %2209 = vmatpush1.msra.mxu0 0.0
      %2210 = vmatprep.subr.mxu0 0.0
      %2211 = vmatpush1.msra.mxu0 0.0
      %2212 = vmatprep.subr.mxu0 0.0
      %2213 = vmatpush1.msra.mxu0 0.0
      %2214 = vmatprep.subr.mxu0 0.0
      %2215 = vmatpush1.msra.mxu0 0.0
      %2216 = vmatprep.subr.mxu0 0.0
      %2217 = vmatpush1.msra.mxu0 0.0
      %2218 = vmatprep.subr.mxu0 0.0
      %2219 = vmatpush1.msra.mxu0 0.0
      %2220 = vmatprep.subr.mxu0 0.0
      %2221 = vmatpush1.msra.mxu0 0.0
      %2222 = vmatprep.subr.mxu0 0.0
      %2223 = vmatpush1.msra.mxu0 0.0
      %2224 = vmatprep.subr.mxu0 0.0
      %2225 = vmatpush1.msra.mxu0 0.0
      %2226 = vmatprep.subr.mxu0 0.0
      %2227 = vmatpush1.msra.mxu0 0.0
      %2228 = vmatprep.mubr.f32.mxu0 0.0
      %2229 = vmatmul.mubr.f32.gmra.mrb[0].mxu0 %v896
      %v2230 = vpop.f32.mrb[0].mxu0
      %v2231 = vadd.f32 0.0, %v2230
      %v2232 = vpop.f32.mrb[0].mxu0
      %2233 = vmatprep.mubr.f32.mxu0 0.0
      %2234 = vmatmul.mubr.f32.gmra.mrb[0].mxu0 %v899
      %v2235 = vpop.f32.mrb[0].mxu0
      %v2236 = vadd.f32 0.0, %v2235
      %v2237 = vpop.f32.mrb[0].mxu0
      %2238 = vmatprep.mubr.f32.mxu0 0.0
      %2239 = vmatmul.mubr.f32.gmra.mrb[0].mxu0 %v902
      %v2240 = vpop.f32.mrb[0].mxu0
      %v2241 = vadd.f32 0.0, %v2240
      %v2242 = vpop.f32.mrb[0].mxu0
      %2243 = vmatprep.mubr.f32.mxu0 0.0
      %2244 = vmatmul.mubr.f32.gmra.mrb[0].mxu0 %v905
      %v2245 = vpop.f32.mrb[0].mxu0
      %v2246 = vadd.f32 0.0, %v2245
      %v2247 = vpop.f32.mrb[0].mxu0
      %2248 = vmatprep.mubr.f32.mxu0 0.0
      %2249 = vmatmul.mubr.f32.gmra.mrb[0].mxu0 %v908
      %v2250 = vpop.f32.mrb[0].mxu0
      %v2251 = vadd.f32 0.0, %v2250
      %v2252 = vpop.f32.mrb[0].mxu0
      %2253 = vmatprep.mubr.f32.mxu0 0.0
      %2254 = vmatmul.mubr.f32.gmra.mrb[0].mxu0 %v911
      %v2255 = vpop.f32.mrb[0].mxu0
      %v2256 = vadd.f32 0.0, %v2255
      %v2257 = vpop.f32.mrb[0].mxu0
      %2258 = vmatprep.mubr.f32.mxu0 0.0
      %2259 = vmatmul.mubr.f32.gmra.mrb[0].mxu0 %v914
      %v2260 = vpop.f32.mrb[0].mxu0
      %v2261 = vadd.f32 0.0, %v2260
      %v2262 = vpop.f32.mrb[0].mxu0
      %2263 = vmatprep.mubr.f32.mxu0 0.0
      %2264 = vmatmul.mubr.f32.gmra.mrb[0].mxu0 %v917
      %v2265 = vpop.f32.mrb[0].mxu0
      %v2266 = vadd.f32 0.0, %v2265
      %v2267 = vpop.f32.mrb[0].mxu0
      %2268 = vmatprep.mubr.f32.mxu0 0.0
      %2269 = vmatmul.mubr.f32.gmra.mrb[0].mxu0 %v920
      %v2270 = vpop.f32.mrb[0].mxu0
      %v2271 = vadd.f32 0.0, %v2270
      %v2272 = vpop.f32.mrb[0].mxu0
      %2273 = vdwg.mxu0
      %vm2274 = vcmask 64512
      %v2276 = vsel %vm2274, %v989, 0
      %v2279 = vsel %vm2274, %v994, 0
      %v2282 = vsel %vm2274, %v999, 0
      %v2285 = vsel %vm2274, %v1004, 0
      %v2288 = vsel %vm2274, %v1009, 0
      %v2291 = vsel %vm2274, %v1014, 0
      %v2294 = vsel %vm2274, %v1019, 0
      %v2297 = vsel %vm2274, %v1024, 0
      %v2300 = vsel %vm2274, %v1029, 0
      %v2303 = vsel %vm2274, %v1445, 0
      %v2306 = vsel %vm2274, %v1450, 0
      %v2309 = vsel %vm2274, %v1455, 0
      %v2312 = vsel %vm2274, %v1460, 0
      %v2315 = vsel %vm2274, %v1465, 0
      %v2318 = vsel %vm2274, %v1470, 0
      %v2321 = vsel %vm2274, %v1475, 0
      %v2324 = vsel %vm2274, %v1480, 0
      %v2327 = vsel %vm2274, %v1485, 0
      %2329 = vmatprep.subr.mxu0 0.0
      %2330 = vmatpush1.xpose.msra.mxu0 %v2303
      %2331 = vmatprep.subr.mxu0 0.0
      %2332 = vmatpush1.xpose.msra.mxu0 %v2306
      %2333 = vmatprep.subr.mxu0 0.0
      %2334 = vmatpush1.xpose.msra.mxu0 %v2309
      %2335 = vmatprep.subr.mxu0 0.0
      %2336 = vmatpush1.xpose.msra.mxu0 %v2312
      %2337 = vmatprep.subr.mxu0 0.0
      %2338 = vmatpush1.xpose.msra.mxu0 %v2315
      %2339 = vmatprep.subr.mxu0 0.0
      %2340 = vmatpush1.xpose.msra.mxu0 %v2318
      %2341 = vmatprep.subr.mxu0 0.0
      %2342 = vmatpush1.xpose.msra.mxu0 %v2321
      %2343 = vmatprep.subr.mxu0 0.0
      %2344 = vmatpush1.xpose.msra.mxu0 %v2324
      %2345 = vmatprep.subr.mxu0 0.0
      %2346 = vmatpush1.xpose.msra.mxu0 %v2327
      %2347 = vmatprep.subr.mxu0 0.0
      %2348 = vmatpush1.xpose.msra.mxu0 0.0
      %2349 = vmatprep.subr.mxu0 0.0
      %2350 = vmatpush1.xpose.msra.mxu0 0.0
      %2351 = vmatprep.subr.mxu0 0.0
      %2352 = vmatpush1.xpose.msra.mxu0 0.0
      %2353 = vmatprep.subr.mxu0 0.0
      %2354 = vmatpush1.xpose.msra.mxu0 0.0
      %2355 = vmatprep.subr.mxu0 0.0
      %2356 = vmatpush1.xpose.msra.mxu0 0.0
      %2357 = vmatprep.subr.mxu0 0.0
      %2358 = vmatpush1.xpose.msra.mxu0 0.0
      %2359 = vmatprep.subr.mxu0 0.0
      %2360 = vmatpush1.xpose.msra.mxu0 0.0
      %2361 = vmatprep.subr.mxu0 0.0
      %2362 = vmatpush1.xpose.msra.mxu0 0.0
      %2363 = vmatprep.subr.mxu0 0.0
      %2364 = vmatpush1.xpose.msra.mxu0 0.0
      %2365 = vmatprep.subr.mxu0 0.0
      %2366 = vmatpush1.xpose.msra.mxu0 0.0
      %2367 = vmatprep.subr.mxu0 0.0
      %2368 = vmatpush1.xpose.msra.mxu0 0.0
      %2369 = vmatprep.subr.mxu0 0.0
      %2370 = vmatpush1.xpose.msra.mxu0 0.0
      %2371 = vmatprep.subr.mxu0 0.0
      %2372 = vmatpush1.xpose.msra.mxu0 0.0
      %2373 = vmatprep.subr.mxu0 0.0
      %2374 = vmatpush1.xpose.msra.mxu0 0.0
      %2375 = vmatprep.subr.mxu0 0.0
      %2376 = vmatpush1.xpose.msra.mxu0 0.0
      %2377 = vmatprep.subr.mxu0 0.0
      %2378 = vmatpush1.xpose.msra.mxu0 0.0
      %2379 = vmatprep.subr.mxu0 0.0
      %2380 = vmatpush1.xpose.msra.mxu0 0.0
      %2381 = vmatprep.subr.mxu0 0.0
      %2382 = vmatpush1.xpose.msra.mxu0 0.0
      %2383 = vmatprep.subr.mxu0 0.0
      %2384 = vmatpush1.xpose.msra.mxu0 0.0
      %2385 = vmatprep.subr.mxu0 0.0
      %2386 = vmatpush1.xpose.msra.mxu0 0.0
      %2387 = vmatprep.subr.mxu0 0.0
      %2388 = vmatpush1.xpose.msra.mxu0 0.0
      %2389 = vmatprep.subr.mxu0 0.0
      %2390 = vmatpush1.xpose.msra.mxu0 0.0
      %2391 = vmatprep.subr.mxu0 0.0
      %2392 = vmatpush1.xpose.msra.mxu0 0.0
      %2393 = vmatprep.mubr.f32.mxu0 0.0
      %2394 = vmatmul.mubr.f32.gmra.mrb[0].mxu0 %v2276
      %v2395 = vpop.f32.mrb[0].mxu0
      %v2396 = vadd.f32 0.0, %v2395
      %v2397 = vpop.f32.mrb[0].mxu0
      %2398 = vmatprep.mubr.f32.mxu0 0.0
      %2399 = vmatmul.mubr.f32.gmra.mrb[0].mxu0 %v2279
      %v2400 = vpop.f32.mrb[0].mxu0
      %v2401 = vadd.f32 0.0, %v2400
      %v2402 = vpop.f32.mrb[0].mxu0
      %2403 = vmatprep.mubr.f32.mxu0 0.0
      %2404 = vmatmul.mubr.f32.gmra.mrb[0].mxu0 %v2282
      %v2405 = vpop.f32.mrb[0].mxu0
      %v2406 = vadd.f32 0.0, %v2405
      %v2407 = vpop.f32.mrb[0].mxu0
      %2408 = vmatprep.mubr.f32.mxu0 0.0
      %2409 = vmatmul.mubr.f32.gmra.mrb[0].mxu0 %v2285
      %v2410 = vpop.f32.mrb[0].mxu0
      %v2411 = vadd.f32 0.0, %v2410
      %v2412 = vpop.f32.mrb[0].mxu0
      %2413 = vmatprep.mubr.f32.mxu0 0.0
      %2414 = vmatmul.mubr.f32.gmra.mrb[0].mxu0 %v2288
      %v2415 = vpop.f32.mrb[0].mxu0
      %v2416 = vadd.f32 0.0, %v2415
      %v2417 = vpop.f32.mrb[0].mxu0
      %2418 = vmatprep.mubr.f32.mxu0 0.0
      %2419 = vmatmul.mubr.f32.gmra.mrb[0].mxu0 %v2291
      %v2420 = vpop.f32.mrb[0].mxu0
      %v2421 = vadd.f32 0.0, %v2420
      %v2422 = vpop.f32.mrb[0].mxu0
      %2423 = vmatprep.mubr.f32.mxu0 0.0
      %2424 = vmatmul.mubr.f32.gmra.mrb[0].mxu0 %v2294
      %v2425 = vpop.f32.mrb[0].mxu0
      %v2426 = vadd.f32 0.0, %v2425
      %v2427 = vpop.f32.mrb[0].mxu0
      %2428 = vmatprep.mubr.f32.mxu0 0.0
      %2429 = vmatmul.mubr.f32.gmra.mrb[0].mxu0 %v2297
      %v2430 = vpop.f32.mrb[0].mxu0
      %v2431 = vadd.f32 0.0, %v2430
      %v2432 = vpop.f32.mrb[0].mxu0
      %2433 = vmatprep.mubr.f32.mxu0 0.0
      %2434 = vmatmul.mubr.f32.gmra.mrb[0].mxu0 %v2300
      %v2435 = vpop.f32.mrb[0].mxu0
      %v2436 = vadd.f32 0.0, %v2435
      %v2437 = vpop.f32.mrb[0].mxu0
      %2438 = vdwg.mxu0
      %v2440 = vsel %vm2274, %v1099, 0
      %v2443 = vsel %vm2274, %v1104, 0
      %v2446 = vsel %vm2274, %v1109, 0
      %v2449 = vsel %vm2274, %v1114, 0
      %v2452 = vsel %vm2274, %v1119, 0
      %v2455 = vsel %vm2274, %v1124, 0
      %v2458 = vsel %vm2274, %v1129, 0
      %v2461 = vsel %vm2274, %v1134, 0
      %v2464 = vsel %vm2274, %v1139, 0
      %v2467 = vsel %vm2274, %v1555, 0
      %v2470 = vsel %vm2274, %v1560, 0
      %v2473 = vsel %vm2274, %v1565, 0
      %v2476 = vsel %vm2274, %v1570, 0
      %v2479 = vsel %vm2274, %v1575, 0
      %v2482 = vsel %vm2274, %v1580, 0
      %v2485 = vsel %vm2274, %v1585, 0
      %v2488 = vsel %vm2274, %v1590, 0
      %v2491 = vsel %vm2274, %v1595, 0
      %2493 = vmatprep.subr.mxu0 0.0
      %2494 = vmatpush1.xpose.msra.mxu0 %v2467
      %2495 = vmatprep.subr.mxu0 0.0
      %2496 = vmatpush1.xpose.msra.mxu0 %v2470
      %2497 = vmatprep.subr.mxu0 0.0
      %2498 = vmatpush1.xpose.msra.mxu0 %v2473
      %2499 = vmatprep.subr.mxu0 0.0
      %2500 = vmatpush1.xpose.msra.mxu0 %v2476
      %2501 = vmatprep.subr.mxu0 0.0
      %2502 = vmatpush1.xpose.msra.mxu0 %v2479
      %2503 = vmatprep.subr.mxu0 0.0
      %2504 = vmatpush1.xpose.msra.mxu0 %v2482
      %2505 = vmatprep.subr.mxu0 0.0
      %2506 = vmatpush1.xpose.msra.mxu0 %v2485
      %2507 = vmatprep.subr.mxu0 0.0
      %2508 = vmatpush1.xpose.msra.mxu0 %v2488
      %2509 = vmatprep.subr.mxu0 0.0
      %2510 = vmatpush1.xpose.msra.mxu0 %v2491
      %2511 = vmatprep.subr.mxu0 0.0
      %2512 = vmatpush1.xpose.msra.mxu0 0.0
      %2513 = vmatprep.subr.mxu0 0.0
      %2514 = vmatpush1.xpose.msra.mxu0 0.0
      %2515 = vmatprep.subr.mxu0 0.0
      %2516 = vmatpush1.xpose.msra.mxu0 0.0
      %2517 = vmatprep.subr.mxu0 0.0
      %2518 = vmatpush1.xpose.msra.mxu0 0.0
      %2519 = vmatprep.subr.mxu0 0.0
      %2520 = vmatpush1.xpose.msra.mxu0 0.0
      %2521 = vmatprep.subr.mxu0 0.0
      %2522 = vmatpush1.xpose.msra.mxu0 0.0
      %2523 = vmatprep.subr.mxu0 0.0
      %2524 = vmatpush1.xpose.msra.mxu0 0.0
      %2525 = vmatprep.subr.mxu0 0.0
      %2526 = vmatpush1.xpose.msra.mxu0 0.0
      %2527 = vmatprep.subr.mxu0 0.0
      %2528 = vmatpush1.xpose.msra.mxu0 0.0
      %2529 = vmatprep.subr.mxu0 0.0
      %2530 = vmatpush1.xpose.msra.mxu0 0.0
      %2531 = vmatprep.subr.mxu0 0.0
      %2532 = vmatpush1.xpose.msra.mxu0 0.0
      %2533 = vmatprep.subr.mxu0 0.0
      %2534 = vmatpush1.xpose.msra.mxu0 0.0
      %2535 = vmatprep.subr.mxu0 0.0
      %2536 = vmatpush1.xpose.msra.mxu0 0.0
      %2537 = vmatprep.subr.mxu0 0.0
      %2538 = vmatpush1.xpose.msra.mxu0 0.0
      %2539 = vmatprep.subr.mxu0 0.0
      %2540 = vmatpush1.xpose.msra.mxu0 0.0
      %2541 = vmatprep.subr.mxu0 0.0
      %2542 = vmatpush1.xpose.msra.mxu0 0.0
      %2543 = vmatprep.subr.mxu0 0.0
      %2544 = vmatpush1.xpose.msra.mxu0 0.0
      %2545 = vmatprep.subr.mxu0 0.0
      %2546 = vmatpush1.xpose.msra.mxu0 0.0
      %2547 = vmatprep.subr.mxu0 0.0
      %2548 = vmatpush1.xpose.msra.mxu0 0.0
      %2549 = vmatprep.subr.mxu0 0.0
      %2550 = vmatpush1.xpose.msra.mxu0 0.0
      %2551 = vmatprep.subr.mxu0 0.0
      %2552 = vmatpush1.xpose.msra.mxu0 0.0
      %2553 = vmatprep.subr.mxu0 0.0
      %2554 = vmatpush1.xpose.msra.mxu0 0.0
      %2555 = vmatprep.subr.mxu0 0.0
      %2556 = vmatpush1.xpose.msra.mxu0 0.0
      %2557 = vmatprep.mubr.f32.mxu0 0.0
      %2558 = vmatmul.mubr.f32.gmra.mrb[0].mxu0 %v2440
      %v2559 = vpop.f32.mrb[0].mxu0
      %v2560 = vadd.f32 0.0, %v2559
      %v2561 = vpop.f32.mrb[0].mxu0
      %2562 = vmatprep.mubr.f32.mxu0 0.0
      %2563 = vmatmul.mubr.f32.gmra.mrb[0].mxu0 %v2443
      %v2564 = vpop.f32.mrb[0].mxu0
      %v2565 = vadd.f32 0.0, %v2564
      %v2566 = vpop.f32.mrb[0].mxu0
      %2567 = vmatprep.mubr.f32.mxu0 0.0
      %2568 = vmatmul.mubr.f32.gmra.mrb[0].mxu0 %v2446
      %v2569 = vpop.f32.mrb[0].mxu0
      %v2570 = vadd.f32 0.0, %v2569
      %v2571 = vpop.f32.mrb[0].mxu0
      %2572 = vmatprep.mubr.f32.mxu0 0.0
      %2573 = vmatmul.mubr.f32.gmra.mrb[0].mxu0 %v2449
      %v2574 = vpop.f32.mrb[0].mxu0
      %v2575 = vadd.f32 0.0, %v2574
      %v2576 = vpop.f32.mrb[0].mxu0
      %2577 = vmatprep.mubr.f32.mxu0 0.0
      %2578 = vmatmul.mubr.f32.gmra.mrb[0].mxu0 %v2452
      %v2579 = vpop.f32.mrb[0].mxu0
      %v2580 = vadd.f32 0.0, %v2579
      %v2581 = vpop.f32.mrb[0].mxu0
      %2582 = vmatprep.mubr.f32.mxu0 0.0
      %2583 = vmatmul.mubr.f32.gmra.mrb[0].mxu0 %v2455
      %v2584 = vpop.f32.mrb[0].mxu0
      %v2585 = vadd.f32 0.0, %v2584
      %v2586 = vpop.f32.mrb[0].mxu0
      %2587 = vmatprep.mubr.f32.mxu0 0.0
      %2588 = vmatmul.mubr.f32.gmra.mrb[0].mxu0 %v2458
      %v2589 = vpop.f32.mrb[0].mxu0
      %v2590 = vadd.f32 0.0, %v2589
      %v2591 = vpop.f32.mrb[0].mxu0
      %2592 = vmatprep.mubr.f32.mxu0 0.0
      %2593 = vmatmul.mubr.f32.gmra.mrb[0].mxu0 %v2461
      %v2594 = vpop.f32.mrb[0].mxu0
      %v2595 = vadd.f32 0.0, %v2594
      %v2596 = vpop.f32.mrb[0].mxu0
      %2597 = vmatprep.mubr.f32.mxu0 0.0
      %2598 = vmatmul.mubr.f32.gmra.mrb[0].mxu0 %v2464
      %v2599 = vpop.f32.mrb[0].mxu0
      %v2600 = vadd.f32 0.0, %v2599
      %v2601 = vpop.f32.mrb[0].mxu0
      %2602 = vdwg.mxu0
      %v2604 = vsel %vm2274, %v1209, 0
      %v2607 = vsel %vm2274, %v1214, 0
      %v2610 = vsel %vm2274, %v1219, 0
      %v2613 = vsel %vm2274, %v1224, 0
      %v2616 = vsel %vm2274, %v1229, 0
      %v2619 = vsel %vm2274, %v1234, 0
      %v2622 = vsel %vm2274, %v1239, 0
      %v2625 = vsel %vm2274, %v1244, 0
      %v2628 = vsel %vm2274, %v1249, 0
      %v2631 = vsel %vm2274, %v1665, 0
      %v2634 = vsel %vm2274, %v1670, 0
      %v2637 = vsel %vm2274, %v1675, 0
      %v2640 = vsel %vm2274, %v1680, 0
      %v2643 = vsel %vm2274, %v1685, 0
      %v2646 = vsel %vm2274, %v1690, 0
      %v2649 = vsel %vm2274, %v1695, 0
      %v2652 = vsel %vm2274, %v1700, 0
      %v2655 = vsel %vm2274, %v1705, 0
      %2657 = vmatprep.subr.mxu0 0.0
      %2658 = vmatpush1.xpose.msra.mxu0 %v2631
      %2659 = vmatprep.subr.mxu0 0.0
      %2660 = vmatpush1.xpose.msra.mxu0 %v2634
      %2661 = vmatprep.subr.mxu0 0.0
      %2662 = vmatpush1.xpose.msra.mxu0 %v2637
      %2663 = vmatprep.subr.mxu0 0.0
      %2664 = vmatpush1.xpose.msra.mxu0 %v2640
      %2665 = vmatprep.subr.mxu0 0.0
      %2666 = vmatpush1.xpose.msra.mxu0 %v2643
      %2667 = vmatprep.subr.mxu0 0.0
      %2668 = vmatpush1.xpose.msra.mxu0 %v2646
      %2669 = vmatprep.subr.mxu0 0.0
      %2670 = vmatpush1.xpose.msra.mxu0 %v2649
      %2671 = vmatprep.subr.mxu0 0.0
      %2672 = vmatpush1.xpose.msra.mxu0 %v2652
      %2673 = vmatprep.subr.mxu0 0.0
      %2674 = vmatpush1.xpose.msra.mxu0 %v2655
      %2675 = vmatprep.subr.mxu0 0.0
      %2676 = vmatpush1.xpose.msra.mxu0 0.0
      %2677 = vmatprep.subr.mxu0 0.0
      %2678 = vmatpush1.xpose.msra.mxu0 0.0
      %2679 = vmatprep.subr.mxu0 0.0
      %2680 = vmatpush1.xpose.msra.mxu0 0.0
      %2681 = vmatprep.subr.mxu0 0.0
      %2682 = vmatpush1.xpose.msra.mxu0 0.0
      %2683 = vmatprep.subr.mxu0 0.0
      %2684 = vmatpush1.xpose.msra.mxu0 0.0
      %2685 = vmatprep.subr.mxu0 0.0
      %2686 = vmatpush1.xpose.msra.mxu0 0.0
      %2687 = vmatprep.subr.mxu0 0.0
      %2688 = vmatpush1.xpose.msra.mxu0 0.0
      %2689 = vmatprep.subr.mxu0 0.0
      %2690 = vmatpush1.xpose.msra.mxu0 0.0
      %2691 = vmatprep.subr.mxu0 0.0
      %2692 = vmatpush1.xpose.msra.mxu0 0.0
      %2693 = vmatprep.subr.mxu0 0.0
      %2694 = vmatpush1.xpose.msra.mxu0 0.0
      %2695 = vmatprep.subr.mxu0 0.0
      %2696 = vmatpush1.xpose.msra.mxu0 0.0
      %2697 = vmatprep.subr.mxu0 0.0
      %2698 = vmatpush1.xpose.msra.mxu0 0.0
      %2699 = vmatprep.subr.mxu0 0.0
      %2700 = vmatpush1.xpose.msra.mxu0 0.0
      %2701 = vmatprep.subr.mxu0 0.0
      %2702 = vmatpush1.xpose.msra.mxu0 0.0
      %2703 = vmatprep.subr.mxu0 0.0
      %2704 = vmatpush1.xpose.msra.mxu0 0.0
      %2705 = vmatprep.subr.mxu0 0.0
      %2706 = vmatpush1.xpose.msra.mxu0 0.0
      %2707 = vmatprep.subr.mxu0 0.0
      %2708 = vmatpush1.xpose.msra.mxu0 0.0
      %2709 = vmatprep.subr.mxu0 0.0
      %2710 = vmatpush1.xpose.msra.mxu0 0.0
      %2711 = vmatprep.subr.mxu0 0.0
      %2712 = vmatpush1.xpose.msra.mxu0 0.0
      %2713 = vmatprep.subr.mxu0 0.0
      %2714 = vmatpush1.xpose.msra.mxu0 0.0
      %2715 = vmatprep.subr.mxu0 0.0
      %2716 = vmatpush1.xpose.msra.mxu0 0.0
      %2717 = vmatprep.subr.mxu0 0.0
      %2718 = vmatpush1.xpose.msra.mxu0 0.0
      %2719 = vmatprep.subr.mxu0 0.0
      %2720 = vmatpush1.xpose.msra.mxu0 0.0
      %2721 = vmatprep.mubr.f32.mxu0 0.0
      %2722 = vmatmul.mubr.f32.gmra.mrb[0].mxu0 %v2604
      %v2723 = vpop.f32.mrb[0].mxu0
      %v2724 = vadd.f32 0.0, %v2723
      %v2725 = vpop.f32.mrb[0].mxu0
      %2726 = vmatprep.mubr.f32.mxu0 0.0
      %2727 = vmatmul.mubr.f32.gmra.mrb[0].mxu0 %v2607
      %v2728 = vpop.f32.mrb[0].mxu0
      %v2729 = vadd.f32 0.0, %v2728
      %v2730 = vpop.f32.mrb[0].mxu0
      %2731 = vmatprep.mubr.f32.mxu0 0.0
      %2732 = vmatmul.mubr.f32.gmra.mrb[0].mxu0 %v2610
      %v2733 = vpop.f32.mrb[0].mxu0
      %v2734 = vadd.f32 0.0, %v2733
      %v2735 = vpop.f32.mrb[0].mxu0
      %2736 = vmatprep.mubr.f32.mxu0 0.0
      %2737 = vmatmul.mubr.f32.gmra.mrb[0].mxu0 %v2613
      %v2738 = vpop.f32.mrb[0].mxu0
      %v2739 = vadd.f32 0.0, %v2738
      %v2740 = vpop.f32.mrb[0].mxu0
      %2741 = vmatprep.mubr.f32.mxu0 0.0
      %2742 = vmatmul.mubr.f32.gmra.mrb[0].mxu0 %v2616
      %v2743 = vpop.f32.mrb[0].mxu0
      %v2744 = vadd.f32 0.0, %v2743
      %v2745 = vpop.f32.mrb[0].mxu0
      %2746 = vmatprep.mubr.f32.mxu0 0.0
      %2747 = vmatmul.mubr.f32.gmra.mrb[0].mxu0 %v2619
      %v2748 = vpop.f32.mrb[0].mxu0
      %v2749 = vadd.f32 0.0, %v2748
      %v2750 = vpop.f32.mrb[0].mxu0
      %2751 = vmatprep.mubr.f32.mxu0 0.0
      %2752 = vmatmul.mubr.f32.gmra.mrb[0].mxu0 %v2622
      %v2753 = vpop.f32.mrb[0].mxu0
      %v2754 = vadd.f32 0.0, %v2753
      %v2755 = vpop.f32.mrb[0].mxu0
      %2756 = vmatprep.mubr.f32.mxu0 0.0
      %2757 = vmatmul.mubr.f32.gmra.mrb[0].mxu0 %v2625
      %v2758 = vpop.f32.mrb[0].mxu0
      %v2759 = vadd.f32 0.0, %v2758
      %v2760 = vpop.f32.mrb[0].mxu0
      %2761 = vmatprep.mubr.f32.mxu0 0.0
      %2762 = vmatmul.mubr.f32.gmra.mrb[0].mxu0 %v2628
      %v2763 = vpop.f32.mrb[0].mxu0
      %v2764 = vadd.f32 0.0, %v2763
      %v2765 = vpop.f32.mrb[0].mxu0
      %2766 = vdwg.mxu0
      %v2768 = vsel %vm2274, %v1319, 0
      %v2771 = vsel %vm2274, %v1324, 0
      %v2774 = vsel %vm2274, %v1329, 0
      %v2777 = vsel %vm2274, %v1334, 0
      %v2780 = vsel %vm2274, %v1339, 0
      %v2783 = vsel %vm2274, %v1344, 0
      %v2786 = vsel %vm2274, %v1349, 0
      %v2789 = vsel %vm2274, %v1354, 0
      %v2792 = vsel %vm2274, %v1359, 0
      %v2795 = vsel %vm2274, %v1775, 0
      %v2798 = vsel %vm2274, %v1780, 0
      %v2801 = vsel %vm2274, %v1785, 0
      %v2804 = vsel %vm2274, %v1790, 0
      %v2807 = vsel %vm2274, %v1795, 0
      %v2810 = vsel %vm2274, %v1800, 0
      %v2813 = vsel %vm2274, %v1805, 0
      %v2816 = vsel %vm2274, %v1810, 0
      %v2819 = vsel %vm2274, %v1815, 0
      %2821 = vmatprep.subr.mxu0 0.0
      %2822 = vmatpush1.xpose.msra.mxu0 %v2795
      %2823 = vmatprep.subr.mxu0 0.0
      %2824 = vmatpush1.xpose.msra.mxu0 %v2798
      %2825 = vmatprep.subr.mxu0 0.0
      %2826 = vmatpush1.xpose.msra.mxu0 %v2801
      %2827 = vmatprep.subr.mxu0 0.0
      %2828 = vmatpush1.xpose.msra.mxu0 %v2804
      %2829 = vmatprep.subr.mxu0 0.0
      %2830 = vmatpush1.xpose.msra.mxu0 %v2807
      %2831 = vmatprep.subr.mxu0 0.0
      %2832 = vmatpush1.xpose.msra.mxu0 %v2810
      %2833 = vmatprep.subr.mxu0 0.0
      %2834 = vmatpush1.xpose.msra.mxu0 %v2813
      %2835 = vmatprep.subr.mxu0 0.0
      %2836 = vmatpush1.xpose.msra.mxu0 %v2816
      %2837 = vmatprep.subr.mxu0 0.0
      %2838 = vmatpush1.xpose.msra.mxu0 %v2819
      %2839 = vmatprep.subr.mxu0 0.0
      %2840 = vmatpush1.xpose.msra.mxu0 0.0
      %2841 = vmatprep.subr.mxu0 0.0
      %2842 = vmatpush1.xpose.msra.mxu0 0.0
      %2843 = vmatprep.subr.mxu0 0.0
      %2844 = vmatpush1.xpose.msra.mxu0 0.0
      %2845 = vmatprep.subr.mxu0 0.0
      %2846 = vmatpush1.xpose.msra.mxu0 0.0
      %2847 = vmatprep.subr.mxu0 0.0
      %2848 = vmatpush1.xpose.msra.mxu0 0.0
      %2849 = vmatprep.subr.mxu0 0.0
      %2850 = vmatpush1.xpose.msra.mxu0 0.0
      %2851 = vmatprep.subr.mxu0 0.0
      %2852 = vmatpush1.xpose.msra.mxu0 0.0
      %2853 = vmatprep.subr.mxu0 0.0
      %2854 = vmatpush1.xpose.msra.mxu0 0.0
      %2855 = vmatprep.subr.mxu0 0.0
      %2856 = vmatpush1.xpose.msra.mxu0 0.0
      %2857 = vmatprep.subr.mxu0 0.0
      %2858 = vmatpush1.xpose.msra.mxu0 0.0
      %2859 = vmatprep.subr.mxu0 0.0
      %2860 = vmatpush1.xpose.msra.mxu0 0.0
      %2861 = vmatprep.subr.mxu0 0.0
      %2862 = vmatpush1.xpose.msra.mxu0 0.0
      %2863 = vmatprep.subr.mxu0 0.0
      %2864 = vmatpush1.xpose.msra.mxu0 0.0
      %2865 = vmatprep.subr.mxu0 0.0
      %2866 = vmatpush1.xpose.msra.mxu0 0.0
      %2867 = vmatprep.subr.mxu0 0.0
      %2868 = vmatpush1.xpose.msra.mxu0 0.0
      %2869 = vmatprep.subr.mxu0 0.0
      %2870 = vmatpush1.xpose.msra.mxu0 0.0
      %2871 = vmatprep.subr.mxu0 0.0
      %2872 = vmatpush1.xpose.msra.mxu0 0.0
      %2873 = vmatprep.subr.mxu0 0.0
      %2874 = vmatpush1.xpose.msra.mxu0 0.0
      %2875 = vmatprep.subr.mxu0 0.0
      %2876 = vmatpush1.xpose.msra.mxu0 0.0
      %2877 = vmatprep.subr.mxu0 0.0
      %2878 = vmatpush1.xpose.msra.mxu0 0.0
      %2879 = vmatprep.subr.mxu0 0.0
      %2880 = vmatpush1.xpose.msra.mxu0 0.0
      %2881 = vmatprep.subr.mxu0 0.0
      %2882 = vmatpush1.xpose.msra.mxu0 0.0
      %2883 = vmatprep.subr.mxu0 0.0
      %2884 = vmatpush1.xpose.msra.mxu0 0.0
      %2885 = vmatprep.mubr.f32.mxu0 0.0
      %2886 = vmatmul.mubr.f32.gmra.mrb[0].mxu0 %v2768
      %v2887 = vpop.f32.mrb[0].mxu0
      %v2888 = vadd.f32 0.0, %v2887
      %v2889 = vpop.f32.mrb[0].mxu0
      %2890 = vmatprep.mubr.f32.mxu0 0.0
      %2891 = vmatmul.mubr.f32.gmra.mrb[0].mxu0 %v2771
      %v2892 = vpop.f32.mrb[0].mxu0
      %v2893 = vadd.f32 0.0, %v2892
      %v2894 = vpop.f32.mrb[0].mxu0
      %2895 = vmatprep.mubr.f32.mxu0 0.0
      %2896 = vmatmul.mubr.f32.gmra.mrb[0].mxu0 %v2774
      %v2897 = vpop.f32.mrb[0].mxu0
      %v2898 = vadd.f32 0.0, %v2897
      %v2899 = vpop.f32.mrb[0].mxu0
      %2900 = vmatprep.mubr.f32.mxu0 0.0
      %2901 = vmatmul.mubr.f32.gmra.mrb[0].mxu0 %v2777
      %v2902 = vpop.f32.mrb[0].mxu0
      %v2903 = vadd.f32 0.0, %v2902
      %v2904 = vpop.f32.mrb[0].mxu0
      %2905 = vmatprep.mubr.f32.mxu0 0.0
      %2906 = vmatmul.mubr.f32.gmra.mrb[0].mxu0 %v2780
      %v2907 = vpop.f32.mrb[0].mxu0
      %v2908 = vadd.f32 0.0, %v2907
      %v2909 = vpop.f32.mrb[0].mxu0
      %2910 = vmatprep.mubr.f32.mxu0 0.0
      %2911 = vmatmul.mubr.f32.gmra.mrb[0].mxu0 %v2783
      %v2912 = vpop.f32.mrb[0].mxu0
      %v2913 = vadd.f32 0.0, %v2912
      %v2914 = vpop.f32.mrb[0].mxu0
      %2915 = vmatprep.mubr.f32.mxu0 0.0
      %2916 = vmatmul.mubr.f32.gmra.mrb[0].mxu0 %v2786
      %v2917 = vpop.f32.mrb[0].mxu0
      %v2918 = vadd.f32 0.0, %v2917
      %v2919 = vpop.f32.mrb[0].mxu0
      %2920 = vmatprep.mubr.f32.mxu0 0.0
      %2921 = vmatmul.mubr.f32.gmra.mrb[0].mxu0 %v2789
      %v2922 = vpop.f32.mrb[0].mxu0
      %v2923 = vadd.f32 0.0, %v2922
      %v2924 = vpop.f32.mrb[0].mxu0
      %2925 = vmatprep.mubr.f32.mxu0 0.0
      %2926 = vmatmul.mubr.f32.gmra.mrb[0].mxu0 %v2792
      %v2927 = vpop.f32.mrb[0].mxu0
      %v2928 = vadd.f32 0.0, %v2927
      %v2929 = vpop.f32.mrb[0].mxu0
      %2930 = vdwg.mxu0
      %v2931 = vmul.f32 %v2396, 0.17677669
      %v2932 = vmul.f32 %v2401, 0.17677669
      %v2933 = vmul.f32 %v2406, 0.17677669
      %v2934 = vmul.f32 %v2411, 0.17677669
      %v2935 = vmul.f32 %v2416, 0.17677669
      %v2936 = vmul.f32 %v2421, 0.17677669
      %v2937 = vmul.f32 %v2426, 0.17677669
      %v2938 = vmul.f32 %v2431, 0.17677669
      %v2939 = vmul.f32 %v2436, 0.17677669
      %v2940 = vmul.f32 %v2560, 0.17677669
      %v2941 = vmul.f32 %v2565, 0.17677669
      %v2942 = vmul.f32 %v2570, 0.17677669
      %v2943 = vmul.f32 %v2575, 0.17677669
      %v2944 = vmul.f32 %v2580, 0.17677669
      %v2945 = vmul.f32 %v2585, 0.17677669
      %v2946 = vmul.f32 %v2590, 0.17677669
      %v2947 = vmul.f32 %v2595, 0.17677669
      %v2948 = vmul.f32 %v2600, 0.17677669
      %v2949 = vmul.f32 %v2724, 0.17677669
      %v2950 = vmul.f32 %v2729, 0.17677669
      %v2951 = vmul.f32 %v2734, 0.17677669
      %v2952 = vmul.f32 %v2739, 0.17677669
      %v2953 = vmul.f32 %v2744, 0.17677669
      %v2954 = vmul.f32 %v2749, 0.17677669
      %v2955 = vmul.f32 %v2754, 0.17677669
      %v2956 = vmul.f32 %v2759, 0.17677669
      %v2957 = vmul.f32 %v2764, 0.17677669
      %v2958 = vmul.f32 %v2888, 0.17677669
      %v2959 = vmul.f32 %v2893, 0.17677669
      %v2960 = vmul.f32 %v2898, 0.17677669
      %v2961 = vmul.f32 %v2903, 0.17677669
      %v2962 = vmul.f32 %v2908, 0.17677669
      %v2963 = vmul.f32 %v2913, 0.17677669
      %v2964 = vmul.f32 %v2918, 0.17677669
      %v2965 = vmul.f32 %v2923, 0.17677669
      %v2966 = vmul.f32 %v2928, 0.17677669
      %vm2967 = vcmask 531456
      %v2968 = vsel %vm2967, %v2931, -inf
      %2969 = vmax.xlane.f32.xlu0 %v2968
      %v2970 = vpop.xlane.xlu0 %2969
      %v2971 = vsel %vm2967, %v2932, -inf
      %2972 = vmax.xlane.f32.xlu0 %v2971
      %v2973 = vpop.xlane.xlu0 %2972
      %v2974 = vsel %vm2967, %v2933, -inf
      %2975 = vmax.xlane.f32.xlu0 %v2974
      %v2976 = vpop.xlane.xlu0 %2975
      %v2977 = vsel %vm2967, %v2934, -inf
      %2978 = vmax.xlane.f32.xlu0 %v2977
      %v2979 = vpop.xlane.xlu0 %2978
      %v2980 = vsel %vm2967, %v2935, -inf
      %2981 = vmax.xlane.f32.xlu0 %v2980
      %v2982 = vpop.xlane.xlu0 %2981
      %v2983 = vsel %vm2967, %v2936, -inf
      %2984 = vmax.xlane.f32.xlu0 %v2983
      %v2985 = vpop.xlane.xlu0 %2984
      %v2986 = vsel %vm2967, %v2937, -inf
      %2987 = vmax.xlane.f32.xlu0 %v2986
      %v2988 = vpop.xlane.xlu0 %2987
      %v2989 = vsel %vm2967, %v2938, -inf
      %2990 = vmax.xlane.f32.xlu0 %v2989
      %v2991 = vpop.xlane.xlu0 %2990
      %vm2992 = vcmask 524288
      %v2993 = vsel %vm2992, %v2939, -inf
      %2994 = vmax.xlane.f32.xlu0 %v2993
      %v2995 = vpop.xlane.xlu0 %2994
      %v2996 = vsel %vm2967, %v2940, -inf
      %2997 = vmax.xlane.f32.xlu0 %v2996
      %v2998 = vpop.xlane.xlu0 %2997
      %v2999 = vsel %vm2967, %v2941, -inf
      %3000 = vmax.xlane.f32.xlu0 %v2999
      %v3001 = vpop.xlane.xlu0 %3000
      %v3002 = vsel %vm2967, %v2942, -inf
      %3003 = vmax.xlane.f32.xlu0 %v3002
      %v3004 = vpop.xlane.xlu0 %3003
      %v3005 = vsel %vm2967, %v2943, -inf
      %3006 = vmax.xlane.f32.xlu0 %v3005
      %v3007 = vpop.xlane.xlu0 %3006
      %v3008 = vsel %vm2967, %v2944, -inf
      %3009 = vmax.xlane.f32.xlu0 %v3008
      %v3010 = vpop.xlane.xlu0 %3009
      %v3011 = vsel %vm2967, %v2945, -inf
      %3012 = vmax.xlane.f32.xlu0 %v3011
      %v3013 = vpop.xlane.xlu0 %3012
      %v3014 = vsel %vm2967, %v2946, -inf
      %3015 = vmax.xlane.f32.xlu0 %v3014
      %v3016 = vpop.xlane.xlu0 %3015
      %v3017 = vsel %vm2967, %v2947, -inf
      %3018 = vmax.xlane.f32.xlu0 %v3017
      %v3019 = vpop.xlane.xlu0 %3018
      %v3020 = vsel %vm2992, %v2948, -inf
      %3021 = vmax.xlane.f32.xlu0 %v3020
      %v3022 = vpop.xlane.xlu0 %3021
      %v3023 = vsel %vm2967, %v2949, -inf
      %3024 = vmax.xlane.f32.xlu0 %v3023
      %v3025 = vpop.xlane.xlu0 %3024
      %v3026 = vsel %vm2967, %v2950, -inf
      %3027 = vmax.xlane.f32.xlu0 %v3026
      %v3028 = vpop.xlane.xlu0 %3027
      %v3029 = vsel %vm2967, %v2951, -inf
      %3030 = vmax.xlane.f32.xlu0 %v3029
      %v3031 = vpop.xlane.xlu0 %3030
      %v3032 = vsel %vm2967, %v2952, -inf
      %3033 = vmax.xlane.f32.xlu0 %v3032
      %v3034 = vpop.xlane.xlu0 %3033
      %v3035 = vsel %vm2967, %v2953, -inf
      %3036 = vmax.xlane.f32.xlu0 %v3035
      %v3037 = vpop.xlane.xlu0 %3036
      %v3038 = vsel %vm2967, %v2954, -inf
      %3039 = vmax.xlane.f32.xlu0 %v3038
      %v3040 = vpop.xlane.xlu0 %3039
      %v3041 = vsel %vm2967, %v2955, -inf
      %3042 = vmax.xlane.f32.xlu0 %v3041
      %v3043 = vpop.xlane.xlu0 %3042
      %v3044 = vsel %vm2967, %v2956, -inf
      %3045 = vmax.xlane.f32.xlu0 %v3044
      %v3046 = vpop.xlane.xlu0 %3045
      %v3047 = vsel %vm2992, %v2957, -inf
      %3048 = vmax.xlane.f32.xlu0 %v3047
      %v3049 = vpop.xlane.xlu0 %3048
      %v3050 = vsel %vm2967, %v2958, -inf
      %3051 = vmax.xlane.f32.xlu0 %v3050
      %v3052 = vpop.xlane.xlu0 %3051
      %v3053 = vsel %vm2967, %v2959, -inf
      %3054 = vmax.xlane.f32.xlu0 %v3053
      %v3055 = vpop.xlane.xlu0 %3054
      %v3056 = vsel %vm2967, %v2960, -inf
      %3057 = vmax.xlane.f32.xlu0 %v3056
      %v3058 = vpop.xlane.xlu0 %3057
      %v3059 = vsel %vm2967, %v2961, -inf
      %3060 = vmax.xlane.f32.xlu0 %v3059
      %v3061 = vpop.xlane.xlu0 %3060
      %v3062 = vsel %vm2967, %v2962, -inf
      %3063 = vmax.xlane.f32.xlu0 %v3062
      %v3064 = vpop.xlane.xlu0 %3063
      %v3065 = vsel %vm2967, %v2963, -inf
      %3066 = vmax.xlane.f32.xlu0 %v3065
      %v3067 = vpop.xlane.xlu0 %3066
      %v3068 = vsel %vm2967, %v2964, -inf
      %3069 = vmax.xlane.f32.xlu0 %v3068
      %v3070 = vpop.xlane.xlu0 %3069
      %v3071 = vsel %vm2967, %v2965, -inf
      %3072 = vmax.xlane.f32.xlu0 %v3071
      %v3073 = vpop.xlane.xlu0 %3072
      %v3074 = vsel %vm2992, %v2966, -inf
      %3075 = vmax.xlane.f32.xlu0 %v3074
      %v3076 = vpop.xlane.xlu0 %3075
      %v3077 = vsub.f32 %v2931, %v2970
      %v3078 = vsub.f32 %v2932, %v2973
      %v3079 = vsub.f32 %v2933, %v2976
      %v3080 = vsub.f32 %v2934, %v2979
      %v3081 = vsub.f32 %v2935, %v2982
      %v3082 = vsub.f32 %v2936, %v2985
      %v3083 = vsub.f32 %v2937, %v2988
      %v3084 = vsub.f32 %v2938, %v2991
      %v3085 = vsub.f32 %v2939, %v2995
      %v3086 = vsub.f32 %v2940, %v2998
      %v3087 = vsub.f32 %v2941, %v3001
      %v3088 = vsub.f32 %v2942, %v3004
      %v3089 = vsub.f32 %v2943, %v3007
      %v3090 = vsub.f32 %v2944, %v3010
      %v3091 = vsub.f32 %v2945, %v3013
      %v3092 = vsub.f32 %v2946, %v3016
      %v3093 = vsub.f32 %v2947, %v3019
      %v3094 = vsub.f32 %v2948, %v3022
      %v3095 = vsub.f32 %v2949, %v3025
      %v3096 = vsub.f32 %v2950, %v3028
      %v3097 = vsub.f32 %v2951, %v3031
      %v3098 = vsub.f32 %v2952, %v3034
      %v3099 = vsub.f32 %v2953, %v3037
      %v3100 = vsub.f32 %v2954, %v3040
      %v3101 = vsub.f32 %v2955, %v3043
      %v3102 = vsub.f32 %v2956, %v3046
      %v3103 = vsub.f32 %v2957, %v3049
      %v3104 = vsub.f32 %v2958, %v3052
      %v3105 = vsub.f32 %v2959, %v3055
      %v3106 = vsub.f32 %v2960, %v3058
      %v3107 = vsub.f32 %v2961, %v3061
      %v3108 = vsub.f32 %v2962, %v3064
      %v3109 = vsub.f32 %v2963, %v3067
      %v3110 = vsub.f32 %v2964, %v3070
      %v3111 = vsub.f32 %v2965, %v3073
      %v3112 = vsub.f32 %v2966, %v3076
      %v3113 = vmul.f32 %v3077, 1.442695
      %v3114 = vpow.pop %v3113
      %v3115 = vmul.f32 %v3078, 1.442695
      %v3116 = vpow.pop %v3115
      %v3117 = vmul.f32 %v3079, 1.442695
      %v3118 = vpow.pop %v3117
      %v3119 = vmul.f32 %v3080, 1.442695
      %v3120 = vpow.pop %v3119
      %v3121 = vmul.f32 %v3081, 1.442695
      %v3122 = vpow.pop %v3121
      %v3123 = vmul.f32 %v3082, 1.442695
      %v3124 = vpow.pop %v3123
      %v3125 = vmul.f32 %v3083, 1.442695
      %v3126 = vpow.pop %v3125
      %v3127 = vmul.f32 %v3084, 1.442695
      %v3128 = vpow.pop %v3127
      %v3129 = vmul.f32 %v3085, 1.442695
      %v3130 = vpow.pop %v3129
      %v3131 = vmul.f32 %v3086, 1.442695
      %v3132 = vpow.pop %v3131
      %v3133 = vmul.f32 %v3087, 1.442695
      %v3134 = vpow.pop %v3133
      %v3135 = vmul.f32 %v3088, 1.442695
      %v3136 = vpow.pop %v3135
      %v3137 = vmul.f32 %v3089, 1.442695
      %v3138 = vpow.pop %v3137
      %v3139 = vmul.f32 %v3090, 1.442695
      %v3140 = vpow.pop %v3139
      %v3141 = vmul.f32 %v3091, 1.442695
      %v3142 = vpow.pop %v3141
      %v3143 = vmul.f32 %v3092, 1.442695
      %v3144 = vpow.pop %v3143
      %v3145 = vmul.f32 %v3093, 1.442695
      %v3146 = vpow.pop %v3145
      %v3147 = vmul.f32 %v3094, 1.442695
      %v3148 = vpow.pop %v3147
      %v3149 = vmul.f32 %v3095, 1.442695
      %v3150 = vpow.pop %v3149
      %v3151 = vmul.f32 %v3096, 1.442695
      %v3152 = vpow.pop %v3151
      %v3153 = vmul.f32 %v3097, 1.442695
      %v3154 = vpow.pop %v3153
      %v3155 = vmul.f32 %v3098, 1.442695
      %v3156 = vpow.pop %v3155
      %v3157 = vmul.f32 %v3099, 1.442695
      %v3158 = vpow.pop %v3157
      %v3159 = vmul.f32 %v3100, 1.442695
      %v3160 = vpow.pop %v3159
      %v3161 = vmul.f32 %v3101, 1.442695
      %v3162 = vpow.pop %v3161
      %v3163 = vmul.f32 %v3102, 1.442695
      %v3164 = vpow.pop %v3163
      %v3165 = vmul.f32 %v3103, 1.442695
      %v3166 = vpow.pop %v3165
      %v3167 = vmul.f32 %v3104, 1.442695
      %v3168 = vpow.pop %v3167
      %v3169 = vmul.f32 %v3105, 1.442695
      %v3170 = vpow.pop %v3169
      %v3171 = vmul.f32 %v3106, 1.442695
      %v3172 = vpow.pop %v3171
      %v3173 = vmul.f32 %v3107, 1.442695
      %v3174 = vpow.pop %v3173
      %v3175 = vmul.f32 %v3108, 1.442695
      %v3176 = vpow.pop %v3175
      %v3177 = vmul.f32 %v3109, 1.442695
      %v3178 = vpow.pop %v3177
      %v3179 = vmul.f32 %v3110, 1.442695
      %v3180 = vpow.pop %v3179
      %v3181 = vmul.f32 %v3111, 1.442695
      %v3182 = vpow.pop %v3181
      %v3183 = vmul.f32 %v3112, 1.442695
      %v3184 = vpow.pop %v3183
      %v3185 = vsel %vm2967, %v3114, 0.0
      %3186 = vadd.xlane.f32.xlu0 %v3185
      %v3187 = vpop.xlane.xlu0 %3186
      %v3188 = vsel %vm2967, %v3116, 0.0
      %3189 = vadd.xlane.f32.xlu0 %v3188
      %v3190 = vpop.xlane.xlu0 %3189
      %v3191 = vsel %vm2967, %v3118, 0.0
      %3192 = vadd.xlane.f32.xlu0 %v3191
      %v3193 = vpop.xlane.xlu0 %3192
      %v3194 = vsel %vm2967, %v3120, 0.0
      %3195 = vadd.xlane.f32.xlu0 %v3194
      %v3196 = vpop.xlane.xlu0 %3195
      %v3197 = vsel %vm2967, %v3122, 0.0
      %3198 = vadd.xlane.f32.xlu0 %v3197
      %v3199 = vpop.xlane.xlu0 %3198
      %v3200 = vsel %vm2967, %v3124, 0.0
      %3201 = vadd.xlane.f32.xlu0 %v3200
      %v3202 = vpop.xlane.xlu0 %3201
      %v3203 = vsel %vm2967, %v3126, 0.0
      %3204 = vadd.xlane.f32.xlu0 %v3203
      %v3205 = vpop.xlane.xlu0 %3204
      %v3206 = vsel %vm2967, %v3128, 0.0
      %3207 = vadd.xlane.f32.xlu0 %v3206
      %v3208 = vpop.xlane.xlu0 %3207
      %v3209 = vsel %vm2992, %v3130, 0.0
      %3210 = vadd.xlane.f32.xlu0 %v3209
      %v3211 = vpop.xlane.xlu0 %3210
      %v3212 = vsel %vm2967, %v3132, 0.0
      %3213 = vadd.xlane.f32.xlu0 %v3212
      %v3214 = vpop.xlane.xlu0 %3213
      %v3215 = vsel %vm2967, %v3134, 0.0
      %3216 = vadd.xlane.f32.xlu0 %v3215
      %v3217 = vpop.xlane.xlu0 %3216
      %v3218 = vsel %vm2967, %v3136, 0.0
      %3219 = vadd.xlane.f32.xlu0 %v3218
      %v3220 = vpop.xlane.xlu0 %3219
      %v3221 = vsel %vm2967, %v3138, 0.0
      %3222 = vadd.xlane.f32.xlu0 %v3221
      %v3223 = vpop.xlane.xlu0 %3222
      %v3224 = vsel %vm2967, %v3140, 0.0
      %3225 = vadd.xlane.f32.xlu0 %v3224
      %v3226 = vpop.xlane.xlu0 %3225
      %v3227 = vsel %vm2967, %v3142, 0.0
      %3228 = vadd.xlane.f32.xlu0 %v3227
      %v3229 = vpop.xlane.xlu0 %3228
      %v3230 = vsel %vm2967, %v3144, 0.0
      %3231 = vadd.xlane.f32.xlu0 %v3230
      %v3232 = vpop.xlane.xlu0 %3231
      %v3233 = vsel %vm2967, %v3146, 0.0
      %3234 = vadd.xlane.f32.xlu0 %v3233
      %v3235 = vpop.xlane.xlu0 %3234
      %v3236 = vsel %vm2992, %v3148, 0.0
      %3237 = vadd.xlane.f32.xlu0 %v3236
      %v3238 = vpop.xlane.xlu0 %3237
      %v3239 = vsel %vm2967, %v3150, 0.0
      %3240 = vadd.xlane.f32.xlu0 %v3239
      %v3241 = vpop.xlane.xlu0 %3240
      %v3242 = vsel %vm2967, %v3152, 0.0
      %3243 = vadd.xlane.f32.xlu0 %v3242
      %v3244 = vpop.xlane.xlu0 %3243
      %v3245 = vsel %vm2967, %v3154, 0.0
      %3246 = vadd.xlane.f32.xlu0 %v3245
      %v3247 = vpop.xlane.xlu0 %3246
      %v3248 = vsel %vm2967, %v3156, 0.0
      %3249 = vadd.xlane.f32.xlu0 %v3248
      %v3250 = vpop.xlane.xlu0 %3249
      %v3251 = vsel %vm2967, %v3158, 0.0
      %3252 = vadd.xlane.f32.xlu0 %v3251
      %v3253 = vpop.xlane.xlu0 %3252
      %v3254 = vsel %vm2967, %v3160, 0.0
      %3255 = vadd.xlane.f32.xlu0 %v3254
      %v3256 = vpop.xlane.xlu0 %3255
      %v3257 = vsel %vm2967, %v3162, 0.0
      %3258 = vadd.xlane.f32.xlu0 %v3257
      %v3259 = vpop.xlane.xlu0 %3258
      %v3260 = vsel %vm2967, %v3164, 0.0
      %3261 = vadd.xlane.f32.xlu0 %v3260
      %v3262 = vpop.xlane.xlu0 %3261
      %v3263 = vsel %vm2992, %v3166, 0.0
      %3264 = vadd.xlane.f32.xlu0 %v3263
      %v3265 = vpop.xlane.xlu0 %3264
      %v3266 = vsel %vm2967, %v3168, 0.0
      %3267 = vadd.xlane.f32.xlu0 %v3266
      %v3268 = vpop.xlane.xlu0 %3267
      %v3269 = vsel %vm2967, %v3170, 0.0
      %3270 = vadd.xlane.f32.xlu0 %v3269
      %v3271 = vpop.xlane.xlu0 %3270
      %v3272 = vsel %vm2967, %v3172, 0.0
      %3273 = vadd.xlane.f32.xlu0 %v3272
      %v3274 = vpop.xlane.xlu0 %3273
      %v3275 = vsel %vm2967, %v3174, 0.0
      %3276 = vadd.xlane.f32.xlu0 %v3275
      %v3277 = vpop.xlane.xlu0 %3276
      %v3278 = vsel %vm2967, %v3176, 0.0
      %3279 = vadd.xlane.f32.xlu0 %v3278
      %v3280 = vpop.xlane.xlu0 %3279
      %v3281 = vsel %vm2967, %v3178, 0.0
      %3282 = vadd.xlane.f32.xlu0 %v3281
      %v3283 = vpop.xlane.xlu0 %3282
      %v3284 = vsel %vm2967, %v3180, 0.0
      %3285 = vadd.xlane.f32.xlu0 %v3284
      %v3286 = vpop.xlane.xlu0 %3285
      %v3287 = vsel %vm2967, %v3182, 0.0
      %3288 = vadd.xlane.f32.xlu0 %v3287
      %v3289 = vpop.xlane.xlu0 %3288
      %v3290 = vsel %vm2992, %v3184, 0.0
      %3291 = vadd.xlane.f32.xlu0 %v3290
      %v3292 = vpop.xlane.xlu0 %3291
      %v3294 = vsel %vm2967, %v3114, 0
      %v3297 = vsel %vm2967, %v3116, 0
      %v3300 = vsel %vm2967, %v3118, 0
      %v3303 = vsel %vm2967, %v3120, 0
      %v3306 = vsel %vm2967, %v3122, 0
      %v3309 = vsel %vm2967, %v3124, 0
      %v3312 = vsel %vm2967, %v3126, 0
      %v3315 = vsel %vm2967, %v3128, 0
      %v3318 = vsel %vm2967, %v3130, 0
      %vm3320 = vcmask 1040384
      %v3322 = vsel %vm3320, %v1941, 0
      %3324 = vmatprep.subr.mxu0 0.0
      %3325 = vmatpush1.msra.mxu0 %v1901
      %3326 = vmatprep.subr.mxu0 0.0
      %3327 = vmatpush1.msra.mxu0 %v1906
      %3328 = vmatprep.subr.mxu0 0.0
      %3329 = vmatpush1.msra.mxu0 %v1911
      %3330 = vmatprep.subr.mxu0 0.0
      %3331 = vmatpush1.msra.mxu0 %v1916
      %3332 = vmatprep.subr.mxu0 0.0
      %3333 = vmatpush1.msra.mxu0 %v1921
      %3334 = vmatprep.subr.mxu0 0.0
      %3335 = vmatpush1.msra.mxu0 %v1926
      %3336 = vmatprep.subr.mxu0 0.0
      %3337 = vmatpush1.msra.mxu0 %v1931
      %3338 = vmatprep.subr.mxu0 0.0
      %3339 = vmatpush1.msra.mxu0 %v1936
      %3340 = vmatprep.subr.mxu0 0.0
      %3341 = vmatpush1.msra.mxu0 %v3322
      %3342 = vmatprep.subr.mxu0 0.0
      %3343 = vmatpush1.msra.mxu0 0.0
      %3344 = vmatprep.subr.mxu0 0.0
      %3345 = vmatpush1.msra.mxu0 0.0
      %3346 = vmatprep.subr.mxu0 0.0
      %3347 = vmatpush1.msra.mxu0 0.0
      %3348 = vmatprep.subr.mxu0 0.0
      %3349 = vmatpush1.msra.mxu0 0.0
      %3350 = vmatprep.subr.mxu0 0.0
      %3351 = vmatpush1.msra.mxu0 0.0
      %3352 = vmatprep.subr.mxu0 0.0
      %3353 = vmatpush1.msra.mxu0 0.0
      %3354 = vmatprep.subr.mxu0 0.0
      %3355 = vmatpush1.msra.mxu0 0.0
      %3356 = vmatprep.subr.mxu0 0.0
      %3357 = vmatpush1.msra.mxu0 0.0
      %3358 = vmatprep.subr.mxu0 0.0
      %3359 = vmatpush1.msra.mxu0 0.0
      %3360 = vmatprep.subr.mxu0 0.0
      %3361 = vmatpush1.msra.mxu0 0.0
      %3362 = vmatprep.subr.mxu0 0.0
      %3363 = vmatpush1.msra.mxu0 0.0
      %3364 = vmatprep.subr.mxu0 0.0
      %3365 = vmatpush1.msra.mxu0 0.0
      %3366 = vmatprep.subr.mxu0 0.0
      %3367 = vmatpush1.msra.mxu0 0.0
      %3368 = vmatprep.subr.mxu0 0.0
      %3369 = vmatpush1.msra.mxu0 0.0
      %3370 = vmatprep.subr.mxu0 0.0
      %3371 = vmatpush1.msra.mxu0 0.0
      %3372 = vmatprep.subr.mxu0 0.0
      %3373 = vmatpush1.msra.mxu0 0.0
      %3374 = vmatprep.subr.mxu0 0.0
      %3375 = vmatpush1.msra.mxu0 0.0
      %3376 = vmatprep.subr.mxu0 0.0
      %3377 = vmatpush1.msra.mxu0 0.0
      %3378 = vmatprep.subr.mxu0 0.0
      %3379 = vmatpush1.msra.mxu0 0.0
      %3380 = vmatprep.subr.mxu0 0.0
      %3381 = vmatpush1.msra.mxu0 0.0
      %3382 = vmatprep.subr.mxu0 0.0
      %3383 = vmatpush1.msra.mxu0 0.0
      %3384 = vmatprep.subr.mxu0 0.0
      %3385 = vmatpush1.msra.mxu0 0.0
      %3386 = vmatprep.subr.mxu0 0.0
      %3387 = vmatpush1.msra.mxu0 0.0
      %3388 = vmatprep.mubr.f32.mxu0 0.0
      %3389 = vmatmul.mubr.f32.gmra.mrb[0].mxu0 %v3294
      %v3390 = vpop.f32.mrb[0].mxu0
      %v3391 = vadd.f32 0.0, %v3390
      %v3392 = vpop.f32.mrb[0].mxu0
      %3393 = vmatprep.mubr.f32.mxu0 0.0
      %3394 = vmatmul.mubr.f32.gmra.mrb[0].mxu0 %v3297
      %v3395 = vpop.f32.mrb[0].mxu0
      %v3396 = vadd.f32 0.0, %v3395
      %v3397 = vpop.f32.mrb[0].mxu0
      %3398 = vmatprep.mubr.f32.mxu0 0.0
      %3399 = vmatmul.mubr.f32.gmra.mrb[0].mxu0 %v3300
      %v3400 = vpop.f32.mrb[0].mxu0
      %v3401 = vadd.f32 0.0, %v3400
      %v3402 = vpop.f32.mrb[0].mxu0
      %3403 = vmatprep.mubr.f32.mxu0 0.0
      %3404 = vmatmul.mubr.f32.gmra.mrb[0].mxu0 %v3303
      %v3405 = vpop.f32.mrb[0].mxu0
      %v3406 = vadd.f32 0.0, %v3405
      %v3407 = vpop.f32.mrb[0].mxu0
      %3408 = vmatprep.mubr.f32.mxu0 0.0
      %3409 = vmatmul.mubr.f32.gmra.mrb[0].mxu0 %v3306
      %v3410 = vpop.f32.mrb[0].mxu0
      %v3411 = vadd.f32 0.0, %v3410
      %v3412 = vpop.f32.mrb[0].mxu0
      %3413 = vmatprep.mubr.f32.mxu0 0.0
      %3414 = vmatmul.mubr.f32.gmra.mrb[0].mxu0 %v3309
      %v3415 = vpop.f32.mrb[0].mxu0
      %v3416 = vadd.f32 0.0, %v3415
      %v3417 = vpop.f32.mrb[0].mxu0
      %3418 = vmatprep.mubr.f32.mxu0 0.0
      %3419 = vmatmul.mubr.f32.gmra.mrb[0].mxu0 %v3312
      %v3420 = vpop.f32.mrb[0].mxu0
      %v3421 = vadd.f32 0.0, %v3420
      %v3422 = vpop.f32.mrb[0].mxu0
      %3423 = vmatprep.mubr.f32.mxu0 0.0
      %3424 = vmatmul.mubr.f32.gmra.mrb[0].mxu0 %v3315
      %v3425 = vpop.f32.mrb[0].mxu0
      %v3426 = vadd.f32 0.0, %v3425
      %v3427 = vpop.f32.mrb[0].mxu0
      %3428 = vmatprep.mubr.f32.mxu0 0.0
      %3429 = vmatmul.mubr.f32.gmra.mrb[0].mxu0 %v3318
      %v3430 = vpop.f32.mrb[0].mxu0
      %v3431 = vadd.f32 0.0, %v3430
      %v3432 = vpop.f32.mrb[0].mxu0
      %3433 = vdwg.mxu0
      %v3435 = vsel %vm2967, %v3132, 0
      %v3438 = vsel %vm2967, %v3134, 0
      %v3441 = vsel %vm2967, %v3136, 0
      %v3444 = vsel %vm2967, %v3138, 0
      %v3447 = vsel %vm2967, %v3140, 0
      %v3450 = vsel %vm2967, %v3142, 0
      %v3453 = vsel %vm2967, %v3144, 0
      %v3456 = vsel %vm2967, %v3146, 0
      %v3459 = vsel %vm2967, %v3148, 0
      %v3462 = vsel %vm3320, %v2051, 0
      %3464 = vmatprep.subr.mxu0 0.0
      %3465 = vmatpush1.msra.mxu0 %v2011
      %3466 = vmatprep.subr.mxu0 0.0
      %3467 = vmatpush1.msra.mxu0 %v2016
      %3468 = vmatprep.subr.mxu0 0.0
      %3469 = vmatpush1.msra.mxu0 %v2021
      %3470 = vmatprep.subr.mxu0 0.0
      %3471 = vmatpush1.msra.mxu0 %v2026
      %3472 = vmatprep.subr.mxu0 0.0
      %3473 = vmatpush1.msra.mxu0 %v2031
      %3474 = vmatprep.subr.mxu0 0.0
      %3475 = vmatpush1.msra.mxu0 %v2036
      %3476 = vmatprep.subr.mxu0 0.0
      %3477 = vmatpush1.msra.mxu0 %v2041
      %3478 = vmatprep.subr.mxu0 0.0
      %3479 = vmatpush1.msra.mxu0 %v2046
      %3480 = vmatprep.subr.mxu0 0.0
      %3481 = vmatpush1.msra.mxu0 %v3462
      %3482 = vmatprep.subr.mxu0 0.0
      %3483 = vmatpush1.msra.mxu0 0.0
      %3484 = vmatprep.subr.mxu0 0.0
      %3485 = vmatpush1.msra.mxu0 0.0
      %3486 = vmatprep.subr.mxu0 0.0
      %3487 = vmatpush1.msra.mxu0 0.0
      %3488 = vmatprep.subr.mxu0 0.0
      %3489 = vmatpush1.msra.mxu0 0.0
      %3490 = vmatprep.subr.mxu0 0.0
      %3491 = vmatpush1.msra.mxu0 0.0
      %3492 = vmatprep.subr.mxu0 0.0
      %3493 = vmatpush1.msra.mxu0 0.0
      %3494 = vmatprep.subr.mxu0 0.0
      %3495 = vmatpush1.msra.mxu0 0.0
      %3496 = vmatprep.subr.mxu0 0.0
      %3497 = vmatpush1.msra.mxu0 0.0
      %3498 = vmatprep.subr.mxu0 0.0
      %3499 = vmatpush1.msra.mxu0 0.0
      %3500 = vmatprep.subr.mxu0 0.0
      %3501 = vmatpush1.msra.mxu0 0.0
      %3502 = vmatprep.subr.mxu0 0.0
      %3503 = vmatpush1.msra.mxu0 0.0
      %3504 = vmatprep.subr.mxu0 0.0
      %3505 = vmatpush1.msra.mxu0 0.0
      %3506 = vmatprep.subr.mxu0 0.0
      %3507 = vmatpush1.msra.mxu0 0.0
      %3508 = vmatprep.subr.mxu0 0.0
      %3509 = vmatpush1.msra.mxu0 0.0
      %3510 = vmatprep.subr.mxu0 0.0
      %3511 = vmatpush1.msra.mxu0 0.0
      %3512 = vmatprep.subr.mxu0 0.0
      %3513 = vmatpush1.msra.mxu0 0.0
      %3514 = vmatprep.subr.mxu0 0.0
      %3515 = vmatpush1.msra.mxu0 0.0
      %3516 = vmatprep.subr.mxu0 0.0
      %3517 = vmatpush1.msra.mxu0 0.0
      %3518 = vmatprep.subr.mxu0 0.0
      %3519 = vmatpush1.msra.mxu0 0.0
      %3520 = vmatprep.subr.mxu0 0.0
      %3521 = vmatpush1.msra.mxu0 0.0
      %3522 = vmatprep.subr.mxu0 0.0
      %3523 = vmatpush1.msra.mxu0 0.0
      %3524 = vmatprep.subr.mxu0 0.0
      %3525 = vmatpush1.msra.mxu0 0.0
      %3526 = vmatprep.subr.mxu0 0.0
      %3527 = vmatpush1.msra.mxu0 0.0
      %3528 = vmatprep.mubr.f32.mxu0 0.0
      %3529 = vmatmul.mubr.f32.gmra.mrb[0].mxu0 %v3435
      %v3530 = vpop.f32.mrb[0].mxu0
      %v3531 = vadd.f32 0.0, %v3530
      %v3532 = vpop.f32.mrb[0].mxu0
      %3533 = vmatprep.mubr.f32.mxu0 0.0
      %3534 = vmatmul.mubr.f32.gmra.mrb[0].mxu0 %v3438
      %v3535 = vpop.f32.mrb[0].mxu0
      %v3536 = vadd.f32 0.0, %v3535
      %v3537 = vpop.f32.mrb[0].mxu0
      %3538 = vmatprep.mubr.f32.mxu0 0.0
      %3539 = vmatmul.mubr.f32.gmra.mrb[0].mxu0 %v3441
      %v3540 = vpop.f32.mrb[0].mxu0
      %v3541 = vadd.f32 0.0, %v3540
      %v3542 = vpop.f32.mrb[0].mxu0
      %3543 = vmatprep.mubr.f32.mxu0 0.0
      %3544 = vmatmul.mubr.f32.gmra.mrb[0].mxu0 %v3444
      %v3545 = vpop.f32.mrb[0].mxu0
      %v3546 = vadd.f32 0.0, %v3545
      %v3547 = vpop.f32.mrb[0].mxu0
      %3548 = vmatprep.mubr.f32.mxu0 0.0
      %3549 = vmatmul.mubr.f32.gmra.mrb[0].mxu0 %v3447
      %v3550 = vpop.f32.mrb[0].mxu0
      %v3551 = vadd.f32 0.0, %v3550
      %v3552 = vpop.f32.mrb[0].mxu0
      %3553 = vmatprep.mubr.f32.mxu0 0.0
      %3554 = vmatmul.mubr.f32.gmra.mrb[0].mxu0 %v3450
      %v3555 = vpop.f32.mrb[0].mxu0
      %v3556 = vadd.f32 0.0, %v3555
      %v3557 = vpop.f32.mrb[0].mxu0
      %3558 = vmatprep.mubr.f32.mxu0 0.0
      %3559 = vmatmul.mubr.f32.gmra.mrb[0].mxu0 %v3453
      %v3560 = vpop.f32.mrb[0].mxu0
      %v3561 = vadd.f32 0.0, %v3560
      %v3562 = vpop.f32.mrb[0].mxu0
      %3563 = vmatprep.mubr.f32.mxu0 0.0
      %3564 = vmatmul.mubr.f32.gmra.mrb[0].mxu0 %v3456
      %v3565 = vpop.f32.mrb[0].mxu0
      %v3566 = vadd.f32 0.0, %v3565
      %v3567 = vpop.f32.mrb[0].mxu0
      %3568 = vmatprep.mubr.f32.mxu0 0.0
      %3569 = vmatmul.mubr.f32.gmra.mrb[0].mxu0 %v3459
      %v3570 = vpop.f32.mrb[0].mxu0
      %v3571 = vadd.f32 0.0, %v3570
      %v3572 = vpop.f32.mrb[0].mxu0
      %3573 = vdwg.mxu0
      %v3575 = vsel %vm2967, %v3150, 0
      %v3578 = vsel %vm2967, %v3152, 0
      %v3581 = vsel %vm2967, %v3154, 0
      %v3584 = vsel %vm2967, %v3156, 0
      %v3587 = vsel %vm2967, %v3158, 0
      %v3590 = vsel %vm2967, %v3160, 0
      %v3593 = vsel %vm2967, %v3162, 0
      %v3596 = vsel %vm2967, %v3164, 0
      %v3599 = vsel %vm2967, %v3166, 0
      %v3602 = vsel %vm3320, %v2161, 0
      %3604 = vmatprep.subr.mxu0 0.0
      %3605 = vmatpush1.msra.mxu0 %v2121
      %3606 = vmatprep.subr.mxu0 0.0
      %3607 = vmatpush1.msra.mxu0 %v2126
      %3608 = vmatprep.subr.mxu0 0.0
      %3609 = vmatpush1.msra.mxu0 %v2131
      %3610 = vmatprep.subr.mxu0 0.0
      %3611 = vmatpush1.msra.mxu0 %v2136
      %3612 = vmatprep.subr.mxu0 0.0
      %3613 = vmatpush1.msra.mxu0 %v2141
      %3614 = vmatprep.subr.mxu0 0.0
      %3615 = vmatpush1.msra.mxu0 %v2146
      %3616 = vmatprep.subr.mxu0 0.0
      %3617 = vmatpush1.msra.mxu0 %v2151
      %3618 = vmatprep.subr.mxu0 0.0
      %3619 = vmatpush1.msra.mxu0 %v2156
      %3620 = vmatprep.subr.mxu0 0.0
      %3621 = vmatpush1.msra.mxu0 %v3602
      %3622 = vmatprep.subr.mxu0 0.0
      %3623 = vmatpush1.msra.mxu0 0.0
      %3624 = vmatprep.subr.mxu0 0.0
      %3625 = vmatpush1.msra.mxu0 0.0
      %3626 = vmatprep.subr.mxu0 0.0
      %3627 = vmatpush1.msra.mxu0 0.0
      %3628 = vmatprep.subr.mxu0 0.0
      %3629 = vmatpush1.msra.mxu0 0.0
      %3630 = vmatprep.subr.mxu0 0.0
      %3631 = vmatpush1.msra.mxu0 0.0
      %3632 = vmatprep.subr.mxu0 0.0
      %3633 = vmatpush1.msra.mxu0 0.0
      %3634 = vmatprep.subr.mxu0 0.0
      %3635 = vmatpush1.msra.mxu0 0.0
      %3636 = vmatprep.subr.mxu0 0.0
      %3637 = vmatpush1.msra.mxu0 0.0
      %3638 = vmatprep.subr.mxu0 0.0
      %3639 = vmatpush1.msra.mxu0 0.0
      %3640 = vmatprep.subr.mxu0 0.0
      %3641 = vmatpush1.msra.mxu0 0.0
      %3642 = vmatprep.subr.mxu0 0.0
      %3643 = vmatpush1.msra.mxu0 0.0
      %3644 = vmatprep.subr.mxu0 0.0
      %3645 = vmatpush1.msra.mxu0 0.0
      %3646 = vmatprep.subr.mxu0 0.0
      %3647 = vmatpush1.msra.mxu0 0.0
      %3648 = vmatprep.subr.mxu0 0.0
      %3649 = vmatpush1.msra.mxu0 0.0
      %3650 = vmatprep.subr.mxu0 0.0
      %3651 = vmatpush1.msra.mxu0 0.0
      %3652 = vmatprep.subr.mxu0 0.0
      %3653 = vmatpush1.msra.mxu0 0.0
      %3654 = vmatprep.subr.mxu0 0.0
      %3655 = vmatpush1.msra.mxu0 0.0
      %3656 = vmatprep.subr.mxu0 0.0
      %3657 = vmatpush1.msra.mxu0 0.0
      %3658 = vmatprep.subr.mxu0 0.0
      %3659 = vmatpush1.msra.mxu0 0.0
      %3660 = vmatprep.subr.mxu0 0.0
      %3661 = vmatpush1.msra.mxu0 0.0
      %3662 = vmatprep.subr.mxu0 0.0
      %3663 = vmatpush1.msra.mxu0 0.0
      %3664 = vmatprep.subr.mxu0 0.0
      %3665 = vmatpush1.msra.mxu0 0.0
      %3666 = vmatprep.subr.mxu0 0.0
      %3667 = vmatpush1.msra.mxu0 0.0
      %3668 = vmatprep.mubr.f32.mxu0 0.0
      %3669 = vmatmul.mubr.f32.gmra.mrb[0].mxu0 %v3575
      %v3670 = vpop.f32.mrb[0].mxu0
      %v3671 = vadd.f32 0.0, %v3670
      %v3672 = vpop.f32.mrb[0].mxu0
      %3673 = vmatprep.mubr.f32.mxu0 0.0
      %3674 = vmatmul.mubr.f32.gmra.mrb[0].mxu0 %v3578
      %v3675 = vpop.f32.mrb[0].mxu0
      %v3676 = vadd.f32 0.0, %v3675
      %v3677 = vpop.f32.mrb[0].mxu0
      %3678 = vmatprep.mubr.f32.mxu0 0.0
      %3679 = vmatmul.mubr.f32.gmra.mrb[0].mxu0 %v3581
      %v3680 = vpop.f32.mrb[0].mxu0
      %v3681 = vadd.f32 0.0, %v3680
      %v3682 = vpop.f32.mrb[0].mxu0
      %3683 = vmatprep.mubr.f32.mxu0 0.0
      %3684 = vmatmul.mubr.f32.gmra.mrb[0].mxu0 %v3584
      %v3685 = vpop.f32.mrb[0].mxu0
      %v3686 = vadd.f32 0.0, %v3685
      %v3687 = vpop.f32.mrb[0].mxu0
      %3688 = vmatprep.mubr.f32.mxu0 0.0
      %3689 = vmatmul.mubr.f32.gmra.mrb[0].mxu0 %v3587
      %v3690 = vpop.f32.mrb[0].mxu0
      %v3691 = vadd.f32 0.0, %v3690
      %v3692 = vpop.f32.mrb[0].mxu0
      %3693 = vmatprep.mubr.f32.mxu0 0.0
      %3694 = vmatmul.mubr.f32.gmra.mrb[0].mxu0 %v3590
      %v3695 = vpop.f32.mrb[0].mxu0
      %v3696 = vadd.f32 0.0, %v3695
      %v3697 = vpop.f32.mrb[0].mxu0
      %3698 = vmatprep.mubr.f32.mxu0 0.0
      %3699 = vmatmul.mubr.f32.gmra.mrb[0].mxu0 %v3593
      %v3700 = vpop.f32.mrb[0].mxu0
      %v3701 = vadd.f32 0.0, %v3700
      %v3702 = vpop.f32.mrb[0].mxu0
      %3703 = vmatprep.mubr.f32.mxu0 0.0
      %3704 = vmatmul.mubr.f32.gmra.mrb[0].mxu0 %v3596
      %v3705 = vpop.f32.mrb[0].mxu0
      %v3706 = vadd.f32 0.0, %v3705
      %v3707 = vpop.f32.mrb[0].mxu0
      %3708 = vmatprep.mubr.f32.mxu0 0.0
      %3709 = vmatmul.mubr.f32.gmra.mrb[0].mxu0 %v3599
      %v3710 = vpop.f32.mrb[0].mxu0
      %v3711 = vadd.f32 0.0, %v3710
      %v3712 = vpop.f32.mrb[0].mxu0
      %3713 = vdwg.mxu0
      %v3715 = vsel %vm2967, %v3168, 0
      %v3718 = vsel %vm2967, %v3170, 0
      %v3721 = vsel %vm2967, %v3172, 0
      %v3724 = vsel %vm2967, %v3174, 0
      %v3727 = vsel %vm2967, %v3176, 0
      %v3730 = vsel %vm2967, %v3178, 0
      %v3733 = vsel %vm2967, %v3180, 0
      %v3736 = vsel %vm2967, %v3182, 0
      %v3739 = vsel %vm2967, %v3184, 0
      %v3742 = vsel %vm3320, %v2271, 0
      %3744 = vmatprep.subr.mxu0 0.0
      %3745 = vmatpush1.msra.mxu0 %v2231
      %3746 = vmatprep.subr.mxu0 0.0
      %3747 = vmatpush1.msra.mxu0 %v2236
      %3748 = vmatprep.subr.mxu0 0.0
      %3749 = vmatpush1.msra.mxu0 %v2241
      %3750 = vmatprep.subr.mxu0 0.0
      %3751 = vmatpush1.msra.mxu0 %v2246
      %3752 = vmatprep.subr.mxu0 0.0
      %3753 = vmatpush1.msra.mxu0 %v2251
      %3754 = vmatprep.subr.mxu0 0.0
      %3755 = vmatpush1.msra.mxu0 %v2256
      %3756 = vmatprep.subr.mxu0 0.0
      %3757 = vmatpush1.msra.mxu0 %v2261
      %3758 = vmatprep.subr.mxu0 0.0
      %3759 = vmatpush1.msra.mxu0 %v2266
      %3760 = vmatprep.subr.mxu0 0.0
      %3761 = vmatpush1.msra.mxu0 %v3742
      %3762 = vmatprep.subr.mxu0 0.0
      %3763 = vmatpush1.msra.mxu0 0.0
      %3764 = vmatprep.subr.mxu0 0.0
      %3765 = vmatpush1.msra.mxu0 0.0
      %3766 = vmatprep.subr.mxu0 0.0
      %3767 = vmatpush1.msra.mxu0 0.0
      %3768 = vmatprep.subr.mxu0 0.0
      %3769 = vmatpush1.msra.mxu0 0.0
      %3770 = vmatprep.subr.mxu0 0.0
      %3771 = vmatpush1.msra.mxu0 0.0
      %3772 = vmatprep.subr.mxu0 0.0
      %3773 = vmatpush1.msra.mxu0 0.0
      %3774 = vmatprep.subr.mxu0 0.0
      %3775 = vmatpush1.msra.mxu0 0.0
      %3776 = vmatprep.subr.mxu0 0.0
      %3777 = vmatpush1.msra.mxu0 0.0
      %3778 = vmatprep.subr.mxu0 0.0
      %3779 = vmatpush1.msra.mxu0 0.0
      %3780 = vmatprep.subr.mxu0 0.0
      %3781 = vmatpush1.msra.mxu0 0.0
      %3782 = vmatprep.subr.mxu0 0.0
      %3783 = vmatpush1.msra.mxu0 0.0
      %3784 = vmatprep.subr.mxu0 0.0
      %3785 = vmatpush1.msra.mxu0 0.0
      %3786 = vmatprep.subr.mxu0 0.0
      %3787 = vmatpush1.msra.mxu0 0.0
      %3788 = vmatprep.subr.mxu0 0.0
      %3789 = vmatpush1.msra.mxu0 0.0
      %3790 = vmatprep.subr.mxu0 0.0
      %3791 = vmatpush1.msra.mxu0 0.0
      %3792 = vmatprep.subr.mxu0 0.0
      %3793 = vmatpush1.msra.mxu0 0.0
      %3794 = vmatprep.subr.mxu0 0.0
      %3795 = vmatpush1.msra.mxu0 0.0
      %3796 = vmatprep.subr.mxu0 0.0
      %3797 = vmatpush1.msra.mxu0 0.0
      %3798 = vmatprep.subr.mxu0 0.0
      %3799 = vmatpush1.msra.mxu0 0.0
      %3800 = vmatprep.subr.mxu0 0.0
      %3801 = vmatpush1.msra.mxu0 0.0
      %3802 = vmatprep.subr.mxu0 0.0
      %3803 = vmatpush1.msra.mxu0 0.0
      %3804 = vmatprep.subr.mxu0 0.0
      %3805 = vmatpush1.msra.mxu0 0.0
      %3806 = vmatprep.subr.mxu0 0.0
      %3807 = vmatpush1.msra.mxu0 0.0
      %3808 = vmatprep.mubr.f32.mxu0 0.0
      %3809 = vmatmul.mubr.f32.gmra.mrb[0].mxu0 %v3715
      %v3810 = vpop.f32.mrb[0].mxu0
      %v3811 = vadd.f32 0.0, %v3810
      %v3812 = vpop.f32.mrb[0].mxu0
      %3813 = vmatprep.mubr.f32.mxu0 0.0
      %3814 = vmatmul.mubr.f32.gmra.mrb[0].mxu0 %v3718
      %v3815 = vpop.f32.mrb[0].mxu0
      %v3816 = vadd.f32 0.0, %v3815
      %v3817 = vpop.f32.mrb[0].mxu0
      %3818 = vmatprep.mubr.f32.mxu0 0.0
      %3819 = vmatmul.mubr.f32.gmra.mrb[0].mxu0 %v3721
      %v3820 = vpop.f32.mrb[0].mxu0
      %v3821 = vadd.f32 0.0, %v3820
      %v3822 = vpop.f32.mrb[0].mxu0
      %3823 = vmatprep.mubr.f32.mxu0 0.0
      %3824 = vmatmul.mubr.f32.gmra.mrb[0].mxu0 %v3724
      %v3825 = vpop.f32.mrb[0].mxu0
      %v3826 = vadd.f32 0.0, %v3825
      %v3827 = vpop.f32.mrb[0].mxu0
      %3828 = vmatprep.mubr.f32.mxu0 0.0
      %3829 = vmatmul.mubr.f32.gmra.mrb[0].mxu0 %v3727
      %v3830 = vpop.f32.mrb[0].mxu0
      %v3831 = vadd.f32 0.0, %v3830
      %v3832 = vpop.f32.mrb[0].mxu0
      %3833 = vmatprep.mubr.f32.mxu0 0.0
      %3834 = vmatmul.mubr.f32.gmra.mrb[0].mxu0 %v3730
      %v3835 = vpop.f32.mrb[0].mxu0
      %v3836 = vadd.f32 0.0, %v3835
      %v3837 = vpop.f32.mrb[0].mxu0
      %3838 = vmatprep.mubr.f32.mxu0 0.0
      %3839 = vmatmul.mubr.f32.gmra.mrb[0].mxu0 %v3733
      %v3840 = vpop.f32.mrb[0].mxu0
      %v3841 = vadd.f32 0.0, %v3840
      %v3842 = vpop.f32.mrb[0].mxu0
      %3843 = vmatprep.mubr.f32.mxu0 0.0
      %3844 = vmatmul.mubr.f32.gmra.mrb[0].mxu0 %v3736
      %v3845 = vpop.f32.mrb[0].mxu0
      %v3846 = vadd.f32 0.0, %v3845
      %v3847 = vpop.f32.mrb[0].mxu0
      %3848 = vmatprep.mubr.f32.mxu0 0.0
      %3849 = vmatmul.mubr.f32.gmra.mrb[0].mxu0 %v3739
      %v3850 = vpop.f32.mrb[0].mxu0
      %v3851 = vadd.f32 0.0, %v3850
      %v3852 = vpop.f32.mrb[0].mxu0
      %3853 = vdwg.mxu0
      %v3854 = vrcp.pop %v3187
      %v3855 = vrcp.pop %v3190
      %v3856 = vrcp.pop %v3193
      %v3857 = vrcp.pop %v3196
      %v3858 = vrcp.pop %v3199
      %v3859 = vrcp.pop %v3202
      %v3860 = vrcp.pop %v3205
      %v3861 = vrcp.pop %v3208
      %v3862 = vrcp.pop %v3211
      %v3863 = vrcp.pop %v3214
      %v3864 = vrcp.pop %v3217
      %v3865 = vrcp.pop %v3220
      %v3866 = vrcp.pop %v3223
      %v3867 = vrcp.pop %v3226
      %v3868 = vrcp.pop %v3229
      %v3869 = vrcp.pop %v3232
      %v3870 = vrcp.pop %v3235
      %v3871 = vrcp.pop %v3238
      %v3872 = vrcp.pop %v3241
      %v3873 = vrcp.pop %v3244
      %v3874 = vrcp.pop %v3247
      %v3875 = vrcp.pop %v3250
      %v3876 = vrcp.pop %v3253
      %v3877 = vrcp.pop %v3256
      %v3878 = vrcp.pop %v3259
      %v3879 = vrcp.pop %v3262
      %v3880 = vrcp.pop %v3265
      %v3881 = vrcp.pop %v3268
      %v3882 = vrcp.pop %v3271
      %v3883 = vrcp.pop %v3274
      %v3884 = vrcp.pop %v3277
      %v3885 = vrcp.pop %v3280
      %v3886 = vrcp.pop %v3283
      %v3887 = vrcp.pop %v3286
      %v3888 = vrcp.pop %v3289
      %v3889 = vrcp.pop %v3292
      %v3890 = vmul.f32 %v3391, %v3854
      %v3891 = vmul.f32 %v3396, %v3855
      %v3892 = vmul.f32 %v3401, %v3856
      %v3893 = vmul.f32 %v3406, %v3857
      %v3894 = vmul.f32 %v3411, %v3858
      %v3895 = vmul.f32 %v3416, %v3859
      %v3896 = vmul.f32 %v3421, %v3860
      %v3897 = vmul.f32 %v3426, %v3861
      %v3898 = vmul.f32 %v3431, %v3862
      %v3899 = vmul.f32 %v3531, %v3863
      %v3900 = vmul.f32 %v3536, %v3864
      %v3901 = vmul.f32 %v3541, %v3865
      %v3902 = vmul.f32 %v3546, %v3866
      %v3903 = vmul.f32 %v3551, %v3867
      %v3904 = vmul.f32 %v3556, %v3868
      %v3905 = vmul.f32 %v3561, %v3869
      %v3906 = vmul.f32 %v3566, %v3870
      %v3907 = vmul.f32 %v3571, %v3871
      %v3908 = vmul.f32 %v3671, %v3872
      %v3909 = vmul.f32 %v3676, %v3873
      %v3910 = vmul.f32 %v3681, %v3874
      %v3911 = vmul.f32 %v3686, %v3875
      %v3912 = vmul.f32 %v3691, %v3876
      %v3913 = vmul.f32 %v3696, %v3877
      %v3914 = vmul.f32 %v3701, %v3878
      %v3915 = vmul.f32 %v3706, %v3879
      %v3916 = vmul.f32 %v3711, %v3880
      %v3917 = vmul.f32 %v3811, %v3881
      %v3918 = vmul.f32 %v3816, %v3882
      %v3919 = vmul.f32 %v3821, %v3883
      %v3920 = vmul.f32 %v3826, %v3884
      %v3921 = vmul.f32 %v3831, %v3885
      %v3922 = vmul.f32 %v3836, %v3886
      %v3923 = vmul.f32 %v3841, %v3887
      %v3924 = vmul.f32 %v3846, %v3888
      %v3925 = vmul.f32 %v3851, %v3889
      %v3926 = vld [vmem:[%s9] sm:$0xff]
      %v3927 = vld [vmem:[%s9 + $0x8] sm:$0xff]
      %v3928 = vld [vmem:[%s9 + $0x10] sm:$0xff]
      %v3929 = vld [vmem:[%s9 + $0x18] sm:$0xff]
      %v3931 = vsel %vm2274, %v3890, 0
      %v3934 = vsel %vm2274, %v3891, 0
      %v3937 = vsel %vm2274, %v3892, 0
      %v3940 = vsel %vm2274, %v3893, 0
      %v3943 = vsel %vm2274, %v3894, 0
      %v3946 = vsel %vm2274, %v3895, 0
      %v3949 = vsel %vm2274, %v3896, 0
      %v3952 = vsel %vm2274, %v3897, 0
      %v3955 = vsel %vm2274, %v3898, 0
      %3957 = vmatprep.subr.mxu0 0.0
      %3958 = vmatpush1.msra.mxu0 %v3926
      %3959 = vmatprep.subr.mxu0 0.0
      %3960 = vmatpush1.msra.mxu0 0.0
      %3961 = vmatprep.subr.mxu0 0.0
      %3962 = vmatpush1.msra.mxu0 0.0
      %3963 = vmatprep.subr.mxu0 0.0
      %3964 = vmatpush1.msra.mxu0 0.0
      %3965 = vmatprep.subr.mxu0 0.0
      %3966 = vmatpush1.msra.mxu0 0.0
      %3967 = vmatprep.subr.mxu0 0.0
      %3968 = vmatpush1.msra.mxu0 0.0
      %3969 = vmatprep.subr.mxu0 0.0
      %3970 = vmatpush1.msra.mxu0 0.0
      %3971 = vmatprep.subr.mxu0 0.0
      %3972 = vmatpush1.msra.mxu0 0.0
      %3973 = vmatprep.subr.mxu0 0.0
      %3974 = vmatpush1.msra.mxu0 0.0
      %3975 = vmatprep.subr.mxu0 0.0
      %3976 = vmatpush1.msra.mxu0 0.0
      %3977 = vmatprep.subr.mxu0 0.0
      %3978 = vmatpush1.msra.mxu0 0.0
      %3979 = vmatprep.subr.mxu0 0.0
      %3980 = vmatpush1.msra.mxu0 0.0
      %3981 = vmatprep.subr.mxu0 0.0
      %3982 = vmatpush1.msra.mxu0 0.0
      %3983 = vmatprep.subr.mxu0 0.0
      %3984 = vmatpush1.msra.mxu0 0.0
      %3985 = vmatprep.subr.mxu0 0.0
      %3986 = vmatpush1.msra.mxu0 0.0
      %3987 = vmatprep.subr.mxu0 0.0
      %3988 = vmatpush1.msra.mxu0 0.0
      %3989 = vmatprep.subr.mxu0 0.0
      %3990 = vmatpush1.msra.mxu0 0.0
      %3991 = vmatprep.subr.mxu0 0.0
      %3992 = vmatpush1.msra.mxu0 0.0
      %3993 = vmatprep.subr.mxu0 0.0
      %3994 = vmatpush1.msra.mxu0 0.0
      %3995 = vmatprep.subr.mxu0 0.0
      %3996 = vmatpush1.msra.mxu0 0.0
      %3997 = vmatprep.subr.mxu0 0.0
      %3998 = vmatpush1.msra.mxu0 0.0
      %3999 = vmatprep.subr.mxu0 0.0
      %4000 = vmatpush1.msra.mxu0 0.0
      %4001 = vmatprep.subr.mxu0 0.0
      %4002 = vmatpush1.msra.mxu0 0.0
      %4003 = vmatprep.subr.mxu0 0.0
      %4004 = vmatpush1.msra.mxu0 0.0
      %4005 = vmatprep.subr.mxu0 0.0
      %4006 = vmatpush1.msra.mxu0 0.0
      %4007 = vmatprep.subr.mxu0 0.0
      %4008 = vmatpush1.msra.mxu0 0.0
      %4009 = vmatprep.subr.mxu0 0.0
      %4010 = vmatpush1.msra.mxu0 0.0
      %4011 = vmatprep.subr.mxu0 0.0
      %4012 = vmatpush1.msra.mxu0 0.0
      %4013 = vmatprep.subr.mxu0 0.0
      %4014 = vmatpush1.msra.mxu0 0.0
      %4015 = vmatprep.subr.mxu0 0.0
      %4016 = vmatpush1.msra.mxu0 0.0
      %4017 = vmatprep.subr.mxu0 0.0
      %4018 = vmatpush1.msra.mxu0 0.0
      %4019 = vmatprep.subr.mxu0 0.0
      %4020 = vmatpush1.msra.mxu0 0.0
      %4021 = vmatprep.mubr.f32.mxu0 0.0
      %4022 = vmatmul.mubr.f32.gmra.mrb[0].mxu0 %v3931
      %v4023 = vpop.f32.mrb[0].mxu0
      %v4024 = vadd.f32 0.0, %v4023
      %v4025 = vpop.f32.mrb[0].mxu0
      %4026 = vmatprep.mubr.f32.mxu0 0.0
      %4027 = vmatmul.mubr.f32.gmra.mrb[0].mxu0 %v3934
      %v4028 = vpop.f32.mrb[0].mxu0
      %v4029 = vadd.f32 0.0, %v4028
      %v4030 = vpop.f32.mrb[0].mxu0
      %4031 = vmatprep.mubr.f32.mxu0 0.0
      %4032 = vmatmul.mubr.f32.gmra.mrb[0].mxu0 %v3937
      %v4033 = vpop.f32.mrb[0].mxu0
      %v4034 = vadd.f32 0.0, %v4033
      %v4035 = vpop.f32.mrb[0].mxu0
      %4036 = vmatprep.mubr.f32.mxu0 0.0
      %4037 = vmatmul.mubr.f32.gmra.mrb[0].mxu0 %v3940
      %v4038 = vpop.f32.mrb[0].mxu0
      %v4039 = vadd.f32 0.0, %v4038
      %v4040 = vpop.f32.mrb[0].mxu0
      %4041 = vmatprep.mubr.f32.mxu0 0.0
      %4042 = vmatmul.mubr.f32.gmra.mrb[0].mxu0 %v3943
      %v4043 = vpop.f32.mrb[0].mxu0
      %v4044 = vadd.f32 0.0, %v4043
      %v4045 = vpop.f32.mrb[0].mxu0
      %4046 = vmatprep.mubr.f32.mxu0 0.0
      %4047 = vmatmul.mubr.f32.gmra.mrb[0].mxu0 %v3946
      %v4048 = vpop.f32.mrb[0].mxu0
      %v4049 = vadd.f32 0.0, %v4048
      %v4050 = vpop.f32.mrb[0].mxu0
      %4051 = vmatprep.mubr.f32.mxu0 0.0
      %4052 = vmatmul.mubr.f32.gmra.mrb[0].mxu0 %v3949
      %v4053 = vpop.f32.mrb[0].mxu0
      %v4054 = vadd.f32 0.0, %v4053
      %v4055 = vpop.f32.mrb[0].mxu0
      %4056 = vmatprep.mubr.f32.mxu0 0.0
      %4057 = vmatmul.mubr.f32.gmra.mrb[0].mxu0 %v3952
      %v4058 = vpop.f32.mrb[0].mxu0
      %v4059 = vadd.f32 0.0, %v4058
      %v4060 = vpop.f32.mrb[0].mxu0
      %4061 = vmatprep.mubr.f32.mxu0 0.0
      %4062 = vmatmul.mubr.f32.gmra.mrb[0].mxu0 %v3955
      %v4063 = vpop.f32.mrb[0].mxu0
      %v4064 = vadd.f32 0.0, %v4063
      %v4065 = vpop.f32.mrb[0].mxu0
      %4066 = vdwg.mxu0
      %v4068 = vsel %vm2274, %v3899, 0
      %v4071 = vsel %vm2274, %v3900, 0
      %v4074 = vsel %vm2274, %v3901, 0
      %v4077 = vsel %vm2274, %v3902, 0
      %v4080 = vsel %vm2274, %v3903, 0
      %v4083 = vsel %vm2274, %v3904, 0
      %v4086 = vsel %vm2274, %v3905, 0
      %v4089 = vsel %vm2274, %v3906, 0
      %v4092 = vsel %vm2274, %v3907, 0
      %4094 = vmatprep.subr.mxu0 0.0
      %4095 = vmatpush1.msra.mxu0 %v3927
      %4096 = vmatprep.subr.mxu0 0.0
      %4097 = vmatpush1.msra.mxu0 0.0
      %4098 = vmatprep.subr.mxu0 0.0
      %4099 = vmatpush1.msra.mxu0 0.0
      %4100 = vmatprep.subr.mxu0 0.0
      %4101 = vmatpush1.msra.mxu0 0.0
      %4102 = vmatprep.subr.mxu0 0.0
      %4103 = vmatpush1.msra.mxu0 0.0
      %4104 = vmatprep.subr.mxu0 0.0
      %4105 = vmatpush1.msra.mxu0 0.0
      %4106 = vmatprep.subr.mxu0 0.0
      %4107 = vmatpush1.msra.mxu0 0.0
      %4108 = vmatprep.subr.mxu0 0.0
      %4109 = vmatpush1.msra.mxu0 0.0
      %4110 = vmatprep.subr.mxu0 0.0
      %4111 = vmatpush1.msra.mxu0 0.0
      %4112 = vmatprep.subr.mxu0 0.0
      %4113 = vmatpush1.msra.mxu0 0.0
      %4114 = vmatprep.subr.mxu0 0.0
      %4115 = vmatpush1.msra.mxu0 0.0
      %4116 = vmatprep.subr.mxu0 0.0
      %4117 = vmatpush1.msra.mxu0 0.0
      %4118 = vmatprep.subr.mxu0 0.0
      %4119 = vmatpush1.msra.mxu0 0.0
      %4120 = vmatprep.subr.mxu0 0.0
      %4121 = vmatpush1.msra.mxu0 0.0
      %4122 = vmatprep.subr.mxu0 0.0
      %4123 = vmatpush1.msra.mxu0 0.0
      %4124 = vmatprep.subr.mxu0 0.0
      %4125 = vmatpush1.msra.mxu0 0.0
      %4126 = vmatprep.subr.mxu0 0.0
      %4127 = vmatpush1.msra.mxu0 0.0
      %4128 = vmatprep.subr.mxu0 0.0
      %4129 = vmatpush1.msra.mxu0 0.0
      %4130 = vmatprep.subr.mxu0 0.0
      %4131 = vmatpush1.msra.mxu0 0.0
      %4132 = vmatprep.subr.mxu0 0.0
      %4133 = vmatpush1.msra.mxu0 0.0
      %4134 = vmatprep.subr.mxu0 0.0
      %4135 = vmatpush1.msra.mxu0 0.0
      %4136 = vmatprep.subr.mxu0 0.0
      %4137 = vmatpush1.msra.mxu0 0.0
      %4138 = vmatprep.subr.mxu0 0.0
      %4139 = vmatpush1.msra.mxu0 0.0
      %4140 = vmatprep.subr.mxu0 0.0
      %4141 = vmatpush1.msra.mxu0 0.0
      %4142 = vmatprep.subr.mxu0 0.0
      %4143 = vmatpush1.msra.mxu0 0.0
      %4144 = vmatprep.subr.mxu0 0.0
      %4145 = vmatpush1.msra.mxu0 0.0
      %4146 = vmatprep.subr.mxu0 0.0
      %4147 = vmatpush1.msra.mxu0 0.0
      %4148 = vmatprep.subr.mxu0 0.0
      %4149 = vmatpush1.msra.mxu0 0.0
      %4150 = vmatprep.subr.mxu0 0.0
      %4151 = vmatpush1.msra.mxu0 0.0
      %4152 = vmatprep.subr.mxu0 0.0
      %4153 = vmatpush1.msra.mxu0 0.0
      %4154 = vmatprep.subr.mxu0 0.0
      %4155 = vmatpush1.msra.mxu0 0.0
      %4156 = vmatprep.subr.mxu0 0.0
      %4157 = vmatpush1.msra.mxu0 0.0
      %4158 = vmatprep.mubr.f32.mxu0 0.0
      %4159 = vmatmul.mubr.f32.gmra.mrb[0].mxu0 %v4068
      %v4160 = vpop.f32.mrb[0].mxu0
      %v4161 = vadd.f32 0.0, %v4160
      %v4162 = vpop.f32.mrb[0].mxu0
      %4163 = vmatprep.mubr.f32.mxu0 0.0
      %4164 = vmatmul.mubr.f32.gmra.mrb[0].mxu0 %v4071
      %v4165 = vpop.f32.mrb[0].mxu0
      %v4166 = vadd.f32 0.0, %v4165
      %v4167 = vpop.f32.mrb[0].mxu0
      %4168 = vmatprep.mubr.f32.mxu0 0.0
      %4169 = vmatmul.mubr.f32.gmra.mrb[0].mxu0 %v4074
      %v4170 = vpop.f32.mrb[0].mxu0
      %v4171 = vadd.f32 0.0, %v4170
      %v4172 = vpop.f32.mrb[0].mxu0
      %4173 = vmatprep.mubr.f32.mxu0 0.0
      %4174 = vmatmul.mubr.f32.gmra.mrb[0].mxu0 %v4077
      %v4175 = vpop.f32.mrb[0].mxu0
      %v4176 = vadd.f32 0.0, %v4175
      %v4177 = vpop.f32.mrb[0].mxu0
      %4178 = vmatprep.mubr.f32.mxu0 0.0
      %4179 = vmatmul.mubr.f32.gmra.mrb[0].mxu0 %v4080
      %v4180 = vpop.f32.mrb[0].mxu0
      %v4181 = vadd.f32 0.0, %v4180
      %v4182 = vpop.f32.mrb[0].mxu0
      %4183 = vmatprep.mubr.f32.mxu0 0.0
      %4184 = vmatmul.mubr.f32.gmra.mrb[0].mxu0 %v4083
      %v4185 = vpop.f32.mrb[0].mxu0
      %v4186 = vadd.f32 0.0, %v4185
      %v4187 = vpop.f32.mrb[0].mxu0
      %4188 = vmatprep.mubr.f32.mxu0 0.0
      %4189 = vmatmul.mubr.f32.gmra.mrb[0].mxu0 %v4086
      %v4190 = vpop.f32.mrb[0].mxu0
      %v4191 = vadd.f32 0.0, %v4190
      %v4192 = vpop.f32.mrb[0].mxu0
      %4193 = vmatprep.mubr.f32.mxu0 0.0
      %4194 = vmatmul.mubr.f32.gmra.mrb[0].mxu0 %v4089
      %v4195 = vpop.f32.mrb[0].mxu0
      %v4196 = vadd.f32 0.0, %v4195
      %v4197 = vpop.f32.mrb[0].mxu0
      %4198 = vmatprep.mubr.f32.mxu0 0.0
      %4199 = vmatmul.mubr.f32.gmra.mrb[0].mxu0 %v4092
      %v4200 = vpop.f32.mrb[0].mxu0
      %v4201 = vadd.f32 0.0, %v4200
      %v4202 = vpop.f32.mrb[0].mxu0
      %4203 = vdwg.mxu0
      %v4205 = vsel %vm2274, %v3908, 0
      %v4208 = vsel %vm2274, %v3909, 0
      %v4211 = vsel %vm2274, %v3910, 0
      %v4214 = vsel %vm2274, %v3911, 0
      %v4217 = vsel %vm2274, %v3912, 0
      %v4220 = vsel %vm2274, %v3913, 0
      %v4223 = vsel %vm2274, %v3914, 0
      %v4226 = vsel %vm2274, %v3915, 0
      %v4229 = vsel %vm2274, %v3916, 0
      %4231 = vmatprep.subr.mxu0 0.0
      %4232 = vmatpush1.msra.mxu0 %v3928
      %4233 = vmatprep.subr.mxu0 0.0
      %4234 = vmatpush1.msra.mxu0 0.0
      %4235 = vmatprep.subr.mxu0 0.0
      %4236 = vmatpush1.msra.mxu0 0.0
      %4237 = vmatprep.subr.mxu0 0.0
      %4238 = vmatpush1.msra.mxu0 0.0
      %4239 = vmatprep.subr.mxu0 0.0
      %4240 = vmatpush1.msra.mxu0 0.0
      %4241 = vmatprep.subr.mxu0 0.0
      %4242 = vmatpush1.msra.mxu0 0.0
      %4243 = vmatprep.subr.mxu0 0.0
      %4244 = vmatpush1.msra.mxu0 0.0
      %4245 = vmatprep.subr.mxu0 0.0
      %4246 = vmatpush1.msra.mxu0 0.0
      %4247 = vmatprep.subr.mxu0 0.0
      %4248 = vmatpush1.msra.mxu0 0.0
      %4249 = vmatprep.subr.mxu0 0.0
      %4250 = vmatpush1.msra.mxu0 0.0
      %4251 = vmatprep.subr.mxu0 0.0
      %4252 = vmatpush1.msra.mxu0 0.0
      %4253 = vmatprep.subr.mxu0 0.0
      %4254 = vmatpush1.msra.mxu0 0.0
      %4255 = vmatprep.subr.mxu0 0.0
      %4256 = vmatpush1.msra.mxu0 0.0
      %4257 = vmatprep.subr.mxu0 0.0
      %4258 = vmatpush1.msra.mxu0 0.0
      %4259 = vmatprep.subr.mxu0 0.0
      %4260 = vmatpush1.msra.mxu0 0.0
      %4261 = vmatprep.subr.mxu0 0.0
      %4262 = vmatpush1.msra.mxu0 0.0
      %4263 = vmatprep.subr.mxu0 0.0
      %4264 = vmatpush1.msra.mxu0 0.0
      %4265 = vmatprep.subr.mxu0 0.0
      %4266 = vmatpush1.msra.mxu0 0.0
      %4267 = vmatprep.subr.mxu0 0.0
      %4268 = vmatpush1.msra.mxu0 0.0
      %4269 = vmatprep.subr.mxu0 0.0
      %4270 = vmatpush1.msra.mxu0 0.0
      %4271 = vmatprep.subr.mxu0 0.0
      %4272 = vmatpush1.msra.mxu0 0.0
      %4273 = vmatprep.subr.mxu0 0.0
      %4274 = vmatpush1.msra.mxu0 0.0
      %4275 = vmatprep.subr.mxu0 0.0
      %4276 = vmatpush1.msra.mxu0 0.0
      %4277 = vmatprep.subr.mxu0 0.0
      %4278 = vmatpush1.msra.mxu0 0.0
      %4279 = vmatprep.subr.mxu0 0.0
      %4280 = vmatpush1.msra.mxu0 0.0
      %4281 = vmatprep.subr.mxu0 0.0
      %4282 = vmatpush1.msra.mxu0 0.0
      %4283 = vmatprep.subr.mxu0 0.0
      %4284 = vmatpush1.msra.mxu0 0.0
      %4285 = vmatprep.subr.mxu0 0.0
      %4286 = vmatpush1.msra.mxu0 0.0
      %4287 = vmatprep.subr.mxu0 0.0
      %4288 = vmatpush1.msra.mxu0 0.0
      %4289 = vmatprep.subr.mxu0 0.0
      %4290 = vmatpush1.msra.mxu0 0.0
      %4291 = vmatprep.subr.mxu0 0.0
      %4292 = vmatpush1.msra.mxu0 0.0
      %4293 = vmatprep.subr.mxu0 0.0
      %4294 = vmatpush1.msra.mxu0 0.0
      %4295 = vmatprep.mubr.f32.mxu0 0.0
      %4296 = vmatmul.mubr.f32.gmra.mrb[0].mxu0 %v4205
      %v4297 = vpop.f32.mrb[0].mxu0
      %v4298 = vadd.f32 0.0, %v4297
      %v4299 = vpop.f32.mrb[0].mxu0
      %4300 = vmatprep.mubr.f32.mxu0 0.0
      %4301 = vmatmul.mubr.f32.gmra.mrb[0].mxu0 %v4208
      %v4302 = vpop.f32.mrb[0].mxu0
      %v4303 = vadd.f32 0.0, %v4302
      %v4304 = vpop.f32.mrb[0].mxu0
      %4305 = vmatprep.mubr.f32.mxu0 0.0
      %4306 = vmatmul.mubr.f32.gmra.mrb[0].mxu0 %v4211
      %v4307 = vpop.f32.mrb[0].mxu0
      %v4308 = vadd.f32 0.0, %v4307
      %v4309 = vpop.f32.mrb[0].mxu0
      %4310 = vmatprep.mubr.f32.mxu0 0.0
      %4311 = vmatmul.mubr.f32.gmra.mrb[0].mxu0 %v4214
      %v4312 = vpop.f32.mrb[0].mxu0
      %v4313 = vadd.f32 0.0, %v4312
      %v4314 = vpop.f32.mrb[0].mxu0
      %4315 = vmatprep.mubr.f32.mxu0 0.0
      %4316 = vmatmul.mubr.f32.gmra.mrb[0].mxu0 %v4217
      %v4317 = vpop.f32.mrb[0].mxu0
      %v4318 = vadd.f32 0.0, %v4317
      %v4319 = vpop.f32.mrb[0].mxu0
      %4320 = vmatprep.mubr.f32.mxu0 0.0
      %4321 = vmatmul.mubr.f32.gmra.mrb[0].mxu0 %v4220
      %v4322 = vpop.f32.mrb[0].mxu0
      %v4323 = vadd.f32 0.0, %v4322
      %v4324 = vpop.f32.mrb[0].mxu0
      %4325 = vmatprep.mubr.f32.mxu0 0.0
      %4326 = vmatmul.mubr.f32.gmra.mrb[0].mxu0 %v4223
      %v4327 = vpop.f32.mrb[0].mxu0
      %v4328 = vadd.f32 0.0, %v4327
      %v4329 = vpop.f32.mrb[0].mxu0
      %4330 = vmatprep.mubr.f32.mxu0 0.0
      %4331 = vmatmul.mubr.f32.gmra.mrb[0].mxu0 %v4226
      %v4332 = vpop.f32.mrb[0].mxu0
      %v4333 = vadd.f32 0.0, %v4332
      %v4334 = vpop.f32.mrb[0].mxu0
      %4335 = vmatprep.mubr.f32.mxu0 0.0
      %4336 = vmatmul.mubr.f32.gmra.mrb[0].mxu0 %v4229
      %v4337 = vpop.f32.mrb[0].mxu0
      %v4338 = vadd.f32 0.0, %v4337
      %v4339 = vpop.f32.mrb[0].mxu0
      %4340 = vdwg.mxu0
      %v4342 = vsel %vm2274, %v3917, 0
      %v4345 = vsel %vm2274, %v3918, 0
      %v4348 = vsel %vm2274, %v3919, 0
      %v4351 = vsel %vm2274, %v3920, 0
      %v4354 = vsel %vm2274, %v3921, 0
      %v4357 = vsel %vm2274, %v3922, 0
      %v4360 = vsel %vm2274, %v3923, 0
      %v4363 = vsel %vm2274, %v3924, 0
      %v4366 = vsel %vm2274, %v3925, 0
      %4368 = vmatprep.subr.mxu0 0.0
      %4369 = vmatpush1.msra.mxu0 %v3929
      %4370 = vmatprep.subr.mxu0 0.0
      %4371 = vmatpush1.msra.mxu0 0.0
      %4372 = vmatprep.subr.mxu0 0.0
      %4373 = vmatpush1.msra.mxu0 0.0
      %4374 = vmatprep.subr.mxu0 0.0
      %4375 = vmatpush1.msra.mxu0 0.0
      %4376 = vmatprep.subr.mxu0 0.0
      %4377 = vmatpush1.msra.mxu0 0.0
      %4378 = vmatprep.subr.mxu0 0.0
      %4379 = vmatpush1.msra.mxu0 0.0
      %4380 = vmatprep.subr.mxu0 0.0
      %4381 = vmatpush1.msra.mxu0 0.0
      %4382 = vmatprep.subr.mxu0 0.0
      %4383 = vmatpush1.msra.mxu0 0.0
      %4384 = vmatprep.subr.mxu0 0.0
      %4385 = vmatpush1.msra.mxu0 0.0
      %4386 = vmatprep.subr.mxu0 0.0
      %4387 = vmatpush1.msra.mxu0 0.0
      %4388 = vmatprep.subr.mxu0 0.0
      %4389 = vmatpush1.msra.mxu0 0.0
      %4390 = vmatprep.subr.mxu0 0.0
      %4391 = vmatpush1.msra.mxu0 0.0
      %4392 = vmatprep.subr.mxu0 0.0
      %4393 = vmatpush1.msra.mxu0 0.0
      %4394 = vmatprep.subr.mxu0 0.0
      %4395 = vmatpush1.msra.mxu0 0.0
      %4396 = vmatprep.subr.mxu0 0.0
      %4397 = vmatpush1.msra.mxu0 0.0
      %4398 = vmatprep.subr.mxu0 0.0
      %4399 = vmatpush1.msra.mxu0 0.0
      %4400 = vmatprep.subr.mxu0 0.0
      %4401 = vmatpush1.msra.mxu0 0.0
      %4402 = vmatprep.subr.mxu0 0.0
      %4403 = vmatpush1.msra.mxu0 0.0
      %4404 = vmatprep.subr.mxu0 0.0
      %4405 = vmatpush1.msra.mxu0 0.0
      %4406 = vmatprep.subr.mxu0 0.0
      %4407 = vmatpush1.msra.mxu0 0.0
      %4408 = vmatprep.subr.mxu0 0.0
      %4409 = vmatpush1.msra.mxu0 0.0
      %4410 = vmatprep.subr.mxu0 0.0
      %4411 = vmatpush1.msra.mxu0 0.0
      %4412 = vmatprep.subr.mxu0 0.0
      %4413 = vmatpush1.msra.mxu0 0.0
      %4414 = vmatprep.subr.mxu0 0.0
      %4415 = vmatpush1.msra.mxu0 0.0
      %4416 = vmatprep.subr.mxu0 0.0
      %4417 = vmatpush1.msra.mxu0 0.0
      %4418 = vmatprep.subr.mxu0 0.0
      %4419 = vmatpush1.msra.mxu0 0.0
      %4420 = vmatprep.subr.mxu0 0.0
      %4421 = vmatpush1.msra.mxu0 0.0
      %4422 = vmatprep.subr.mxu0 0.0
      %4423 = vmatpush1.msra.mxu0 0.0
      %4424 = vmatprep.subr.mxu0 0.0
      %4425 = vmatpush1.msra.mxu0 0.0
      %4426 = vmatprep.subr.mxu0 0.0
      %4427 = vmatpush1.msra.mxu0 0.0
      %4428 = vmatprep.subr.mxu0 0.0
      %4429 = vmatpush1.msra.mxu0 0.0
      %4430 = vmatprep.subr.mxu0 0.0
      %4431 = vmatpush1.msra.mxu0 0.0
      %4432 = vmatprep.mubr.f32.mxu0 0.0
      %4433 = vmatmul.mubr.f32.gmra.mrb[0].mxu0 %v4342
      %v4434 = vpop.f32.mrb[0].mxu0
      %v4435 = vadd.f32 0.0, %v4434
      %v4436 = vpop.f32.mrb[0].mxu0
      %4437 = vmatprep.mubr.f32.mxu0 0.0
      %4438 = vmatmul.mubr.f32.gmra.mrb[0].mxu0 %v4345
      %v4439 = vpop.f32.mrb[0].mxu0
      %v4440 = vadd.f32 0.0, %v4439
      %v4441 = vpop.f32.mrb[0].mxu0
      %4442 = vmatprep.mubr.f32.mxu0 0.0
      %4443 = vmatmul.mubr.f32.gmra.mrb[0].mxu0 %v4348
      %v4444 = vpop.f32.mrb[0].mxu0
      %v4445 = vadd.f32 0.0, %v4444
      %v4446 = vpop.f32.mrb[0].mxu0
      %4447 = vmatprep.mubr.f32.mxu0 0.0
      %4448 = vmatmul.mubr.f32.gmra.mrb[0].mxu0 %v4351
      %v4449 = vpop.f32.mrb[0].mxu0
      %v4450 = vadd.f32 0.0, %v4449
      %v4451 = vpop.f32.mrb[0].mxu0
      %4452 = vmatprep.mubr.f32.mxu0 0.0
      %4453 = vmatmul.mubr.f32.gmra.mrb[0].mxu0 %v4354
      %v4454 = vpop.f32.mrb[0].mxu0
      %v4455 = vadd.f32 0.0, %v4454
      %v4456 = vpop.f32.mrb[0].mxu0
      %4457 = vmatprep.mubr.f32.mxu0 0.0
      %4458 = vmatmul.mubr.f32.gmra.mrb[0].mxu0 %v4357
      %v4459 = vpop.f32.mrb[0].mxu0
      %v4460 = vadd.f32 0.0, %v4459
      %v4461 = vpop.f32.mrb[0].mxu0
      %4462 = vmatprep.mubr.f32.mxu0 0.0
      %4463 = vmatmul.mubr.f32.gmra.mrb[0].mxu0 %v4360
      %v4464 = vpop.f32.mrb[0].mxu0
      %v4465 = vadd.f32 0.0, %v4464
      %v4466 = vpop.f32.mrb[0].mxu0
      %4467 = vmatprep.mubr.f32.mxu0 0.0
      %4468 = vmatmul.mubr.f32.gmra.mrb[0].mxu0 %v4363
      %v4469 = vpop.f32.mrb[0].mxu0
      %v4470 = vadd.f32 0.0, %v4469
      %v4471 = vpop.f32.mrb[0].mxu0
      %4472 = vmatprep.mubr.f32.mxu0 0.0
      %4473 = vmatmul.mubr.f32.gmra.mrb[0].mxu0 %v4366
      %v4474 = vpop.f32.mrb[0].mxu0
      %v4475 = vadd.f32 0.0, %v4474
      %v4476 = vpop.f32.mrb[0].mxu0
      %4477 = vdwg.mxu0
      %v4478 = vsel %vm729, %v4024, 0.0
      %v4479 = vsel %vm729, %v4161, 0.0
      %v4480 = vadd.f32 %v4478, %v4479
      %v4481 = vsel %vm729, %v4298, 0.0
      %v4482 = vadd.f32 %v4480, %v4481
      %v4483 = vsel %vm729, %v4435, 0.0
      %v4484 = vadd.f32 %v4482, %v4483
      %v4485 = vsel %vm729, %v4029, 0.0
      %v4486 = vsel %vm729, %v4166, 0.0
      %v4487 = vadd.f32 %v4485, %v4486
      %v4488 = vsel %vm729, %v4303, 0.0
      %v4489 = vadd.f32 %v4487, %v4488
      %v4490 = vsel %vm729, %v4440, 0.0
      %v4491 = vadd.f32 %v4489, %v4490
      %v4492 = vsel %vm729, %v4034, 0.0
      %v4493 = vsel %vm729, %v4171, 0.0
      %v4494 = vadd.f32 %v4492, %v4493
      %v4495 = vsel %vm729, %v4308, 0.0
      %v4496 = vadd.f32 %v4494, %v4495
      %v4497 = vsel %vm729, %v4445, 0.0
      %v4498 = vadd.f32 %v4496, %v4497
      %v4499 = vsel %vm729, %v4039, 0.0
      %v4500 = vsel %vm729, %v4176, 0.0
      %v4501 = vadd.f32 %v4499, %v4500
      %v4502 = vsel %vm729, %v4313, 0.0
      %v4503 = vadd.f32 %v4501, %v4502
      %v4504 = vsel %vm729, %v4450, 0.0
      %v4505 = vadd.f32 %v4503, %v4504
      %v4506 = vsel %vm729, %v4044, 0.0
      %v4507 = vsel %vm729, %v4181, 0.0
      %v4508 = vadd.f32 %v4506, %v4507
      %v4509 = vsel %vm729, %v4318, 0.0
      %v4510 = vadd.f32 %v4508, %v4509
      %v4511 = vsel %vm729, %v4455, 0.0
      %v4512 = vadd.f32 %v4510, %v4511
      %v4513 = vsel %vm729, %v4049, 0.0
      %v4514 = vsel %vm729, %v4186, 0.0
      %v4515 = vadd.f32 %v4513, %v4514
      %v4516 = vsel %vm729, %v4323, 0.0
      %v4517 = vadd.f32 %v4515, %v4516
      %v4518 = vsel %vm729, %v4460, 0.0
      %v4519 = vadd.f32 %v4517, %v4518
      %v4520 = vsel %vm729, %v4054, 0.0
      %v4521 = vsel %vm729, %v4191, 0.0
      %v4522 = vadd.f32 %v4520, %v4521
      %v4523 = vsel %vm729, %v4328, 0.0
      %v4524 = vadd.f32 %v4522, %v4523
      %v4525 = vsel %vm729, %v4465, 0.0
      %v4526 = vadd.f32 %v4524, %v4525
      %v4527 = vsel %vm729, %v4059, 0.0
      %v4528 = vsel %vm729, %v4196, 0.0
      %v4529 = vadd.f32 %v4527, %v4528
      %v4530 = vsel %vm729, %v4333, 0.0
      %v4531 = vadd.f32 %v4529, %v4530
      %v4532 = vsel %vm729, %v4470, 0.0
      %v4533 = vadd.f32 %v4531, %v4532
      %v4534 = vsel %vm754, %v4064, 0.0
      %v4535 = vsel %vm754, %v4201, 0.0
      %v4536 = vadd.f32 %v4534, %v4535
      %v4537 = vsel %vm754, %v4338, 0.0
      %v4538 = vadd.f32 %v4536, %v4537
      %v4539 = vsel %vm754, %v4475, 0.0
      %v4540 = vadd.f32 %v4538, %v4539
      %v4541 = vadd.f32 %v718, %v4484
      %v4542 = vadd.f32 %v719, %v4491
      %v4543 = vadd.f32 %v720, %v4498
      %v4544 = vadd.f32 %v721, %v4505
      %v4545 = vadd.f32 %v722, %v4512
      %v4546 = vadd.f32 %v723, %v4519
      %v4547 = vadd.f32 %v724, %v4526
      %v4548 = vadd.f32 %v725, %v4533
      %v4549 = vadd.f32 %v726, %v4540
      %v4550 = vld [vmem:[%s10] sm:$0x1]
      %v4552 = vlaneseq
      %v4553 = vshrl.u32 %v4552, 7
      %v4554 = vsub.s32 0, %v4553
      %v4555 = vrot.slane %v4550, %v4554
      %v4557 = vadd.f32 %v4541, %v4555
      %v4558 = vadd.f32 %v4542, %v4555
      %v4559 = vadd.f32 %v4543, %v4555
      %v4560 = vadd.f32 %v4544, %v4555
      %v4561 = vadd.f32 %v4545, %v4555
      %v4562 = vadd.f32 %v4546, %v4555
      %v4563 = vadd.f32 %v4547, %v4555
      %v4564 = vadd.f32 %v4548, %v4555
      %v4565 = vadd.f32 %v4549, %v4555
      %v4566 = vld [vmem:[%s11] sm:$0x1]
      %v4567 = vld [vmem:[%s12] sm:$0x1]
      %v4568 = vsel %vm729, %v4557, 0.0
      %4569 = vadd.xlane.f32.xlu0 %v4568
      %v4570 = vpop.xlane.xlu0 %4569
      %v4571 = vsel %vm729, %v4558, 0.0
      %4572 = vadd.xlane.f32.xlu0 %v4571
      %v4573 = vpop.xlane.xlu0 %4572
      %v4574 = vsel %vm729, %v4559, 0.0
      %4575 = vadd.xlane.f32.xlu0 %v4574
      %v4576 = vpop.xlane.xlu0 %4575
      %v4577 = vsel %vm729, %v4560, 0.0
      %4578 = vadd.xlane.f32.xlu0 %v4577
      %v4579 = vpop.xlane.xlu0 %4578
      %v4580 = vsel %vm729, %v4561, 0.0
      %4581 = vadd.xlane.f32.xlu0 %v4580
      %v4582 = vpop.xlane.xlu0 %4581
      %v4583 = vsel %vm729, %v4562, 0.0
      %4584 = vadd.xlane.f32.xlu0 %v4583
      %v4585 = vpop.xlane.xlu0 %4584
      %v4586 = vsel %vm729, %v4563, 0.0
      %4587 = vadd.xlane.f32.xlu0 %v4586
      %v4588 = vpop.xlane.xlu0 %4587
      %v4589 = vsel %vm729, %v4564, 0.0
      %4590 = vadd.xlane.f32.xlu0 %v4589
      %v4591 = vpop.xlane.xlu0 %4590
      %v4592 = vsel %vm754, %v4565, 0.0
      %4593 = vadd.xlane.f32.xlu0 %v4592
      %v4594 = vpop.xlane.xlu0 %4593
      %v4595 = vmul.f32 %v4570, %v758
      %v4596 = vmul.f32 %v4573, %v758
      %v4597 = vmul.f32 %v4576, %v758
      %v4598 = vmul.f32 %v4579, %v758
      %v4599 = vmul.f32 %v4582, %v758
      %v4600 = vmul.f32 %v4585, %v758
      %v4601 = vmul.f32 %v4588, %v758
      %v4602 = vmul.f32 %v4591, %v758
      %v4603 = vmul.f32 %v4594, %v758
      %v4604 = vsub.f32 %v4557, %v4595
      %v4605 = vsub.f32 %v4558, %v4596
      %v4606 = vsub.f32 %v4559, %v4597
      %v4607 = vsub.f32 %v4560, %v4598
      %v4608 = vsub.f32 %v4561, %v4599
      %v4609 = vsub.f32 %v4562, %v4600
      %v4610 = vsub.f32 %v4563, %v4601
      %v4611 = vsub.f32 %v4564, %v4602
      %v4612 = vsub.f32 %v4565, %v4603
      %v4613 = vmul.f32 %v4604, %v4604
      %v4614 = vmul.f32 %v4605, %v4605
      %v4615 = vmul.f32 %v4606, %v4606
      %v4616 = vmul.f32 %v4607, %v4607
      %v4617 = vmul.f32 %v4608, %v4608
      %v4618 = vmul.f32 %v4609, %v4609
      %v4619 = vmul.f32 %v4610, %v4610
      %v4620 = vmul.f32 %v4611, %v4611
      %v4621 = vmul.f32 %v4612, %v4612
      %v4622 = vsel %vm729, %v4613, 0.0
      %4623 = vadd.xlane.f32.xlu0 %v4622
      %v4624 = vpop.xlane.xlu0 %4623
      %v4625 = vsel %vm729, %v4614, 0.0
      %4626 = vadd.xlane.f32.xlu0 %v4625
      %v4627 = vpop.xlane.xlu0 %4626
      %v4628 = vsel %vm729, %v4615, 0.0
      %4629 = vadd.xlane.f32.xlu0 %v4628
      %v4630 = vpop.xlane.xlu0 %4629
      %v4631 = vsel %vm729, %v4616, 0.0
      %4632 = vadd.xlane.f32.xlu0 %v4631
      %v4633 = vpop.xlane.xlu0 %4632
      %v4634 = vsel %vm729, %v4617, 0.0
      %4635 = vadd.xlane.f32.xlu0 %v4634
      %v4636 = vpop.xlane.xlu0 %4635
      %v4637 = vsel %vm729, %v4618, 0.0
      %4638 = vadd.xlane.f32.xlu0 %v4637
      %v4639 = vpop.xlane.xlu0 %4638
      %v4640 = vsel %vm729, %v4619, 0.0
      %4641 = vadd.xlane.f32.xlu0 %v4640
      %v4642 = vpop.xlane.xlu0 %4641
      %v4643 = vsel %vm729, %v4620, 0.0
      %4644 = vadd.xlane.f32.xlu0 %v4643
      %v4645 = vpop.xlane.xlu0 %4644
      %v4646 = vsel %vm754, %v4621, 0.0
      %4647 = vadd.xlane.f32.xlu0 %v4646
      %v4648 = vpop.xlane.xlu0 %4647
      %v4649 = vmul.f32 %v4624, %v758
      %v4650 = vmul.f32 %v4627, %v758
      %v4651 = vmul.f32 %v4630, %v758
      %v4652 = vmul.f32 %v4633, %v758
      %v4653 = vmul.f32 %v4636, %v758
      %v4654 = vmul.f32 %v4639, %v758
      %v4655 = vmul.f32 %v4642, %v758
      %v4656 = vmul.f32 %v4645, %v758
      %v4657 = vmul.f32 %v4648, %v758
      %v4658 = vadd.f32 %v4649, 1e-05
      %v4659 = vadd.f32 %v4650, 1e-05
      %v4660 = vadd.f32 %v4651, 1e-05
      %v4661 = vadd.f32 %v4652, 1e-05
      %v4662 = vadd.f32 %v4653, 1e-05
      %v4663 = vadd.f32 %v4654, 1e-05
      %v4664 = vadd.f32 %v4655, 1e-05
      %v4665 = vadd.f32 %v4656, 1e-05
      %v4666 = vadd.f32 %v4657, 1e-05
      %v4667 = vrsqrt.pop %v4658
      %v4668 = vrsqrt.pop %v4659
      %v4669 = vrsqrt.pop %v4660
      %v4670 = vrsqrt.pop %v4661
      %v4671 = vrsqrt.pop %v4662
      %v4672 = vrsqrt.pop %v4663
      %v4673 = vrsqrt.pop %v4664
      %v4674 = vrsqrt.pop %v4665
      %v4675 = vrsqrt.pop %v4666
      %v4676 = vmul.f32 %v4604, %v4667
      %v4677 = vmul.f32 %v4605, %v4668
      %v4678 = vmul.f32 %v4606, %v4669
      %v4679 = vmul.f32 %v4607, %v4670
      %v4680 = vmul.f32 %v4608, %v4671
      %v4681 = vmul.f32 %v4609, %v4672
      %v4682 = vmul.f32 %v4610, %v4673
      %v4683 = vmul.f32 %v4611, %v4674
      %v4684 = vmul.f32 %v4612, %v4675
      %v4686 = vlaneseq
      %v4687 = vshrl.u32 %v4686, 7
      %v4688 = vsub.s32 0, %v4687
      %v4689 = vrot.slane %v4566, %v4688
      %v4691 = vmul.f32 %v4676, %v4689
      %v4692 = vmul.f32 %v4677, %v4689
      %v4693 = vmul.f32 %v4678, %v4689
      %v4694 = vmul.f32 %v4679, %v4689
      %v4695 = vmul.f32 %v4680, %v4689
      %v4696 = vmul.f32 %v4681, %v4689
      %v4697 = vmul.f32 %v4682, %v4689
      %v4698 = vmul.f32 %v4683, %v4689
      %v4699 = vmul.f32 %v4684, %v4689
      %v4701 = vlaneseq
      %v4702 = vshrl.u32 %v4701, 7
      %v4703 = vsub.s32 0, %v4702
      %v4704 = vrot.slane %v4567, %v4703
      %v4706 = vadd.f32 %v4691, %v4704
      %v4707 = vadd.f32 %v4692, %v4704
      %v4708 = vadd.f32 %v4693, %v4704
      %v4709 = vadd.f32 %v4694, %v4704
      %v4710 = vadd.f32 %v4695, %v4704
      %v4711 = vadd.f32 %v4696, %v4704
      %v4712 = vadd.f32 %v4697, %v4704
      %v4713 = vadd.f32 %v4698, %v4704
      %v4714 = vadd.f32 %v4699, %v4704
      %v4715 = vld [vmem:[%s13] sm:$0xff]
      %v4716 = vld [vmem:[%s13 + $0x8] sm:$0xff]
      %v4717 = vld [vmem:[%s13 + $0x10] sm:$0xff]
      %v4718 = vld [vmem:[%s13 + $0x18] sm:$0xff]
      %v4719 = vld [vmem:[%s14] sm:$0x1]
      %v4721 = vlaneseq
      %v4722 = vshrl.u32 %v4721, 7
      %v4723 = vsub.s32 0, %v4722
      %v4724 = vrot.slane %v4719, %v4723
      %v4727 = vsel %vm729, %v4706, 0
      %v4730 = vsel %vm729, %v4707, 0
      %v4733 = vsel %vm729, %v4708, 0
      %v4736 = vsel %vm729, %v4709, 0
      %v4739 = vsel %vm729, %v4710, 0
      %v4742 = vsel %vm729, %v4711, 0
      %v4745 = vsel %vm729, %v4712, 0
      %v4748 = vsel %vm729, %v4713, 0
      %v4751 = vsel %vm729, %v4714, 0
      %4753 = vmatprep.subr.mxu0 0.0
      %4754 = vmatpush1.msra.mxu0 %v4715
      %4755 = vmatprep.subr.mxu0 0.0
      %4756 = vmatpush1.msra.mxu0 %v4716
      %4757 = vmatprep.subr.mxu0 0.0
      %4758 = vmatpush1.msra.mxu0 %v4717
      %4759 = vmatprep.subr.mxu0 0.0
      %4760 = vmatpush1.msra.mxu0 %v4718
      %4761 = vmatprep.subr.mxu0 0.0
      %4762 = vmatpush1.msra.mxu0 0.0
      %4763 = vmatprep.subr.mxu0 0.0
      %4764 = vmatpush1.msra.mxu0 0.0
      %4765 = vmatprep.subr.mxu0 0.0
      %4766 = vmatpush1.msra.mxu0 0.0
      %4767 = vmatprep.subr.mxu0 0.0
      %4768 = vmatpush1.msra.mxu0 0.0
      %4769 = vmatprep.subr.mxu0 0.0
      %4770 = vmatpush1.msra.mxu0 0.0
      %4771 = vmatprep.subr.mxu0 0.0
      %4772 = vmatpush1.msra.mxu0 0.0
      %4773 = vmatprep.subr.mxu0 0.0
      %4774 = vmatpush1.msra.mxu0 0.0
      %4775 = vmatprep.subr.mxu0 0.0
      %4776 = vmatpush1.msra.mxu0 0.0
      %4777 = vmatprep.subr.mxu0 0.0
      %4778 = vmatpush1.msra.mxu0 0.0
      %4779 = vmatprep.subr.mxu0 0.0
      %4780 = vmatpush1.msra.mxu0 0.0
      %4781 = vmatprep.subr.mxu0 0.0
      %4782 = vmatpush1.msra.mxu0 0.0
      %4783 = vmatprep.subr.mxu0 0.0
      %4784 = vmatpush1.msra.mxu0 0.0
      %4785 = vmatprep.subr.mxu0 0.0
      %4786 = vmatpush1.msra.mxu0 0.0
      %4787 = vmatprep.subr.mxu0 0.0
      %4788 = vmatpush1.msra.mxu0 0.0
      %4789 = vmatprep.subr.mxu0 0.0
      %4790 = vmatpush1.msra.mxu0 0.0
      %4791 = vmatprep.subr.mxu0 0.0
      %4792 = vmatpush1.msra.mxu0 0.0
      %4793 = vmatprep.subr.mxu0 0.0
      %4794 = vmatpush1.msra.mxu0 0.0
      %4795 = vmatprep.subr.mxu0 0.0
      %4796 = vmatpush1.msra.mxu0 0.0
      %4797 = vmatprep.subr.mxu0 0.0
      %4798 = vmatpush1.msra.mxu0 0.0
      %4799 = vmatprep.subr.mxu0 0.0
      %4800 = vmatpush1.msra.mxu0 0.0
      %4801 = vmatprep.subr.mxu0 0.0
      %4802 = vmatpush1.msra.mxu0 0.0
      %4803 = vmatprep.subr.mxu0 0.0
      %4804 = vmatpush1.msra.mxu0 0.0
      %4805 = vmatprep.subr.mxu0 0.0
      %4806 = vmatpush1.msra.mxu0 0.0
      %4807 = vmatprep.subr.mxu0 0.0
      %4808 = vmatpush1.msra.mxu0 0.0
      %4809 = vmatprep.subr.mxu0 0.0
      %4810 = vmatpush1.msra.mxu0 0.0
      %4811 = vmatprep.subr.mxu0 0.0
      %4812 = vmatpush1.msra.mxu0 0.0
      %4813 = vmatprep.subr.mxu0 0.0
      %4814 = vmatpush1.msra.mxu0 0.0
      %4815 = vmatprep.subr.mxu0 0.0
      %4816 = vmatpush1.msra.mxu0 0.0
      %4817 = vmatprep.mubr.f32.mxu0 0.0
      %4818 = vmatmul.mubr.f32.gmra.mrb[0].mxu0 %v4727
      %v4819 = vpop.f32.mrb[0].mxu0
      %v4820 = vadd.f32 %v4724, %v4819
      %v4821 = vpop.f32.mrb[0].mxu0
      %4822 = vmatprep.mubr.f32.mxu0 0.0
      %4823 = vmatmul.mubr.f32.gmra.mrb[0].mxu0 %v4730
      %v4824 = vpop.f32.mrb[0].mxu0
      %v4825 = vadd.f32 %v4724, %v4824
      %v4826 = vpop.f32.mrb[0].mxu0
      %4827 = vmatprep.mubr.f32.mxu0 0.0
      %4828 = vmatmul.mubr.f32.gmra.mrb[0].mxu0 %v4733
      %v4829 = vpop.f32.mrb[0].mxu0
      %v4830 = vadd.f32 %v4724, %v4829
      %v4831 = vpop.f32.mrb[0].mxu0
      %4832 = vmatprep.mubr.f32.mxu0 0.0
      %4833 = vmatmul.mubr.f32.gmra.mrb[0].mxu0 %v4736
      %v4834 = vpop.f32.mrb[0].mxu0
      %v4835 = vadd.f32 %v4724, %v4834
      %v4836 = vpop.f32.mrb[0].mxu0
      %4837 = vmatprep.mubr.f32.mxu0 0.0
      %4838 = vmatmul.mubr.f32.gmra.mrb[0].mxu0 %v4739
      %v4839 = vpop.f32.mrb[0].mxu0
      %v4840 = vadd.f32 %v4724, %v4839
      %v4841 = vpop.f32.mrb[0].mxu0
      %4842 = vmatprep.mubr.f32.mxu0 0.0
      %4843 = vmatmul.mubr.f32.gmra.mrb[0].mxu0 %v4742
      %v4844 = vpop.f32.mrb[0].mxu0
      %v4845 = vadd.f32 %v4724, %v4844
      %v4846 = vpop.f32.mrb[0].mxu0
      %4847 = vmatprep.mubr.f32.mxu0 0.0
      %4848 = vmatmul.mubr.f32.gmra.mrb[0].mxu0 %v4745
      %v4849 = vpop.f32.mrb[0].mxu0
      %v4850 = vadd.f32 %v4724, %v4849
      %v4851 = vpop.f32.mrb[0].mxu0
      %4852 = vmatprep.mubr.f32.mxu0 0.0
      %4853 = vmatmul.mubr.f32.gmra.mrb[0].mxu0 %v4748
      %v4854 = vpop.f32.mrb[0].mxu0
      %v4855 = vadd.f32 %v4724, %v4854
      %v4856 = vpop.f32.mrb[0].mxu0
      %4857 = vmatprep.mubr.f32.mxu0 0.0
      %4858 = vmatmul.mubr.f32.gmra.mrb[0].mxu0 %v4751
      %v4859 = vpop.f32.mrb[0].mxu0
      %v4860 = vadd.f32 %v4724, %v4859
      %v4861 = vpop.f32.mrb[0].mxu0
      %4862 = vdwg.mxu0
      %v4863 = vmul.f32 %v4820, 0.5
      %v4864 = vmul.f32 %v4825, 0.5
      %v4865 = vmul.f32 %v4830, 0.5
      %v4866 = vmul.f32 %v4835, 0.5
      %v4867 = vmul.f32 %v4840, 0.5
      %v4868 = vmul.f32 %v4845, 0.5
      %v4869 = vmul.f32 %v4850, 0.5
      %v4870 = vmul.f32 %v4855, 0.5
      %v4871 = vmul.f32 %v4860, 0.5
      %v4872 = vmul.f32 %v4820, 0.70710677
      %v4873 = vmul.f32 %v4825, 0.70710677
      %v4874 = vmul.f32 %v4830, 0.70710677
      %v4875 = vmul.f32 %v4835, 0.70710677
      %v4876 = vmul.f32 %v4840, 0.70710677
      %v4877 = vmul.f32 %v4845, 0.70710677
      %v4878 = vmul.f32 %v4850, 0.70710677
      %v4879 = vmul.f32 %v4855, 0.70710677
      %v4880 = vmul.f32 %v4860, 0.70710677
      %v4881 = vmax.f32 %v4872, -4.0
      %v4882 = vmax.f32 %v4873, -4.0
      %v4883 = vmax.f32 %v4874, -4.0
      %v4884 = vmax.f32 %v4875, -4.0
      %v4885 = vmax.f32 %v4876, -4.0
      %v4886 = vmax.f32 %v4877, -4.0
      %v4887 = vmax.f32 %v4878, -4.0
      %v4888 = vmax.f32 %v4879, -4.0
      %v4889 = vmax.f32 %v4880, -4.0
      %v4890 = vmin.f32 %v4881, 4.0
      %v4891 = vmin.f32 %v4882, 4.0
      %v4892 = vmin.f32 %v4883, 4.0
      %v4893 = vmin.f32 %v4884, 4.0
      %v4894 = vmin.f32 %v4885, 4.0
      %v4895 = vmin.f32 %v4886, 4.0
      %v4896 = vmin.f32 %v4887, 4.0
      %v4897 = vmin.f32 %v4888, 4.0
      %v4898 = vmin.f32 %v4889, 4.0
      %v4899 = vmul.f32 %v4890, %v4890
      %v4900 = vmul.f32 %v4891, %v4891
      %v4901 = vmul.f32 %v4892, %v4892
      %v4902 = vmul.f32 %v4893, %v4893
      %v4903 = vmul.f32 %v4894, %v4894
      %v4904 = vmul.f32 %v4895, %v4895
      %v4905 = vmul.f32 %v4896, %v4896
      %v4906 = vmul.f32 %v4897, %v4897
      %v4907 = vmul.f32 %v4898, %v4898
      %v4908 = vmul.f32 %v4899, -2.7261424e-10
      %v4909 = vmul.f32 %v4900, -2.7261424e-10
      %v4910 = vmul.f32 %v4901, -2.7261424e-10
      %v4911 = vmul.f32 %v4902, -2.7261424e-10
      %v4912 = vmul.f32 %v4903, -2.7261424e-10
      %v4913 = vmul.f32 %v4904, -2.7261424e-10
      %v4914 = vmul.f32 %v4905, -2.7261424e-10
      %v4915 = vmul.f32 %v4906, -2.7261424e-10
      %v4916 = vmul.f32 %v4907, -2.7261424e-10
      %v4917 = vadd.f32 %v4908, 2.7706815e-08
      %v4918 = vadd.f32 %v4909, 2.7706815e-08
      %v4919 = vadd.f32 %v4910, 2.7706815e-08
      %v4920 = vadd.f32 %v4911, 2.7706815e-08
      %v4921 = vadd.f32 %v4912, 2.7706815e-08
      %v4922 = vadd.f32 %v4913, 2.7706815e-08
      %v4923 = vadd.f32 %v4914, 2.7706815e-08
      %v4924 = vadd.f32 %v4915, 2.7706815e-08
      %v4925 = vadd.f32 %v4916, 2.7706815e-08
      %v4926 = vmul.f32 %v4917, %v4899
      %v4927 = vmul.f32 %v4918, %v4900
      %v4928 = vmul.f32 %v4919, %v4901
      %v4929 = vmul.f32 %v4920, %v4902
      %v4930 = vmul.f32 %v4921, %v4903
      %v4931 = vmul.f32 %v4922, %v4904
      %v4932 = vmul.f32 %v4923, %v4905
      %v4933 = vmul.f32 %v4924, %v4906
      %v4934 = vmul.f32 %v4925, %v4907
      %v4935 = vadd.f32 %v4926, -2.101024e-06
      %v4936 = vadd.f32 %v4927, -2.101024e-06
      %v4937 = vadd.f32 %v4928, -2.101024e-06
      %v4938 = vadd.f32 %v4929, -2.101024e-06
      %v4939 = vadd.f32 %v4930, -2.101024e-06
      %v4940 = vadd.f32 %v4931, -2.101024e-06
      %v4941 = vadd.f32 %v4932, -2.101024e-06
      %v4942 = vadd.f32 %v4933, -2.101024e-06
      %v4943 = vadd.f32 %v4934, -2.101024e-06
      %v4944 = vmul.f32 %v4935, %v4899
      %v4945 = vmul.f32 %v4936, %v4900
      %v4946 = vmul.f32 %v4937, %v4901
      %v4947 = vmul.f32 %v4938, %v4902
      %v4948 = vmul.f32 %v4939, %v4903
      %v4949 = vmul.f32 %v4940, %v4904
      %v4950 = vmul.f32 %v4941, %v4905
      %v4951 = vmul.f32 %v4942, %v4906
      %v4952 = vmul.f32 %v4943, %v4907
      %v4953 = vadd.f32 %v4944, -5.6925062e-05
      %v4954 = vadd.f32 %v4945, -5.6925062e-05
      %v4955 = vadd.f32 %v4946, -5.6925062e-05
      %v4956 = vadd.f32 %v4947, -5.6925062e-05
      %v4957 = vadd.f32 %v4948, -5.6925062e-05
      %v4958 = vadd.f32 %v4949, -5.6925062e-05
      %v4959 = vadd.f32 %v4950, -5.6925062e-05
      %v4960 = vadd.f32 %v4951, -5.6925062e-05
      %v4961 = vadd.f32 %v4952, -5.6925062e-05
      %v4962 = vmul.f32 %v4953, %v4899
      %v4963 = vmul.f32 %v4954, %v4900
      %v4964 = vmul.f32 %v4955, %v4901
      %v4965 = vmul.f32 %v4956, %v4902
      %v4966 = vmul.f32 %v4957, %v4903
      %v4967 = vmul.f32 %v4958, %v4904
      %v4968 = vmul.f32 %v4959, %v4905
      %v4969 = vmul.f32 %v4960, %v4906
      %v4970 = vmul.f32 %v4961, %v4907
      %v4971 = vadd.f32 %v4962, -0.00073499064
      %v4972 = vadd.f32 %v4963, -0.00073499064
      %v4973 = vadd.f32 %v4964, -0.00073499064
      %v4974 = vadd.f32 %v4965, -0.00073499064
      %v4975 = vadd.f32 %v4966, -0.00073499064
      %v4976 = vadd.f32 %v4967, -0.00073499064
      %v4977 = vadd.f32 %v4968, -0.00073499064
      %v4978 = vadd.f32 %v4969, -0.00073499064
      %v4979 = vadd.f32 %v4970, -0.00073499064
      %v4980 = vmul.f32 %v4971, %v4899
      %v4981 = vmul.f32 %v4972, %v4900
      %v4982 = vmul.f32 %v4973, %v4901
      %v4983 = vmul.f32 %v4974, %v4902
      %v4984 = vmul.f32 %v4975, %v4903
      %v4985 = vmul.f32 %v4976, %v4904
      %v4986 = vmul.f32 %v4977, %v4905
      %v4987 = vmul.f32 %v4978, %v4906
      %v4988 = vmul.f32 %v4979, %v4907
      %v4989 = vadd.f32 %v4980, -0.0029546
      %v4990 = vadd.f32 %v4981, -0.0029546
      %v4991 = vadd.f32 %v4982, -0.0029546
      %v4992 = vadd.f32 %v4983, -0.0029546
      %v4993 = vadd.f32 %v4984, -0.0029546
      %v4994 = vadd.f32 %v4985, -0.0029546
      %v4995 = vadd.f32 %v4986, -0.0029546
      %v4996 = vadd.f32 %v4987, -0.0029546
      %v4997 = vadd.f32 %v4988, -0.0029546
      %v4998 = vmul.f32 %v4989, %v4899
      %v4999 = vmul.f32 %v4990, %v4900
      %v5000 = vmul.f32 %v4991, %v4901
      %v5001 = vmul.f32 %v4992, %v4902
      %v5002 = vmul.f32 %v4993, %v4903
      %v5003 = vmul.f32 %v4994, %v4904
      %v5004 = vmul.f32 %v4995, %v4905
      %v5005 = vmul.f32 %v4996, %v4906
      %v5006 = vmul.f32 %v4997, %v4907
      %v5007 = vadd.f32 %v4998, -0.016096033
      %v5008 = vadd.f32 %v4999, -0.016096033
      %v5009 = vadd.f32 %v5000, -0.016096033
      %v5010 = vadd.f32 %v5001, -0.016096033
      %v5011 = vadd.f32 %v5002, -0.016096033
      %v5012 = vadd.f32 %v5003, -0.016096033
      %v5013 = vadd.f32 %v5004, -0.016096033
      %v5014 = vadd.f32 %v5005, -0.016096033
      %v5015 = vadd.f32 %v5006, -0.016096033
      %v5016 = vmul.f32 %v4899, -1.45660715e-05
      %v5017 = vmul.f32 %v4900, -1.45660715e-05
      %v5018 = vmul.f32 %v4901, -1.45660715e-05
      %v5019 = vmul.f32 %v4902, -1.45660715e-05
      %v5020 = vmul.f32 %v4903, -1.45660715e-05
      %v5021 = vmul.f32 %v4904, -1.45660715e-05
      %v5022 = vmul.f32 %v4905, -1.45660715e-05
      %v5023 = vmul.f32 %v4906, -1.45660715e-05
      %v5024 = vmul.f32 %v4907, -1.45660715e-05
      %v5025 = vadd.f32 %v5016, -0.00021337405
      %v5026 = vadd.f32 %v5017, -0.00021337405
      %v5027 = vadd.f32 %v5018, -0.00021337405
      %v5028 = vadd.f32 %v5019, -0.00021337405
      %v5029 = vadd.f32 %v5020, -0.00021337405
      %v5030 = vadd.f32 %v5021, -0.00021337405
      %v5031 = vadd.f32 %v5022, -0.00021337405
      %v5032 = vadd.f32 %v5023, -0.00021337405
      %v5033 = vadd.f32 %v5024, -0.00021337405
      %v5034 = vmul.f32 %v5025, %v4899
      %v5035 = vmul.f32 %v5026, %v4900
      %v5036 = vmul.f32 %v5027, %v4901
      %v5037 = vmul.f32 %v5028, %v4902
      %v5038 = vmul.f32 %v5029, %v4903
      %v5039 = vmul.f32 %v5030, %v4904
      %v5040 = vmul.f32 %v5031, %v4905
      %v5041 = vmul.f32 %v5032, %v4906
      %v5042 = vmul.f32 %v5033, %v4907
      %v5043 = vadd.f32 %v5034, -0.001682827
      %v5044 = vadd.f32 %v5035, -0.001682827
      %v5045 = vadd.f32 %v5036, -0.001682827
      %v5046 = vadd.f32 %v5037, -0.001682827
      %v5047 = vadd.f32 %v5038, -0.001682827
      %v5048 = vadd.f32 %v5039, -0.001682827
      %v5049 = vadd.f32 %v5040, -0.001682827
      %v5050 = vadd.f32 %v5041, -0.001682827
      %v5051 = vadd.f32 %v5042, -0.001682827
      %v5052 = vmul.f32 %v5043, %v4899
      %v5053 = vmul.f32 %v5044, %v4900
      %v5054 = vmul.f32 %v5045, %v4901
      %v5055 = vmul.f32 %v5046, %v4902
      %v5056 = vmul.f32 %v5047, %v4903
      %v5057 = vmul.f32 %v5048, %v4904
      %v5058 = vmul.f32 %v5049, %v4905
      %v5059 = vmul.f32 %v5050, %v4906
      %v5060 = vmul.f32 %v5051, %v4907
      %v5061 = vadd.f32 %v5052, -0.0073733293
      %v5062 = vadd.f32 %v5053, -0.0073733293
      %v5063 = vadd.f32 %v5054, -0.0073733293
      %v5064 = vadd.f32 %v5055, -0.0073733293
      %v5065 = vadd.f32 %v5056, -0.0073733293
      %v5066 = vadd.f32 %v5057, -0.0073733293
      %v5067 = vadd.f32 %v5058, -0.0073733293
      %v5068 = vadd.f32 %v5059, -0.0073733293
      %v5069 = vadd.f32 %v5060, -0.0073733293
      %v5070 = vmul.f32 %v5061, %v4899
      %v5071 = vmul.f32 %v5062, %v4900
      %v5072 = vmul.f32 %v5063, %v4901
      %v5073 = vmul.f32 %v5064, %v4902
      %v5074 = vmul.f32 %v5065, %v4903
      %v5075 = vmul.f32 %v5066, %v4904
      %v5076 = vmul.f32 %v5067, %v4905
      %v5077 = vmul.f32 %v5068, %v4906
      %v5078 = vmul.f32 %v5069, %v4907
      %v5079 = vadd.f32 %v5070, -0.014264739
      %v5080 = vadd.f32 %v5071, -0.014264739
      %v5081 = vadd.f32 %v5072, -0.014264739
      %v5082 = vadd.f32 %v5073, -0.014264739
      %v5083 = vadd.f32 %v5074, -0.014264739
      %v5084 = vadd.f32 %v5075, -0.014264739
      %v5085 = vadd.f32 %v5076, -0.014264739
      %v5086 = vadd.f32 %v5077, -0.014264739
      %v5087 = vadd.f32 %v5078, -0.014264739
      %v5088 = vmul.f32 %v4890, %v5007
      %v5089 = vmul.f32 %v4891, %v5008
      %v5090 = vmul.f32 %v4892, %v5009
      %v5091 = vmul.f32 %v4893, %v5010
      %v5092 = vmul.f32 %v4894, %v5011
      %v5093 = vmul.f32 %v4895, %v5012
      %v5094 = vmul.f32 %v4896, %v5013
      %v5095 = vmul.f32 %v4897, %v5014
      %v5096 = vmul.f32 %v4898, %v5015
      %v5097 = vrcp.pop %v5079
      %v5098 = vmul.f32 %v5088, %v5097
      %v5099 = vrcp.pop %v5080
      %v5100 = vmul.f32 %v5089, %v5099
      %v5101 = vrcp.pop %v5081
      %v5102 = vmul.f32 %v5090, %v5101
      %v5103 = vrcp.pop %v5082
      %v5104 = vmul.f32 %v5091, %v5103
      %v5105 = vrcp.pop %v5083
      %v5106 = vmul.f32 %v5092, %v5105
      %v5107 = vrcp.pop %v5084
      %v5108 = vmul.f32 %v5093, %v5107
      %v5109 = vrcp.pop %v5085
      %v5110 = vmul.f32 %v5094, %v5109
      %v5111 = vrcp.pop %v5086
      %v5112 = vmul.f32 %v5095, %v5111
      %v5113 = vrcp.pop %v5087
      %v5114 = vmul.f32 %v5096, %v5113
      %v5115 = vadd.f32 %v5098, 1.0
      %v5116 = vadd.f32 %v5100, 1.0
      %v5117 = vadd.f32 %v5102, 1.0
      %v5118 = vadd.f32 %v5104, 1.0
      %v5119 = vadd.f32 %v5106, 1.0
      %v5120 = vadd.f32 %v5108, 1.0
      %v5121 = vadd.f32 %v5110, 1.0
      %v5122 = vadd.f32 %v5112, 1.0
      %v5123 = vadd.f32 %v5114, 1.0
      %v5124 = vmul.f32 %v4863, %v5115
      %v5125 = vmul.f32 %v4864, %v5116
      %v5126 = vmul.f32 %v4865, %v5117
      %v5127 = vmul.f32 %v4866, %v5118
      %v5128 = vmul.f32 %v4867, %v5119
      %v5129 = vmul.f32 %v4868, %v5120
      %v5130 = vmul.f32 %v4869, %v5121
      %v5131 = vmul.f32 %v4870, %v5122
      %v5132 = vmul.f32 %v4871, %v5123
      %v5133 = vld [vmem:[%s15] sm:$0xff]
      %v5134 = vld [vmem:[%s15 + $0x8] sm:$0xff]
      %v5135 = vld [vmem:[%s15 + $0x10] sm:$0xff]
      %v5136 = vld [vmem:[%s15 + $0x18] sm:$0xff]
      %v5137 = vld [vmem:[%s15 + $0x20] sm:$0xff]
      %v5138 = vld [vmem:[%s15 + $0x28] sm:$0xff]
      %v5139 = vld [vmem:[%s15 + $0x30] sm:$0xff]
      %v5140 = vld [vmem:[%s15 + $0x38] sm:$0xff]
      %v5141 = vld [vmem:[%s16] sm:$0x1]
      %v5143 = vlaneseq
      %v5144 = vshrl.u32 %v5143, 7
      %v5145 = vsub.s32 0, %v5144
      %v5146 = vrot.slane %v5141, %v5145
      %vm5148 = vcmask 523264
      %v5150 = vsel %vm5148, %v5124, 0
      %v5153 = vsel %vm5148, %v5125, 0
      %v5156 = vsel %vm5148, %v5126, 0
      %v5159 = vsel %vm5148, %v5127, 0
      %v5162 = vsel %vm5148, %v5128, 0
      %v5165 = vsel %vm5148, %v5129, 0
      %v5168 = vsel %vm5148, %v5130, 0
      %v5171 = vsel %vm5148, %v5131, 0
      %v5174 = vsel %vm5148, %v5132, 0
      %5176 = vmatprep.subr.mxu0 0.0
      %5177 = vmatpush1.msra.mxu0 %v5133
      %5178 = vmatprep.subr.mxu0 0.0
      %5179 = vmatpush1.msra.mxu0 %v5134
      %5180 = vmatprep.subr.mxu0 0.0
      %5181 = vmatpush1.msra.mxu0 %v5135
      %5182 = vmatprep.subr.mxu0 0.0
      %5183 = vmatpush1.msra.mxu0 %v5136
      %5184 = vmatprep.subr.mxu0 0.0
      %5185 = vmatpush1.msra.mxu0 %v5137
      %5186 = vmatprep.subr.mxu0 0.0
      %5187 = vmatpush1.msra.mxu0 %v5138
      %5188 = vmatprep.subr.mxu0 0.0
      %5189 = vmatpush1.msra.mxu0 %v5139
      %5190 = vmatprep.subr.mxu0 0.0
      %5191 = vmatpush1.msra.mxu0 %v5140
      %5192 = vmatprep.subr.mxu0 0.0
      %5193 = vmatpush1.msra.mxu0 0.0
      %5194 = vmatprep.subr.mxu0 0.0
      %5195 = vmatpush1.msra.mxu0 0.0
      %5196 = vmatprep.subr.mxu0 0.0
      %5197 = vmatpush1.msra.mxu0 0.0
      %5198 = vmatprep.subr.mxu0 0.0
      %5199 = vmatpush1.msra.mxu0 0.0
      %5200 = vmatprep.subr.mxu0 0.0
      %5201 = vmatpush1.msra.mxu0 0.0
      %5202 = vmatprep.subr.mxu0 0.0
      %5203 = vmatpush1.msra.mxu0 0.0
      %5204 = vmatprep.subr.mxu0 0.0
      %5205 = vmatpush1.msra.mxu0 0.0
      %5206 = vmatprep.subr.mxu0 0.0
      %5207 = vmatpush1.msra.mxu0 0.0
      %5208 = vmatprep.subr.mxu0 0.0
      %5209 = vmatpush1.msra.mxu0 0.0
      %5210 = vmatprep.subr.mxu0 0.0
      %5211 = vmatpush1.msra.mxu0 0.0
      %5212 = vmatprep.subr.mxu0 0.0
      %5213 = vmatpush1.msra.mxu0 0.0
      %5214 = vmatprep.subr.mxu0 0.0
      %5215 = vmatpush1.msra.mxu0 0.0
      %5216 = vmatprep.subr.mxu0 0.0
      %5217 = vmatpush1.msra.mxu0 0.0
      %5218 = vmatprep.subr.mxu0 0.0
      %5219 = vmatpush1.msra.mxu0 0.0
      %5220 = vmatprep.subr.mxu0 0.0
      %5221 = vmatpush1.msra.mxu0 0.0
      %5222 = vmatprep.subr.mxu0 0.0
      %5223 = vmatpush1.msra.mxu0 0.0
      %5224 = vmatprep.subr.mxu0 0.0
      %5225 = vmatpush1.msra.mxu0 0.0
      %5226 = vmatprep.subr.mxu0 0.0
      %5227 = vmatpush1.msra.mxu0 0.0
      %5228 = vmatprep.subr.mxu0 0.0
      %5229 = vmatpush1.msra.mxu0 0.0
      %5230 = vmatprep.subr.mxu0 0.0
      %5231 = vmatpush1.msra.mxu0 0.0
      %5232 = vmatprep.subr.mxu0 0.0
      %5233 = vmatpush1.msra.mxu0 0.0
      %5234 = vmatprep.subr.mxu0 0.0
      %5235 = vmatpush1.msra.mxu0 0.0
      %5236 = vmatprep.subr.mxu0 0.0
      %5237 = vmatpush1.msra.mxu0 0.0
      %5238 = vmatprep.subr.mxu0 0.0
      %5239 = vmatpush1.msra.mxu0 0.0
      %5240 = vmatprep.mubr.f32.mxu0 0.0
      %5241 = vmatmul.mubr.f32.gmra.mrb[0].mxu0 %v5150
      %v5242 = vpop.f32.mrb[0].mxu0
      %v5243 = vadd.f32 %v5146, %v5242
      %v5244 = vpop.f32.mrb[0].mxu0
      %5245 = vmatprep.mubr.f32.mxu0 0.0
      %5246 = vmatmul.mubr.f32.gmra.mrb[0].mxu0 %v5153
      %v5247 = vpop.f32.mrb[0].mxu0
      %v5248 = vadd.f32 %v5146, %v5247
      %v5249 = vpop.f32.mrb[0].mxu0
      %5250 = vmatprep.mubr.f32.mxu0 0.0
      %5251 = vmatmul.mubr.f32.gmra.mrb[0].mxu0 %v5156
      %v5252 = vpop.f32.mrb[0].mxu0
      %v5253 = vadd.f32 %v5146, %v5252
      %v5254 = vpop.f32.mrb[0].mxu0
      %5255 = vmatprep.mubr.f32.mxu0 0.0
      %5256 = vmatmul.mubr.f32.gmra.mrb[0].mxu0 %v5159
      %v5257 = vpop.f32.mrb[0].mxu0
      %v5258 = vadd.f32 %v5146, %v5257
      %v5259 = vpop.f32.mrb[0].mxu0
      %5260 = vmatprep.mubr.f32.mxu0 0.0
      %5261 = vmatmul.mubr.f32.gmra.mrb[0].mxu0 %v5162
      %v5262 = vpop.f32.mrb[0].mxu0
      %v5263 = vadd.f32 %v5146, %v5262
      %v5264 = vpop.f32.mrb[0].mxu0
      %5265 = vmatprep.mubr.f32.mxu0 0.0
      %5266 = vmatmul.mubr.f32.gmra.mrb[0].mxu0 %v5165
      %v5267 = vpop.f32.mrb[0].mxu0
      %v5268 = vadd.f32 %v5146, %v5267
      %v5269 = vpop.f32.mrb[0].mxu0
      %5270 = vmatprep.mubr.f32.mxu0 0.0
      %5271 = vmatmul.mubr.f32.gmra.mrb[0].mxu0 %v5168
      %v5272 = vpop.f32.mrb[0].mxu0
      %v5273 = vadd.f32 %v5146, %v5272
      %v5274 = vpop.f32.mrb[0].mxu0
      %5275 = vmatprep.mubr.f32.mxu0 0.0
      %5276 = vmatmul.mubr.f32.gmra.mrb[0].mxu0 %v5171
      %v5277 = vpop.f32.mrb[0].mxu0
      %v5278 = vadd.f32 %v5146, %v5277
      %v5279 = vpop.f32.mrb[0].mxu0
      %5280 = vmatprep.mubr.f32.mxu0 0.0
      %5281 = vmatmul.mubr.f32.gmra.mrb[0].mxu0 %v5174
      %v5282 = vpop.f32.mrb[0].mxu0
      %v5283 = vadd.f32 %v5146, %v5282
      %v5284 = vpop.f32.mrb[0].mxu0
      %5285 = vdwg.mxu0
      %v5286 = vadd.f32 %v4557, %v5243
      %v5287 = vadd.f32 %v4558, %v5248
      %v5288 = vadd.f32 %v4559, %v5253
      %v5289 = vadd.f32 %v4560, %v5258
      %v5290 = vadd.f32 %v4561, %v5263
      %v5291 = vadd.f32 %v4562, %v5268
      %v5292 = vadd.f32 %v4563, %v5273
      %v5293 = vadd.f32 %v4564, %v5278
      %v5294 = vadd.f32 %v4565, %v5283
      %s5295 = scalar_lea.vmem %s4, 1
      %v5296 = vld [vmem:[%s5295] sm:$0x1]
      %s5297 = scalar_lea.vmem %s5, 1
      %v5298 = vld [vmem:[%s5297] sm:$0x1]
      %v5299 = vsel %vm729, %v5286, 0.0
      %5300 = vadd.xlane.f32.xlu0 %v5299
      %v5301 = vpop.xlane.xlu0 %5300
      %v5302 = vsel %vm729, %v5287, 0.0
      %5303 = vadd.xlane.f32.xlu0 %v5302
      %v5304 = vpop.xlane.xlu0 %5303
      %v5305 = vsel %vm729, %v5288, 0.0
      %5306 = vadd.xlane.f32.xlu0 %v5305
      %v5307 = vpop.xlane.xlu0 %5306
      %v5308 = vsel %vm729, %v5289, 0.0
      %5309 = vadd.xlane.f32.xlu0 %v5308
      %v5310 = vpop.xlane.xlu0 %5309
      %v5311 = vsel %vm729, %v5290, 0.0
      %5312 = vadd.xlane.f32.xlu0 %v5311
      %v5313 = vpop.xlane.xlu0 %5312
      %v5314 = vsel %vm729, %v5291, 0.0
      %5315 = vadd.xlane.f32.xlu0 %v5314
      %v5316 = vpop.xlane.xlu0 %5315
      %v5317 = vsel %vm729, %v5292, 0.0
      %5318 = vadd.xlane.f32.xlu0 %v5317
      %v5319 = vpop.xlane.xlu0 %5318
      %v5320 = vsel %vm729, %v5293, 0.0
      %5321 = vadd.xlane.f32.xlu0 %v5320
      %v5322 = vpop.xlane.xlu0 %5321
      %v5323 = vsel %vm754, %v5294, 0.0
      %5324 = vadd.xlane.f32.xlu0 %v5323
      %v5325 = vpop.xlane.xlu0 %5324
      %v5326 = vmul.f32 %v5301, %v758
      %v5327 = vmul.f32 %v5304, %v758
      %v5328 = vmul.f32 %v5307, %v758
      %v5329 = vmul.f32 %v5310, %v758
      %v5330 = vmul.f32 %v5313, %v758
      %v5331 = vmul.f32 %v5316, %v758
      %v5332 = vmul.f32 %v5319, %v758
      %v5333 = vmul.f32 %v5322, %v758
      %v5334 = vmul.f32 %v5325, %v758
      %v5335 = vsub.f32 %v5286, %v5326
      %v5336 = vsub.f32 %v5287, %v5327
      %v5337 = vsub.f32 %v5288, %v5328
      %v5338 = vsub.f32 %v5289, %v5329
      %v5339 = vsub.f32 %v5290, %v5330
      %v5340 = vsub.f32 %v5291, %v5331
      %v5341 = vsub.f32 %v5292, %v5332
      %v5342 = vsub.f32 %v5293, %v5333
      %v5343 = vsub.f32 %v5294, %v5334
      %v5344 = vmul.f32 %v5335, %v5335
      %v5345 = vmul.f32 %v5336, %v5336
      %v5346 = vmul.f32 %v5337, %v5337
      %v5347 = vmul.f32 %v5338, %v5338
      %v5348 = vmul.f32 %v5339, %v5339
      %v5349 = vmul.f32 %v5340, %v5340
      %v5350 = vmul.f32 %v5341, %v5341
      %v5351 = vmul.f32 %v5342, %v5342
      %v5352 = vmul.f32 %v5343, %v5343
      %v5353 = vsel %vm729, %v5344, 0.0
      %5354 = vadd.xlane.f32.xlu0 %v5353
      %v5355 = vpop.xlane.xlu0 %5354
      %v5356 = vsel %vm729, %v5345, 0.0
      %5357 = vadd.xlane.f32.xlu0 %v5356
      %v5358 = vpop.xlane.xlu0 %5357
      %v5359 = vsel %vm729, %v5346, 0.0
      %5360 = vadd.xlane.f32.xlu0 %v5359
      %v5361 = vpop.xlane.xlu0 %5360
      %v5362 = vsel %vm729, %v5347, 0.0
      %5363 = vadd.xlane.f32.xlu0 %v5362
      %v5364 = vpop.xlane.xlu0 %5363
      %v5365 = vsel %vm729, %v5348, 0.0
      %5366 = vadd.xlane.f32.xlu0 %v5365
      %v5367 = vpop.xlane.xlu0 %5366
      %v5368 = vsel %vm729, %v5349, 0.0
      %5369 = vadd.xlane.f32.xlu0 %v5368
      %v5370 = vpop.xlane.xlu0 %5369
      %v5371 = vsel %vm729, %v5350, 0.0
      %5372 = vadd.xlane.f32.xlu0 %v5371
      %v5373 = vpop.xlane.xlu0 %5372
      %v5374 = vsel %vm729, %v5351, 0.0
      %5375 = vadd.xlane.f32.xlu0 %v5374
      %v5376 = vpop.xlane.xlu0 %5375
      %v5377 = vsel %vm754, %v5352, 0.0
      %5378 = vadd.xlane.f32.xlu0 %v5377
      %v5379 = vpop.xlane.xlu0 %5378
      %v5380 = vmul.f32 %v5355, %v758
      %v5381 = vmul.f32 %v5358, %v758
      %v5382 = vmul.f32 %v5361, %v758
      %v5383 = vmul.f32 %v5364, %v758
      %v5384 = vmul.f32 %v5367, %v758
      %v5385 = vmul.f32 %v5370, %v758
      %v5386 = vmul.f32 %v5373, %v758
      %v5387 = vmul.f32 %v5376, %v758
      %v5388 = vmul.f32 %v5379, %v758
      %v5389 = vadd.f32 %v5380, 1e-05
      %v5390 = vadd.f32 %v5381, 1e-05
      %v5391 = vadd.f32 %v5382, 1e-05
      %v5392 = vadd.f32 %v5383, 1e-05
      %v5393 = vadd.f32 %v5384, 1e-05
      %v5394 = vadd.f32 %v5385, 1e-05
      %v5395 = vadd.f32 %v5386, 1e-05
      %v5396 = vadd.f32 %v5387, 1e-05
      %v5397 = vadd.f32 %v5388, 1e-05
      %v5398 = vrsqrt.pop %v5389
      %v5399 = vrsqrt.pop %v5390
      %v5400 = vrsqrt.pop %v5391
      %v5401 = vrsqrt.pop %v5392
      %v5402 = vrsqrt.pop %v5393
      %v5403 = vrsqrt.pop %v5394
      %v5404 = vrsqrt.pop %v5395
      %v5405 = vrsqrt.pop %v5396
      %v5406 = vrsqrt.pop %v5397
      %v5407 = vmul.f32 %v5335, %v5398
      %v5408 = vmul.f32 %v5336, %v5399
      %v5409 = vmul.f32 %v5337, %v5400
      %v5410 = vmul.f32 %v5338, %v5401
      %v5411 = vmul.f32 %v5339, %v5402
      %v5412 = vmul.f32 %v5340, %v5403
      %v5413 = vmul.f32 %v5341, %v5404
      %v5414 = vmul.f32 %v5342, %v5405
      %v5415 = vmul.f32 %v5343, %v5406
      %v5417 = vlaneseq
      %v5418 = vshrl.u32 %v5417, 7
      %v5419 = vsub.s32 0, %v5418
      %v5420 = vrot.slane %v5296, %v5419
      %v5422 = vmul.f32 %v5407, %v5420
      %v5423 = vmul.f32 %v5408, %v5420
      %v5424 = vmul.f32 %v5409, %v5420
      %v5425 = vmul.f32 %v5410, %v5420
      %v5426 = vmul.f32 %v5411, %v5420
      %v5427 = vmul.f32 %v5412, %v5420
      %v5428 = vmul.f32 %v5413, %v5420
      %v5429 = vmul.f32 %v5414, %v5420
      %v5430 = vmul.f32 %v5415, %v5420
      %v5432 = vlaneseq
      %v5433 = vshrl.u32 %v5432, 7
      %v5434 = vsub.s32 0, %v5433
      %v5435 = vrot.slane %v5298, %v5434
      %v5437 = vadd.f32 %v5422, %v5435
      %v5438 = vadd.f32 %v5423, %v5435
      %v5439 = vadd.f32 %v5424, %v5435
      %v5440 = vadd.f32 %v5425, %v5435
      %v5441 = vadd.f32 %v5426, %v5435
      %v5442 = vadd.f32 %v5427, %v5435
      %v5443 = vadd.f32 %v5428, %v5435
      %v5444 = vadd.f32 %v5429, %v5435
      %v5445 = vadd.f32 %v5430, %v5435
      %s5446 = scalar_lea.vmem %s6, 128
      %v5447 = vld [vmem:[%s5446] sm:$0xff]
      %v5448 = vld [vmem:[%s5446 + $0x8] sm:$0xff]
      %v5449 = vld [vmem:[%s5446 + $0x10] sm:$0xff]
      %v5450 = vld [vmem:[%s5446 + $0x18] sm:$0xff]
      %v5451 = vld [vmem:[%s5446 + $0x20] sm:$0xff]
      %v5452 = vld [vmem:[%s5446 + $0x28] sm:$0xff]
      %v5453 = vld [vmem:[%s5446 + $0x30] sm:$0xff]
      %v5454 = vld [vmem:[%s5446 + $0x38] sm:$0xff]
      %v5455 = vld [vmem:[%s5446 + $0x40] sm:$0xff]
      %v5456 = vld [vmem:[%s5446 + $0x48] sm:$0xff]
      %v5457 = vld [vmem:[%s5446 + $0x50] sm:$0xff]
      %v5458 = vld [vmem:[%s5446 + $0x58] sm:$0xff]
      %v5459 = vld [vmem:[%s5446 + $0x60] sm:$0xff]
      %v5460 = vld [vmem:[%s5446 + $0x68] sm:$0xff]
      %v5461 = vld [vmem:[%s5446 + $0x70] sm:$0xff]
      %v5462 = vld [vmem:[%s5446 + $0x78] sm:$0xff]
      %v5464 = vsel %vm729, %v5437, 0
      %v5467 = vsel %vm729, %v5438, 0
      %v5470 = vsel %vm729, %v5439, 0
      %v5473 = vsel %vm729, %v5440, 0
      %v5476 = vsel %vm729, %v5441, 0
      %v5479 = vsel %vm729, %v5442, 0
      %v5482 = vsel %vm729, %v5443, 0
      %v5485 = vsel %vm729, %v5444, 0
      %v5488 = vsel %vm729, %v5445, 0
      %5490 = vmatprep.subr.mxu0 0.0
      %5491 = vmatpush1.msra.mxu0 %v5447
      %5492 = vmatprep.subr.mxu0 0.0
      %5493 = vmatpush1.msra.mxu0 %v5448
      %5494 = vmatprep.subr.mxu0 0.0
      %5495 = vmatpush1.msra.mxu0 %v5449
      %5496 = vmatprep.subr.mxu0 0.0
      %5497 = vmatpush1.msra.mxu0 %v5450
      %5498 = vmatprep.subr.mxu0 0.0
      %5499 = vmatpush1.msra.mxu0 0.0
      %5500 = vmatprep.subr.mxu0 0.0
      %5501 = vmatpush1.msra.mxu0 0.0
      %5502 = vmatprep.subr.mxu0 0.0
      %5503 = vmatpush1.msra.mxu0 0.0
      %5504 = vmatprep.subr.mxu0 0.0
      %5505 = vmatpush1.msra.mxu0 0.0
      %5506 = vmatprep.subr.mxu0 0.0
      %5507 = vmatpush1.msra.mxu0 0.0
      %5508 = vmatprep.subr.mxu0 0.0
      %5509 = vmatpush1.msra.mxu0 0.0
      %5510 = vmatprep.subr.mxu0 0.0
      %5511 = vmatpush1.msra.mxu0 0.0
      %5512 = vmatprep.subr.mxu0 0.0
      %5513 = vmatpush1.msra.mxu0 0.0
      %5514 = vmatprep.subr.mxu0 0.0
      %5515 = vmatpush1.msra.mxu0 0.0
      %5516 = vmatprep.subr.mxu0 0.0
      %5517 = vmatpush1.msra.mxu0 0.0
      %5518 = vmatprep.subr.mxu0 0.0
      %5519 = vmatpush1.msra.mxu0 0.0
      %5520 = vmatprep.subr.mxu0 0.0
      %5521 = vmatpush1.msra.mxu0 0.0
      %5522 = vmatprep.subr.mxu0 0.0
      %5523 = vmatpush1.msra.mxu0 0.0
      %5524 = vmatprep.subr.mxu0 0.0
      %5525 = vmatpush1.msra.mxu0 0.0
      %5526 = vmatprep.subr.mxu0 0.0
      %5527 = vmatpush1.msra.mxu0 0.0
      %5528 = vmatprep.subr.mxu0 0.0
      %5529 = vmatpush1.msra.mxu0 0.0
      %5530 = vmatprep.subr.mxu0 0.0
      %5531 = vmatpush1.msra.mxu0 0.0
      %5532 = vmatprep.subr.mxu0 0.0
      %5533 = vmatpush1.msra.mxu0 0.0
      %5534 = vmatprep.subr.mxu0 0.0
      %5535 = vmatpush1.msra.mxu0 0.0
      %5536 = vmatprep.subr.mxu0 0.0
      %5537 = vmatpush1.msra.mxu0 0.0
      %5538 = vmatprep.subr.mxu0 0.0
      %5539 = vmatpush1.msra.mxu0 0.0
      %5540 = vmatprep.subr.mxu0 0.0
      %5541 = vmatpush1.msra.mxu0 0.0
      %5542 = vmatprep.subr.mxu0 0.0
      %5543 = vmatpush1.msra.mxu0 0.0
      %5544 = vmatprep.subr.mxu0 0.0
      %5545 = vmatpush1.msra.mxu0 0.0
      %5546 = vmatprep.subr.mxu0 0.0
      %5547 = vmatpush1.msra.mxu0 0.0
      %5548 = vmatprep.subr.mxu0 0.0
      %5549 = vmatpush1.msra.mxu0 0.0
      %5550 = vmatprep.subr.mxu0 0.0
      %5551 = vmatpush1.msra.mxu0 0.0
      %5552 = vmatprep.subr.mxu0 0.0
      %5553 = vmatpush1.msra.mxu0 0.0
      %5554 = vmatprep.mubr.f32.mxu0 0.0
      %5555 = vmatmul.mubr.f32.gmra.mrb[0].mxu0 %v5464
      %v5556 = vpop.f32.mrb[0].mxu0
      %v5557 = vadd.f32 0.0, %v5556
      %v5558 = vpop.f32.mrb[0].mxu0
      %5559 = vmatprep.mubr.f32.mxu0 0.0
      %5560 = vmatmul.mubr.f32.gmra.mrb[0].mxu0 %v5467
      %v5561 = vpop.f32.mrb[0].mxu0
      %v5562 = vadd.f32 0.0, %v5561
      %v5563 = vpop.f32.mrb[0].mxu0
      %5564 = vmatprep.mubr.f32.mxu0 0.0
      %5565 = vmatmul.mubr.f32.gmra.mrb[0].mxu0 %v5470
      %v5566 = vpop.f32.mrb[0].mxu0
      %v5567 = vadd.f32 0.0, %v5566
      %v5568 = vpop.f32.mrb[0].mxu0
      %5569 = vmatprep.mubr.f32.mxu0 0.0
      %5570 = vmatmul.mubr.f32.gmra.mrb[0].mxu0 %v5473
      %v5571 = vpop.f32.mrb[0].mxu0
      %v5572 = vadd.f32 0.0, %v5571
      %v5573 = vpop.f32.mrb[0].mxu0
      %5574 = vmatprep.mubr.f32.mxu0 0.0
      %5575 = vmatmul.mubr.f32.gmra.mrb[0].mxu0 %v5476
      %v5576 = vpop.f32.mrb[0].mxu0
      %v5577 = vadd.f32 0.0, %v5576
      %v5578 = vpop.f32.mrb[0].mxu0
      %5579 = vmatprep.mubr.f32.mxu0 0.0
      %5580 = vmatmul.mubr.f32.gmra.mrb[0].mxu0 %v5479
      %v5581 = vpop.f32.mrb[0].mxu0
      %v5582 = vadd.f32 0.0, %v5581
      %v5583 = vpop.f32.mrb[0].mxu0
      %5584 = vmatprep.mubr.f32.mxu0 0.0
      %5585 = vmatmul.mubr.f32.gmra.mrb[0].mxu0 %v5482
      %v5586 = vpop.f32.mrb[0].mxu0
      %v5587 = vadd.f32 0.0, %v5586
      %v5588 = vpop.f32.mrb[0].mxu0
      %5589 = vmatprep.mubr.f32.mxu0 0.0
      %5590 = vmatmul.mubr.f32.gmra.mrb[0].mxu0 %v5485
      %v5591 = vpop.f32.mrb[0].mxu0
      %v5592 = vadd.f32 0.0, %v5591
      %v5593 = vpop.f32.mrb[0].mxu0
      %5594 = vmatprep.mubr.f32.mxu0 0.0
      %5595 = vmatmul.mubr.f32.gmra.mrb[0].mxu0 %v5488
      %v5596 = vpop.f32.mrb[0].mxu0
      %v5597 = vadd.f32 0.0, %v5596
      %v5598 = vpop.f32.mrb[0].mxu0
      %5599 = vdwg.mxu0
      %5600 = vmatprep.subr.mxu0 0.0
      %5601 = vmatpush1.msra.mxu0 %v5451
      %5602 = vmatprep.subr.mxu0 0.0
      %5603 = vmatpush1.msra.mxu0 %v5452
      %5604 = vmatprep.subr.mxu0 0.0
      %5605 = vmatpush1.msra.mxu0 %v5453
      %5606 = vmatprep.subr.mxu0 0.0
      %5607 = vmatpush1.msra.mxu0 %v5454
      %5608 = vmatprep.subr.mxu0 0.0
      %5609 = vmatpush1.msra.mxu0 0.0
      %5610 = vmatprep.subr.mxu0 0.0
      %5611 = vmatpush1.msra.mxu0 0.0
      %5612 = vmatprep.subr.mxu0 0.0
      %5613 = vmatpush1.msra.mxu0 0.0
      %5614 = vmatprep.subr.mxu0 0.0
      %5615 = vmatpush1.msra.mxu0 0.0
      %5616 = vmatprep.subr.mxu0 0.0
      %5617 = vmatpush1.msra.mxu0 0.0
      %5618 = vmatprep.subr.mxu0 0.0
      %5619 = vmatpush1.msra.mxu0 0.0
      %5620 = vmatprep.subr.mxu0 0.0
      %5621 = vmatpush1.msra.mxu0 0.0
      %5622 = vmatprep.subr.mxu0 0.0
      %5623 = vmatpush1.msra.mxu0 0.0
      %5624 = vmatprep.subr.mxu0 0.0
      %5625 = vmatpush1.msra.mxu0 0.0
      %5626 = vmatprep.subr.mxu0 0.0
      %5627 = vmatpush1.msra.mxu0 0.0
      %5628 = vmatprep.subr.mxu0 0.0
      %5629 = vmatpush1.msra.mxu0 0.0
      %5630 = vmatprep.subr.mxu0 0.0
      %5631 = vmatpush1.msra.mxu0 0.0
      %5632 = vmatprep.subr.mxu0 0.0
      %5633 = vmatpush1.msra.mxu0 0.0
      %5634 = vmatprep.subr.mxu0 0.0
      %5635 = vmatpush1.msra.mxu0 0.0
      %5636 = vmatprep.subr.mxu0 0.0
      %5637 = vmatpush1.msra.mxu0 0.0
      %5638 = vmatprep.subr.mxu0 0.0
      %5639 = vmatpush1.msra.mxu0 0.0
      %5640 = vmatprep.subr.mxu0 0.0
      %5641 = vmatpush1.msra.mxu0 0.0
      %5642 = vmatprep.subr.mxu0 0.0
      %5643 = vmatpush1.msra.mxu0 0.0
      %5644 = vmatprep.subr.mxu0 0.0
      %5645 = vmatpush1.msra.mxu0 0.0
      %5646 = vmatprep.subr.mxu0 0.0
      %5647 = vmatpush1.msra.mxu0 0.0
      %5648 = vmatprep.subr.mxu0 0.0
      %5649 = vmatpush1.msra.mxu0 0.0
      %5650 = vmatprep.subr.mxu0 0.0
      %5651 = vmatpush1.msra.mxu0 0.0
      %5652 = vmatprep.subr.mxu0 0.0
      %5653 = vmatpush1.msra.mxu0 0.0
      %5654 = vmatprep.subr.mxu0 0.0
      %5655 = vmatpush1.msra.mxu0 0.0
      %5656 = vmatprep.subr.mxu0 0.0
      %5657 = vmatpush1.msra.mxu0 0.0
      %5658 = vmatprep.subr.mxu0 0.0
      %5659 = vmatpush1.msra.mxu0 0.0
      %5660 = vmatprep.subr.mxu0 0.0
      %5661 = vmatpush1.msra.mxu0 0.0
      %5662 = vmatprep.subr.mxu0 0.0
      %5663 = vmatpush1.msra.mxu0 0.0
      %5664 = vmatprep.mubr.f32.mxu0 0.0
      %5665 = vmatmul.mubr.f32.gmra.mrb[0].mxu0 %v5464
      %v5666 = vpop.f32.mrb[0].mxu0
      %v5667 = vadd.f32 0.0, %v5666
      %v5668 = vpop.f32.mrb[0].mxu0
      %5669 = vmatprep.mubr.f32.mxu0 0.0
      %5670 = vmatmul.mubr.f32.gmra.mrb[0].mxu0 %v5467
      %v5671 = vpop.f32.mrb[0].mxu0
      %v5672 = vadd.f32 0.0, %v5671
      %v5673 = vpop.f32.mrb[0].mxu0
      %5674 = vmatprep.mubr.f32.mxu0 0.0
      %5675 = vmatmul.mubr.f32.gmra.mrb[0].mxu0 %v5470
      %v5676 = vpop.f32.mrb[0].mxu0
      %v5677 = vadd.f32 0.0, %v5676
      %v5678 = vpop.f32.mrb[0].mxu0
      %5679 = vmatprep.mubr.f32.mxu0 0.0
      %5680 = vmatmul.mubr.f32.gmra.mrb[0].mxu0 %v5473
      %v5681 = vpop.f32.mrb[0].mxu0
      %v5682 = vadd.f32 0.0, %v5681
      %v5683 = vpop.f32.mrb[0].mxu0
      %5684 = vmatprep.mubr.f32.mxu0 0.0
      %5685 = vmatmul.mubr.f32.gmra.mrb[0].mxu0 %v5476
      %v5686 = vpop.f32.mrb[0].mxu0
      %v5687 = vadd.f32 0.0, %v5686
      %v5688 = vpop.f32.mrb[0].mxu0
      %5689 = vmatprep.mubr.f32.mxu0 0.0
      %5690 = vmatmul.mubr.f32.gmra.mrb[0].mxu0 %v5479
      %v5691 = vpop.f32.mrb[0].mxu0
      %v5692 = vadd.f32 0.0, %v5691
      %v5693 = vpop.f32.mrb[0].mxu0
      %5694 = vmatprep.mubr.f32.mxu0 0.0
      %5695 = vmatmul.mubr.f32.gmra.mrb[0].mxu0 %v5482
      %v5696 = vpop.f32.mrb[0].mxu0
      %v5697 = vadd.f32 0.0, %v5696
      %v5698 = vpop.f32.mrb[0].mxu0
      %5699 = vmatprep.mubr.f32.mxu0 0.0
      %5700 = vmatmul.mubr.f32.gmra.mrb[0].mxu0 %v5485
      %v5701 = vpop.f32.mrb[0].mxu0
      %v5702 = vadd.f32 0.0, %v5701
      %v5703 = vpop.f32.mrb[0].mxu0
      %5704 = vmatprep.mubr.f32.mxu0 0.0
      %5705 = vmatmul.mubr.f32.gmra.mrb[0].mxu0 %v5488
      %v5706 = vpop.f32.mrb[0].mxu0
      %v5707 = vadd.f32 0.0, %v5706
      %v5708 = vpop.f32.mrb[0].mxu0
      %5709 = vdwg.mxu0
      %5710 = vmatprep.subr.mxu0 0.0
      %5711 = vmatpush1.msra.mxu0 %v5455
      %5712 = vmatprep.subr.mxu0 0.0
      %5713 = vmatpush1.msra.mxu0 %v5456
      %5714 = vmatprep.subr.mxu0 0.0
      %5715 = vmatpush1.msra.mxu0 %v5457
      %5716 = vmatprep.subr.mxu0 0.0
      %5717 = vmatpush1.msra.mxu0 %v5458
      %5718 = vmatprep.subr.mxu0 0.0
      %5719 = vmatpush1.msra.mxu0 0.0
      %5720 = vmatprep.subr.mxu0 0.0
      %5721 = vmatpush1.msra.mxu0 0.0
      %5722 = vmatprep.subr.mxu0 0.0
      %5723 = vmatpush1.msra.mxu0 0.0
      %5724 = vmatprep.subr.mxu0 0.0
      %5725 = vmatpush1.msra.mxu0 0.0
      %5726 = vmatprep.subr.mxu0 0.0
      %5727 = vmatpush1.msra.mxu0 0.0
      %5728 = vmatprep.subr.mxu0 0.0
      %5729 = vmatpush1.msra.mxu0 0.0
      %5730 = vmatprep.subr.mxu0 0.0
      %5731 = vmatpush1.msra.mxu0 0.0
      %5732 = vmatprep.subr.mxu0 0.0
      %5733 = vmatpush1.msra.mxu0 0.0
      %5734 = vmatprep.subr.mxu0 0.0
      %5735 = vmatpush1.msra.mxu0 0.0
      %5736 = vmatprep.subr.mxu0 0.0
      %5737 = vmatpush1.msra.mxu0 0.0
      %5738 = vmatprep.subr.mxu0 0.0
      %5739 = vmatpush1.msra.mxu0 0.0
      %5740 = vmatprep.subr.mxu0 0.0
      %5741 = vmatpush1.msra.mxu0 0.0
      %5742 = vmatprep.subr.mxu0 0.0
      %5743 = vmatpush1.msra.mxu0 0.0
      %5744 = vmatprep.subr.mxu0 0.0
      %5745 = vmatpush1.msra.mxu0 0.0
      %5746 = vmatprep.subr.mxu0 0.0
      %5747 = vmatpush1.msra.mxu0 0.0
      %5748 = vmatprep.subr.mxu0 0.0
      %5749 = vmatpush1.msra.mxu0 0.0
      %5750 = vmatprep.subr.mxu0 0.0
      %5751 = vmatpush1.msra.mxu0 0.0
      %5752 = vmatprep.subr.mxu0 0.0
      %5753 = vmatpush1.msra.mxu0 0.0
      %5754 = vmatprep.subr.mxu0 0.0
      %5755 = vmatpush1.msra.mxu0 0.0
      %5756 = vmatprep.subr.mxu0 0.0
      %5757 = vmatpush1.msra.mxu0 0.0
      %5758 = vmatprep.subr.mxu0 0.0
      %5759 = vmatpush1.msra.mxu0 0.0
      %5760 = vmatprep.subr.mxu0 0.0
      %5761 = vmatpush1.msra.mxu0 0.0
      %5762 = vmatprep.subr.mxu0 0.0
      %5763 = vmatpush1.msra.mxu0 0.0
      %5764 = vmatprep.subr.mxu0 0.0
      %5765 = vmatpush1.msra.mxu0 0.0
      %5766 = vmatprep.subr.mxu0 0.0
      %5767 = vmatpush1.msra.mxu0 0.0
      %5768 = vmatprep.subr.mxu0 0.0
      %5769 = vmatpush1.msra.mxu0 0.0
      %5770 = vmatprep.subr.mxu0 0.0
      %5771 = vmatpush1.msra.mxu0 0.0
      %5772 = vmatprep.subr.mxu0 0.0
      %5773 = vmatpush1.msra.mxu0 0.0
      %5774 = vmatprep.mubr.f32.mxu0 0.0
      %5775 = vmatmul.mubr.f32.gmra.mrb[0].mxu0 %v5464
      %v5776 = vpop.f32.mrb[0].mxu0
      %v5777 = vadd.f32 0.0, %v5776
      %v5778 = vpop.f32.mrb[0].mxu0
      %5779 = vmatprep.mubr.f32.mxu0 0.0
      %5780 = vmatmul.mubr.f32.gmra.mrb[0].mxu0 %v5467
      %v5781 = vpop.f32.mrb[0].mxu0
      %v5782 = vadd.f32 0.0, %v5781
      %v5783 = vpop.f32.mrb[0].mxu0
      %5784 = vmatprep.mubr.f32.mxu0 0.0
      %5785 = vmatmul.mubr.f32.gmra.mrb[0].mxu0 %v5470
      %v5786 = vpop.f32.mrb[0].mxu0
      %v5787 = vadd.f32 0.0, %v5786
      %v5788 = vpop.f32.mrb[0].mxu0
      %5789 = vmatprep.mubr.f32.mxu0 0.0
      %5790 = vmatmul.mubr.f32.gmra.mrb[0].mxu0 %v5473
      %v5791 = vpop.f32.mrb[0].mxu0
      %v5792 = vadd.f32 0.0, %v5791
      %v5793 = vpop.f32.mrb[0].mxu0
      %5794 = vmatprep.mubr.f32.mxu0 0.0
      %5795 = vmatmul.mubr.f32.gmra.mrb[0].mxu0 %v5476
      %v5796 = vpop.f32.mrb[0].mxu0
      %v5797 = vadd.f32 0.0, %v5796
      %v5798 = vpop.f32.mrb[0].mxu0
      %5799 = vmatprep.mubr.f32.mxu0 0.0
      %5800 = vmatmul.mubr.f32.gmra.mrb[0].mxu0 %v5479
      %v5801 = vpop.f32.mrb[0].mxu0
      %v5802 = vadd.f32 0.0, %v5801
      %v5803 = vpop.f32.mrb[0].mxu0
      %5804 = vmatprep.mubr.f32.mxu0 0.0
      %5805 = vmatmul.mubr.f32.gmra.mrb[0].mxu0 %v5482
      %v5806 = vpop.f32.mrb[0].mxu0
      %v5807 = vadd.f32 0.0, %v5806
      %v5808 = vpop.f32.mrb[0].mxu0
      %5809 = vmatprep.mubr.f32.mxu0 0.0
      %5810 = vmatmul.mubr.f32.gmra.mrb[0].mxu0 %v5485
      %v5811 = vpop.f32.mrb[0].mxu0
      %v5812 = vadd.f32 0.0, %v5811
      %v5813 = vpop.f32.mrb[0].mxu0
      %5814 = vmatprep.mubr.f32.mxu0 0.0
      %5815 = vmatmul.mubr.f32.gmra.mrb[0].mxu0 %v5488
      %v5816 = vpop.f32.mrb[0].mxu0
      %v5817 = vadd.f32 0.0, %v5816
      %v5818 = vpop.f32.mrb[0].mxu0
      %5819 = vdwg.mxu0
      %5820 = vmatprep.subr.mxu0 0.0
      %5821 = vmatpush1.msra.mxu0 %v5459
      %5822 = vmatprep.subr.mxu0 0.0
      %5823 = vmatpush1.msra.mxu0 %v5460
      %5824 = vmatprep.subr.mxu0 0.0
      %5825 = vmatpush1.msra.mxu0 %v5461
      %5826 = vmatprep.subr.mxu0 0.0
      %5827 = vmatpush1.msra.mxu0 %v5462
      %5828 = vmatprep.subr.mxu0 0.0
      %5829 = vmatpush1.msra.mxu0 0.0
      %5830 = vmatprep.subr.mxu0 0.0
      %5831 = vmatpush1.msra.mxu0 0.0
      %5832 = vmatprep.subr.mxu0 0.0
      %5833 = vmatpush1.msra.mxu0 0.0
      %5834 = vmatprep.subr.mxu0 0.0
      %5835 = vmatpush1.msra.mxu0 0.0
      %5836 = vmatprep.subr.mxu0 0.0
      %5837 = vmatpush1.msra.mxu0 0.0
      %5838 = vmatprep.subr.mxu0 0.0
      %5839 = vmatpush1.msra.mxu0 0.0
      %5840 = vmatprep.subr.mxu0 0.0
      %5841 = vmatpush1.msra.mxu0 0.0
      %5842 = vmatprep.subr.mxu0 0.0
      %5843 = vmatpush1.msra.mxu0 0.0
      %5844 = vmatprep.subr.mxu0 0.0
      %5845 = vmatpush1.msra.mxu0 0.0
      %5846 = vmatprep.subr.mxu0 0.0
      %5847 = vmatpush1.msra.mxu0 0.0
      %5848 = vmatprep.subr.mxu0 0.0
      %5849 = vmatpush1.msra.mxu0 0.0
      %5850 = vmatprep.subr.mxu0 0.0
      %5851 = vmatpush1.msra.mxu0 0.0
      %5852 = vmatprep.subr.mxu0 0.0
      %5853 = vmatpush1.msra.mxu0 0.0
      %5854 = vmatprep.subr.mxu0 0.0
      %5855 = vmatpush1.msra.mxu0 0.0
      %5856 = vmatprep.subr.mxu0 0.0
      %5857 = vmatpush1.msra.mxu0 0.0
      %5858 = vmatprep.subr.mxu0 0.0
      %5859 = vmatpush1.msra.mxu0 0.0
      %5860 = vmatprep.subr.mxu0 0.0
      %5861 = vmatpush1.msra.mxu0 0.0
      %5862 = vmatprep.subr.mxu0 0.0
      %5863 = vmatpush1.msra.mxu0 0.0
      %5864 = vmatprep.subr.mxu0 0.0
      %5865 = vmatpush1.msra.mxu0 0.0
      %5866 = vmatprep.subr.mxu0 0.0
      %5867 = vmatpush1.msra.mxu0 0.0
      %5868 = vmatprep.subr.mxu0 0.0
      %5869 = vmatpush1.msra.mxu0 0.0
      %5870 = vmatprep.subr.mxu0 0.0
      %5871 = vmatpush1.msra.mxu0 0.0
      %5872 = vmatprep.subr.mxu0 0.0
      %5873 = vmatpush1.msra.mxu0 0.0
      %5874 = vmatprep.subr.mxu0 0.0
      %5875 = vmatpush1.msra.mxu0 0.0
      %5876 = vmatprep.subr.mxu0 0.0
      %5877 = vmatpush1.msra.mxu0 0.0
      %5878 = vmatprep.subr.mxu0 0.0
      %5879 = vmatpush1.msra.mxu0 0.0
      %5880 = vmatprep.subr.mxu0 0.0
      %5881 = vmatpush1.msra.mxu0 0.0
      %5882 = vmatprep.subr.mxu0 0.0
      %5883 = vmatpush1.msra.mxu0 0.0
      %5884 = vmatprep.mubr.f32.mxu0 0.0
      %5885 = vmatmul.mubr.f32.gmra.mrb[0].mxu0 %v5464
      %v5886 = vpop.f32.mrb[0].mxu0
      %v5887 = vadd.f32 0.0, %v5886
      %v5888 = vpop.f32.mrb[0].mxu0
      %5889 = vmatprep.mubr.f32.mxu0 0.0
      %5890 = vmatmul.mubr.f32.gmra.mrb[0].mxu0 %v5467
      %v5891 = vpop.f32.mrb[0].mxu0
      %v5892 = vadd.f32 0.0, %v5891
      %v5893 = vpop.f32.mrb[0].mxu0
      %5894 = vmatprep.mubr.f32.mxu0 0.0
      %5895 = vmatmul.mubr.f32.gmra.mrb[0].mxu0 %v5470
      %v5896 = vpop.f32.mrb[0].mxu0
      %v5897 = vadd.f32 0.0, %v5896
      %v5898 = vpop.f32.mrb[0].mxu0
      %5899 = vmatprep.mubr.f32.mxu0 0.0
      %5900 = vmatmul.mubr.f32.gmra.mrb[0].mxu0 %v5473
      %v5901 = vpop.f32.mrb[0].mxu0
      %v5902 = vadd.f32 0.0, %v5901
      %v5903 = vpop.f32.mrb[0].mxu0
      %5904 = vmatprep.mubr.f32.mxu0 0.0
      %5905 = vmatmul.mubr.f32.gmra.mrb[0].mxu0 %v5476
      %v5906 = vpop.f32.mrb[0].mxu0
      %v5907 = vadd.f32 0.0, %v5906
      %v5908 = vpop.f32.mrb[0].mxu0
      %5909 = vmatprep.mubr.f32.mxu0 0.0
      %5910 = vmatmul.mubr.f32.gmra.mrb[0].mxu0 %v5479
      %v5911 = vpop.f32.mrb[0].mxu0
      %v5912 = vadd.f32 0.0, %v5911
      %v5913 = vpop.f32.mrb[0].mxu0
      %5914 = vmatprep.mubr.f32.mxu0 0.0
      %5915 = vmatmul.mubr.f32.gmra.mrb[0].mxu0 %v5482
      %v5916 = vpop.f32.mrb[0].mxu0
      %v5917 = vadd.f32 0.0, %v5916
      %v5918 = vpop.f32.mrb[0].mxu0
      %5919 = vmatprep.mubr.f32.mxu0 0.0
      %5920 = vmatmul.mubr.f32.gmra.mrb[0].mxu0 %v5485
      %v5921 = vpop.f32.mrb[0].mxu0
      %v5922 = vadd.f32 0.0, %v5921
      %v5923 = vpop.f32.mrb[0].mxu0
      %5924 = vmatprep.mubr.f32.mxu0 0.0
      %5925 = vmatmul.mubr.f32.gmra.mrb[0].mxu0 %v5488
      %v5926 = vpop.f32.mrb[0].mxu0
      %v5927 = vadd.f32 0.0, %v5926
      %v5928 = vpop.f32.mrb[0].mxu0
      %5929 = vdwg.mxu0
      %s5930 = scalar_lea.vmem %s7, 128
      %v5931 = vld [vmem:[%s5930] sm:$0xff]
      %v5932 = vld [vmem:[%s5930 + $0x8] sm:$0xff]
      %v5933 = vld [vmem:[%s5930 + $0x10] sm:$0xff]
      %v5934 = vld [vmem:[%s5930 + $0x18] sm:$0xff]
      %v5935 = vld [vmem:[%s5930 + $0x20] sm:$0xff]
      %v5936 = vld [vmem:[%s5930 + $0x28] sm:$0xff]
      %v5937 = vld [vmem:[%s5930 + $0x30] sm:$0xff]
      %v5938 = vld [vmem:[%s5930 + $0x38] sm:$0xff]
      %v5939 = vld [vmem:[%s5930 + $0x40] sm:$0xff]
      %v5940 = vld [vmem:[%s5930 + $0x48] sm:$0xff]
      %v5941 = vld [vmem:[%s5930 + $0x50] sm:$0xff]
      %v5942 = vld [vmem:[%s5930 + $0x58] sm:$0xff]
      %v5943 = vld [vmem:[%s5930 + $0x60] sm:$0xff]
      %v5944 = vld [vmem:[%s5930 + $0x68] sm:$0xff]
      %v5945 = vld [vmem:[%s5930 + $0x70] sm:$0xff]
      %v5946 = vld [vmem:[%s5930 + $0x78] sm:$0xff]
      %5947 = vmatprep.subr.mxu0 0.0
      %5948 = vmatpush1.msra.mxu0 %v5931
      %5949 = vmatprep.subr.mxu0 0.0
      %5950 = vmatpush1.msra.mxu0 %v5932
      %5951 = vmatprep.subr.mxu0 0.0
      %5952 = vmatpush1.msra.mxu0 %v5933
      %5953 = vmatprep.subr.mxu0 0.0
      %5954 = vmatpush1.msra.mxu0 %v5934
      %5955 = vmatprep.subr.mxu0 0.0
      %5956 = vmatpush1.msra.mxu0 0.0
      %5957 = vmatprep.subr.mxu0 0.0
      %5958 = vmatpush1.msra.mxu0 0.0
      %5959 = vmatprep.subr.mxu0 0.0
      %5960 = vmatpush1.msra.mxu0 0.0
      %5961 = vmatprep.subr.mxu0 0.0
      %5962 = vmatpush1.msra.mxu0 0.0
      %5963 = vmatprep.subr.mxu0 0.0
      %5964 = vmatpush1.msra.mxu0 0.0
      %5965 = vmatprep.subr.mxu0 0.0
      %5966 = vmatpush1.msra.mxu0 0.0
      %5967 = vmatprep.subr.mxu0 0.0
      %5968 = vmatpush1.msra.mxu0 0.0
      %5969 = vmatprep.subr.mxu0 0.0
      %5970 = vmatpush1.msra.mxu0 0.0
      %5971 = vmatprep.subr.mxu0 0.0
      %5972 = vmatpush1.msra.mxu0 0.0
      %5973 = vmatprep.subr.mxu0 0.0
      %5974 = vmatpush1.msra.mxu0 0.0
      %5975 = vmatprep.subr.mxu0 0.0
      %5976 = vmatpush1.msra.mxu0 0.0
      %5977 = vmatprep.subr.mxu0 0.0
      %5978 = vmatpush1.msra.mxu0 0.0
      %5979 = vmatprep.subr.mxu0 0.0
      %5980 = vmatpush1.msra.mxu0 0.0
      %5981 = vmatprep.subr.mxu0 0.0
      %5982 = vmatpush1.msra.mxu0 0.0
      %5983 = vmatprep.subr.mxu0 0.0
      %5984 = vmatpush1.msra.mxu0 0.0
      %5985 = vmatprep.subr.mxu0 0.0
      %5986 = vmatpush1.msra.mxu0 0.0
      %5987 = vmatprep.subr.mxu0 0.0
      %5988 = vmatpush1.msra.mxu0 0.0
      %5989 = vmatprep.subr.mxu0 0.0
      %5990 = vmatpush1.msra.mxu0 0.0
      %5991 = vmatprep.subr.mxu0 0.0
      %5992 = vmatpush1.msra.mxu0 0.0
      %5993 = vmatprep.subr.mxu0 0.0
      %5994 = vmatpush1.msra.mxu0 0.0
      %5995 = vmatprep.subr.mxu0 0.0
      %5996 = vmatpush1.msra.mxu0 0.0
      %5997 = vmatprep.subr.mxu0 0.0
      %5998 = vmatpush1.msra.mxu0 0.0
      %5999 = vmatprep.subr.mxu0 0.0
      %6000 = vmatpush1.msra.mxu0 0.0
      %6001 = vmatprep.subr.mxu0 0.0
      %6002 = vmatpush1.msra.mxu0 0.0
      %6003 = vmatprep.subr.mxu0 0.0
      %6004 = vmatpush1.msra.mxu0 0.0
      %6005 = vmatprep.subr.mxu0 0.0
      %6006 = vmatpush1.msra.mxu0 0.0
      %6007 = vmatprep.subr.mxu0 0.0
      %6008 = vmatpush1.msra.mxu0 0.0
      %6009 = vmatprep.subr.mxu0 0.0
      %6010 = vmatpush1.msra.mxu0 0.0
      %6011 = vmatprep.mubr.f32.mxu0 0.0
      %6012 = vmatmul.mubr.f32.gmra.mrb[0].mxu0 %v5464
      %v6013 = vpop.f32.mrb[0].mxu0
      %v6014 = vadd.f32 0.0, %v6013
      %v6015 = vpop.f32.mrb[0].mxu0
      %6016 = vmatprep.mubr.f32.mxu0 0.0
      %6017 = vmatmul.mubr.f32.gmra.mrb[0].mxu0 %v5467
      %v6018 = vpop.f32.mrb[0].mxu0
      %v6019 = vadd.f32 0.0, %v6018
      %v6020 = vpop.f32.mrb[0].mxu0
      %6021 = vmatprep.mubr.f32.mxu0 0.0
      %6022 = vmatmul.mubr.f32.gmra.mrb[0].mxu0 %v5470
      %v6023 = vpop.f32.mrb[0].mxu0
      %v6024 = vadd.f32 0.0, %v6023
      %v6025 = vpop.f32.mrb[0].mxu0
      %6026 = vmatprep.mubr.f32.mxu0 0.0
      %6027 = vmatmul.mubr.f32.gmra.mrb[0].mxu0 %v5473
      %v6028 = vpop.f32.mrb[0].mxu0
      %v6029 = vadd.f32 0.0, %v6028
      %v6030 = vpop.f32.mrb[0].mxu0
      %6031 = vmatprep.mubr.f32.mxu0 0.0
      %6032 = vmatmul.mubr.f32.gmra.mrb[0].mxu0 %v5476
      %v6033 = vpop.f32.mrb[0].mxu0
      %v6034 = vadd.f32 0.0, %v6033
      %v6035 = vpop.f32.mrb[0].mxu0
      %6036 = vmatprep.mubr.f32.mxu0 0.0
      %6037 = vmatmul.mubr.f32.gmra.mrb[0].mxu0 %v5479
      %v6038 = vpop.f32.mrb[0].mxu0
      %v6039 = vadd.f32 0.0, %v6038
      %v6040 = vpop.f32.mrb[0].mxu0
      %6041 = vmatprep.mubr.f32.mxu0 0.0
      %6042 = vmatmul.mubr.f32.gmra.mrb[0].mxu0 %v5482
      %v6043 = vpop.f32.mrb[0].mxu0
      %v6044 = vadd.f32 0.0, %v6043
      %v6045 = vpop.f32.mrb[0].mxu0
      %6046 = vmatprep.mubr.f32.mxu0 0.0
      %6047 = vmatmul.mubr.f32.gmra.mrb[0].mxu0 %v5485
      %v6048 = vpop.f32.mrb[0].mxu0
      %v6049 = vadd.f32 0.0, %v6048
      %v6050 = vpop.f32.mrb[0].mxu0
      %6051 = vmatprep.mubr.f32.mxu0 0.0
      %6052 = vmatmul.mubr.f32.gmra.mrb[0].mxu0 %v5488
      %v6053 = vpop.f32.mrb[0].mxu0
      %v6054 = vadd.f32 0.0, %v6053
      %v6055 = vpop.f32.mrb[0].mxu0
      %6056 = vdwg.mxu0
      %6057 = vmatprep.subr.mxu0 0.0
      %6058 = vmatpush1.msra.mxu0 %v5935
      %6059 = vmatprep.subr.mxu0 0.0
      %6060 = vmatpush1.msra.mxu0 %v5936
      %6061 = vmatprep.subr.mxu0 0.0
      %6062 = vmatpush1.msra.mxu0 %v5937
      %6063 = vmatprep.subr.mxu0 0.0
      %6064 = vmatpush1.msra.mxu0 %v5938
      %6065 = vmatprep.subr.mxu0 0.0
      %6066 = vmatpush1.msra.mxu0 0.0
      %6067 = vmatprep.subr.mxu0 0.0
      %6068 = vmatpush1.msra.mxu0 0.0
      %6069 = vmatprep.subr.mxu0 0.0
      %6070 = vmatpush1.msra.mxu0 0.0
      %6071 = vmatprep.subr.mxu0 0.0
      %6072 = vmatpush1.msra.mxu0 0.0
      %6073 = vmatprep.subr.mxu0 0.0
      %6074 = vmatpush1.msra.mxu0 0.0
      %6075 = vmatprep.subr.mxu0 0.0
      %6076 = vmatpush1.msra.mxu0 0.0
      %6077 = vmatprep.subr.mxu0 0.0
      %6078 = vmatpush1.msra.mxu0 0.0
      %6079 = vmatprep.subr.mxu0 0.0
      %6080 = vmatpush1.msra.mxu0 0.0
      %6081 = vmatprep.subr.mxu0 0.0
      %6082 = vmatpush1.msra.mxu0 0.0
      %6083 = vmatprep.subr.mxu0 0.0
      %6084 = vmatpush1.msra.mxu0 0.0
      %6085 = vmatprep.subr.mxu0 0.0
      %6086 = vmatpush1.msra.mxu0 0.0
      %6087 = vmatprep.subr.mxu0 0.0
      %6088 = vmatpush1.msra.mxu0 0.0
      %6089 = vmatprep.subr.mxu0 0.0
      %6090 = vmatpush1.msra.mxu0 0.0
      %6091 = vmatprep.subr.mxu0 0.0
      %6092 = vmatpush1.msra.mxu0 0.0
      %6093 = vmatprep.subr.mxu0 0.0
      %6094 = vmatpush1.msra.mxu0 0.0
      %6095 = vmatprep.subr.mxu0 0.0
      %6096 = vmatpush1.msra.mxu0 0.0
      %6097 = vmatprep.subr.mxu0 0.0
      %6098 = vmatpush1.msra.mxu0 0.0
      %6099 = vmatprep.subr.mxu0 0.0
      %6100 = vmatpush1.msra.mxu0 0.0
      %6101 = vmatprep.subr.mxu0 0.0
      %6102 = vmatpush1.msra.mxu0 0.0
      %6103 = vmatprep.subr.mxu0 0.0
      %6104 = vmatpush1.msra.mxu0 0.0
      %6105 = vmatprep.subr.mxu0 0.0
      %6106 = vmatpush1.msra.mxu0 0.0
      %6107 = vmatprep.subr.mxu0 0.0
      %6108 = vmatpush1.msra.mxu0 0.0
      %6109 = vmatprep.subr.mxu0 0.0
      %6110 = vmatpush1.msra.mxu0 0.0
      %6111 = vmatprep.subr.mxu0 0.0
      %6112 = vmatpush1.msra.mxu0 0.0
      %6113 = vmatprep.subr.mxu0 0.0
      %6114 = vmatpush1.msra.mxu0 0.0
      %6115 = vmatprep.subr.mxu0 0.0
      %6116 = vmatpush1.msra.mxu0 0.0
      %6117 = vmatprep.subr.mxu0 0.0
      %6118 = vmatpush1.msra.mxu0 0.0
      %6119 = vmatprep.subr.mxu0 0.0
      %6120 = vmatpush1.msra.mxu0 0.0
      %6121 = vmatprep.mubr.f32.mxu0 0.0
      %6122 = vmatmul.mubr.f32.gmra.mrb[0].mxu0 %v5464
      %v6123 = vpop.f32.mrb[0].mxu0
      %v6124 = vadd.f32 0.0, %v6123
      %v6125 = vpop.f32.mrb[0].mxu0
      %6126 = vmatprep.mubr.f32.mxu0 0.0
      %6127 = vmatmul.mubr.f32.gmra.mrb[0].mxu0 %v5467
      %v6128 = vpop.f32.mrb[0].mxu0
      %v6129 = vadd.f32 0.0, %v6128
      %v6130 = vpop.f32.mrb[0].mxu0
      %6131 = vmatprep.mubr.f32.mxu0 0.0
      %6132 = vmatmul.mubr.f32.gmra.mrb[0].mxu0 %v5470
      %v6133 = vpop.f32.mrb[0].mxu0
      %v6134 = vadd.f32 0.0, %v6133
      %v6135 = vpop.f32.mrb[0].mxu0
      %6136 = vmatprep.mubr.f32.mxu0 0.0
      %6137 = vmatmul.mubr.f32.gmra.mrb[0].mxu0 %v5473
      %v6138 = vpop.f32.mrb[0].mxu0
      %v6139 = vadd.f32 0.0, %v6138
      %v6140 = vpop.f32.mrb[0].mxu0
      %6141 = vmatprep.mubr.f32.mxu0 0.0
      %6142 = vmatmul.mubr.f32.gmra.mrb[0].mxu0 %v5476
      %v6143 = vpop.f32.mrb[0].mxu0
      %v6144 = vadd.f32 0.0, %v6143
      %v6145 = vpop.f32.mrb[0].mxu0
      %6146 = vmatprep.mubr.f32.mxu0 0.0
      %6147 = vmatmul.mubr.f32.gmra.mrb[0].mxu0 %v5479
      %v6148 = vpop.f32.mrb[0].mxu0
      %v6149 = vadd.f32 0.0, %v6148
      %v6150 = vpop.f32.mrb[0].mxu0
      %6151 = vmatprep.mubr.f32.mxu0 0.0
      %6152 = vmatmul.mubr.f32.gmra.mrb[0].mxu0 %v5482
      %v6153 = vpop.f32.mrb[0].mxu0
      %v6154 = vadd.f32 0.0, %v6153
      %v6155 = vpop.f32.mrb[0].mxu0
      %6156 = vmatprep.mubr.f32.mxu0 0.0
      %6157 = vmatmul.mubr.f32.gmra.mrb[0].mxu0 %v5485
      %v6158 = vpop.f32.mrb[0].mxu0
      %v6159 = vadd.f32 0.0, %v6158
      %v6160 = vpop.f32.mrb[0].mxu0
      %6161 = vmatprep.mubr.f32.mxu0 0.0
      %6162 = vmatmul.mubr.f32.gmra.mrb[0].mxu0 %v5488
      %v6163 = vpop.f32.mrb[0].mxu0
      %v6164 = vadd.f32 0.0, %v6163
      %v6165 = vpop.f32.mrb[0].mxu0
      %6166 = vdwg.mxu0
      %6167 = vmatprep.subr.mxu0 0.0
      %6168 = vmatpush1.msra.mxu0 %v5939
      %6169 = vmatprep.subr.mxu0 0.0
      %6170 = vmatpush1.msra.mxu0 %v5940
      %6171 = vmatprep.subr.mxu0 0.0
      %6172 = vmatpush1.msra.mxu0 %v5941
      %6173 = vmatprep.subr.mxu0 0.0
      %6174 = vmatpush1.msra.mxu0 %v5942
      %6175 = vmatprep.subr.mxu0 0.0
      %6176 = vmatpush1.msra.mxu0 0.0
      %6177 = vmatprep.subr.mxu0 0.0
      %6178 = vmatpush1.msra.mxu0 0.0
      %6179 = vmatprep.subr.mxu0 0.0
      %6180 = vmatpush1.msra.mxu0 0.0
      %6181 = vmatprep.subr.mxu0 0.0
      %6182 = vmatpush1.msra.mxu0 0.0
      %6183 = vmatprep.subr.mxu0 0.0
      %6184 = vmatpush1.msra.mxu0 0.0
      %6185 = vmatprep.subr.mxu0 0.0
      %6186 = vmatpush1.msra.mxu0 0.0
      %6187 = vmatprep.subr.mxu0 0.0
      %6188 = vmatpush1.msra.mxu0 0.0
      %6189 = vmatprep.subr.mxu0 0.0
      %6190 = vmatpush1.msra.mxu0 0.0
      %6191 = vmatprep.subr.mxu0 0.0
      %6192 = vmatpush1.msra.mxu0 0.0
      %6193 = vmatprep.subr.mxu0 0.0
      %6194 = vmatpush1.msra.mxu0 0.0
      %6195 = vmatprep.subr.mxu0 0.0
      %6196 = vmatpush1.msra.mxu0 0.0
      %6197 = vmatprep.subr.mxu0 0.0
      %6198 = vmatpush1.msra.mxu0 0.0
      %6199 = vmatprep.subr.mxu0 0.0
      %6200 = vmatpush1.msra.mxu0 0.0
      %6201 = vmatprep.subr.mxu0 0.0
      %6202 = vmatpush1.msra.mxu0 0.0
      %6203 = vmatprep.subr.mxu0 0.0
      %6204 = vmatpush1.msra.mxu0 0.0
      %6205 = vmatprep.subr.mxu0 0.0
      %6206 = vmatpush1.msra.mxu0 0.0
      %6207 = vmatprep.subr.mxu0 0.0
      %6208 = vmatpush1.msra.mxu0 0.0
      %6209 = vmatprep.subr.mxu0 0.0
      %6210 = vmatpush1.msra.mxu0 0.0
      %6211 = vmatprep.subr.mxu0 0.0
      %6212 = vmatpush1.msra.mxu0 0.0
      %6213 = vmatprep.subr.mxu0 0.0
      %6214 = vmatpush1.msra.mxu0 0.0
      %6215 = vmatprep.subr.mxu0 0.0
      %6216 = vmatpush1.msra.mxu0 0.0
      %6217 = vmatprep.subr.mxu0 0.0
      %6218 = vmatpush1.msra.mxu0 0.0
      %6219 = vmatprep.subr.mxu0 0.0
      %6220 = vmatpush1.msra.mxu0 0.0
      %6221 = vmatprep.subr.mxu0 0.0
      %6222 = vmatpush1.msra.mxu0 0.0
      %6223 = vmatprep.subr.mxu0 0.0
      %6224 = vmatpush1.msra.mxu0 0.0
      %6225 = vmatprep.subr.mxu0 0.0
      %6226 = vmatpush1.msra.mxu0 0.0
      %6227 = vmatprep.subr.mxu0 0.0
      %6228 = vmatpush1.msra.mxu0 0.0
      %6229 = vmatprep.subr.mxu0 0.0
      %6230 = vmatpush1.msra.mxu0 0.0
      %6231 = vmatprep.mubr.f32.mxu0 0.0
      %6232 = vmatmul.mubr.f32.gmra.mrb[0].mxu0 %v5464
      %v6233 = vpop.f32.mrb[0].mxu0
      %v6234 = vadd.f32 0.0, %v6233
      %v6235 = vpop.f32.mrb[0].mxu0
      %6236 = vmatprep.mubr.f32.mxu0 0.0
      %6237 = vmatmul.mubr.f32.gmra.mrb[0].mxu0 %v5467
      %v6238 = vpop.f32.mrb[0].mxu0
      %v6239 = vadd.f32 0.0, %v6238
      %v6240 = vpop.f32.mrb[0].mxu0
      %6241 = vmatprep.mubr.f32.mxu0 0.0
      %6242 = vmatmul.mubr.f32.gmra.mrb[0].mxu0 %v5470
      %v6243 = vpop.f32.mrb[0].mxu0
      %v6244 = vadd.f32 0.0, %v6243
      %v6245 = vpop.f32.mrb[0].mxu0
      %6246 = vmatprep.mubr.f32.mxu0 0.0
      %6247 = vmatmul.mubr.f32.gmra.mrb[0].mxu0 %v5473
      %v6248 = vpop.f32.mrb[0].mxu0
      %v6249 = vadd.f32 0.0, %v6248
      %v6250 = vpop.f32.mrb[0].mxu0
      %6251 = vmatprep.mubr.f32.mxu0 0.0
      %6252 = vmatmul.mubr.f32.gmra.mrb[0].mxu0 %v5476
      %v6253 = vpop.f32.mrb[0].mxu0
      %v6254 = vadd.f32 0.0, %v6253
      %v6255 = vpop.f32.mrb[0].mxu0
      %6256 = vmatprep.mubr.f32.mxu0 0.0
      %6257 = vmatmul.mubr.f32.gmra.mrb[0].mxu0 %v5479
      %v6258 = vpop.f32.mrb[0].mxu0
      %v6259 = vadd.f32 0.0, %v6258
      %v6260 = vpop.f32.mrb[0].mxu0
      %6261 = vmatprep.mubr.f32.mxu0 0.0
      %6262 = vmatmul.mubr.f32.gmra.mrb[0].mxu0 %v5482
      %v6263 = vpop.f32.mrb[0].mxu0
      %v6264 = vadd.f32 0.0, %v6263
      %v6265 = vpop.f32.mrb[0].mxu0
      %6266 = vmatprep.mubr.f32.mxu0 0.0
      %6267 = vmatmul.mubr.f32.gmra.mrb[0].mxu0 %v5485
      %v6268 = vpop.f32.mrb[0].mxu0
      %v6269 = vadd.f32 0.0, %v6268
      %v6270 = vpop.f32.mrb[0].mxu0
      %6271 = vmatprep.mubr.f32.mxu0 0.0
      %6272 = vmatmul.mubr.f32.gmra.mrb[0].mxu0 %v5488
      %v6273 = vpop.f32.mrb[0].mxu0
      %v6274 = vadd.f32 0.0, %v6273
      %v6275 = vpop.f32.mrb[0].mxu0
      %6276 = vdwg.mxu0
      %6277 = vmatprep.subr.mxu0 0.0
      %6278 = vmatpush1.msra.mxu0 %v5943
      %6279 = vmatprep.subr.mxu0 0.0
      %6280 = vmatpush1.msra.mxu0 %v5944
      %6281 = vmatprep.subr.mxu0 0.0
      %6282 = vmatpush1.msra.mxu0 %v5945
      %6283 = vmatprep.subr.mxu0 0.0
      %6284 = vmatpush1.msra.mxu0 %v5946
      %6285 = vmatprep.subr.mxu0 0.0
      %6286 = vmatpush1.msra.mxu0 0.0
      %6287 = vmatprep.subr.mxu0 0.0
      %6288 = vmatpush1.msra.mxu0 0.0
      %6289 = vmatprep.subr.mxu0 0.0
      %6290 = vmatpush1.msra.mxu0 0.0
      %6291 = vmatprep.subr.mxu0 0.0
      %6292 = vmatpush1.msra.mxu0 0.0
      %6293 = vmatprep.subr.mxu0 0.0
      %6294 = vmatpush1.msra.mxu0 0.0
      %6295 = vmatprep.subr.mxu0 0.0
      %6296 = vmatpush1.msra.mxu0 0.0
      %6297 = vmatprep.subr.mxu0 0.0
      %6298 = vmatpush1.msra.mxu0 0.0
      %6299 = vmatprep.subr.mxu0 0.0
      %6300 = vmatpush1.msra.mxu0 0.0
      %6301 = vmatprep.subr.mxu0 0.0
      %6302 = vmatpush1.msra.mxu0 0.0
      %6303 = vmatprep.subr.mxu0 0.0
      %6304 = vmatpush1.msra.mxu0 0.0
      %6305 = vmatprep.subr.mxu0 0.0
      %6306 = vmatpush1.msra.mxu0 0.0
      %6307 = vmatprep.subr.mxu0 0.0
      %6308 = vmatpush1.msra.mxu0 0.0
      %6309 = vmatprep.subr.mxu0 0.0
      %6310 = vmatpush1.msra.mxu0 0.0
      %6311 = vmatprep.subr.mxu0 0.0
      %6312 = vmatpush1.msra.mxu0 0.0
      %6313 = vmatprep.subr.mxu0 0.0
      %6314 = vmatpush1.msra.mxu0 0.0
      %6315 = vmatprep.subr.mxu0 0.0
      %6316 = vmatpush1.msra.mxu0 0.0
      %6317 = vmatprep.subr.mxu0 0.0
      %6318 = vmatpush1.msra.mxu0 0.0
      %6319 = vmatprep.subr.mxu0 0.0
      %6320 = vmatpush1.msra.mxu0 0.0
      %6321 = vmatprep.subr.mxu0 0.0
      %6322 = vmatpush1.msra.mxu0 0.0
      %6323 = vmatprep.subr.mxu0 0.0
      %6324 = vmatpush1.msra.mxu0 0.0
      %6325 = vmatprep.subr.mxu0 0.0
      %6326 = vmatpush1.msra.mxu0 0.0
      %6327 = vmatprep.subr.mxu0 0.0
      %6328 = vmatpush1.msra.mxu0 0.0
      %6329 = vmatprep.subr.mxu0 0.0
      %6330 = vmatpush1.msra.mxu0 0.0
      %6331 = vmatprep.subr.mxu0 0.0
      %6332 = vmatpush1.msra.mxu0 0.0
      %6333 = vmatprep.subr.mxu0 0.0
      %6334 = vmatpush1.msra.mxu0 0.0
      %6335 = vmatprep.subr.mxu0 0.0
      %6336 = vmatpush1.msra.mxu0 0.0
      %6337 = vmatprep.subr.mxu0 0.0
      %6338 = vmatpush1.msra.mxu0 0.0
      %6339 = vmatprep.subr.mxu0 0.0
      %6340 = vmatpush1.msra.mxu0 0.0
      %6341 = vmatprep.mubr.f32.mxu0 0.0
      %6342 = vmatmul.mubr.f32.gmra.mrb[0].mxu0 %v5464
      %v6343 = vpop.f32.mrb[0].mxu0
      %v6344 = vadd.f32 0.0, %v6343
      %v6345 = vpop.f32.mrb[0].mxu0
      %6346 = vmatprep.mubr.f32.mxu0 0.0
      %6347 = vmatmul.mubr.f32.gmra.mrb[0].mxu0 %v5467
      %v6348 = vpop.f32.mrb[0].mxu0
      %v6349 = vadd.f32 0.0, %v6348
      %v6350 = vpop.f32.mrb[0].mxu0
      %6351 = vmatprep.mubr.f32.mxu0 0.0
      %6352 = vmatmul.mubr.f32.gmra.mrb[0].mxu0 %v5470
      %v6353 = vpop.f32.mrb[0].mxu0
      %v6354 = vadd.f32 0.0, %v6353
      %v6355 = vpop.f32.mrb[0].mxu0
      %6356 = vmatprep.mubr.f32.mxu0 0.0
      %6357 = vmatmul.mubr.f32.gmra.mrb[0].mxu0 %v5473
      %v6358 = vpop.f32.mrb[0].mxu0
      %v6359 = vadd.f32 0.0, %v6358
      %v6360 = vpop.f32.mrb[0].mxu0
      %6361 = vmatprep.mubr.f32.mxu0 0.0
      %6362 = vmatmul.mubr.f32.gmra.mrb[0].mxu0 %v5476
      %v6363 = vpop.f32.mrb[0].mxu0
      %v6364 = vadd.f32 0.0, %v6363
      %v6365 = vpop.f32.mrb[0].mxu0
      %6366 = vmatprep.mubr.f32.mxu0 0.0
      %6367 = vmatmul.mubr.f32.gmra.mrb[0].mxu0 %v5479
      %v6368 = vpop.f32.mrb[0].mxu0
      %v6369 = vadd.f32 0.0, %v6368
      %v6370 = vpop.f32.mrb[0].mxu0
      %6371 = vmatprep.mubr.f32.mxu0 0.0
      %6372 = vmatmul.mubr.f32.gmra.mrb[0].mxu0 %v5482
      %v6373 = vpop.f32.mrb[0].mxu0
      %v6374 = vadd.f32 0.0, %v6373
      %v6375 = vpop.f32.mrb[0].mxu0
      %6376 = vmatprep.mubr.f32.mxu0 0.0
      %6377 = vmatmul.mubr.f32.gmra.mrb[0].mxu0 %v5485
      %v6378 = vpop.f32.mrb[0].mxu0
      %v6379 = vadd.f32 0.0, %v6378
      %v6380 = vpop.f32.mrb[0].mxu0
      %6381 = vmatprep.mubr.f32.mxu0 0.0
      %6382 = vmatmul.mubr.f32.gmra.mrb[0].mxu0 %v5488
      %v6383 = vpop.f32.mrb[0].mxu0
      %v6384 = vadd.f32 0.0, %v6383
      %v6385 = vpop.f32.mrb[0].mxu0
      %6386 = vdwg.mxu0
      %s6387 = scalar_lea.vmem %s8, 128
      %v6388 = vld [vmem:[%s6387] sm:$0xff]
      %v6389 = vld [vmem:[%s6387 + $0x8] sm:$0xff]
      %v6390 = vld [vmem:[%s6387 + $0x10] sm:$0xff]
      %v6391 = vld [vmem:[%s6387 + $0x18] sm:$0xff]
      %v6392 = vld [vmem:[%s6387 + $0x20] sm:$0xff]
      %v6393 = vld [vmem:[%s6387 + $0x28] sm:$0xff]
      %v6394 = vld [vmem:[%s6387 + $0x30] sm:$0xff]
      %v6395 = vld [vmem:[%s6387 + $0x38] sm:$0xff]
      %v6396 = vld [vmem:[%s6387 + $0x40] sm:$0xff]
      %v6397 = vld [vmem:[%s6387 + $0x48] sm:$0xff]
      %v6398 = vld [vmem:[%s6387 + $0x50] sm:$0xff]
      %v6399 = vld [vmem:[%s6387 + $0x58] sm:$0xff]
      %v6400 = vld [vmem:[%s6387 + $0x60] sm:$0xff]
      %v6401 = vld [vmem:[%s6387 + $0x68] sm:$0xff]
      %v6402 = vld [vmem:[%s6387 + $0x70] sm:$0xff]
      %v6403 = vld [vmem:[%s6387 + $0x78] sm:$0xff]
      %6404 = vmatprep.subr.mxu0 0.0
      %6405 = vmatpush1.msra.mxu0 %v6388
      %6406 = vmatprep.subr.mxu0 0.0
      %6407 = vmatpush1.msra.mxu0 %v6389
      %6408 = vmatprep.subr.mxu0 0.0
      %6409 = vmatpush1.msra.mxu0 %v6390
      %6410 = vmatprep.subr.mxu0 0.0
      %6411 = vmatpush1.msra.mxu0 %v6391
      %6412 = vmatprep.subr.mxu0 0.0
      %6413 = vmatpush1.msra.mxu0 0.0
      %6414 = vmatprep.subr.mxu0 0.0
      %6415 = vmatpush1.msra.mxu0 0.0
      %6416 = vmatprep.subr.mxu0 0.0
      %6417 = vmatpush1.msra.mxu0 0.0
      %6418 = vmatprep.subr.mxu0 0.0
      %6419 = vmatpush1.msra.mxu0 0.0
      %6420 = vmatprep.subr.mxu0 0.0
      %6421 = vmatpush1.msra.mxu0 0.0
      %6422 = vmatprep.subr.mxu0 0.0
      %6423 = vmatpush1.msra.mxu0 0.0
      %6424 = vmatprep.subr.mxu0 0.0
      %6425 = vmatpush1.msra.mxu0 0.0
      %6426 = vmatprep.subr.mxu0 0.0
      %6427 = vmatpush1.msra.mxu0 0.0
      %6428 = vmatprep.subr.mxu0 0.0
      %6429 = vmatpush1.msra.mxu0 0.0
      %6430 = vmatprep.subr.mxu0 0.0
      %6431 = vmatpush1.msra.mxu0 0.0
      %6432 = vmatprep.subr.mxu0 0.0
      %6433 = vmatpush1.msra.mxu0 0.0
      %6434 = vmatprep.subr.mxu0 0.0
      %6435 = vmatpush1.msra.mxu0 0.0
      %6436 = vmatprep.subr.mxu0 0.0
      %6437 = vmatpush1.msra.mxu0 0.0
      %6438 = vmatprep.subr.mxu0 0.0
      %6439 = vmatpush1.msra.mxu0 0.0
      %6440 = vmatprep.subr.mxu0 0.0
      %6441 = vmatpush1.msra.mxu0 0.0
      %6442 = vmatprep.subr.mxu0 0.0
      %6443 = vmatpush1.msra.mxu0 0.0
      %6444 = vmatprep.subr.mxu0 0.0
      %6445 = vmatpush1.msra.mxu0 0.0
      %6446 = vmatprep.subr.mxu0 0.0
      %6447 = vmatpush1.msra.mxu0 0.0
      %6448 = vmatprep.subr.mxu0 0.0
      %6449 = vmatpush1.msra.mxu0 0.0
      %6450 = vmatprep.subr.mxu0 0.0
      %6451 = vmatpush1.msra.mxu0 0.0
      %6452 = vmatprep.subr.mxu0 0.0
      %6453 = vmatpush1.msra.mxu0 0.0
      %6454 = vmatprep.subr.mxu0 0.0
      %6455 = vmatpush1.msra.mxu0 0.0
      %6456 = vmatprep.subr.mxu0 0.0
      %6457 = vmatpush1.msra.mxu0 0.0
      %6458 = vmatprep.subr.mxu0 0.0
      %6459 = vmatpush1.msra.mxu0 0.0
      %6460 = vmatprep.subr.mxu0 0.0
      %6461 = vmatpush1.msra.mxu0 0.0
      %6462 = vmatprep.subr.mxu0 0.0
      %6463 = vmatpush1.msra.mxu0 0.0
      %6464 = vmatprep.subr.mxu0 0.0
      %6465 = vmatpush1.msra.mxu0 0.0
      %6466 = vmatprep.subr.mxu0 0.0
      %6467 = vmatpush1.msra.mxu0 0.0
      %6468 = vmatprep.mubr.f32.mxu0 0.0
      %6469 = vmatmul.mubr.f32.gmra.mrb[0].mxu0 %v5464
      %v6470 = vpop.f32.mrb[0].mxu0
      %v6471 = vadd.f32 0.0, %v6470
      %v6472 = vpop.f32.mrb[0].mxu0
      %6473 = vmatprep.mubr.f32.mxu0 0.0
      %6474 = vmatmul.mubr.f32.gmra.mrb[0].mxu0 %v5467
      %v6475 = vpop.f32.mrb[0].mxu0
      %v6476 = vadd.f32 0.0, %v6475
      %v6477 = vpop.f32.mrb[0].mxu0
      %6478 = vmatprep.mubr.f32.mxu0 0.0
      %6479 = vmatmul.mubr.f32.gmra.mrb[0].mxu0 %v5470
      %v6480 = vpop.f32.mrb[0].mxu0
      %v6481 = vadd.f32 0.0, %v6480
      %v6482 = vpop.f32.mrb[0].mxu0
      %6483 = vmatprep.mubr.f32.mxu0 0.0
      %6484 = vmatmul.mubr.f32.gmra.mrb[0].mxu0 %v5473
      %v6485 = vpop.f32.mrb[0].mxu0
      %v6486 = vadd.f32 0.0, %v6485
      %v6487 = vpop.f32.mrb[0].mxu0
      %6488 = vmatprep.mubr.f32.mxu0 0.0
      %6489 = vmatmul.mubr.f32.gmra.mrb[0].mxu0 %v5476
      %v6490 = vpop.f32.mrb[0].mxu0
      %v6491 = vadd.f32 0.0, %v6490
      %v6492 = vpop.f32.mrb[0].mxu0
      %6493 = vmatprep.mubr.f32.mxu0 0.0
      %6494 = vmatmul.mubr.f32.gmra.mrb[0].mxu0 %v5479
      %v6495 = vpop.f32.mrb[0].mxu0
      %v6496 = vadd.f32 0.0, %v6495
      %v6497 = vpop.f32.mrb[0].mxu0
      %6498 = vmatprep.mubr.f32.mxu0 0.0
      %6499 = vmatmul.mubr.f32.gmra.mrb[0].mxu0 %v5482
      %v6500 = vpop.f32.mrb[0].mxu0
      %v6501 = vadd.f32 0.0, %v6500
      %v6502 = vpop.f32.mrb[0].mxu0
      %6503 = vmatprep.mubr.f32.mxu0 0.0
      %6504 = vmatmul.mubr.f32.gmra.mrb[0].mxu0 %v5485
      %v6505 = vpop.f32.mrb[0].mxu0
      %v6506 = vadd.f32 0.0, %v6505
      %v6507 = vpop.f32.mrb[0].mxu0
      %6508 = vmatprep.mubr.f32.mxu0 0.0
      %6509 = vmatmul.mubr.f32.gmra.mrb[0].mxu0 %v5488
      %v6510 = vpop.f32.mrb[0].mxu0
      %v6511 = vadd.f32 0.0, %v6510
      %v6512 = vpop.f32.mrb[0].mxu0
      %6513 = vdwg.mxu0
      %6514 = vmatprep.subr.mxu0 0.0
      %6515 = vmatpush1.msra.mxu0 %v6392
      %6516 = vmatprep.subr.mxu0 0.0
      %6517 = vmatpush1.msra.mxu0 %v6393
      %6518 = vmatprep.subr.mxu0 0.0
      %6519 = vmatpush1.msra.mxu0 %v6394
      %6520 = vmatprep.subr.mxu0 0.0
      %6521 = vmatpush1.msra.mxu0 %v6395
      %6522 = vmatprep.subr.mxu0 0.0
      %6523 = vmatpush1.msra.mxu0 0.0
      %6524 = vmatprep.subr.mxu0 0.0
      %6525 = vmatpush1.msra.mxu0 0.0
      %6526 = vmatprep.subr.mxu0 0.0
      %6527 = vmatpush1.msra.mxu0 0.0
      %6528 = vmatprep.subr.mxu0 0.0
      %6529 = vmatpush1.msra.mxu0 0.0
      %6530 = vmatprep.subr.mxu0 0.0
      %6531 = vmatpush1.msra.mxu0 0.0
      %6532 = vmatprep.subr.mxu0 0.0
      %6533 = vmatpush1.msra.mxu0 0.0
      %6534 = vmatprep.subr.mxu0 0.0
      %6535 = vmatpush1.msra.mxu0 0.0
      %6536 = vmatprep.subr.mxu0 0.0
      %6537 = vmatpush1.msra.mxu0 0.0
      %6538 = vmatprep.subr.mxu0 0.0
      %6539 = vmatpush1.msra.mxu0 0.0
      %6540 = vmatprep.subr.mxu0 0.0
      %6541 = vmatpush1.msra.mxu0 0.0
      %6542 = vmatprep.subr.mxu0 0.0
      %6543 = vmatpush1.msra.mxu0 0.0
      %6544 = vmatprep.subr.mxu0 0.0
      %6545 = vmatpush1.msra.mxu0 0.0
      %6546 = vmatprep.subr.mxu0 0.0
      %6547 = vmatpush1.msra.mxu0 0.0
      %6548 = vmatprep.subr.mxu0 0.0
      %6549 = vmatpush1.msra.mxu0 0.0
      %6550 = vmatprep.subr.mxu0 0.0
      %6551 = vmatpush1.msra.mxu0 0.0
      %6552 = vmatprep.subr.mxu0 0.0
      %6553 = vmatpush1.msra.mxu0 0.0
      %6554 = vmatprep.subr.mxu0 0.0
      %6555 = vmatpush1.msra.mxu0 0.0
      %6556 = vmatprep.subr.mxu0 0.0
      %6557 = vmatpush1.msra.mxu0 0.0
      %6558 = vmatprep.subr.mxu0 0.0
      %6559 = vmatpush1.msra.mxu0 0.0
      %6560 = vmatprep.subr.mxu0 0.0
      %6561 = vmatpush1.msra.mxu0 0.0
      %6562 = vmatprep.subr.mxu0 0.0
      %6563 = vmatpush1.msra.mxu0 0.0
      %6564 = vmatprep.subr.mxu0 0.0
      %6565 = vmatpush1.msra.mxu0 0.0
      %6566 = vmatprep.subr.mxu0 0.0
      %6567 = vmatpush1.msra.mxu0 0.0
      %6568 = vmatprep.subr.mxu0 0.0
      %6569 = vmatpush1.msra.mxu0 0.0
      %6570 = vmatprep.subr.mxu0 0.0
      %6571 = vmatpush1.msra.mxu0 0.0
      %6572 = vmatprep.subr.mxu0 0.0
      %6573 = vmatpush1.msra.mxu0 0.0
      %6574 = vmatprep.subr.mxu0 0.0
      %6575 = vmatpush1.msra.mxu0 0.0
      %6576 = vmatprep.subr.mxu0 0.0
      %6577 = vmatpush1.msra.mxu0 0.0
      %6578 = vmatprep.mubr.f32.mxu0 0.0
      %6579 = vmatmul.mubr.f32.gmra.mrb[0].mxu0 %v5464
      %v6580 = vpop.f32.mrb[0].mxu0
      %v6581 = vadd.f32 0.0, %v6580
      %v6582 = vpop.f32.mrb[0].mxu0
      %6583 = vmatprep.mubr.f32.mxu0 0.0
      %6584 = vmatmul.mubr.f32.gmra.mrb[0].mxu0 %v5467
      %v6585 = vpop.f32.mrb[0].mxu0
      %v6586 = vadd.f32 0.0, %v6585
      %v6587 = vpop.f32.mrb[0].mxu0
      %6588 = vmatprep.mubr.f32.mxu0 0.0
      %6589 = vmatmul.mubr.f32.gmra.mrb[0].mxu0 %v5470
      %v6590 = vpop.f32.mrb[0].mxu0
      %v6591 = vadd.f32 0.0, %v6590
      %v6592 = vpop.f32.mrb[0].mxu0
      %6593 = vmatprep.mubr.f32.mxu0 0.0
      %6594 = vmatmul.mubr.f32.gmra.mrb[0].mxu0 %v5473
      %v6595 = vpop.f32.mrb[0].mxu0
      %v6596 = vadd.f32 0.0, %v6595
      %v6597 = vpop.f32.mrb[0].mxu0
      %6598 = vmatprep.mubr.f32.mxu0 0.0
      %6599 = vmatmul.mubr.f32.gmra.mrb[0].mxu0 %v5476
      %v6600 = vpop.f32.mrb[0].mxu0
      %v6601 = vadd.f32 0.0, %v6600
      %v6602 = vpop.f32.mrb[0].mxu0
      %6603 = vmatprep.mubr.f32.mxu0 0.0
      %6604 = vmatmul.mubr.f32.gmra.mrb[0].mxu0 %v5479
      %v6605 = vpop.f32.mrb[0].mxu0
      %v6606 = vadd.f32 0.0, %v6605
      %v6607 = vpop.f32.mrb[0].mxu0
      %6608 = vmatprep.mubr.f32.mxu0 0.0
      %6609 = vmatmul.mubr.f32.gmra.mrb[0].mxu0 %v5482
      %v6610 = vpop.f32.mrb[0].mxu0
      %v6611 = vadd.f32 0.0, %v6610
      %v6612 = vpop.f32.mrb[0].mxu0
      %6613 = vmatprep.mubr.f32.mxu0 0.0
      %6614 = vmatmul.mubr.f32.gmra.mrb[0].mxu0 %v5485
      %v6615 = vpop.f32.mrb[0].mxu0
      %v6616 = vadd.f32 0.0, %v6615
      %v6617 = vpop.f32.mrb[0].mxu0
      %6618 = vmatprep.mubr.f32.mxu0 0.0
      %6619 = vmatmul.mubr.f32.gmra.mrb[0].mxu0 %v5488
      %v6620 = vpop.f32.mrb[0].mxu0
      %v6621 = vadd.f32 0.0, %v6620
      %v6622 = vpop.f32.mrb[0].mxu0
      %6623 = vdwg.mxu0
      %6624 = vmatprep.subr.mxu0 0.0
      %6625 = vmatpush1.msra.mxu0 %v6396
      %6626 = vmatprep.subr.mxu0 0.0
      %6627 = vmatpush1.msra.mxu0 %v6397
      %6628 = vmatprep.subr.mxu0 0.0
      %6629 = vmatpush1.msra.mxu0 %v6398
      %6630 = vmatprep.subr.mxu0 0.0
      %6631 = vmatpush1.msra.mxu0 %v6399
      %6632 = vmatprep.subr.mxu0 0.0
      %6633 = vmatpush1.msra.mxu0 0.0
      %6634 = vmatprep.subr.mxu0 0.0
      %6635 = vmatpush1.msra.mxu0 0.0
      %6636 = vmatprep.subr.mxu0 0.0
      %6637 = vmatpush1.msra.mxu0 0.0
      %6638 = vmatprep.subr.mxu0 0.0
      %6639 = vmatpush1.msra.mxu0 0.0
      %6640 = vmatprep.subr.mxu0 0.0
      %6641 = vmatpush1.msra.mxu0 0.0
      %6642 = vmatprep.subr.mxu0 0.0
      %6643 = vmatpush1.msra.mxu0 0.0
      %6644 = vmatprep.subr.mxu0 0.0
      %6645 = vmatpush1.msra.mxu0 0.0
      %6646 = vmatprep.subr.mxu0 0.0
      %6647 = vmatpush1.msra.mxu0 0.0
      %6648 = vmatprep.subr.mxu0 0.0
      %6649 = vmatpush1.msra.mxu0 0.0
      %6650 = vmatprep.subr.mxu0 0.0
      %6651 = vmatpush1.msra.mxu0 0.0
      %6652 = vmatprep.subr.mxu0 0.0
      %6653 = vmatpush1.msra.mxu0 0.0
      %6654 = vmatprep.subr.mxu0 0.0
      %6655 = vmatpush1.msra.mxu0 0.0
      %6656 = vmatprep.subr.mxu0 0.0
      %6657 = vmatpush1.msra.mxu0 0.0
      %6658 = vmatprep.subr.mxu0 0.0
      %6659 = vmatpush1.msra.mxu0 0.0
      %6660 = vmatprep.subr.mxu0 0.0
      %6661 = vmatpush1.msra.mxu0 0.0
      %6662 = vmatprep.subr.mxu0 0.0
      %6663 = vmatpush1.msra.mxu0 0.0
      %6664 = vmatprep.subr.mxu0 0.0
      %6665 = vmatpush1.msra.mxu0 0.0
      %6666 = vmatprep.subr.mxu0 0.0
      %6667 = vmatpush1.msra.mxu0 0.0
      %6668 = vmatprep.subr.mxu0 0.0
      %6669 = vmatpush1.msra.mxu0 0.0
      %6670 = vmatprep.subr.mxu0 0.0
      %6671 = vmatpush1.msra.mxu0 0.0
      %6672 = vmatprep.subr.mxu0 0.0
      %6673 = vmatpush1.msra.mxu0 0.0
      %6674 = vmatprep.subr.mxu0 0.0
      %6675 = vmatpush1.msra.mxu0 0.0
      %6676 = vmatprep.subr.mxu0 0.0
      %6677 = vmatpush1.msra.mxu0 0.0
      %6678 = vmatprep.subr.mxu0 0.0
      %6679 = vmatpush1.msra.mxu0 0.0
      %6680 = vmatprep.subr.mxu0 0.0
      %6681 = vmatpush1.msra.mxu0 0.0
      %6682 = vmatprep.subr.mxu0 0.0
      %6683 = vmatpush1.msra.mxu0 0.0
      %6684 = vmatprep.subr.mxu0 0.0
      %6685 = vmatpush1.msra.mxu0 0.0
      %6686 = vmatprep.subr.mxu0 0.0
      %6687 = vmatpush1.msra.mxu0 0.0
      %6688 = vmatprep.mubr.f32.mxu0 0.0
      %6689 = vmatmul.mubr.f32.gmra.mrb[0].mxu0 %v5464
      %v6690 = vpop.f32.mrb[0].mxu0
      %v6691 = vadd.f32 0.0, %v6690
      %v6692 = vpop.f32.mrb[0].mxu0
      %6693 = vmatprep.mubr.f32.mxu0 0.0
      %6694 = vmatmul.mubr.f32.gmra.mrb[0].mxu0 %v5467
      %v6695 = vpop.f32.mrb[0].mxu0
      %v6696 = vadd.f32 0.0, %v6695
      %v6697 = vpop.f32.mrb[0].mxu0
      %6698 = vmatprep.mubr.f32.mxu0 0.0
      %6699 = vmatmul.mubr.f32.gmra.mrb[0].mxu0 %v5470
      %v6700 = vpop.f32.mrb[0].mxu0
      %v6701 = vadd.f32 0.0, %v6700
      %v6702 = vpop.f32.mrb[0].mxu0
      %6703 = vmatprep.mubr.f32.mxu0 0.0
      %6704 = vmatmul.mubr.f32.gmra.mrb[0].mxu0 %v5473
      %v6705 = vpop.f32.mrb[0].mxu0
      %v6706 = vadd.f32 0.0, %v6705
      %v6707 = vpop.f32.mrb[0].mxu0
      %6708 = vmatprep.mubr.f32.mxu0 0.0
      %6709 = vmatmul.mubr.f32.gmra.mrb[0].mxu0 %v5476
      %v6710 = vpop.f32.mrb[0].mxu0
      %v6711 = vadd.f32 0.0, %v6710
      %v6712 = vpop.f32.mrb[0].mxu0
      %6713 = vmatprep.mubr.f32.mxu0 0.0
      %6714 = vmatmul.mubr.f32.gmra.mrb[0].mxu0 %v5479
      %v6715 = vpop.f32.mrb[0].mxu0
      %v6716 = vadd.f32 0.0, %v6715
      %v6717 = vpop.f32.mrb[0].mxu0
      %6718 = vmatprep.mubr.f32.mxu0 0.0
      %6719 = vmatmul.mubr.f32.gmra.mrb[0].mxu0 %v5482
      %v6720 = vpop.f32.mrb[0].mxu0
      %v6721 = vadd.f32 0.0, %v6720
      %v6722 = vpop.f32.mrb[0].mxu0
      %6723 = vmatprep.mubr.f32.mxu0 0.0
      %6724 = vmatmul.mubr.f32.gmra.mrb[0].mxu0 %v5485
      %v6725 = vpop.f32.mrb[0].mxu0
      %v6726 = vadd.f32 0.0, %v6725
      %v6727 = vpop.f32.mrb[0].mxu0
      %6728 = vmatprep.mubr.f32.mxu0 0.0
      %6729 = vmatmul.mubr.f32.gmra.mrb[0].mxu0 %v5488
      %v6730 = vpop.f32.mrb[0].mxu0
      %v6731 = vadd.f32 0.0, %v6730
      %v6732 = vpop.f32.mrb[0].mxu0
      %6733 = vdwg.mxu0
      %6734 = vmatprep.subr.mxu0 0.0
      %6735 = vmatpush1.msra.mxu0 %v6400
      %6736 = vmatprep.subr.mxu0 0.0
      %6737 = vmatpush1.msra.mxu0 %v6401
      %6738 = vmatprep.subr.mxu0 0.0
      %6739 = vmatpush1.msra.mxu0 %v6402
      %6740 = vmatprep.subr.mxu0 0.0
      %6741 = vmatpush1.msra.mxu0 %v6403
      %6742 = vmatprep.subr.mxu0 0.0
      %6743 = vmatpush1.msra.mxu0 0.0
      %6744 = vmatprep.subr.mxu0 0.0
      %6745 = vmatpush1.msra.mxu0 0.0
      %6746 = vmatprep.subr.mxu0 0.0
      %6747 = vmatpush1.msra.mxu0 0.0
      %6748 = vmatprep.subr.mxu0 0.0
      %6749 = vmatpush1.msra.mxu0 0.0
      %6750 = vmatprep.subr.mxu0 0.0
      %6751 = vmatpush1.msra.mxu0 0.0
      %6752 = vmatprep.subr.mxu0 0.0
      %6753 = vmatpush1.msra.mxu0 0.0
      %6754 = vmatprep.subr.mxu0 0.0
      %6755 = vmatpush1.msra.mxu0 0.0
      %6756 = vmatprep.subr.mxu0 0.0
      %6757 = vmatpush1.msra.mxu0 0.0
      %6758 = vmatprep.subr.mxu0 0.0
      %6759 = vmatpush1.msra.mxu0 0.0
      %6760 = vmatprep.subr.mxu0 0.0
      %6761 = vmatpush1.msra.mxu0 0.0
      %6762 = vmatprep.subr.mxu0 0.0
      %6763 = vmatpush1.msra.mxu0 0.0
      %6764 = vmatprep.subr.mxu0 0.0
      %6765 = vmatpush1.msra.mxu0 0.0
      %6766 = vmatprep.subr.mxu0 0.0
      %6767 = vmatpush1.msra.mxu0 0.0
      %6768 = vmatprep.subr.mxu0 0.0
      %6769 = vmatpush1.msra.mxu0 0.0
      %6770 = vmatprep.subr.mxu0 0.0
      %6771 = vmatpush1.msra.mxu0 0.0
      %6772 = vmatprep.subr.mxu0 0.0
      %6773 = vmatpush1.msra.mxu0 0.0
      %6774 = vmatprep.subr.mxu0 0.0
      %6775 = vmatpush1.msra.mxu0 0.0
      %6776 = vmatprep.subr.mxu0 0.0
      %6777 = vmatpush1.msra.mxu0 0.0
      %6778 = vmatprep.subr.mxu0 0.0
      %6779 = vmatpush1.msra.mxu0 0.0
      %6780 = vmatprep.subr.mxu0 0.0
      %6781 = vmatpush1.msra.mxu0 0.0
      %6782 = vmatprep.subr.mxu0 0.0
      %6783 = vmatpush1.msra.mxu0 0.0
      %6784 = vmatprep.subr.mxu0 0.0
      %6785 = vmatpush1.msra.mxu0 0.0
      %6786 = vmatprep.subr.mxu0 0.0
      %6787 = vmatpush1.msra.mxu0 0.0
      %6788 = vmatprep.subr.mxu0 0.0
      %6789 = vmatpush1.msra.mxu0 0.0
      %6790 = vmatprep.subr.mxu0 0.0
      %6791 = vmatpush1.msra.mxu0 0.0
      %6792 = vmatprep.subr.mxu0 0.0
      %6793 = vmatpush1.msra.mxu0 0.0
      %6794 = vmatprep.subr.mxu0 0.0
      %6795 = vmatpush1.msra.mxu0 0.0
      %6796 = vmatprep.subr.mxu0 0.0
      %6797 = vmatpush1.msra.mxu0 0.0
      %6798 = vmatprep.mubr.f32.mxu0 0.0
      %6799 = vmatmul.mubr.f32.gmra.mrb[0].mxu0 %v5464
      %v6800 = vpop.f32.mrb[0].mxu0
      %v6801 = vadd.f32 0.0, %v6800
      %v6802 = vpop.f32.mrb[0].mxu0
      %6803 = vmatprep.mubr.f32.mxu0 0.0
      %6804 = vmatmul.mubr.f32.gmra.mrb[0].mxu0 %v5467
      %v6805 = vpop.f32.mrb[0].mxu0
      %v6806 = vadd.f32 0.0, %v6805
      %v6807 = vpop.f32.mrb[0].mxu0
      %6808 = vmatprep.mubr.f32.mxu0 0.0
      %6809 = vmatmul.mubr.f32.gmra.mrb[0].mxu0 %v5470
      %v6810 = vpop.f32.mrb[0].mxu0
      %v6811 = vadd.f32 0.0, %v6810
      %v6812 = vpop.f32.mrb[0].mxu0
      %6813 = vmatprep.mubr.f32.mxu0 0.0
      %6814 = vmatmul.mubr.f32.gmra.mrb[0].mxu0 %v5473
      %v6815 = vpop.f32.mrb[0].mxu0
      %v6816 = vadd.f32 0.0, %v6815
      %v6817 = vpop.f32.mrb[0].mxu0
      %6818 = vmatprep.mubr.f32.mxu0 0.0
      %6819 = vmatmul.mubr.f32.gmra.mrb[0].mxu0 %v5476
      %v6820 = vpop.f32.mrb[0].mxu0
      %v6821 = vadd.f32 0.0, %v6820
      %v6822 = vpop.f32.mrb[0].mxu0
      %6823 = vmatprep.mubr.f32.mxu0 0.0
      %6824 = vmatmul.mubr.f32.gmra.mrb[0].mxu0 %v5479
      %v6825 = vpop.f32.mrb[0].mxu0
      %v6826 = vadd.f32 0.0, %v6825
      %v6827 = vpop.f32.mrb[0].mxu0
      %6828 = vmatprep.mubr.f32.mxu0 0.0
      %6829 = vmatmul.mubr.f32.gmra.mrb[0].mxu0 %v5482
      %v6830 = vpop.f32.mrb[0].mxu0
      %v6831 = vadd.f32 0.0, %v6830
      %v6832 = vpop.f32.mrb[0].mxu0
      %6833 = vmatprep.mubr.f32.mxu0 0.0
      %6834 = vmatmul.mubr.f32.gmra.mrb[0].mxu0 %v5485
      %v6835 = vpop.f32.mrb[0].mxu0
      %v6836 = vadd.f32 0.0, %v6835
      %v6837 = vpop.f32.mrb[0].mxu0
      %6838 = vmatprep.mubr.f32.mxu0 0.0
      %6839 = vmatmul.mubr.f32.gmra.mrb[0].mxu0 %v5488
      %v6840 = vpop.f32.mrb[0].mxu0
      %v6841 = vadd.f32 0.0, %v6840
      %v6842 = vpop.f32.mrb[0].mxu0
      %6843 = vdwg.mxu0
      %v6845 = vsel %vm2274, %v5557, 0
      %v6848 = vsel %vm2274, %v5562, 0
      %v6851 = vsel %vm2274, %v5567, 0
      %v6854 = vsel %vm2274, %v5572, 0
      %v6857 = vsel %vm2274, %v5577, 0
      %v6860 = vsel %vm2274, %v5582, 0
      %v6863 = vsel %vm2274, %v5587, 0
      %v6866 = vsel %vm2274, %v5592, 0
      %v6869 = vsel %vm2274, %v5597, 0
      %v6872 = vsel %vm2274, %v6014, 0
      %v6875 = vsel %vm2274, %v6019, 0
      %v6878 = vsel %vm2274, %v6024, 0
      %v6881 = vsel %vm2274, %v6029, 0
      %v6884 = vsel %vm2274, %v6034, 0
      %v6887 = vsel %vm2274, %v6039, 0
      %v6890 = vsel %vm2274, %v6044, 0
      %v6893 = vsel %vm2274, %v6049, 0
      %v6896 = vsel %vm2274, %v6054, 0
      %6898 = vmatprep.subr.mxu0 0.0
      %6899 = vmatpush1.xpose.msra.mxu0 %v6872
      %6900 = vmatprep.subr.mxu0 0.0
      %6901 = vmatpush1.xpose.msra.mxu0 %v6875
      %6902 = vmatprep.subr.mxu0 0.0
      %6903 = vmatpush1.xpose.msra.mxu0 %v6878
      %6904 = vmatprep.subr.mxu0 0.0
      %6905 = vmatpush1.xpose.msra.mxu0 %v6881
      %6906 = vmatprep.subr.mxu0 0.0
      %6907 = vmatpush1.xpose.msra.mxu0 %v6884
      %6908 = vmatprep.subr.mxu0 0.0
      %6909 = vmatpush1.xpose.msra.mxu0 %v6887
      %6910 = vmatprep.subr.mxu0 0.0
      %6911 = vmatpush1.xpose.msra.mxu0 %v6890
      %6912 = vmatprep.subr.mxu0 0.0
      %6913 = vmatpush1.xpose.msra.mxu0 %v6893
      %6914 = vmatprep.subr.mxu0 0.0
      %6915 = vmatpush1.xpose.msra.mxu0 %v6896
      %6916 = vmatprep.subr.mxu0 0.0
      %6917 = vmatpush1.xpose.msra.mxu0 0.0
      %6918 = vmatprep.subr.mxu0 0.0
      %6919 = vmatpush1.xpose.msra.mxu0 0.0
      %6920 = vmatprep.subr.mxu0 0.0
      %6921 = vmatpush1.xpose.msra.mxu0 0.0
      %6922 = vmatprep.subr.mxu0 0.0
      %6923 = vmatpush1.xpose.msra.mxu0 0.0
      %6924 = vmatprep.subr.mxu0 0.0
      %6925 = vmatpush1.xpose.msra.mxu0 0.0
      %6926 = vmatprep.subr.mxu0 0.0
      %6927 = vmatpush1.xpose.msra.mxu0 0.0
      %6928 = vmatprep.subr.mxu0 0.0
      %6929 = vmatpush1.xpose.msra.mxu0 0.0
      %6930 = vmatprep.subr.mxu0 0.0
      %6931 = vmatpush1.xpose.msra.mxu0 0.0
      %6932 = vmatprep.subr.mxu0 0.0
      %6933 = vmatpush1.xpose.msra.mxu0 0.0
      %6934 = vmatprep.subr.mxu0 0.0
      %6935 = vmatpush1.xpose.msra.mxu0 0.0
      %6936 = vmatprep.subr.mxu0 0.0
      %6937 = vmatpush1.xpose.msra.mxu0 0.0
      %6938 = vmatprep.subr.mxu0 0.0
      %6939 = vmatpush1.xpose.msra.mxu0 0.0
      %6940 = vmatprep.subr.mxu0 0.0
      %6941 = vmatpush1.xpose.msra.mxu0 0.0
      %6942 = vmatprep.subr.mxu0 0.0
      %6943 = vmatpush1.xpose.msra.mxu0 0.0
      %6944 = vmatprep.subr.mxu0 0.0
      %6945 = vmatpush1.xpose.msra.mxu0 0.0
      %6946 = vmatprep.subr.mxu0 0.0
      %6947 = vmatpush1.xpose.msra.mxu0 0.0
      %6948 = vmatprep.subr.mxu0 0.0
      %6949 = vmatpush1.xpose.msra.mxu0 0.0
      %6950 = vmatprep.subr.mxu0 0.0
      %6951 = vmatpush1.xpose.msra.mxu0 0.0
      %6952 = vmatprep.subr.mxu0 0.0
      %6953 = vmatpush1.xpose.msra.mxu0 0.0
      %6954 = vmatprep.subr.mxu0 0.0
      %6955 = vmatpush1.xpose.msra.mxu0 0.0
      %6956 = vmatprep.subr.mxu0 0.0
      %6957 = vmatpush1.xpose.msra.mxu0 0.0
      %6958 = vmatprep.subr.mxu0 0.0
      %6959 = vmatpush1.xpose.msra.mxu0 0.0
      %6960 = vmatprep.subr.mxu0 0.0
      %6961 = vmatpush1.xpose.msra.mxu0 0.0
      %6962 = vmatprep.mubr.f32.mxu0 0.0
      %6963 = vmatmul.mubr.f32.gmra.mrb[0].mxu0 %v6845
      %v6964 = vpop.f32.mrb[0].mxu0
      %v6965 = vadd.f32 0.0, %v6964
      %v6966 = vpop.f32.mrb[0].mxu0
      %6967 = vmatprep.mubr.f32.mxu0 0.0
      %6968 = vmatmul.mubr.f32.gmra.mrb[0].mxu0 %v6848
      %v6969 = vpop.f32.mrb[0].mxu0
      %v6970 = vadd.f32 0.0, %v6969
      %v6971 = vpop.f32.mrb[0].mxu0
      %6972 = vmatprep.mubr.f32.mxu0 0.0
      %6973 = vmatmul.mubr.f32.gmra.mrb[0].mxu0 %v6851
      %v6974 = vpop.f32.mrb[0].mxu0
      %v6975 = vadd.f32 0.0, %v6974
      %v6976 = vpop.f32.mrb[0].mxu0
      %6977 = vmatprep.mubr.f32.mxu0 0.0
      %6978 = vmatmul.mubr.f32.gmra.mrb[0].mxu0 %v6854
      %v6979 = vpop.f32.mrb[0].mxu0
      %v6980 = vadd.f32 0.0, %v6979
      %v6981 = vpop.f32.mrb[0].mxu0
      %6982 = vmatprep.mubr.f32.mxu0 0.0
      %6983 = vmatmul.mubr.f32.gmra.mrb[0].mxu0 %v6857
      %v6984 = vpop.f32.mrb[0].mxu0
      %v6985 = vadd.f32 0.0, %v6984
      %v6986 = vpop.f32.mrb[0].mxu0
      %6987 = vmatprep.mubr.f32.mxu0 0.0
      %6988 = vmatmul.mubr.f32.gmra.mrb[0].mxu0 %v6860
      %v6989 = vpop.f32.mrb[0].mxu0
      %v6990 = vadd.f32 0.0, %v6989
      %v6991 = vpop.f32.mrb[0].mxu0
      %6992 = vmatprep.mubr.f32.mxu0 0.0
      %6993 = vmatmul.mubr.f32.gmra.mrb[0].mxu0 %v6863
      %v6994 = vpop.f32.mrb[0].mxu0
      %v6995 = vadd.f32 0.0, %v6994
      %v6996 = vpop.f32.mrb[0].mxu0
      %6997 = vmatprep.mubr.f32.mxu0 0.0
      %6998 = vmatmul.mubr.f32.gmra.mrb[0].mxu0 %v6866
      %v6999 = vpop.f32.mrb[0].mxu0
      %v7000 = vadd.f32 0.0, %v6999
      %v7001 = vpop.f32.mrb[0].mxu0
      %7002 = vmatprep.mubr.f32.mxu0 0.0
      %7003 = vmatmul.mubr.f32.gmra.mrb[0].mxu0 %v6869
      %v7004 = vpop.f32.mrb[0].mxu0
      %v7005 = vadd.f32 0.0, %v7004
      %v7006 = vpop.f32.mrb[0].mxu0
      %7007 = vdwg.mxu0
      %v7009 = vsel %vm2274, %v5667, 0
      %v7012 = vsel %vm2274, %v5672, 0
      %v7015 = vsel %vm2274, %v5677, 0
      %v7018 = vsel %vm2274, %v5682, 0
      %v7021 = vsel %vm2274, %v5687, 0
      %v7024 = vsel %vm2274, %v5692, 0
      %v7027 = vsel %vm2274, %v5697, 0
      %v7030 = vsel %vm2274, %v5702, 0
      %v7033 = vsel %vm2274, %v5707, 0
      %v7036 = vsel %vm2274, %v6124, 0
      %v7039 = vsel %vm2274, %v6129, 0
      %v7042 = vsel %vm2274, %v6134, 0
      %v7045 = vsel %vm2274, %v6139, 0
      %v7048 = vsel %vm2274, %v6144, 0
      %v7051 = vsel %vm2274, %v6149, 0
      %v7054 = vsel %vm2274, %v6154, 0
      %v7057 = vsel %vm2274, %v6159, 0
      %v7060 = vsel %vm2274, %v6164, 0
      %7062 = vmatprep.subr.mxu0 0.0
      %7063 = vmatpush1.xpose.msra.mxu0 %v7036
      %7064 = vmatprep.subr.mxu0 0.0
      %7065 = vmatpush1.xpose.msra.mxu0 %v7039
      %7066 = vmatprep.subr.mxu0 0.0
      %7067 = vmatpush1.xpose.msra.mxu0 %v7042
      %7068 = vmatprep.subr.mxu0 0.0
      %7069 = vmatpush1.xpose.msra.mxu0 %v7045
      %7070 = vmatprep.subr.mxu0 0.0
      %7071 = vmatpush1.xpose.msra.mxu0 %v7048
      %7072 = vmatprep.subr.mxu0 0.0
      %7073 = vmatpush1.xpose.msra.mxu0 %v7051
      %7074 = vmatprep.subr.mxu0 0.0
      %7075 = vmatpush1.xpose.msra.mxu0 %v7054
      %7076 = vmatprep.subr.mxu0 0.0
      %7077 = vmatpush1.xpose.msra.mxu0 %v7057
      %7078 = vmatprep.subr.mxu0 0.0
      %7079 = vmatpush1.xpose.msra.mxu0 %v7060
      %7080 = vmatprep.subr.mxu0 0.0
      %7081 = vmatpush1.xpose.msra.mxu0 0.0
      %7082 = vmatprep.subr.mxu0 0.0
      %7083 = vmatpush1.xpose.msra.mxu0 0.0
      %7084 = vmatprep.subr.mxu0 0.0
      %7085 = vmatpush1.xpose.msra.mxu0 0.0
      %7086 = vmatprep.subr.mxu0 0.0
      %7087 = vmatpush1.xpose.msra.mxu0 0.0
      %7088 = vmatprep.subr.mxu0 0.0
      %7089 = vmatpush1.xpose.msra.mxu0 0.0
      %7090 = vmatprep.subr.mxu0 0.0
      %7091 = vmatpush1.xpose.msra.mxu0 0.0
      %7092 = vmatprep.subr.mxu0 0.0
      %7093 = vmatpush1.xpose.msra.mxu0 0.0
      %7094 = vmatprep.subr.mxu0 0.0
      %7095 = vmatpush1.xpose.msra.mxu0 0.0
      %7096 = vmatprep.subr.mxu0 0.0
      %7097 = vmatpush1.xpose.msra.mxu0 0.0
      %7098 = vmatprep.subr.mxu0 0.0
      %7099 = vmatpush1.xpose.msra.mxu0 0.0
      %7100 = vmatprep.subr.mxu0 0.0
      %7101 = vmatpush1.xpose.msra.mxu0 0.0
      %7102 = vmatprep.subr.mxu0 0.0
      %7103 = vmatpush1.xpose.msra.mxu0 0.0
      %7104 = vmatprep.subr.mxu0 0.0
      %7105 = vmatpush1.xpose.msra.mxu0 0.0
      %7106 = vmatprep.subr.mxu0 0.0
      %7107 = vmatpush1.xpose.msra.mxu0 0.0
      %7108 = vmatprep.subr.mxu0 0.0
      %7109 = vmatpush1.xpose.msra.mxu0 0.0
      %7110 = vmatprep.subr.mxu0 0.0
      %7111 = vmatpush1.xpose.msra.mxu0 0.0
      %7112 = vmatprep.subr.mxu0 0.0
      %7113 = vmatpush1.xpose.msra.mxu0 0.0
      %7114 = vmatprep.subr.mxu0 0.0
      %7115 = vmatpush1.xpose.msra.mxu0 0.0
      %7116 = vmatprep.subr.mxu0 0.0
      %7117 = vmatpush1.xpose.msra.mxu0 0.0
      %7118 = vmatprep.subr.mxu0 0.0
      %7119 = vmatpush1.xpose.msra.mxu0 0.0
      %7120 = vmatprep.subr.mxu0 0.0
      %7121 = vmatpush1.xpose.msra.mxu0 0.0
      %7122 = vmatprep.subr.mxu0 0.0
      %7123 = vmatpush1.xpose.msra.mxu0 0.0
      %7124 = vmatprep.subr.mxu0 0.0
      %7125 = vmatpush1.xpose.msra.mxu0 0.0
      %7126 = vmatprep.mubr.f32.mxu0 0.0
      %7127 = vmatmul.mubr.f32.gmra.mrb[0].mxu0 %v7009
      %v7128 = vpop.f32.mrb[0].mxu0
      %v7129 = vadd.f32 0.0, %v7128
      %v7130 = vpop.f32.mrb[0].mxu0
      %7131 = vmatprep.mubr.f32.mxu0 0.0
      %7132 = vmatmul.mubr.f32.gmra.mrb[0].mxu0 %v7012
      %v7133 = vpop.f32.mrb[0].mxu0
      %v7134 = vadd.f32 0.0, %v7133
      %v7135 = vpop.f32.mrb[0].mxu0
      %7136 = vmatprep.mubr.f32.mxu0 0.0
      %7137 = vmatmul.mubr.f32.gmra.mrb[0].mxu0 %v7015
      %v7138 = vpop.f32.mrb[0].mxu0
      %v7139 = vadd.f32 0.0, %v7138
      %v7140 = vpop.f32.mrb[0].mxu0
      %7141 = vmatprep.mubr.f32.mxu0 0.0
      %7142 = vmatmul.mubr.f32.gmra.mrb[0].mxu0 %v7018
      %v7143 = vpop.f32.mrb[0].mxu0
      %v7144 = vadd.f32 0.0, %v7143
      %v7145 = vpop.f32.mrb[0].mxu0
      %7146 = vmatprep.mubr.f32.mxu0 0.0
      %7147 = vmatmul.mubr.f32.gmra.mrb[0].mxu0 %v7021
      %v7148 = vpop.f32.mrb[0].mxu0
      %v7149 = vadd.f32 0.0, %v7148
      %v7150 = vpop.f32.mrb[0].mxu0
      %7151 = vmatprep.mubr.f32.mxu0 0.0
      %7152 = vmatmul.mubr.f32.gmra.mrb[0].mxu0 %v7024
      %v7153 = vpop.f32.mrb[0].mxu0
      %v7154 = vadd.f32 0.0, %v7153
      %v7155 = vpop.f32.mrb[0].mxu0
      %7156 = vmatprep.mubr.f32.mxu0 0.0
      %7157 = vmatmul.mubr.f32.gmra.mrb[0].mxu0 %v7027
      %v7158 = vpop.f32.mrb[0].mxu0
      %v7159 = vadd.f32 0.0, %v7158
      %v7160 = vpop.f32.mrb[0].mxu0
      %7161 = vmatprep.mubr.f32.mxu0 0.0
      %7162 = vmatmul.mubr.f32.gmra.mrb[0].mxu0 %v7030
      %v7163 = vpop.f32.mrb[0].mxu0
      %v7164 = vadd.f32 0.0, %v7163
      %v7165 = vpop.f32.mrb[0].mxu0
      %7166 = vmatprep.mubr.f32.mxu0 0.0
      %7167 = vmatmul.mubr.f32.gmra.mrb[0].mxu0 %v7033
      %v7168 = vpop.f32.mrb[0].mxu0
      %v7169 = vadd.f32 0.0, %v7168
      %v7170 = vpop.f32.mrb[0].mxu0
      %7171 = vdwg.mxu0
      %v7173 = vsel %vm2274, %v5777, 0
      %v7176 = vsel %vm2274, %v5782, 0
      %v7179 = vsel %vm2274, %v5787, 0
      %v7182 = vsel %vm2274, %v5792, 0
      %v7185 = vsel %vm2274, %v5797, 0
      %v7188 = vsel %vm2274, %v5802, 0
      %v7191 = vsel %vm2274, %v5807, 0
      %v7194 = vsel %vm2274, %v5812, 0
      %v7197 = vsel %vm2274, %v5817, 0
      %v7200 = vsel %vm2274, %v6234, 0
      %v7203 = vsel %vm2274, %v6239, 0
      %v7206 = vsel %vm2274, %v6244, 0
      %v7209 = vsel %vm2274, %v6249, 0
      %v7212 = vsel %vm2274, %v6254, 0
      %v7215 = vsel %vm2274, %v6259, 0
      %v7218 = vsel %vm2274, %v6264, 0
      %v7221 = vsel %vm2274, %v6269, 0
      %v7224 = vsel %vm2274, %v6274, 0
      %7226 = vmatprep.subr.mxu0 0.0
      %7227 = vmatpush1.xpose.msra.mxu0 %v7200
      %7228 = vmatprep.subr.mxu0 0.0
      %7229 = vmatpush1.xpose.msra.mxu0 %v7203
      %7230 = vmatprep.subr.mxu0 0.0
      %7231 = vmatpush1.xpose.msra.mxu0 %v7206
      %7232 = vmatprep.subr.mxu0 0.0
      %7233 = vmatpush1.xpose.msra.mxu0 %v7209
      %7234 = vmatprep.subr.mxu0 0.0
      %7235 = vmatpush1.xpose.msra.mxu0 %v7212
      %7236 = vmatprep.subr.mxu0 0.0
      %7237 = vmatpush1.xpose.msra.mxu0 %v7215
      %7238 = vmatprep.subr.mxu0 0.0
      %7239 = vmatpush1.xpose.msra.mxu0 %v7218
      %7240 = vmatprep.subr.mxu0 0.0
      %7241 = vmatpush1.xpose.msra.mxu0 %v7221
      %7242 = vmatprep.subr.mxu0 0.0
      %7243 = vmatpush1.xpose.msra.mxu0 %v7224
      %7244 = vmatprep.subr.mxu0 0.0
      %7245 = vmatpush1.xpose.msra.mxu0 0.0
      %7246 = vmatprep.subr.mxu0 0.0
      %7247 = vmatpush1.xpose.msra.mxu0 0.0
      %7248 = vmatprep.subr.mxu0 0.0
      %7249 = vmatpush1.xpose.msra.mxu0 0.0
      %7250 = vmatprep.subr.mxu0 0.0
      %7251 = vmatpush1.xpose.msra.mxu0 0.0
      %7252 = vmatprep.subr.mxu0 0.0
      %7253 = vmatpush1.xpose.msra.mxu0 0.0
      %7254 = vmatprep.subr.mxu0 0.0
      %7255 = vmatpush1.xpose.msra.mxu0 0.0
      %7256 = vmatprep.subr.mxu0 0.0
      %7257 = vmatpush1.xpose.msra.mxu0 0.0
      %7258 = vmatprep.subr.mxu0 0.0
      %7259 = vmatpush1.xpose.msra.mxu0 0.0
      %7260 = vmatprep.subr.mxu0 0.0
      %7261 = vmatpush1.xpose.msra.mxu0 0.0
      %7262 = vmatprep.subr.mxu0 0.0
      %7263 = vmatpush1.xpose.msra.mxu0 0.0
      %7264 = vmatprep.subr.mxu0 0.0
      %7265 = vmatpush1.xpose.msra.mxu0 0.0
      %7266 = vmatprep.subr.mxu0 0.0
      %7267 = vmatpush1.xpose.msra.mxu0 0.0
      %7268 = vmatprep.subr.mxu0 0.0
      %7269 = vmatpush1.xpose.msra.mxu0 0.0
      %7270 = vmatprep.subr.mxu0 0.0
      %7271 = vmatpush1.xpose.msra.mxu0 0.0
      %7272 = vmatprep.subr.mxu0 0.0
      %7273 = vmatpush1.xpose.msra.mxu0 0.0
      %7274 = vmatprep.subr.mxu0 0.0
      %7275 = vmatpush1.xpose.msra.mxu0 0.0
      %7276 = vmatprep.subr.mxu0 0.0
      %7277 = vmatpush1.xpose.msra.mxu0 0.0
      %7278 = vmatprep.subr.mxu0 0.0
      %7279 = vmatpush1.xpose.msra.mxu0 0.0
      %7280 = vmatprep.subr.mxu0 0.0
      %7281 = vmatpush1.xpose.msra.mxu0 0.0
      %7282 = vmatprep.subr.mxu0 0.0
      %7283 = vmatpush1.xpose.msra.mxu0 0.0
      %7284 = vmatprep.subr.mxu0 0.0
      %7285 = vmatpush1.xpose.msra.mxu0 0.0
      %7286 = vmatprep.subr.mxu0 0.0
      %7287 = vmatpush1.xpose.msra.mxu0 0.0
      %7288 = vmatprep.subr.mxu0 0.0
      %7289 = vmatpush1.xpose.msra.mxu0 0.0
      %7290 = vmatprep.mubr.f32.mxu0 0.0
      %7291 = vmatmul.mubr.f32.gmra.mrb[0].mxu0 %v7173
      %v7292 = vpop.f32.mrb[0].mxu0
      %v7293 = vadd.f32 0.0, %v7292
      %v7294 = vpop.f32.mrb[0].mxu0
      %7295 = vmatprep.mubr.f32.mxu0 0.0
      %7296 = vmatmul.mubr.f32.gmra.mrb[0].mxu0 %v7176
      %v7297 = vpop.f32.mrb[0].mxu0
      %v7298 = vadd.f32 0.0, %v7297
      %v7299 = vpop.f32.mrb[0].mxu0
      %7300 = vmatprep.mubr.f32.mxu0 0.0
      %7301 = vmatmul.mubr.f32.gmra.mrb[0].mxu0 %v7179
      %v7302 = vpop.f32.mrb[0].mxu0
      %v7303 = vadd.f32 0.0, %v7302
      %v7304 = vpop.f32.mrb[0].mxu0
      %7305 = vmatprep.mubr.f32.mxu0 0.0
      %7306 = vmatmul.mubr.f32.gmra.mrb[0].mxu0 %v7182
      %v7307 = vpop.f32.mrb[0].mxu0
      %v7308 = vadd.f32 0.0, %v7307
      %v7309 = vpop.f32.mrb[0].mxu0
      %7310 = vmatprep.mubr.f32.mxu0 0.0
      %7311 = vmatmul.mubr.f32.gmra.mrb[0].mxu0 %v7185
      %v7312 = vpop.f32.mrb[0].mxu0
      %v7313 = vadd.f32 0.0, %v7312
      %v7314 = vpop.f32.mrb[0].mxu0
      %7315 = vmatprep.mubr.f32.mxu0 0.0
      %7316 = vmatmul.mubr.f32.gmra.mrb[0].mxu0 %v7188
      %v7317 = vpop.f32.mrb[0].mxu0
      %v7318 = vadd.f32 0.0, %v7317
      %v7319 = vpop.f32.mrb[0].mxu0
      %7320 = vmatprep.mubr.f32.mxu0 0.0
      %7321 = vmatmul.mubr.f32.gmra.mrb[0].mxu0 %v7191
      %v7322 = vpop.f32.mrb[0].mxu0
      %v7323 = vadd.f32 0.0, %v7322
      %v7324 = vpop.f32.mrb[0].mxu0
      %7325 = vmatprep.mubr.f32.mxu0 0.0
      %7326 = vmatmul.mubr.f32.gmra.mrb[0].mxu0 %v7194
      %v7327 = vpop.f32.mrb[0].mxu0
      %v7328 = vadd.f32 0.0, %v7327
      %v7329 = vpop.f32.mrb[0].mxu0
      %7330 = vmatprep.mubr.f32.mxu0 0.0
      %7331 = vmatmul.mubr.f32.gmra.mrb[0].mxu0 %v7197
      %v7332 = vpop.f32.mrb[0].mxu0
      %v7333 = vadd.f32 0.0, %v7332
      %v7334 = vpop.f32.mrb[0].mxu0
      %7335 = vdwg.mxu0
      %v7337 = vsel %vm2274, %v5887, 0
      %v7340 = vsel %vm2274, %v5892, 0
      %v7343 = vsel %vm2274, %v5897, 0
      %v7346 = vsel %vm2274, %v5902, 0
      %v7349 = vsel %vm2274, %v5907, 0
      %v7352 = vsel %vm2274, %v5912, 0
      %v7355 = vsel %vm2274, %v5917, 0
      %v7358 = vsel %vm2274, %v5922, 0
      %v7361 = vsel %vm2274, %v5927, 0
      %v7364 = vsel %vm2274, %v6344, 0
      %v7367 = vsel %vm2274, %v6349, 0
      %v7370 = vsel %vm2274, %v6354, 0
      %v7373 = vsel %vm2274, %v6359, 0
      %v7376 = vsel %vm2274, %v6364, 0
      %v7379 = vsel %vm2274, %v6369, 0
      %v7382 = vsel %vm2274, %v6374, 0
      %v7385 = vsel %vm2274, %v6379, 0
      %v7388 = vsel %vm2274, %v6384, 0
      %7390 = vmatprep.subr.mxu0 0.0
      %7391 = vmatpush1.xpose.msra.mxu0 %v7364
      %7392 = vmatprep.subr.mxu0 0.0
      %7393 = vmatpush1.xpose.msra.mxu0 %v7367
      %7394 = vmatprep.subr.mxu0 0.0
      %7395 = vmatpush1.xpose.msra.mxu0 %v7370
      %7396 = vmatprep.subr.mxu0 0.0
      %7397 = vmatpush1.xpose.msra.mxu0 %v7373
      %7398 = vmatprep.subr.mxu0 0.0
      %7399 = vmatpush1.xpose.msra.mxu0 %v7376
      %7400 = vmatprep.subr.mxu0 0.0
      %7401 = vmatpush1.xpose.msra.mxu0 %v7379
      %7402 = vmatprep.subr.mxu0 0.0
      %7403 = vmatpush1.xpose.msra.mxu0 %v7382
      %7404 = vmatprep.subr.mxu0 0.0
      %7405 = vmatpush1.xpose.msra.mxu0 %v7385
      %7406 = vmatprep.subr.mxu0 0.0
      %7407 = vmatpush1.xpose.msra.mxu0 %v7388
      %7408 = vmatprep.subr.mxu0 0.0
      %7409 = vmatpush1.xpose.msra.mxu0 0.0
      %7410 = vmatprep.subr.mxu0 0.0
      %7411 = vmatpush1.xpose.msra.mxu0 0.0
      %7412 = vmatprep.subr.mxu0 0.0
      %7413 = vmatpush1.xpose.msra.mxu0 0.0
      %7414 = vmatprep.subr.mxu0 0.0
      %7415 = vmatpush1.xpose.msra.mxu0 0.0
      %7416 = vmatprep.subr.mxu0 0.0
      %7417 = vmatpush1.xpose.msra.mxu0 0.0
      %7418 = vmatprep.subr.mxu0 0.0
      %7419 = vmatpush1.xpose.msra.mxu0 0.0
      %7420 = vmatprep.subr.mxu0 0.0
      %7421 = vmatpush1.xpose.msra.mxu0 0.0
      %7422 = vmatprep.subr.mxu0 0.0
      %7423 = vmatpush1.xpose.msra.mxu0 0.0
      %7424 = vmatprep.subr.mxu0 0.0
      %7425 = vmatpush1.xpose.msra.mxu0 0.0
      %7426 = vmatprep.subr.mxu0 0.0
      %7427 = vmatpush1.xpose.msra.mxu0 0.0
      %7428 = vmatprep.subr.mxu0 0.0
      %7429 = vmatpush1.xpose.msra.mxu0 0.0
      %7430 = vmatprep.subr.mxu0 0.0
      %7431 = vmatpush1.xpose.msra.mxu0 0.0
      %7432 = vmatprep.subr.mxu0 0.0
      %7433 = vmatpush1.xpose.msra.mxu0 0.0
      %7434 = vmatprep.subr.mxu0 0.0
      %7435 = vmatpush1.xpose.msra.mxu0 0.0
      %7436 = vmatprep.subr.mxu0 0.0
      %7437 = vmatpush1.xpose.msra.mxu0 0.0
      %7438 = vmatprep.subr.mxu0 0.0
      %7439 = vmatpush1.xpose.msra.mxu0 0.0
      %7440 = vmatprep.subr.mxu0 0.0
      %7441 = vmatpush1.xpose.msra.mxu0 0.0
      %7442 = vmatprep.subr.mxu0 0.0
      %7443 = vmatpush1.xpose.msra.mxu0 0.0
      %7444 = vmatprep.subr.mxu0 0.0
      %7445 = vmatpush1.xpose.msra.mxu0 0.0
      %7446 = vmatprep.subr.mxu0 0.0
      %7447 = vmatpush1.xpose.msra.mxu0 0.0
      %7448 = vmatprep.subr.mxu0 0.0
      %7449 = vmatpush1.xpose.msra.mxu0 0.0
      %7450 = vmatprep.subr.mxu0 0.0
      %7451 = vmatpush1.xpose.msra.mxu0 0.0
      %7452 = vmatprep.subr.mxu0 0.0
      %7453 = vmatpush1.xpose.msra.mxu0 0.0
      %7454 = vmatprep.mubr.f32.mxu0 0.0
      %7455 = vmatmul.mubr.f32.gmra.mrb[0].mxu0 %v7337
      %v7456 = vpop.f32.mrb[0].mxu0
      %v7457 = vadd.f32 0.0, %v7456
      %v7458 = vpop.f32.mrb[0].mxu0
      %7459 = vmatprep.mubr.f32.mxu0 0.0
      %7460 = vmatmul.mubr.f32.gmra.mrb[0].mxu0 %v7340
      %v7461 = vpop.f32.mrb[0].mxu0
      %v7462 = vadd.f32 0.0, %v7461
      %v7463 = vpop.f32.mrb[0].mxu0
      %7464 = vmatprep.mubr.f32.mxu0 0.0
      %7465 = vmatmul.mubr.f32.gmra.mrb[0].mxu0 %v7343
      %v7466 = vpop.f32.mrb[0].mxu0
      %v7467 = vadd.f32 0.0, %v7466
      %v7468 = vpop.f32.mrb[0].mxu0
      %7469 = vmatprep.mubr.f32.mxu0 0.0
      %7470 = vmatmul.mubr.f32.gmra.mrb[0].mxu0 %v7346
      %v7471 = vpop.f32.mrb[0].mxu0
      %v7472 = vadd.f32 0.0, %v7471
      %v7473 = vpop.f32.mrb[0].mxu0
      %7474 = vmatprep.mubr.f32.mxu0 0.0
      %7475 = vmatmul.mubr.f32.gmra.mrb[0].mxu0 %v7349
      %v7476 = vpop.f32.mrb[0].mxu0
      %v7477 = vadd.f32 0.0, %v7476
      %v7478 = vpop.f32.mrb[0].mxu0
      %7479 = vmatprep.mubr.f32.mxu0 0.0
      %7480 = vmatmul.mubr.f32.gmra.mrb[0].mxu0 %v7352
      %v7481 = vpop.f32.mrb[0].mxu0
      %v7482 = vadd.f32 0.0, %v7481
      %v7483 = vpop.f32.mrb[0].mxu0
      %7484 = vmatprep.mubr.f32.mxu0 0.0
      %7485 = vmatmul.mubr.f32.gmra.mrb[0].mxu0 %v7355
      %v7486 = vpop.f32.mrb[0].mxu0
      %v7487 = vadd.f32 0.0, %v7486
      %v7488 = vpop.f32.mrb[0].mxu0
      %7489 = vmatprep.mubr.f32.mxu0 0.0
      %7490 = vmatmul.mubr.f32.gmra.mrb[0].mxu0 %v7358
      %v7491 = vpop.f32.mrb[0].mxu0
      %v7492 = vadd.f32 0.0, %v7491
      %v7493 = vpop.f32.mrb[0].mxu0
      %7494 = vmatprep.mubr.f32.mxu0 0.0
      %7495 = vmatmul.mubr.f32.gmra.mrb[0].mxu0 %v7361
      %v7496 = vpop.f32.mrb[0].mxu0
      %v7497 = vadd.f32 0.0, %v7496
      %v7498 = vpop.f32.mrb[0].mxu0
      %7499 = vdwg.mxu0
      %v7500 = vmul.f32 %v6965, 0.17677669
      %v7501 = vmul.f32 %v6970, 0.17677669
      %v7502 = vmul.f32 %v6975, 0.17677669
      %v7503 = vmul.f32 %v6980, 0.17677669
      %v7504 = vmul.f32 %v6985, 0.17677669
      %v7505 = vmul.f32 %v6990, 0.17677669
      %v7506 = vmul.f32 %v6995, 0.17677669
      %v7507 = vmul.f32 %v7000, 0.17677669
      %v7508 = vmul.f32 %v7005, 0.17677669
      %v7509 = vmul.f32 %v7129, 0.17677669
      %v7510 = vmul.f32 %v7134, 0.17677669
      %v7511 = vmul.f32 %v7139, 0.17677669
      %v7512 = vmul.f32 %v7144, 0.17677669
      %v7513 = vmul.f32 %v7149, 0.17677669
      %v7514 = vmul.f32 %v7154, 0.17677669
      %v7515 = vmul.f32 %v7159, 0.17677669
      %v7516 = vmul.f32 %v7164, 0.17677669
      %v7517 = vmul.f32 %v7169, 0.17677669
      %v7518 = vmul.f32 %v7293, 0.17677669
      %v7519 = vmul.f32 %v7298, 0.17677669
      %v7520 = vmul.f32 %v7303, 0.17677669
      %v7521 = vmul.f32 %v7308, 0.17677669
      %v7522 = vmul.f32 %v7313, 0.17677669
      %v7523 = vmul.f32 %v7318, 0.17677669
      %v7524 = vmul.f32 %v7323, 0.17677669
      %v7525 = vmul.f32 %v7328, 0.17677669
      %v7526 = vmul.f32 %v7333, 0.17677669
      %v7527 = vmul.f32 %v7457, 0.17677669
      %v7528 = vmul.f32 %v7462, 0.17677669
      %v7529 = vmul.f32 %v7467, 0.17677669
      %v7530 = vmul.f32 %v7472, 0.17677669
      %v7531 = vmul.f32 %v7477, 0.17677669
      %v7532 = vmul.f32 %v7482, 0.17677669
      %v7533 = vmul.f32 %v7487, 0.17677669
      %v7534 = vmul.f32 %v7492, 0.17677669
      %v7535 = vmul.f32 %v7497, 0.17677669
      %v7536 = vsel %vm2967, %v7500, -inf
      %7537 = vmax.xlane.f32.xlu0 %v7536
      %v7538 = vpop.xlane.xlu0 %7537
      %v7539 = vsel %vm2967, %v7501, -inf
      %7540 = vmax.xlane.f32.xlu0 %v7539
      %v7541 = vpop.xlane.xlu0 %7540
      %v7542 = vsel %vm2967, %v7502, -inf
      %7543 = vmax.xlane.f32.xlu0 %v7542
      %v7544 = vpop.xlane.xlu0 %7543
      %v7545 = vsel %vm2967, %v7503, -inf
      %7546 = vmax.xlane.f32.xlu0 %v7545
      %v7547 = vpop.xlane.xlu0 %7546
      %v7548 = vsel %vm2967, %v7504, -inf
      %7549 = vmax.xlane.f32.xlu0 %v7548
      %v7550 = vpop.xlane.xlu0 %7549
      %v7551 = vsel %vm2967, %v7505, -inf
      %7552 = vmax.xlane.f32.xlu0 %v7551
      %v7553 = vpop.xlane.xlu0 %7552
      %v7554 = vsel %vm2967, %v7506, -inf
      %7555 = vmax.xlane.f32.xlu0 %v7554
      %v7556 = vpop.xlane.xlu0 %7555
      %v7557 = vsel %vm2967, %v7507, -inf
      %7558 = vmax.xlane.f32.xlu0 %v7557
      %v7559 = vpop.xlane.xlu0 %7558
      %v7560 = vsel %vm2992, %v7508, -inf
      %7561 = vmax.xlane.f32.xlu0 %v7560
      %v7562 = vpop.xlane.xlu0 %7561
      %v7563 = vsel %vm2967, %v7509, -inf
      %7564 = vmax.xlane.f32.xlu0 %v7563
      %v7565 = vpop.xlane.xlu0 %7564
      %v7566 = vsel %vm2967, %v7510, -inf
      %7567 = vmax.xlane.f32.xlu0 %v7566
      %v7568 = vpop.xlane.xlu0 %7567
      %v7569 = vsel %vm2967, %v7511, -inf
      %7570 = vmax.xlane.f32.xlu0 %v7569
      %v7571 = vpop.xlane.xlu0 %7570
      %v7572 = vsel %vm2967, %v7512, -inf
      %7573 = vmax.xlane.f32.xlu0 %v7572
      %v7574 = vpop.xlane.xlu0 %7573
      %v7575 = vsel %vm2967, %v7513, -inf
      %7576 = vmax.xlane.f32.xlu0 %v7575
      %v7577 = vpop.xlane.xlu0 %7576
      %v7578 = vsel %vm2967, %v7514, -inf
      %7579 = vmax.xlane.f32.xlu0 %v7578
      %v7580 = vpop.xlane.xlu0 %7579
      %v7581 = vsel %vm2967, %v7515, -inf
      %7582 = vmax.xlane.f32.xlu0 %v7581
      %v7583 = vpop.xlane.xlu0 %7582
      %v7584 = vsel %vm2967, %v7516, -inf
      %7585 = vmax.xlane.f32.xlu0 %v7584
      %v7586 = vpop.xlane.xlu0 %7585
      %v7587 = vsel %vm2992, %v7517, -inf
      %7588 = vmax.xlane.f32.xlu0 %v7587
      %v7589 = vpop.xlane.xlu0 %7588
      %v7590 = vsel %vm2967, %v7518, -inf
      %7591 = vmax.xlane.f32.xlu0 %v7590
      %v7592 = vpop.xlane.xlu0 %7591
      %v7593 = vsel %vm2967, %v7519, -inf
      %7594 = vmax.xlane.f32.xlu0 %v7593
      %v7595 = vpop.xlane.xlu0 %7594
      %v7596 = vsel %vm2967, %v7520, -inf
      %7597 = vmax.xlane.f32.xlu0 %v7596
      %v7598 = vpop.xlane.xlu0 %7597
      %v7599 = vsel %vm2967, %v7521, -inf
      %7600 = vmax.xlane.f32.xlu0 %v7599
      %v7601 = vpop.xlane.xlu0 %7600
      %v7602 = vsel %vm2967, %v7522, -inf
      %7603 = vmax.xlane.f32.xlu0 %v7602
      %v7604 = vpop.xlane.xlu0 %7603
      %v7605 = vsel %vm2967, %v7523, -inf
      %7606 = vmax.xlane.f32.xlu0 %v7605
      %v7607 = vpop.xlane.xlu0 %7606
      %v7608 = vsel %vm2967, %v7524, -inf
      %7609 = vmax.xlane.f32.xlu0 %v7608
      %v7610 = vpop.xlane.xlu0 %7609
      %v7611 = vsel %vm2967, %v7525, -inf
      %7612 = vmax.xlane.f32.xlu0 %v7611
      %v7613 = vpop.xlane.xlu0 %7612
      %v7614 = vsel %vm2992, %v7526, -inf
      %7615 = vmax.xlane.f32.xlu0 %v7614
      %v7616 = vpop.xlane.xlu0 %7615
      %v7617 = vsel %vm2967, %v7527, -inf
      %7618 = vmax.xlane.f32.xlu0 %v7617
      %v7619 = vpop.xlane.xlu0 %7618
      %v7620 = vsel %vm2967, %v7528, -inf
      %7621 = vmax.xlane.f32.xlu0 %v7620
      %v7622 = vpop.xlane.xlu0 %7621
      %v7623 = vsel %vm2967, %v7529, -inf
      %7624 = vmax.xlane.f32.xlu0 %v7623
      %v7625 = vpop.xlane.xlu0 %7624
      %v7626 = vsel %vm2967, %v7530, -inf
      %7627 = vmax.xlane.f32.xlu0 %v7626
      %v7628 = vpop.xlane.xlu0 %7627
      %v7629 = vsel %vm2967, %v7531, -inf
      %7630 = vmax.xlane.f32.xlu0 %v7629
      %v7631 = vpop.xlane.xlu0 %7630
      %v7632 = vsel %vm2967, %v7532, -inf
      %7633 = vmax.xlane.f32.xlu0 %v7632
      %v7634 = vpop.xlane.xlu0 %7633
      %v7635 = vsel %vm2967, %v7533, -inf
      %7636 = vmax.xlane.f32.xlu0 %v7635
      %v7637 = vpop.xlane.xlu0 %7636
      %v7638 = vsel %vm2967, %v7534, -inf
      %7639 = vmax.xlane.f32.xlu0 %v7638
      %v7640 = vpop.xlane.xlu0 %7639
      %v7641 = vsel %vm2992, %v7535, -inf
      %7642 = vmax.xlane.f32.xlu0 %v7641
      %v7643 = vpop.xlane.xlu0 %7642
      %v7644 = vsub.f32 %v7500, %v7538
      %v7645 = vsub.f32 %v7501, %v7541
      %v7646 = vsub.f32 %v7502, %v7544
      %v7647 = vsub.f32 %v7503, %v7547
      %v7648 = vsub.f32 %v7504, %v7550
      %v7649 = vsub.f32 %v7505, %v7553
      %v7650 = vsub.f32 %v7506, %v7556
      %v7651 = vsub.f32 %v7507, %v7559
      %v7652 = vsub.f32 %v7508, %v7562
      %v7653 = vsub.f32 %v7509, %v7565
      %v7654 = vsub.f32 %v7510, %v7568
      %v7655 = vsub.f32 %v7511, %v7571
      %v7656 = vsub.f32 %v7512, %v7574
      %v7657 = vsub.f32 %v7513, %v7577
      %v7658 = vsub.f32 %v7514, %v7580
      %v7659 = vsub.f32 %v7515, %v7583
      %v7660 = vsub.f32 %v7516, %v7586
      %v7661 = vsub.f32 %v7517, %v7589
      %v7662 = vsub.f32 %v7518, %v7592
      %v7663 = vsub.f32 %v7519, %v7595
      %v7664 = vsub.f32 %v7520, %v7598
      %v7665 = vsub.f32 %v7521, %v7601
      %v7666 = vsub.f32 %v7522, %v7604
      %v7667 = vsub.f32 %v7523, %v7607
      %v7668 = vsub.f32 %v7524, %v7610
      %v7669 = vsub.f32 %v7525, %v7613
      %v7670 = vsub.f32 %v7526, %v7616
      %v7671 = vsub.f32 %v7527, %v7619
      %v7672 = vsub.f32 %v7528, %v7622
      %v7673 = vsub.f32 %v7529, %v7625
      %v7674 = vsub.f32 %v7530, %v7628
      %v7675 = vsub.f32 %v7531, %v7631
      %v7676 = vsub.f32 %v7532, %v7634
      %v7677 = vsub.f32 %v7533, %v7637
      %v7678 = vsub.f32 %v7534, %v7640
      %v7679 = vsub.f32 %v7535, %v7643
      %v7680 = vmul.f32 %v7644, 1.442695
      %v7681 = vpow.pop %v7680
      %v7682 = vmul.f32 %v7645, 1.442695
      %v7683 = vpow.pop %v7682
      %v7684 = vmul.f32 %v7646, 1.442695
      %v7685 = vpow.pop %v7684
      %v7686 = vmul.f32 %v7647, 1.442695
      %v7687 = vpow.pop %v7686
      %v7688 = vmul.f32 %v7648, 1.442695
      %v7689 = vpow.pop %v7688
      %v7690 = vmul.f32 %v7649, 1.442695
      %v7691 = vpow.pop %v7690
      %v7692 = vmul.f32 %v7650, 1.442695
      %v7693 = vpow.pop %v7692
      %v7694 = vmul.f32 %v7651, 1.442695
      %v7695 = vpow.pop %v7694
      %v7696 = vmul.f32 %v7652, 1.442695
      %v7697 = vpow.pop %v7696
      %v7698 = vmul.f32 %v7653, 1.442695
      %v7699 = vpow.pop %v7698
      %v7700 = vmul.f32 %v7654, 1.442695
      %v7701 = vpow.pop %v7700
      %v7702 = vmul.f32 %v7655, 1.442695
      %v7703 = vpow.pop %v7702
      %v7704 = vmul.f32 %v7656, 1.442695
      %v7705 = vpow.pop %v7704
      %v7706 = vmul.f32 %v7657, 1.442695
      %v7707 = vpow.pop %v7706
      %v7708 = vmul.f32 %v7658, 1.442695
      %v7709 = vpow.pop %v7708
      %v7710 = vmul.f32 %v7659, 1.442695
      %v7711 = vpow.pop %v7710
      %v7712 = vmul.f32 %v7660, 1.442695
      %v7713 = vpow.pop %v7712
      %v7714 = vmul.f32 %v7661, 1.442695
      %v7715 = vpow.pop %v7714
      %v7716 = vmul.f32 %v7662, 1.442695
      %v7717 = vpow.pop %v7716
      %v7718 = vmul.f32 %v7663, 1.442695
      %v7719 = vpow.pop %v7718
      %v7720 = vmul.f32 %v7664, 1.442695
      %v7721 = vpow.pop %v7720
      %v7722 = vmul.f32 %v7665, 1.442695
      %v7723 = vpow.pop %v7722
      %v7724 = vmul.f32 %v7666, 1.442695
      %v7725 = vpow.pop %v7724
      %v7726 = vmul.f32 %v7667, 1.442695
      %v7727 = vpow.pop %v7726
      %v7728 = vmul.f32 %v7668, 1.442695
      %v7729 = vpow.pop %v7728
      %v7730 = vmul.f32 %v7669, 1.442695
      %v7731 = vpow.pop %v7730
      %v7732 = vmul.f32 %v7670, 1.442695
      %v7733 = vpow.pop %v7732
      %v7734 = vmul.f32 %v7671, 1.442695
      %v7735 = vpow.pop %v7734
      %v7736 = vmul.f32 %v7672, 1.442695
      %v7737 = vpow.pop %v7736
      %v7738 = vmul.f32 %v7673, 1.442695
      %v7739 = vpow.pop %v7738
      %v7740 = vmul.f32 %v7674, 1.442695
      %v7741 = vpow.pop %v7740
      %v7742 = vmul.f32 %v7675, 1.442695
      %v7743 = vpow.pop %v7742
      %v7744 = vmul.f32 %v7676, 1.442695
      %v7745 = vpow.pop %v7744
      %v7746 = vmul.f32 %v7677, 1.442695
      %v7747 = vpow.pop %v7746
      %v7748 = vmul.f32 %v7678, 1.442695
      %v7749 = vpow.pop %v7748
      %v7750 = vmul.f32 %v7679, 1.442695
      %v7751 = vpow.pop %v7750
      %v7752 = vsel %vm2967, %v7681, 0.0
      %7753 = vadd.xlane.f32.xlu0 %v7752
      %v7754 = vpop.xlane.xlu0 %7753
      %v7755 = vsel %vm2967, %v7683, 0.0
      %7756 = vadd.xlane.f32.xlu0 %v7755
      %v7757 = vpop.xlane.xlu0 %7756
      %v7758 = vsel %vm2967, %v7685, 0.0
      %7759 = vadd.xlane.f32.xlu0 %v7758
      %v7760 = vpop.xlane.xlu0 %7759
      %v7761 = vsel %vm2967, %v7687, 0.0
      %7762 = vadd.xlane.f32.xlu0 %v7761
      %v7763 = vpop.xlane.xlu0 %7762
      %v7764 = vsel %vm2967, %v7689, 0.0
      %7765 = vadd.xlane.f32.xlu0 %v7764
      %v7766 = vpop.xlane.xlu0 %7765
      %v7767 = vsel %vm2967, %v7691, 0.0
      %7768 = vadd.xlane.f32.xlu0 %v7767
      %v7769 = vpop.xlane.xlu0 %7768
      %v7770 = vsel %vm2967, %v7693, 0.0
      %7771 = vadd.xlane.f32.xlu0 %v7770
      %v7772 = vpop.xlane.xlu0 %7771
      %v7773 = vsel %vm2967, %v7695, 0.0
      %7774 = vadd.xlane.f32.xlu0 %v7773
      %v7775 = vpop.xlane.xlu0 %7774
      %v7776 = vsel %vm2992, %v7697, 0.0
      %7777 = vadd.xlane.f32.xlu0 %v7776
      %v7778 = vpop.xlane.xlu0 %7777
      %v7779 = vsel %vm2967, %v7699, 0.0
      %7780 = vadd.xlane.f32.xlu0 %v7779
      %v7781 = vpop.xlane.xlu0 %7780
      %v7782 = vsel %vm2967, %v7701, 0.0
      %7783 = vadd.xlane.f32.xlu0 %v7782
      %v7784 = vpop.xlane.xlu0 %7783
      %v7785 = vsel %vm2967, %v7703, 0.0
      %7786 = vadd.xlane.f32.xlu0 %v7785
      %v7787 = vpop.xlane.xlu0 %7786
      %v7788 = vsel %vm2967, %v7705, 0.0
      %7789 = vadd.xlane.f32.xlu0 %v7788
      %v7790 = vpop.xlane.xlu0 %7789
      %v7791 = vsel %vm2967, %v7707, 0.0
      %7792 = vadd.xlane.f32.xlu0 %v7791
      %v7793 = vpop.xlane.xlu0 %7792
      %v7794 = vsel %vm2967, %v7709, 0.0
      %7795 = vadd.xlane.f32.xlu0 %v7794
      %v7796 = vpop.xlane.xlu0 %7795
      %v7797 = vsel %vm2967, %v7711, 0.0
      %7798 = vadd.xlane.f32.xlu0 %v7797
      %v7799 = vpop.xlane.xlu0 %7798
      %v7800 = vsel %vm2967, %v7713, 0.0
      %7801 = vadd.xlane.f32.xlu0 %v7800
      %v7802 = vpop.xlane.xlu0 %7801
      %v7803 = vsel %vm2992, %v7715, 0.0
      %7804 = vadd.xlane.f32.xlu0 %v7803
      %v7805 = vpop.xlane.xlu0 %7804
      %v7806 = vsel %vm2967, %v7717, 0.0
      %7807 = vadd.xlane.f32.xlu0 %v7806
      %v7808 = vpop.xlane.xlu0 %7807
      %v7809 = vsel %vm2967, %v7719, 0.0
      %7810 = vadd.xlane.f32.xlu0 %v7809
      %v7811 = vpop.xlane.xlu0 %7810
      %v7812 = vsel %vm2967, %v7721, 0.0
      %7813 = vadd.xlane.f32.xlu0 %v7812
      %v7814 = vpop.xlane.xlu0 %7813
      %v7815 = vsel %vm2967, %v7723, 0.0
      %7816 = vadd.xlane.f32.xlu0 %v7815
      %v7817 = vpop.xlane.xlu0 %7816
      %v7818 = vsel %vm2967, %v7725, 0.0
      %7819 = vadd.xlane.f32.xlu0 %v7818
      %v7820 = vpop.xlane.xlu0 %7819
      %v7821 = vsel %vm2967, %v7727, 0.0
      %7822 = vadd.xlane.f32.xlu0 %v7821
      %v7823 = vpop.xlane.xlu0 %7822
      %v7824 = vsel %vm2967, %v7729, 0.0
      %7825 = vadd.xlane.f32.xlu0 %v7824
      %v7826 = vpop.xlane.xlu0 %7825
      %v7827 = vsel %vm2967, %v7731, 0.0
      %7828 = vadd.xlane.f32.xlu0 %v7827
      %v7829 = vpop.xlane.xlu0 %7828
      %v7830 = vsel %vm2992, %v7733, 0.0
      %7831 = vadd.xlane.f32.xlu0 %v7830
      %v7832 = vpop.xlane.xlu0 %7831
      %v7833 = vsel %vm2967, %v7735, 0.0
      %7834 = vadd.xlane.f32.xlu0 %v7833
      %v7835 = vpop.xlane.xlu0 %7834
      %v7836 = vsel %vm2967, %v7737, 0.0
      %7837 = vadd.xlane.f32.xlu0 %v7836
      %v7838 = vpop.xlane.xlu0 %7837
      %v7839 = vsel %vm2967, %v7739, 0.0
      %7840 = vadd.xlane.f32.xlu0 %v7839
      %v7841 = vpop.xlane.xlu0 %7840
      %v7842 = vsel %vm2967, %v7741, 0.0
      %7843 = vadd.xlane.f32.xlu0 %v7842
      %v7844 = vpop.xlane.xlu0 %7843
      %v7845 = vsel %vm2967, %v7743, 0.0
      %7846 = vadd.xlane.f32.xlu0 %v7845
      %v7847 = vpop.xlane.xlu0 %7846
      %v7848 = vsel %vm2967, %v7745, 0.0
      %7849 = vadd.xlane.f32.xlu0 %v7848
      %v7850 = vpop.xlane.xlu0 %7849
      %v7851 = vsel %vm2967, %v7747, 0.0
      %7852 = vadd.xlane.f32.xlu0 %v7851
      %v7853 = vpop.xlane.xlu0 %7852
      %v7854 = vsel %vm2967, %v7749, 0.0
      %7855 = vadd.xlane.f32.xlu0 %v7854
      %v7856 = vpop.xlane.xlu0 %7855
      %v7857 = vsel %vm2992, %v7751, 0.0
      %7858 = vadd.xlane.f32.xlu0 %v7857
      %v7859 = vpop.xlane.xlu0 %7858
      %v7861 = vsel %vm2967, %v7681, 0
      %v7864 = vsel %vm2967, %v7683, 0
      %v7867 = vsel %vm2967, %v7685, 0
      %v7870 = vsel %vm2967, %v7687, 0
      %v7873 = vsel %vm2967, %v7689, 0
      %v7876 = vsel %vm2967, %v7691, 0
      %v7879 = vsel %vm2967, %v7693, 0
      %v7882 = vsel %vm2967, %v7695, 0
      %v7885 = vsel %vm2967, %v7697, 0
      %v7888 = vsel %vm3320, %v6511, 0
      %7890 = vmatprep.subr.mxu0 0.0
      %7891 = vmatpush1.msra.mxu0 %v6471
      %7892 = vmatprep.subr.mxu0 0.0
      %7893 = vmatpush1.msra.mxu0 %v6476
      %7894 = vmatprep.subr.mxu0 0.0
      %7895 = vmatpush1.msra.mxu0 %v6481
      %7896 = vmatprep.subr.mxu0 0.0
      %7897 = vmatpush1.msra.mxu0 %v6486
      %7898 = vmatprep.subr.mxu0 0.0
      %7899 = vmatpush1.msra.mxu0 %v6491
      %7900 = vmatprep.subr.mxu0 0.0
      %7901 = vmatpush1.msra.mxu0 %v6496
      %7902 = vmatprep.subr.mxu0 0.0
      %7903 = vmatpush1.msra.mxu0 %v6501
      %7904 = vmatprep.subr.mxu0 0.0
      %7905 = vmatpush1.msra.mxu0 %v6506
      %7906 = vmatprep.subr.mxu0 0.0
      %7907 = vmatpush1.msra.mxu0 %v7888
      %7908 = vmatprep.subr.mxu0 0.0
      %7909 = vmatpush1.msra.mxu0 0.0
      %7910 = vmatprep.subr.mxu0 0.0
      %7911 = vmatpush1.msra.mxu0 0.0
      %7912 = vmatprep.subr.mxu0 0.0
      %7913 = vmatpush1.msra.mxu0 0.0
      %7914 = vmatprep.subr.mxu0 0.0
      %7915 = vmatpush1.msra.mxu0 0.0
      %7916 = vmatprep.subr.mxu0 0.0
      %7917 = vmatpush1.msra.mxu0 0.0
      %7918 = vmatprep.subr.mxu0 0.0
      %7919 = vmatpush1.msra.mxu0 0.0
      %7920 = vmatprep.subr.mxu0 0.0
      %7921 = vmatpush1.msra.mxu0 0.0
      %7922 = vmatprep.subr.mxu0 0.0
      %7923 = vmatpush1.msra.mxu0 0.0
      %7924 = vmatprep.subr.mxu0 0.0
      %7925 = vmatpush1.msra.mxu0 0.0
      %7926 = vmatprep.subr.mxu0 0.0
      %7927 = vmatpush1.msra.mxu0 0.0
      %7928 = vmatprep.subr.mxu0 0.0
      %7929 = vmatpush1.msra.mxu0 0.0
      %7930 = vmatprep.subr.mxu0 0.0
      %7931 = vmatpush1.msra.mxu0 0.0
      %7932 = vmatprep.subr.mxu0 0.0
      %7933 = vmatpush1.msra.mxu0 0.0
      %7934 = vmatprep.subr.mxu0 0.0
      %7935 = vmatpush1.msra.mxu0 0.0
      %7936 = vmatprep.subr.mxu0 0.0
      %7937 = vmatpush1.msra.mxu0 0.0
      %7938 = vmatprep.subr.mxu0 0.0
      %7939 = vmatpush1.msra.mxu0 0.0
      %7940 = vmatprep.subr.mxu0 0.0
      %7941 = vmatpush1.msra.mxu0 0.0
      %7942 = vmatprep.subr.mxu0 0.0
      %7943 = vmatpush1.msra.mxu0 0.0
      %7944 = vmatprep.subr.mxu0 0.0
      %7945 = vmatpush1.msra.mxu0 0.0
      %7946 = vmatprep.subr.mxu0 0.0
      %7947 = vmatpush1.msra.mxu0 0.0
      %7948 = vmatprep.subr.mxu0 0.0
      %7949 = vmatpush1.msra.mxu0 0.0
      %7950 = vmatprep.subr.mxu0 0.0
      %7951 = vmatpush1.msra.mxu0 0.0
      %7952 = vmatprep.subr.mxu0 0.0
      %7953 = vmatpush1.msra.mxu0 0.0
      %7954 = vmatprep.mubr.f32.mxu0 0.0
      %7955 = vmatmul.mubr.f32.gmra.mrb[0].mxu0 %v7861
      %v7956 = vpop.f32.mrb[0].mxu0
      %v7957 = vadd.f32 0.0, %v7956
      %v7958 = vpop.f32.mrb[0].mxu0
      %7959 = vmatprep.mubr.f32.mxu0 0.0
      %7960 = vmatmul.mubr.f32.gmra.mrb[0].mxu0 %v7864
      %v7961 = vpop.f32.mrb[0].mxu0
      %v7962 = vadd.f32 0.0, %v7961
      %v7963 = vpop.f32.mrb[0].mxu0
      %7964 = vmatprep.mubr.f32.mxu0 0.0
      %7965 = vmatmul.mubr.f32.gmra.mrb[0].mxu0 %v7867
      %v7966 = vpop.f32.mrb[0].mxu0
      %v7967 = vadd.f32 0.0, %v7966
      %v7968 = vpop.f32.mrb[0].mxu0
      %7969 = vmatprep.mubr.f32.mxu0 0.0
      %7970 = vmatmul.mubr.f32.gmra.mrb[0].mxu0 %v7870
      %v7971 = vpop.f32.mrb[0].mxu0
      %v7972 = vadd.f32 0.0, %v7971
      %v7973 = vpop.f32.mrb[0].mxu0
      %7974 = vmatprep.mubr.f32.mxu0 0.0
      %7975 = vmatmul.mubr.f32.gmra.mrb[0].mxu0 %v7873
      %v7976 = vpop.f32.mrb[0].mxu0
      %v7977 = vadd.f32 0.0, %v7976
      %v7978 = vpop.f32.mrb[0].mxu0
      %7979 = vmatprep.mubr.f32.mxu0 0.0
      %7980 = vmatmul.mubr.f32.gmra.mrb[0].mxu0 %v7876
      %v7981 = vpop.f32.mrb[0].mxu0
      %v7982 = vadd.f32 0.0, %v7981
      %v7983 = vpop.f32.mrb[0].mxu0
      %7984 = vmatprep.mubr.f32.mxu0 0.0
      %7985 = vmatmul.mubr.f32.gmra.mrb[0].mxu0 %v7879
      %v7986 = vpop.f32.mrb[0].mxu0
      %v7987 = vadd.f32 0.0, %v7986
      %v7988 = vpop.f32.mrb[0].mxu0
      %7989 = vmatprep.mubr.f32.mxu0 0.0
      %7990 = vmatmul.mubr.f32.gmra.mrb[0].mxu0 %v7882
      %v7991 = vpop.f32.mrb[0].mxu0
      %v7992 = vadd.f32 0.0, %v7991
      %v7993 = vpop.f32.mrb[0].mxu0
      %7994 = vmatprep.mubr.f32.mxu0 0.0
      %7995 = vmatmul.mubr.f32.gmra.mrb[0].mxu0 %v7885
      %v7996 = vpop.f32.mrb[0].mxu0
      %v7997 = vadd.f32 0.0, %v7996
      %v7998 = vpop.f32.mrb[0].mxu0
      %7999 = vdwg.mxu0
      %v8001 = vsel %vm2967, %v7699, 0
      %v8004 = vsel %vm2967, %v7701, 0
      %v8007 = vsel %vm2967, %v7703, 0
      %v8010 = vsel %vm2967, %v7705, 0
      %v8013 = vsel %vm2967, %v7707, 0
      %v8016 = vsel %vm2967, %v7709, 0
      %v8019 = vsel %vm2967, %v7711, 0
      %v8022 = vsel %vm2967, %v7713, 0
      %v8025 = vsel %vm2967, %v7715, 0
      %v8028 = vsel %vm3320, %v6621, 0
      %8030 = vmatprep.subr.mxu0 0.0
      %8031 = vmatpush1.msra.mxu0 %v6581
      %8032 = vmatprep.subr.mxu0 0.0
      %8033 = vmatpush1.msra.mxu0 %v6586
      %8034 = vmatprep.subr.mxu0 0.0
      %8035 = vmatpush1.msra.mxu0 %v6591
      %8036 = vmatprep.subr.mxu0 0.0
      %8037 = vmatpush1.msra.mxu0 %v6596
      %8038 = vmatprep.subr.mxu0 0.0
      %8039 = vmatpush1.msra.mxu0 %v6601
      %8040 = vmatprep.subr.mxu0 0.0
      %8041 = vmatpush1.msra.mxu0 %v6606
      %8042 = vmatprep.subr.mxu0 0.0
      %8043 = vmatpush1.msra.mxu0 %v6611
      %8044 = vmatprep.subr.mxu0 0.0
      %8045 = vmatpush1.msra.mxu0 %v6616
      %8046 = vmatprep.subr.mxu0 0.0
      %8047 = vmatpush1.msra.mxu0 %v8028
      %8048 = vmatprep.subr.mxu0 0.0
      %8049 = vmatpush1.msra.mxu0 0.0
      %8050 = vmatprep.subr.mxu0 0.0
      %8051 = vmatpush1.msra.mxu0 0.0
      %8052 = vmatprep.subr.mxu0 0.0
      %8053 = vmatpush1.msra.mxu0 0.0
      %8054 = vmatprep.subr.mxu0 0.0
      %8055 = vmatpush1.msra.mxu0 0.0
      %8056 = vmatprep.subr.mxu0 0.0
      %8057 = vmatpush1.msra.mxu0 0.0
      %8058 = vmatprep.subr.mxu0 0.0
      %8059 = vmatpush1.msra.mxu0 0.0
      %8060 = vmatprep.subr.mxu0 0.0
      %8061 = vmatpush1.msra.mxu0 0.0
      %8062 = vmatprep.subr.mxu0 0.0
      %8063 = vmatpush1.msra.mxu0 0.0
      %8064 = vmatprep.subr.mxu0 0.0
      %8065 = vmatpush1.msra.mxu0 0.0
      %8066 = vmatprep.subr.mxu0 0.0
      %8067 = vmatpush1.msra.mxu0 0.0
      %8068 = vmatprep.subr.mxu0 0.0
      %8069 = vmatpush1.msra.mxu0 0.0
      %8070 = vmatprep.subr.mxu0 0.0
      %8071 = vmatpush1.msra.mxu0 0.0
      %8072 = vmatprep.subr.mxu0 0.0
      %8073 = vmatpush1.msra.mxu0 0.0
      %8074 = vmatprep.subr.mxu0 0.0
      %8075 = vmatpush1.msra.mxu0 0.0
      %8076 = vmatprep.subr.mxu0 0.0
      %8077 = vmatpush1.msra.mxu0 0.0
      %8078 = vmatprep.subr.mxu0 0.0
      %8079 = vmatpush1.msra.mxu0 0.0
      %8080 = vmatprep.subr.mxu0 0.0
      %8081 = vmatpush1.msra.mxu0 0.0
      %8082 = vmatprep.subr.mxu0 0.0
      %8083 = vmatpush1.msra.mxu0 0.0
      %8084 = vmatprep.subr.mxu0 0.0
      %8085 = vmatpush1.msra.mxu0 0.0
      %8086 = vmatprep.subr.mxu0 0.0
      %8087 = vmatpush1.msra.mxu0 0.0
      %8088 = vmatprep.subr.mxu0 0.0
      %8089 = vmatpush1.msra.mxu0 0.0
      %8090 = vmatprep.subr.mxu0 0.0
      %8091 = vmatpush1.msra.mxu0 0.0
      %8092 = vmatprep.subr.mxu0 0.0
      %8093 = vmatpush1.msra.mxu0 0.0
      %8094 = vmatprep.mubr.f32.mxu0 0.0
      %8095 = vmatmul.mubr.f32.gmra.mrb[0].mxu0 %v8001
      %v8096 = vpop.f32.mrb[0].mxu0
      %v8097 = vadd.f32 0.0, %v8096
      %v8098 = vpop.f32.mrb[0].mxu0
      %8099 = vmatprep.mubr.f32.mxu0 0.0
      %8100 = vmatmul.mubr.f32.gmra.mrb[0].mxu0 %v8004
      %v8101 = vpop.f32.mrb[0].mxu0
      %v8102 = vadd.f32 0.0, %v8101
      %v8103 = vpop.f32.mrb[0].mxu0
      %8104 = vmatprep.mubr.f32.mxu0 0.0
      %8105 = vmatmul.mubr.f32.gmra.mrb[0].mxu0 %v8007
      %v8106 = vpop.f32.mrb[0].mxu0
      %v8107 = vadd.f32 0.0, %v8106
      %v8108 = vpop.f32.mrb[0].mxu0
      %8109 = vmatprep.mubr.f32.mxu0 0.0
      %8110 = vmatmul.mubr.f32.gmra.mrb[0].mxu0 %v8010
      %v8111 = vpop.f32.mrb[0].mxu0
      %v8112 = vadd.f32 0.0, %v8111
      %v8113 = vpop.f32.mrb[0].mxu0
      %8114 = vmatprep.mubr.f32.mxu0 0.0
      %8115 = vmatmul.mubr.f32.gmra.mrb[0].mxu0 %v8013
      %v8116 = vpop.f32.mrb[0].mxu0
      %v8117 = vadd.f32 0.0, %v8116
      %v8118 = vpop.f32.mrb[0].mxu0
      %8119 = vmatprep.mubr.f32.mxu0 0.0
      %8120 = vmatmul.mubr.f32.gmra.mrb[0].mxu0 %v8016
      %v8121 = vpop.f32.mrb[0].mxu0
      %v8122 = vadd.f32 0.0, %v8121
      %v8123 = vpop.f32.mrb[0].mxu0
      %8124 = vmatprep.mubr.f32.mxu0 0.0
      %8125 = vmatmul.mubr.f32.gmra.mrb[0].mxu0 %v8019
      %v8126 = vpop.f32.mrb[0].mxu0
      %v8127 = vadd.f32 0.0, %v8126
      %v8128 = vpop.f32.mrb[0].mxu0
      %8129 = vmatprep.mubr.f32.mxu0 0.0
      %8130 = vmatmul.mubr.f32.gmra.mrb[0].mxu0 %v8022
      %v8131 = vpop.f32.mrb[0].mxu0
      %v8132 = vadd.f32 0.0, %v8131
      %v8133 = vpop.f32.mrb[0].mxu0
      %8134 = vmatprep.mubr.f32.mxu0 0.0
      %8135 = vmatmul.mubr.f32.gmra.mrb[0].mxu0 %v8025
      %v8136 = vpop.f32.mrb[0].mxu0
      %v8137 = vadd.f32 0.0, %v8136
      %v8138 = vpop.f32.mrb[0].mxu0
      %8139 = vdwg.mxu0
      %v8141 = vsel %vm2967, %v7717, 0
      %v8144 = vsel %vm2967, %v7719, 0
      %v8147 = vsel %vm2967, %v7721, 0
      %v8150 = vsel %vm2967, %v7723, 0
      %v8153 = vsel %vm2967, %v7725, 0
      %v8156 = vsel %vm2967, %v7727, 0
      %v8159 = vsel %vm2967, %v7729, 0
      %v8162 = vsel %vm2967, %v7731, 0
      %v8165 = vsel %vm2967, %v7733, 0
      %v8168 = vsel %vm3320, %v6731, 0
      %8170 = vmatprep.subr.mxu0 0.0
      %8171 = vmatpush1.msra.mxu0 %v6691
      %8172 = vmatprep.subr.mxu0 0.0
      %8173 = vmatpush1.msra.mxu0 %v6696
      %8174 = vmatprep.subr.mxu0 0.0
      %8175 = vmatpush1.msra.mxu0 %v6701
      %8176 = vmatprep.subr.mxu0 0.0
      %8177 = vmatpush1.msra.mxu0 %v6706
      %8178 = vmatprep.subr.mxu0 0.0
      %8179 = vmatpush1.msra.mxu0 %v6711
      %8180 = vmatprep.subr.mxu0 0.0
      %8181 = vmatpush1.msra.mxu0 %v6716
      %8182 = vmatprep.subr.mxu0 0.0
      %8183 = vmatpush1.msra.mxu0 %v6721
      %8184 = vmatprep.subr.mxu0 0.0
      %8185 = vmatpush1.msra.mxu0 %v6726
      %8186 = vmatprep.subr.mxu0 0.0
      %8187 = vmatpush1.msra.mxu0 %v8168
      %8188 = vmatprep.subr.mxu0 0.0
      %8189 = vmatpush1.msra.mxu0 0.0
      %8190 = vmatprep.subr.mxu0 0.0
      %8191 = vmatpush1.msra.mxu0 0.0
      %8192 = vmatprep.subr.mxu0 0.0
      %8193 = vmatpush1.msra.mxu0 0.0
      %8194 = vmatprep.subr.mxu0 0.0
      %8195 = vmatpush1.msra.mxu0 0.0
      %8196 = vmatprep.subr.mxu0 0.0
      %8197 = vmatpush1.msra.mxu0 0.0
      %8198 = vmatprep.subr.mxu0 0.0
      %8199 = vmatpush1.msra.mxu0 0.0
      %8200 = vmatprep.subr.mxu0 0.0
      %8201 = vmatpush1.msra.mxu0 0.0
      %8202 = vmatprep.subr.mxu0 0.0
      %8203 = vmatpush1.msra.mxu0 0.0
      %8204 = vmatprep.subr.mxu0 0.0
      %8205 = vmatpush1.msra.mxu0 0.0
      %8206 = vmatprep.subr.mxu0 0.0
      %8207 = vmatpush1.msra.mxu0 0.0
      %8208 = vmatprep.subr.mxu0 0.0
      %8209 = vmatpush1.msra.mxu0 0.0
      %8210 = vmatprep.subr.mxu0 0.0
      %8211 = vmatpush1.msra.mxu0 0.0
      %8212 = vmatprep.subr.mxu0 0.0
      %8213 = vmatpush1.msra.mxu0 0.0
      %8214 = vmatprep.subr.mxu0 0.0
      %8215 = vmatpush1.msra.mxu0 0.0
      %8216 = vmatprep.subr.mxu0 0.0
      %8217 = vmatpush1.msra.mxu0 0.0
      %8218 = vmatprep.subr.mxu0 0.0
      %8219 = vmatpush1.msra.mxu0 0.0
      %8220 = vmatprep.subr.mxu0 0.0
      %8221 = vmatpush1.msra.mxu0 0.0
      %8222 = vmatprep.subr.mxu0 0.0
      %8223 = vmatpush1.msra.mxu0 0.0
      %8224 = vmatprep.subr.mxu0 0.0
      %8225 = vmatpush1.msra.mxu0 0.0
      %8226 = vmatprep.subr.mxu0 0.0
      %8227 = vmatpush1.msra.mxu0 0.0
      %8228 = vmatprep.subr.mxu0 0.0
      %8229 = vmatpush1.msra.mxu0 0.0
      %8230 = vmatprep.subr.mxu0 0.0
      %8231 = vmatpush1.msra.mxu0 0.0
      %8232 = vmatprep.subr.mxu0 0.0
      %8233 = vmatpush1.msra.mxu0 0.0
      %8234 = vmatprep.mubr.f32.mxu0 0.0
      %8235 = vmatmul.mubr.f32.gmra.mrb[0].mxu0 %v8141
      %v8236 = vpop.f32.mrb[0].mxu0
      %v8237 = vadd.f32 0.0, %v8236
      %v8238 = vpop.f32.mrb[0].mxu0
      %8239 = vmatprep.mubr.f32.mxu0 0.0
      %8240 = vmatmul.mubr.f32.gmra.mrb[0].mxu0 %v8144
      %v8241 = vpop.f32.mrb[0].mxu0
      %v8242 = vadd.f32 0.0, %v8241
      %v8243 = vpop.f32.mrb[0].mxu0
      %8244 = vmatprep.mubr.f32.mxu0 0.0
      %8245 = vmatmul.mubr.f32.gmra.mrb[0].mxu0 %v8147
      %v8246 = vpop.f32.mrb[0].mxu0
      %v8247 = vadd.f32 0.0, %v8246
      %v8248 = vpop.f32.mrb[0].mxu0
      %8249 = vmatprep.mubr.f32.mxu0 0.0
      %8250 = vmatmul.mubr.f32.gmra.mrb[0].mxu0 %v8150
      %v8251 = vpop.f32.mrb[0].mxu0
      %v8252 = vadd.f32 0.0, %v8251
      %v8253 = vpop.f32.mrb[0].mxu0
      %8254 = vmatprep.mubr.f32.mxu0 0.0
      %8255 = vmatmul.mubr.f32.gmra.mrb[0].mxu0 %v8153
      %v8256 = vpop.f32.mrb[0].mxu0
      %v8257 = vadd.f32 0.0, %v8256
      %v8258 = vpop.f32.mrb[0].mxu0
      %8259 = vmatprep.mubr.f32.mxu0 0.0
      %8260 = vmatmul.mubr.f32.gmra.mrb[0].mxu0 %v8156
      %v8261 = vpop.f32.mrb[0].mxu0
      %v8262 = vadd.f32 0.0, %v8261
      %v8263 = vpop.f32.mrb[0].mxu0
      %8264 = vmatprep.mubr.f32.mxu0 0.0
      %8265 = vmatmul.mubr.f32.gmra.mrb[0].mxu0 %v8159
      %v8266 = vpop.f32.mrb[0].mxu0
      %v8267 = vadd.f32 0.0, %v8266
      %v8268 = vpop.f32.mrb[0].mxu0
      %8269 = vmatprep.mubr.f32.mxu0 0.0
      %8270 = vmatmul.mubr.f32.gmra.mrb[0].mxu0 %v8162
      %v8271 = vpop.f32.mrb[0].mxu0
      %v8272 = vadd.f32 0.0, %v8271
      %v8273 = vpop.f32.mrb[0].mxu0
      %8274 = vmatprep.mubr.f32.mxu0 0.0
      %8275 = vmatmul.mubr.f32.gmra.mrb[0].mxu0 %v8165
      %v8276 = vpop.f32.mrb[0].mxu0
      %v8277 = vadd.f32 0.0, %v8276
      %v8278 = vpop.f32.mrb[0].mxu0
      %8279 = vdwg.mxu0
      %v8281 = vsel %vm2967, %v7735, 0
      %v8284 = vsel %vm2967, %v7737, 0
      %v8287 = vsel %vm2967, %v7739, 0
      %v8290 = vsel %vm2967, %v7741, 0
      %v8293 = vsel %vm2967, %v7743, 0
      %v8296 = vsel %vm2967, %v7745, 0
      %v8299 = vsel %vm2967, %v7747, 0
      %v8302 = vsel %vm2967, %v7749, 0
      %v8305 = vsel %vm2967, %v7751, 0
      %v8308 = vsel %vm3320, %v6841, 0
      %8310 = vmatprep.subr.mxu0 0.0
      %8311 = vmatpush1.msra.mxu0 %v6801
      %8312 = vmatprep.subr.mxu0 0.0
      %8313 = vmatpush1.msra.mxu0 %v6806
      %8314 = vmatprep.subr.mxu0 0.0
      %8315 = vmatpush1.msra.mxu0 %v6811
      %8316 = vmatprep.subr.mxu0 0.0
      %8317 = vmatpush1.msra.mxu0 %v6816
      %8318 = vmatprep.subr.mxu0 0.0
      %8319 = vmatpush1.msra.mxu0 %v6821
      %8320 = vmatprep.subr.mxu0 0.0
      %8321 = vmatpush1.msra.mxu0 %v6826
      %8322 = vmatprep.subr.mxu0 0.0
      %8323 = vmatpush1.msra.mxu0 %v6831
      %8324 = vmatprep.subr.mxu0 0.0
      %8325 = vmatpush1.msra.mxu0 %v6836
      %8326 = vmatprep.subr.mxu0 0.0
      %8327 = vmatpush1.msra.mxu0 %v8308
      %8328 = vmatprep.subr.mxu0 0.0
      %8329 = vmatpush1.msra.mxu0 0.0
      %8330 = vmatprep.subr.mxu0 0.0
      %8331 = vmatpush1.msra.mxu0 0.0
      %8332 = vmatprep.subr.mxu0 0.0
      %8333 = vmatpush1.msra.mxu0 0.0
      %8334 = vmatprep.subr.mxu0 0.0
      %8335 = vmatpush1.msra.mxu0 0.0
      %8336 = vmatprep.subr.mxu0 0.0
      %8337 = vmatpush1.msra.mxu0 0.0
      %8338 = vmatprep.subr.mxu0 0.0
      %8339 = vmatpush1.msra.mxu0 0.0
      %8340 = vmatprep.subr.mxu0 0.0
      %8341 = vmatpush1.msra.mxu0 0.0
      %8342 = vmatprep.subr.mxu0 0.0
      %8343 = vmatpush1.msra.mxu0 0.0
      %8344 = vmatprep.subr.mxu0 0.0
      %8345 = vmatpush1.msra.mxu0 0.0
      %8346 = vmatprep.subr.mxu0 0.0
      %8347 = vmatpush1.msra.mxu0 0.0
      %8348 = vmatprep.subr.mxu0 0.0
      %8349 = vmatpush1.msra.mxu0 0.0
      %8350 = vmatprep.subr.mxu0 0.0
      %8351 = vmatpush1.msra.mxu0 0.0
      %8352 = vmatprep.subr.mxu0 0.0
      %8353 = vmatpush1.msra.mxu0 0.0
      %8354 = vmatprep.subr.mxu0 0.0
      %8355 = vmatpush1.msra.mxu0 0.0
      %8356 = vmatprep.subr.mxu0 0.0
      %8357 = vmatpush1.msra.mxu0 0.0
      %8358 = vmatprep.subr.mxu0 0.0
      %8359 = vmatpush1.msra.mxu0 0.0
      %8360 = vmatprep.subr.mxu0 0.0
      %8361 = vmatpush1.msra.mxu0 0.0
      %8362 = vmatprep.subr.mxu0 0.0
      %8363 = vmatpush1.msra.mxu0 0.0
      %8364 = vmatprep.subr.mxu0 0.0
      %8365 = vmatpush1.msra.mxu0 0.0
      %8366 = vmatprep.subr.mxu0 0.0
      %8367 = vmatpush1.msra.mxu0 0.0
      %8368 = vmatprep.subr.mxu0 0.0
      %8369 = vmatpush1.msra.mxu0 0.0
      %8370 = vmatprep.subr.mxu0 0.0
      %8371 = vmatpush1.msra.mxu0 0.0
      %8372 = vmatprep.subr.mxu0 0.0
      %8373 = vmatpush1.msra.mxu0 0.0
      %8374 = vmatprep.mubr.f32.mxu0 0.0
      %8375 = vmatmul.mubr.f32.gmra.mrb[0].mxu0 %v8281
      %v8376 = vpop.f32.mrb[0].mxu0
      %v8377 = vadd.f32 0.0, %v8376
      %v8378 = vpop.f32.mrb[0].mxu0
      %8379 = vmatprep.mubr.f32.mxu0 0.0
      %8380 = vmatmul.mubr.f32.gmra.mrb[0].mxu0 %v8284
      %v8381 = vpop.f32.mrb[0].mxu0
      %v8382 = vadd.f32 0.0, %v8381
      %v8383 = vpop.f32.mrb[0].mxu0
      %8384 = vmatprep.mubr.f32.mxu0 0.0
      %8385 = vmatmul.mubr.f32.gmra.mrb[0].mxu0 %v8287
      %v8386 = vpop.f32.mrb[0].mxu0
      %v8387 = vadd.f32 0.0, %v8386
      %v8388 = vpop.f32.mrb[0].mxu0
      %8389 = vmatprep.mubr.f32.mxu0 0.0
      %8390 = vmatmul.mubr.f32.gmra.mrb[0].mxu0 %v8290
      %v8391 = vpop.f32.mrb[0].mxu0
      %v8392 = vadd.f32 0.0, %v8391
      %v8393 = vpop.f32.mrb[0].mxu0
      %8394 = vmatprep.mubr.f32.mxu0 0.0
      %8395 = vmatmul.mubr.f32.gmra.mrb[0].mxu0 %v8293
      %v8396 = vpop.f32.mrb[0].mxu0
      %v8397 = vadd.f32 0.0, %v8396
      %v8398 = vpop.f32.mrb[0].mxu0
      %8399 = vmatprep.mubr.f32.mxu0 0.0
      %8400 = vmatmul.mubr.f32.gmra.mrb[0].mxu0 %v8296
      %v8401 = vpop.f32.mrb[0].mxu0
      %v8402 = vadd.f32 0.0, %v8401
      %v8403 = vpop.f32.mrb[0].mxu0
      %8404 = vmatprep.mubr.f32.mxu0 0.0
      %8405 = vmatmul.mubr.f32.gmra.mrb[0].mxu0 %v8299
      %v8406 = vpop.f32.mrb[0].mxu0
      %v8407 = vadd.f32 0.0, %v8406
      %v8408 = vpop.f32.mrb[0].mxu0
      %8409 = vmatprep.mubr.f32.mxu0 0.0
      %8410 = vmatmul.mubr.f32.gmra.mrb[0].mxu0 %v8302
      %v8411 = vpop.f32.mrb[0].mxu0
      %v8412 = vadd.f32 0.0, %v8411
      %v8413 = vpop.f32.mrb[0].mxu0
      %8414 = vmatprep.mubr.f32.mxu0 0.0
      %8415 = vmatmul.mubr.f32.gmra.mrb[0].mxu0 %v8305
      %v8416 = vpop.f32.mrb[0].mxu0
      %v8417 = vadd.f32 0.0, %v8416
      %v8418 = vpop.f32.mrb[0].mxu0
      %8419 = vdwg.mxu0
      %v8420 = vrcp.pop %v7754
      %v8421 = vrcp.pop %v7757
      %v8422 = vrcp.pop %v7760
      %v8423 = vrcp.pop %v7763
      %v8424 = vrcp.pop %v7766
      %v8425 = vrcp.pop %v7769
      %v8426 = vrcp.pop %v7772
      %v8427 = vrcp.pop %v7775
      %v8428 = vrcp.pop %v7778
      %v8429 = vrcp.pop %v7781
      %v8430 = vrcp.pop %v7784
      %v8431 = vrcp.pop %v7787
      %v8432 = vrcp.pop %v7790
      %v8433 = vrcp.pop %v7793
      %v8434 = vrcp.pop %v7796
      %v8435 = vrcp.pop %v7799
      %v8436 = vrcp.pop %v7802
      %v8437 = vrcp.pop %v7805
      %v8438 = vrcp.pop %v7808
      %v8439 = vrcp.pop %v7811
      %v8440 = vrcp.pop %v7814
      %v8441 = vrcp.pop %v7817
      %v8442 = vrcp.pop %v7820
      %v8443 = vrcp.pop %v7823
      %v8444 = vrcp.pop %v7826
      %v8445 = vrcp.pop %v7829
      %v8446 = vrcp.pop %v7832
      %v8447 = vrcp.pop %v7835
      %v8448 = vrcp.pop %v7838
      %v8449 = vrcp.pop %v7841
      %v8450 = vrcp.pop %v7844
      %v8451 = vrcp.pop %v7847
      %v8452 = vrcp.pop %v7850
      %v8453 = vrcp.pop %v7853
      %v8454 = vrcp.pop %v7856
      %v8455 = vrcp.pop %v7859
      %v8456 = vmul.f32 %v7957, %v8420
      %v8457 = vmul.f32 %v7962, %v8421
      %v8458 = vmul.f32 %v7967, %v8422
      %v8459 = vmul.f32 %v7972, %v8423
      %v8460 = vmul.f32 %v7977, %v8424
      %v8461 = vmul.f32 %v7982, %v8425
      %v8462 = vmul.f32 %v7987, %v8426
      %v8463 = vmul.f32 %v7992, %v8427
      %v8464 = vmul.f32 %v7997, %v8428
      %v8465 = vmul.f32 %v8097, %v8429
      %v8466 = vmul.f32 %v8102, %v8430
      %v8467 = vmul.f32 %v8107, %v8431
      %v8468 = vmul.f32 %v8112, %v8432
      %v8469 = vmul.f32 %v8117, %v8433
      %v8470 = vmul.f32 %v8122, %v8434
      %v8471 = vmul.f32 %v8127, %v8435
      %v8472 = vmul.f32 %v8132, %v8436
      %v8473 = vmul.f32 %v8137, %v8437
      %v8474 = vmul.f32 %v8237, %v8438
      %v8475 = vmul.f32 %v8242, %v8439
      %v8476 = vmul.f32 %v8247, %v8440
      %v8477 = vmul.f32 %v8252, %v8441
      %v8478 = vmul.f32 %v8257, %v8442
      %v8479 = vmul.f32 %v8262, %v8443
      %v8480 = vmul.f32 %v8267, %v8444
      %v8481 = vmul.f32 %v8272, %v8445
      %v8482 = vmul.f32 %v8277, %v8446
      %v8483 = vmul.f32 %v8377, %v8447
      %v8484 = vmul.f32 %v8382, %v8448
      %v8485 = vmul.f32 %v8387, %v8449
      %v8486 = vmul.f32 %v8392, %v8450
      %v8487 = vmul.f32 %v8397, %v8451
      %v8488 = vmul.f32 %v8402, %v8452
      %v8489 = vmul.f32 %v8407, %v8453
      %v8490 = vmul.f32 %v8412, %v8454
      %v8491 = vmul.f32 %v8417, %v8455
      %s8492 = scalar_lea.vmem %s9, 32
      %v8493 = vld [vmem:[%s8492] sm:$0xff]
      %v8494 = vld [vmem:[%s8492 + $0x8] sm:$0xff]
      %v8495 = vld [vmem:[%s8492 + $0x10] sm:$0xff]
      %v8496 = vld [vmem:[%s8492 + $0x18] sm:$0xff]
      %v8498 = vsel %vm2274, %v8456, 0
      %v8501 = vsel %vm2274, %v8457, 0
      %v8504 = vsel %vm2274, %v8458, 0
      %v8507 = vsel %vm2274, %v8459, 0
      %v8510 = vsel %vm2274, %v8460, 0
      %v8513 = vsel %vm2274, %v8461, 0
      %v8516 = vsel %vm2274, %v8462, 0
      %v8519 = vsel %vm2274, %v8463, 0
      %v8522 = vsel %vm2274, %v8464, 0
      %8524 = vmatprep.subr.mxu0 0.0
      %8525 = vmatpush1.msra.mxu0 %v8493
      %8526 = vmatprep.subr.mxu0 0.0
      %8527 = vmatpush1.msra.mxu0 0.0
      %8528 = vmatprep.subr.mxu0 0.0
      %8529 = vmatpush1.msra.mxu0 0.0
      %8530 = vmatprep.subr.mxu0 0.0
      %8531 = vmatpush1.msra.mxu0 0.0
      %8532 = vmatprep.subr.mxu0 0.0
      %8533 = vmatpush1.msra.mxu0 0.0
      %8534 = vmatprep.subr.mxu0 0.0
      %8535 = vmatpush1.msra.mxu0 0.0
      %8536 = vmatprep.subr.mxu0 0.0
      %8537 = vmatpush1.msra.mxu0 0.0
      %8538 = vmatprep.subr.mxu0 0.0
      %8539 = vmatpush1.msra.mxu0 0.0
      %8540 = vmatprep.subr.mxu0 0.0
      %8541 = vmatpush1.msra.mxu0 0.0
      %8542 = vmatprep.subr.mxu0 0.0
      %8543 = vmatpush1.msra.mxu0 0.0
      %8544 = vmatprep.subr.mxu0 0.0
      %8545 = vmatpush1.msra.mxu0 0.0
      %8546 = vmatprep.subr.mxu0 0.0
      %8547 = vmatpush1.msra.mxu0 0.0
      %8548 = vmatprep.subr.mxu0 0.0
      %8549 = vmatpush1.msra.mxu0 0.0
      %8550 = vmatprep.subr.mxu0 0.0
      %8551 = vmatpush1.msra.mxu0 0.0
      %8552 = vmatprep.subr.mxu0 0.0
      %8553 = vmatpush1.msra.mxu0 0.0
      %8554 = vmatprep.subr.mxu0 0.0
      %8555 = vmatpush1.msra.mxu0 0.0
      %8556 = vmatprep.subr.mxu0 0.0
      %8557 = vmatpush1.msra.mxu0 0.0
      %8558 = vmatprep.subr.mxu0 0.0
      %8559 = vmatpush1.msra.mxu0 0.0
      %8560 = vmatprep.subr.mxu0 0.0
      %8561 = vmatpush1.msra.mxu0 0.0
      %8562 = vmatprep.subr.mxu0 0.0
      %8563 = vmatpush1.msra.mxu0 0.0
      %8564 = vmatprep.subr.mxu0 0.0
      %8565 = vmatpush1.msra.mxu0 0.0
      %8566 = vmatprep.subr.mxu0 0.0
      %8567 = vmatpush1.msra.mxu0 0.0
      %8568 = vmatprep.subr.mxu0 0.0
      %8569 = vmatpush1.msra.mxu0 0.0
      %8570 = vmatprep.subr.mxu0 0.0
      %8571 = vmatpush1.msra.mxu0 0.0
      %8572 = vmatprep.subr.mxu0 0.0
      %8573 = vmatpush1.msra.mxu0 0.0
      %8574 = vmatprep.subr.mxu0 0.0
      %8575 = vmatpush1.msra.mxu0 0.0
      %8576 = vmatprep.subr.mxu0 0.0
      %8577 = vmatpush1.msra.mxu0 0.0
      %8578 = vmatprep.subr.mxu0 0.0
      %8579 = vmatpush1.msra.mxu0 0.0
      %8580 = vmatprep.subr.mxu0 0.0
      %8581 = vmatpush1.msra.mxu0 0.0
      %8582 = vmatprep.subr.mxu0 0.0
      %8583 = vmatpush1.msra.mxu0 0.0
      %8584 = vmatprep.subr.mxu0 0.0
      %8585 = vmatpush1.msra.mxu0 0.0
      %8586 = vmatprep.subr.mxu0 0.0
      %8587 = vmatpush1.msra.mxu0 0.0
      %8588 = vmatprep.mubr.f32.mxu0 0.0
      %8589 = vmatmul.mubr.f32.gmra.mrb[0].mxu0 %v8498
      %v8590 = vpop.f32.mrb[0].mxu0
      %v8591 = vadd.f32 0.0, %v8590
      %v8592 = vpop.f32.mrb[0].mxu0
      %8593 = vmatprep.mubr.f32.mxu0 0.0
      %8594 = vmatmul.mubr.f32.gmra.mrb[0].mxu0 %v8501
      %v8595 = vpop.f32.mrb[0].mxu0
      %v8596 = vadd.f32 0.0, %v8595
      %v8597 = vpop.f32.mrb[0].mxu0
      %8598 = vmatprep.mubr.f32.mxu0 0.0
      %8599 = vmatmul.mubr.f32.gmra.mrb[0].mxu0 %v8504
      %v8600 = vpop.f32.mrb[0].mxu0
      %v8601 = vadd.f32 0.0, %v8600
      %v8602 = vpop.f32.mrb[0].mxu0
      %8603 = vmatprep.mubr.f32.mxu0 0.0
      %8604 = vmatmul.mubr.f32.gmra.mrb[0].mxu0 %v8507
      %v8605 = vpop.f32.mrb[0].mxu0
      %v8606 = vadd.f32 0.0, %v8605
      %v8607 = vpop.f32.mrb[0].mxu0
      %8608 = vmatprep.mubr.f32.mxu0 0.0
      %8609 = vmatmul.mubr.f32.gmra.mrb[0].mxu0 %v8510
      %v8610 = vpop.f32.mrb[0].mxu0
      %v8611 = vadd.f32 0.0, %v8610
      %v8612 = vpop.f32.mrb[0].mxu0
      %8613 = vmatprep.mubr.f32.mxu0 0.0
      %8614 = vmatmul.mubr.f32.gmra.mrb[0].mxu0 %v8513
      %v8615 = vpop.f32.mrb[0].mxu0
      %v8616 = vadd.f32 0.0, %v8615
      %v8617 = vpop.f32.mrb[0].mxu0
      %8618 = vmatprep.mubr.f32.mxu0 0.0
      %8619 = vmatmul.mubr.f32.gmra.mrb[0].mxu0 %v8516
      %v8620 = vpop.f32.mrb[0].mxu0
      %v8621 = vadd.f32 0.0, %v8620
      %v8622 = vpop.f32.mrb[0].mxu0
      %8623 = vmatprep.mubr.f32.mxu0 0.0
      %8624 = vmatmul.mubr.f32.gmra.mrb[0].mxu0 %v8519
      %v8625 = vpop.f32.mrb[0].mxu0
      %v8626 = vadd.f32 0.0, %v8625
      %v8627 = vpop.f32.mrb[0].mxu0
      %8628 = vmatprep.mubr.f32.mxu0 0.0
      %8629 = vmatmul.mubr.f32.gmra.mrb[0].mxu0 %v8522
      %v8630 = vpop.f32.mrb[0].mxu0
      %v8631 = vadd.f32 0.0, %v8630
      %v8632 = vpop.f32.mrb[0].mxu0
      %8633 = vdwg.mxu0
      %v8635 = vsel %vm2274, %v8465, 0
      %v8638 = vsel %vm2274, %v8466, 0
      %v8641 = vsel %vm2274, %v8467, 0
      %v8644 = vsel %vm2274, %v8468, 0
      %v8647 = vsel %vm2274, %v8469, 0
      %v8650 = vsel %vm2274, %v8470, 0
      %v8653 = vsel %vm2274, %v8471, 0
      %v8656 = vsel %vm2274, %v8472, 0
      %v8659 = vsel %vm2274, %v8473, 0
      %8661 = vmatprep.subr.mxu0 0.0
      %8662 = vmatpush1.msra.mxu0 %v8494
      %8663 = vmatprep.subr.mxu0 0.0
      %8664 = vmatpush1.msra.mxu0 0.0
      %8665 = vmatprep.subr.mxu0 0.0
      %8666 = vmatpush1.msra.mxu0 0.0
      %8667 = vmatprep.subr.mxu0 0.0
      %8668 = vmatpush1.msra.mxu0 0.0
      %8669 = vmatprep.subr.mxu0 0.0
      %8670 = vmatpush1.msra.mxu0 0.0
      %8671 = vmatprep.subr.mxu0 0.0
      %8672 = vmatpush1.msra.mxu0 0.0
      %8673 = vmatprep.subr.mxu0 0.0
      %8674 = vmatpush1.msra.mxu0 0.0
      %8675 = vmatprep.subr.mxu0 0.0
      %8676 = vmatpush1.msra.mxu0 0.0
      %8677 = vmatprep.subr.mxu0 0.0
      %8678 = vmatpush1.msra.mxu0 0.0
      %8679 = vmatprep.subr.mxu0 0.0
      %8680 = vmatpush1.msra.mxu0 0.0
      %8681 = vmatprep.subr.mxu0 0.0
      %8682 = vmatpush1.msra.mxu0 0.0
      %8683 = vmatprep.subr.mxu0 0.0
      %8684 = vmatpush1.msra.mxu0 0.0
      %8685 = vmatprep.subr.mxu0 0.0
      %8686 = vmatpush1.msra.mxu0 0.0
      %8687 = vmatprep.subr.mxu0 0.0
      %8688 = vmatpush1.msra.mxu0 0.0
      %8689 = vmatprep.subr.mxu0 0.0
      %8690 = vmatpush1.msra.mxu0 0.0
      %8691 = vmatprep.subr.mxu0 0.0
      %8692 = vmatpush1.msra.mxu0 0.0
      %8693 = vmatprep.subr.mxu0 0.0
      %8694 = vmatpush1.msra.mxu0 0.0
      %8695 = vmatprep.subr.mxu0 0.0
      %8696 = vmatpush1.msra.mxu0 0.0
      %8697 = vmatprep.subr.mxu0 0.0
      %8698 = vmatpush1.msra.mxu0 0.0
      %8699 = vmatprep.subr.mxu0 0.0
      %8700 = vmatpush1.msra.mxu0 0.0
      %8701 = vmatprep.subr.mxu0 0.0
      %8702 = vmatpush1.msra.mxu0 0.0
      %8703 = vmatprep.subr.mxu0 0.0
      %8704 = vmatpush1.msra.mxu0 0.0
      %8705 = vmatprep.subr.mxu0 0.0
      %8706 = vmatpush1.msra.mxu0 0.0
      %8707 = vmatprep.subr.mxu0 0.0
      %8708 = vmatpush1.msra.mxu0 0.0
      %8709 = vmatprep.subr.mxu0 0.0
      %8710 = vmatpush1.msra.mxu0 0.0
      %8711 = vmatprep.subr.mxu0 0.0
      %8712 = vmatpush1.msra.mxu0 0.0
      %8713 = vmatprep.subr.mxu0 0.0
      %8714 = vmatpush1.msra.mxu0 0.0
      %8715 = vmatprep.subr.mxu0 0.0
      %8716 = vmatpush1.msra.mxu0 0.0
      %8717 = vmatprep.subr.mxu0 0.0
      %8718 = vmatpush1.msra.mxu0 0.0
      %8719 = vmatprep.subr.mxu0 0.0
      %8720 = vmatpush1.msra.mxu0 0.0
      %8721 = vmatprep.subr.mxu0 0.0
      %8722 = vmatpush1.msra.mxu0 0.0
      %8723 = vmatprep.subr.mxu0 0.0
      %8724 = vmatpush1.msra.mxu0 0.0
      %8725 = vmatprep.mubr.f32.mxu0 0.0
      %8726 = vmatmul.mubr.f32.gmra.mrb[0].mxu0 %v8635
      %v8727 = vpop.f32.mrb[0].mxu0
      %v8728 = vadd.f32 0.0, %v8727
      %v8729 = vpop.f32.mrb[0].mxu0
      %8730 = vmatprep.mubr.f32.mxu0 0.0
      %8731 = vmatmul.mubr.f32.gmra.mrb[0].mxu0 %v8638
      %v8732 = vpop.f32.mrb[0].mxu0
      %v8733 = vadd.f32 0.0, %v8732
      %v8734 = vpop.f32.mrb[0].mxu0
      %8735 = vmatprep.mubr.f32.mxu0 0.0
      %8736 = vmatmul.mubr.f32.gmra.mrb[0].mxu0 %v8641
      %v8737 = vpop.f32.mrb[0].mxu0
      %v8738 = vadd.f32 0.0, %v8737
      %v8739 = vpop.f32.mrb[0].mxu0
      %8740 = vmatprep.mubr.f32.mxu0 0.0
      %8741 = vmatmul.mubr.f32.gmra.mrb[0].mxu0 %v8644
      %v8742 = vpop.f32.mrb[0].mxu0
      %v8743 = vadd.f32 0.0, %v8742
      %v8744 = vpop.f32.mrb[0].mxu0
      %8745 = vmatprep.mubr.f32.mxu0 0.0
      %8746 = vmatmul.mubr.f32.gmra.mrb[0].mxu0 %v8647
      %v8747 = vpop.f32.mrb[0].mxu0
      %v8748 = vadd.f32 0.0, %v8747
      %v8749 = vpop.f32.mrb[0].mxu0
      %8750 = vmatprep.mubr.f32.mxu0 0.0
      %8751 = vmatmul.mubr.f32.gmra.mrb[0].mxu0 %v8650
      %v8752 = vpop.f32.mrb[0].mxu0
      %v8753 = vadd.f32 0.0, %v8752
      %v8754 = vpop.f32.mrb[0].mxu0
      %8755 = vmatprep.mubr.f32.mxu0 0.0
      %8756 = vmatmul.mubr.f32.gmra.mrb[0].mxu0 %v8653
      %v8757 = vpop.f32.mrb[0].mxu0
      %v8758 = vadd.f32 0.0, %v8757
      %v8759 = vpop.f32.mrb[0].mxu0
      %8760 = vmatprep.mubr.f32.mxu0 0.0
      %8761 = vmatmul.mubr.f32.gmra.mrb[0].mxu0 %v8656
      %v8762 = vpop.f32.mrb[0].mxu0
      %v8763 = vadd.f32 0.0, %v8762
      %v8764 = vpop.f32.mrb[0].mxu0
      %8765 = vmatprep.mubr.f32.mxu0 0.0
      %8766 = vmatmul.mubr.f32.gmra.mrb[0].mxu0 %v8659
      %v8767 = vpop.f32.mrb[0].mxu0
      %v8768 = vadd.f32 0.0, %v8767
      %v8769 = vpop.f32.mrb[0].mxu0
      %8770 = vdwg.mxu0
      %v8772 = vsel %vm2274, %v8474, 0
      %v8775 = vsel %vm2274, %v8475, 0
      %v8778 = vsel %vm2274, %v8476, 0
      %v8781 = vsel %vm2274, %v8477, 0
      %v8784 = vsel %vm2274, %v8478, 0
      %v8787 = vsel %vm2274, %v8479, 0
      %v8790 = vsel %vm2274, %v8480, 0
      %v8793 = vsel %vm2274, %v8481, 0
      %v8796 = vsel %vm2274, %v8482, 0
      %8798 = vmatprep.subr.mxu0 0.0
      %8799 = vmatpush1.msra.mxu0 %v8495
      %8800 = vmatprep.subr.mxu0 0.0
      %8801 = vmatpush1.msra.mxu0 0.0
      %8802 = vmatprep.subr.mxu0 0.0
      %8803 = vmatpush1.msra.mxu0 0.0
      %8804 = vmatprep.subr.mxu0 0.0
      %8805 = vmatpush1.msra.mxu0 0.0
      %8806 = vmatprep.subr.mxu0 0.0
      %8807 = vmatpush1.msra.mxu0 0.0
      %8808 = vmatprep.subr.mxu0 0.0
      %8809 = vmatpush1.msra.mxu0 0.0
      %8810 = vmatprep.subr.mxu0 0.0
      %8811 = vmatpush1.msra.mxu0 0.0
      %8812 = vmatprep.subr.mxu0 0.0
      %8813 = vmatpush1.msra.mxu0 0.0
      %8814 = vmatprep.subr.mxu0 0.0
      %8815 = vmatpush1.msra.mxu0 0.0
      %8816 = vmatprep.subr.mxu0 0.0
      %8817 = vmatpush1.msra.mxu0 0.0
      %8818 = vmatprep.subr.mxu0 0.0
      %8819 = vmatpush1.msra.mxu0 0.0
      %8820 = vmatprep.subr.mxu0 0.0
      %8821 = vmatpush1.msra.mxu0 0.0
      %8822 = vmatprep.subr.mxu0 0.0
      %8823 = vmatpush1.msra.mxu0 0.0
      %8824 = vmatprep.subr.mxu0 0.0
      %8825 = vmatpush1.msra.mxu0 0.0
      %8826 = vmatprep.subr.mxu0 0.0
      %8827 = vmatpush1.msra.mxu0 0.0
      %8828 = vmatprep.subr.mxu0 0.0
      %8829 = vmatpush1.msra.mxu0 0.0
      %8830 = vmatprep.subr.mxu0 0.0
      %8831 = vmatpush1.msra.mxu0 0.0
      %8832 = vmatprep.subr.mxu0 0.0
      %8833 = vmatpush1.msra.mxu0 0.0
      %8834 = vmatprep.subr.mxu0 0.0
      %8835 = vmatpush1.msra.mxu0 0.0
      %8836 = vmatprep.subr.mxu0 0.0
      %8837 = vmatpush1.msra.mxu0 0.0
      %8838 = vmatprep.subr.mxu0 0.0
      %8839 = vmatpush1.msra.mxu0 0.0
      %8840 = vmatprep.subr.mxu0 0.0
      %8841 = vmatpush1.msra.mxu0 0.0
      %8842 = vmatprep.subr.mxu0 0.0
      %8843 = vmatpush1.msra.mxu0 0.0
      %8844 = vmatprep.subr.mxu0 0.0
      %8845 = vmatpush1.msra.mxu0 0.0
      %8846 = vmatprep.subr.mxu0 0.0
      %8847 = vmatpush1.msra.mxu0 0.0
      %8848 = vmatprep.subr.mxu0 0.0
      %8849 = vmatpush1.msra.mxu0 0.0
      %8850 = vmatprep.subr.mxu0 0.0
      %8851 = vmatpush1.msra.mxu0 0.0
      %8852 = vmatprep.subr.mxu0 0.0
      %8853 = vmatpush1.msra.mxu0 0.0
      %8854 = vmatprep.subr.mxu0 0.0
      %8855 = vmatpush1.msra.mxu0 0.0
      %8856 = vmatprep.subr.mxu0 0.0
      %8857 = vmatpush1.msra.mxu0 0.0
      %8858 = vmatprep.subr.mxu0 0.0
      %8859 = vmatpush1.msra.mxu0 0.0
      %8860 = vmatprep.subr.mxu0 0.0
      %8861 = vmatpush1.msra.mxu0 0.0
      %8862 = vmatprep.mubr.f32.mxu0 0.0
      %8863 = vmatmul.mubr.f32.gmra.mrb[0].mxu0 %v8772
      %v8864 = vpop.f32.mrb[0].mxu0
      %v8865 = vadd.f32 0.0, %v8864
      %v8866 = vpop.f32.mrb[0].mxu0
      %8867 = vmatprep.mubr.f32.mxu0 0.0
      %8868 = vmatmul.mubr.f32.gmra.mrb[0].mxu0 %v8775
      %v8869 = vpop.f32.mrb[0].mxu0
      %v8870 = vadd.f32 0.0, %v8869
      %v8871 = vpop.f32.mrb[0].mxu0
      %8872 = vmatprep.mubr.f32.mxu0 0.0
      %8873 = vmatmul.mubr.f32.gmra.mrb[0].mxu0 %v8778
      %v8874 = vpop.f32.mrb[0].mxu0
      %v8875 = vadd.f32 0.0, %v8874
      %v8876 = vpop.f32.mrb[0].mxu0
      %8877 = vmatprep.mubr.f32.mxu0 0.0
      %8878 = vmatmul.mubr.f32.gmra.mrb[0].mxu0 %v8781
      %v8879 = vpop.f32.mrb[0].mxu0
      %v8880 = vadd.f32 0.0, %v8879
      %v8881 = vpop.f32.mrb[0].mxu0
      %8882 = vmatprep.mubr.f32.mxu0 0.0
      %8883 = vmatmul.mubr.f32.gmra.mrb[0].mxu0 %v8784
      %v8884 = vpop.f32.mrb[0].mxu0
      %v8885 = vadd.f32 0.0, %v8884
      %v8886 = vpop.f32.mrb[0].mxu0
      %8887 = vmatprep.mubr.f32.mxu0 0.0
      %8888 = vmatmul.mubr.f32.gmra.mrb[0].mxu0 %v8787
      %v8889 = vpop.f32.mrb[0].mxu0
      %v8890 = vadd.f32 0.0, %v8889
      %v8891 = vpop.f32.mrb[0].mxu0
      %8892 = vmatprep.mubr.f32.mxu0 0.0
      %8893 = vmatmul.mubr.f32.gmra.mrb[0].mxu0 %v8790
      %v8894 = vpop.f32.mrb[0].mxu0
      %v8895 = vadd.f32 0.0, %v8894
      %v8896 = vpop.f32.mrb[0].mxu0
      %8897 = vmatprep.mubr.f32.mxu0 0.0
      %8898 = vmatmul.mubr.f32.gmra.mrb[0].mxu0 %v8793
      %v8899 = vpop.f32.mrb[0].mxu0
      %v8900 = vadd.f32 0.0, %v8899
      %v8901 = vpop.f32.mrb[0].mxu0
      %8902 = vmatprep.mubr.f32.mxu0 0.0
      %8903 = vmatmul.mubr.f32.gmra.mrb[0].mxu0 %v8796
      %v8904 = vpop.f32.mrb[0].mxu0
      %v8905 = vadd.f32 0.0, %v8904
      %v8906 = vpop.f32.mrb[0].mxu0
      %8907 = vdwg.mxu0
      %v8909 = vsel %vm2274, %v8483, 0
      %v8912 = vsel %vm2274, %v8484, 0
      %v8915 = vsel %vm2274, %v8485, 0
      %v8918 = vsel %vm2274, %v8486, 0
      %v8921 = vsel %vm2274, %v8487, 0
      %v8924 = vsel %vm2274, %v8488, 0
      %v8927 = vsel %vm2274, %v8489, 0
      %v8930 = vsel %vm2274, %v8490, 0
      %v8933 = vsel %vm2274, %v8491, 0
      %8935 = vmatprep.subr.mxu0 0.0
      %8936 = vmatpush1.msra.mxu0 %v8496
      %8937 = vmatprep.subr.mxu0 0.0
      %8938 = vmatpush1.msra.mxu0 0.0
      %8939 = vmatprep.subr.mxu0 0.0
      %8940 = vmatpush1.msra.mxu0 0.0
      %8941 = vmatprep.subr.mxu0 0.0
      %8942 = vmatpush1.msra.mxu0 0.0
      %8943 = vmatprep.subr.mxu0 0.0
      %8944 = vmatpush1.msra.mxu0 0.0
      %8945 = vmatprep.subr.mxu0 0.0
      %8946 = vmatpush1.msra.mxu0 0.0
      %8947 = vmatprep.subr.mxu0 0.0
      %8948 = vmatpush1.msra.mxu0 0.0
      %8949 = vmatprep.subr.mxu0 0.0
      %8950 = vmatpush1.msra.mxu0 0.0
      %8951 = vmatprep.subr.mxu0 0.0
      %8952 = vmatpush1.msra.mxu0 0.0
      %8953 = vmatprep.subr.mxu0 0.0
      %8954 = vmatpush1.msra.mxu0 0.0
      %8955 = vmatprep.subr.mxu0 0.0
      %8956 = vmatpush1.msra.mxu0 0.0
      %8957 = vmatprep.subr.mxu0 0.0
      %8958 = vmatpush1.msra.mxu0 0.0
      %8959 = vmatprep.subr.mxu0 0.0
      %8960 = vmatpush1.msra.mxu0 0.0
      %8961 = vmatprep.subr.mxu0 0.0
      %8962 = vmatpush1.msra.mxu0 0.0
      %8963 = vmatprep.subr.mxu0 0.0
      %8964 = vmatpush1.msra.mxu0 0.0
      %8965 = vmatprep.subr.mxu0 0.0
      %8966 = vmatpush1.msra.mxu0 0.0
      %8967 = vmatprep.subr.mxu0 0.0
      %8968 = vmatpush1.msra.mxu0 0.0
      %8969 = vmatprep.subr.mxu0 0.0
      %8970 = vmatpush1.msra.mxu0 0.0
      %8971 = vmatprep.subr.mxu0 0.0
      %8972 = vmatpush1.msra.mxu0 0.0
      %8973 = vmatprep.subr.mxu0 0.0
      %8974 = vmatpush1.msra.mxu0 0.0
      %8975 = vmatprep.subr.mxu0 0.0
      %8976 = vmatpush1.msra.mxu0 0.0
      %8977 = vmatprep.subr.mxu0 0.0
      %8978 = vmatpush1.msra.mxu0 0.0
      %8979 = vmatprep.subr.mxu0 0.0
      %8980 = vmatpush1.msra.mxu0 0.0
      %8981 = vmatprep.subr.mxu0 0.0
      %8982 = vmatpush1.msra.mxu0 0.0
      %8983 = vmatprep.subr.mxu0 0.0
      %8984 = vmatpush1.msra.mxu0 0.0
      %8985 = vmatprep.subr.mxu0 0.0
      %8986 = vmatpush1.msra.mxu0 0.0
      %8987 = vmatprep.subr.mxu0 0.0
      %8988 = vmatpush1.msra.mxu0 0.0
      %8989 = vmatprep.subr.mxu0 0.0
      %8990 = vmatpush1.msra.mxu0 0.0
      %8991 = vmatprep.subr.mxu0 0.0
      %8992 = vmatpush1.msra.mxu0 0.0
      %8993 = vmatprep.subr.mxu0 0.0
      %8994 = vmatpush1.msra.mxu0 0.0
      %8995 = vmatprep.subr.mxu0 0.0
      %8996 = vmatpush1.msra.mxu0 0.0
      %8997 = vmatprep.subr.mxu0 0.0
      %8998 = vmatpush1.msra.mxu0 0.0
      %8999 = vmatprep.mubr.f32.mxu0 0.0
      %9000 = vmatmul.mubr.f32.gmra.mrb[0].mxu0 %v8909
      %v9001 = vpop.f32.mrb[0].mxu0
      %v9002 = vadd.f32 0.0, %v9001
      %v9003 = vpop.f32.mrb[0].mxu0
      %9004 = vmatprep.mubr.f32.mxu0 0.0
      %9005 = vmatmul.mubr.f32.gmra.mrb[0].mxu0 %v8912
      %v9006 = vpop.f32.mrb[0].mxu0
      %v9007 = vadd.f32 0.0, %v9006
      %v9008 = vpop.f32.mrb[0].mxu0
      %9009 = vmatprep.mubr.f32.mxu0 0.0
      %9010 = vmatmul.mubr.f32.gmra.mrb[0].mxu0 %v8915
      %v9011 = vpop.f32.mrb[0].mxu0
      %v9012 = vadd.f32 0.0, %v9011
      %v9013 = vpop.f32.mrb[0].mxu0
      %9014 = vmatprep.mubr.f32.mxu0 0.0
      %9015 = vmatmul.mubr.f32.gmra.mrb[0].mxu0 %v8918
      %v9016 = vpop.f32.mrb[0].mxu0
      %v9017 = vadd.f32 0.0, %v9016
      %v9018 = vpop.f32.mrb[0].mxu0
      %9019 = vmatprep.mubr.f32.mxu0 0.0
      %9020 = vmatmul.mubr.f32.gmra.mrb[0].mxu0 %v8921
      %v9021 = vpop.f32.mrb[0].mxu0
      %v9022 = vadd.f32 0.0, %v9021
      %v9023 = vpop.f32.mrb[0].mxu0
      %9024 = vmatprep.mubr.f32.mxu0 0.0
      %9025 = vmatmul.mubr.f32.gmra.mrb[0].mxu0 %v8924
      %v9026 = vpop.f32.mrb[0].mxu0
      %v9027 = vadd.f32 0.0, %v9026
      %v9028 = vpop.f32.mrb[0].mxu0
      %9029 = vmatprep.mubr.f32.mxu0 0.0
      %9030 = vmatmul.mubr.f32.gmra.mrb[0].mxu0 %v8927
      %v9031 = vpop.f32.mrb[0].mxu0
      %v9032 = vadd.f32 0.0, %v9031
      %v9033 = vpop.f32.mrb[0].mxu0
      %9034 = vmatprep.mubr.f32.mxu0 0.0
      %9035 = vmatmul.mubr.f32.gmra.mrb[0].mxu0 %v8930
      %v9036 = vpop.f32.mrb[0].mxu0
      %v9037 = vadd.f32 0.0, %v9036
      %v9038 = vpop.f32.mrb[0].mxu0
      %9039 = vmatprep.mubr.f32.mxu0 0.0
      %9040 = vmatmul.mubr.f32.gmra.mrb[0].mxu0 %v8933
      %v9041 = vpop.f32.mrb[0].mxu0
      %v9042 = vadd.f32 0.0, %v9041
      %v9043 = vpop.f32.mrb[0].mxu0
      %9044 = vdwg.mxu0
      %v9045 = vsel %vm729, %v8591, 0.0
      %v9046 = vsel %vm729, %v8728, 0.0
      %v9047 = vadd.f32 %v9045, %v9046
      %v9048 = vsel %vm729, %v8865, 0.0
      %v9049 = vadd.f32 %v9047, %v9048
      %v9050 = vsel %vm729, %v9002, 0.0
      %v9051 = vadd.f32 %v9049, %v9050
      %v9052 = vsel %vm729, %v8596, 0.0
      %v9053 = vsel %vm729, %v8733, 0.0
      %v9054 = vadd.f32 %v9052, %v9053
      %v9055 = vsel %vm729, %v8870, 0.0
      %v9056 = vadd.f32 %v9054, %v9055
      %v9057 = vsel %vm729, %v9007, 0.0
      %v9058 = vadd.f32 %v9056, %v9057
      %v9059 = vsel %vm729, %v8601, 0.0
      %v9060 = vsel %vm729, %v8738, 0.0
      %v9061 = vadd.f32 %v9059, %v9060
      %v9062 = vsel %vm729, %v8875, 0.0
      %v9063 = vadd.f32 %v9061, %v9062
      %v9064 = vsel %vm729, %v9012, 0.0
      %v9065 = vadd.f32 %v9063, %v9064
      %v9066 = vsel %vm729, %v8606, 0.0
      %v9067 = vsel %vm729, %v8743, 0.0
      %v9068 = vadd.f32 %v9066, %v9067
      %v9069 = vsel %vm729, %v8880, 0.0
      %v9070 = vadd.f32 %v9068, %v9069
      %v9071 = vsel %vm729, %v9017, 0.0
      %v9072 = vadd.f32 %v9070, %v9071
      %v9073 = vsel %vm729, %v8611, 0.0
      %v9074 = vsel %vm729, %v8748, 0.0
      %v9075 = vadd.f32 %v9073, %v9074
      %v9076 = vsel %vm729, %v8885, 0.0
      %v9077 = vadd.f32 %v9075, %v9076
      %v9078 = vsel %vm729, %v9022, 0.0
      %v9079 = vadd.f32 %v9077, %v9078
      %v9080 = vsel %vm729, %v8616, 0.0
      %v9081 = vsel %vm729, %v8753, 0.0
      %v9082 = vadd.f32 %v9080, %v9081
      %v9083 = vsel %vm729, %v8890, 0.0
      %v9084 = vadd.f32 %v9082, %v9083
      %v9085 = vsel %vm729, %v9027, 0.0
      %v9086 = vadd.f32 %v9084, %v9085
      %v9087 = vsel %vm729, %v8621, 0.0
      %v9088 = vsel %vm729, %v8758, 0.0
      %v9089 = vadd.f32 %v9087, %v9088
      %v9090 = vsel %vm729, %v8895, 0.0
      %v9091 = vadd.f32 %v9089, %v9090
      %v9092 = vsel %vm729, %v9032, 0.0
      %v9093 = vadd.f32 %v9091, %v9092
      %v9094 = vsel %vm729, %v8626, 0.0
      %v9095 = vsel %vm729, %v8763, 0.0
      %v9096 = vadd.f32 %v9094, %v9095
      %v9097 = vsel %vm729, %v8900, 0.0
      %v9098 = vadd.f32 %v9096, %v9097
      %v9099 = vsel %vm729, %v9037, 0.0
      %v9100 = vadd.f32 %v9098, %v9099
      %v9101 = vsel %vm754, %v8631, 0.0
      %v9102 = vsel %vm754, %v8768, 0.0
      %v9103 = vadd.f32 %v9101, %v9102
      %v9104 = vsel %vm754, %v8905, 0.0
      %v9105 = vadd.f32 %v9103, %v9104
      %v9106 = vsel %vm754, %v9042, 0.0
      %v9107 = vadd.f32 %v9105, %v9106
      %v9108 = vadd.f32 %v5286, %v9051
      %v9109 = vadd.f32 %v5287, %v9058
      %v9110 = vadd.f32 %v5288, %v9065
      %v9111 = vadd.f32 %v5289, %v9072
      %v9112 = vadd.f32 %v5290, %v9079
      %v9113 = vadd.f32 %v5291, %v9086
      %v9114 = vadd.f32 %v5292, %v9093
      %v9115 = vadd.f32 %v5293, %v9100
      %v9116 = vadd.f32 %v5294, %v9107
      %s9117 = scalar_lea.vmem %s10, 1
      %v9118 = vld [vmem:[%s9117] sm:$0x1]
      %v9120 = vlaneseq
      %v9121 = vshrl.u32 %v9120, 7
      %v9122 = vsub.s32 0, %v9121
      %v9123 = vrot.slane %v9118, %v9122
      %v9125 = vadd.f32 %v9108, %v9123
      %v9126 = vadd.f32 %v9109, %v9123
      %v9127 = vadd.f32 %v9110, %v9123
      %v9128 = vadd.f32 %v9111, %v9123
      %v9129 = vadd.f32 %v9112, %v9123
      %v9130 = vadd.f32 %v9113, %v9123
      %v9131 = vadd.f32 %v9114, %v9123
      %v9132 = vadd.f32 %v9115, %v9123
      %v9133 = vadd.f32 %v9116, %v9123
      %s9134 = scalar_lea.vmem %s11, 1
      %v9135 = vld [vmem:[%s9134] sm:$0x1]
      %s9136 = scalar_lea.vmem %s12, 1
      %v9137 = vld [vmem:[%s9136] sm:$0x1]
      %v9138 = vsel %vm729, %v9125, 0.0
      %9139 = vadd.xlane.f32.xlu0 %v9138
      %v9140 = vpop.xlane.xlu0 %9139
      %v9141 = vsel %vm729, %v9126, 0.0
      %9142 = vadd.xlane.f32.xlu0 %v9141
      %v9143 = vpop.xlane.xlu0 %9142
      %v9144 = vsel %vm729, %v9127, 0.0
      %9145 = vadd.xlane.f32.xlu0 %v9144
      %v9146 = vpop.xlane.xlu0 %9145
      %v9147 = vsel %vm729, %v9128, 0.0
      %9148 = vadd.xlane.f32.xlu0 %v9147
      %v9149 = vpop.xlane.xlu0 %9148
      %v9150 = vsel %vm729, %v9129, 0.0
      %9151 = vadd.xlane.f32.xlu0 %v9150
      %v9152 = vpop.xlane.xlu0 %9151
      %v9153 = vsel %vm729, %v9130, 0.0
      %9154 = vadd.xlane.f32.xlu0 %v9153
      %v9155 = vpop.xlane.xlu0 %9154
      %v9156 = vsel %vm729, %v9131, 0.0
      %9157 = vadd.xlane.f32.xlu0 %v9156
      %v9158 = vpop.xlane.xlu0 %9157
      %v9159 = vsel %vm729, %v9132, 0.0
      %9160 = vadd.xlane.f32.xlu0 %v9159
      %v9161 = vpop.xlane.xlu0 %9160
      %v9162 = vsel %vm754, %v9133, 0.0
      %9163 = vadd.xlane.f32.xlu0 %v9162
      %v9164 = vpop.xlane.xlu0 %9163
      %v9165 = vmul.f32 %v9140, %v758
      %v9166 = vmul.f32 %v9143, %v758
      %v9167 = vmul.f32 %v9146, %v758
      %v9168 = vmul.f32 %v9149, %v758
      %v9169 = vmul.f32 %v9152, %v758
      %v9170 = vmul.f32 %v9155, %v758
      %v9171 = vmul.f32 %v9158, %v758
      %v9172 = vmul.f32 %v9161, %v758
      %v9173 = vmul.f32 %v9164, %v758
      %v9174 = vsub.f32 %v9125, %v9165
      %v9175 = vsub.f32 %v9126, %v9166
      %v9176 = vsub.f32 %v9127, %v9167
      %v9177 = vsub.f32 %v9128, %v9168
      %v9178 = vsub.f32 %v9129, %v9169
      %v9179 = vsub.f32 %v9130, %v9170
      %v9180 = vsub.f32 %v9131, %v9171
      %v9181 = vsub.f32 %v9132, %v9172
      %v9182 = vsub.f32 %v9133, %v9173
      %v9183 = vmul.f32 %v9174, %v9174
      %v9184 = vmul.f32 %v9175, %v9175
      %v9185 = vmul.f32 %v9176, %v9176
      %v9186 = vmul.f32 %v9177, %v9177
      %v9187 = vmul.f32 %v9178, %v9178
      %v9188 = vmul.f32 %v9179, %v9179
      %v9189 = vmul.f32 %v9180, %v9180
      %v9190 = vmul.f32 %v9181, %v9181
      %v9191 = vmul.f32 %v9182, %v9182
      %v9192 = vsel %vm729, %v9183, 0.0
      %9193 = vadd.xlane.f32.xlu0 %v9192
      %v9194 = vpop.xlane.xlu0 %9193
      %v9195 = vsel %vm729, %v9184, 0.0
      %9196 = vadd.xlane.f32.xlu0 %v9195
      %v9197 = vpop.xlane.xlu0 %9196
      %v9198 = vsel %vm729, %v9185, 0.0
      %9199 = vadd.xlane.f32.xlu0 %v9198
      %v9200 = vpop.xlane.xlu0 %9199
      %v9201 = vsel %vm729, %v9186, 0.0
      %9202 = vadd.xlane.f32.xlu0 %v9201
      %v9203 = vpop.xlane.xlu0 %9202
      %v9204 = vsel %vm729, %v9187, 0.0
      %9205 = vadd.xlane.f32.xlu0 %v9204
      %v9206 = vpop.xlane.xlu0 %9205
      %v9207 = vsel %vm729, %v9188, 0.0
      %9208 = vadd.xlane.f32.xlu0 %v9207
      %v9209 = vpop.xlane.xlu0 %9208
      %v9210 = vsel %vm729, %v9189, 0.0
      %9211 = vadd.xlane.f32.xlu0 %v9210
      %v9212 = vpop.xlane.xlu0 %9211
      %v9213 = vsel %vm729, %v9190, 0.0
      %9214 = vadd.xlane.f32.xlu0 %v9213
      %v9215 = vpop.xlane.xlu0 %9214
      %v9216 = vsel %vm754, %v9191, 0.0
      %9217 = vadd.xlane.f32.xlu0 %v9216
      %v9218 = vpop.xlane.xlu0 %9217
      %v9219 = vmul.f32 %v9194, %v758
      %v9220 = vmul.f32 %v9197, %v758
      %v9221 = vmul.f32 %v9200, %v758
      %v9222 = vmul.f32 %v9203, %v758
      %v9223 = vmul.f32 %v9206, %v758
      %v9224 = vmul.f32 %v9209, %v758
      %v9225 = vmul.f32 %v9212, %v758
      %v9226 = vmul.f32 %v9215, %v758
      %v9227 = vmul.f32 %v9218, %v758
      %v9228 = vadd.f32 %v9219, 1e-05
      %v9229 = vadd.f32 %v9220, 1e-05
      %v9230 = vadd.f32 %v9221, 1e-05
      %v9231 = vadd.f32 %v9222, 1e-05
      %v9232 = vadd.f32 %v9223, 1e-05
      %v9233 = vadd.f32 %v9224, 1e-05
      %v9234 = vadd.f32 %v9225, 1e-05
      %v9235 = vadd.f32 %v9226, 1e-05
      %v9236 = vadd.f32 %v9227, 1e-05
      %v9237 = vrsqrt.pop %v9228
      %v9238 = vrsqrt.pop %v9229
      %v9239 = vrsqrt.pop %v9230
      %v9240 = vrsqrt.pop %v9231
      %v9241 = vrsqrt.pop %v9232
      %v9242 = vrsqrt.pop %v9233
      %v9243 = vrsqrt.pop %v9234
      %v9244 = vrsqrt.pop %v9235
      %v9245 = vrsqrt.pop %v9236
      %v9246 = vmul.f32 %v9174, %v9237
      %v9247 = vmul.f32 %v9175, %v9238
      %v9248 = vmul.f32 %v9176, %v9239
      %v9249 = vmul.f32 %v9177, %v9240
      %v9250 = vmul.f32 %v9178, %v9241
      %v9251 = vmul.f32 %v9179, %v9242
      %v9252 = vmul.f32 %v9180, %v9243
      %v9253 = vmul.f32 %v9181, %v9244
      %v9254 = vmul.f32 %v9182, %v9245
      %v9256 = vlaneseq
      %v9257 = vshrl.u32 %v9256, 7
      %v9258 = vsub.s32 0, %v9257
      %v9259 = vrot.slane %v9135, %v9258
      %v9261 = vmul.f32 %v9246, %v9259
      %v9262 = vmul.f32 %v9247, %v9259
      %v9263 = vmul.f32 %v9248, %v9259
      %v9264 = vmul.f32 %v9249, %v9259
      %v9265 = vmul.f32 %v9250, %v9259
      %v9266 = vmul.f32 %v9251, %v9259
      %v9267 = vmul.f32 %v9252, %v9259
      %v9268 = vmul.f32 %v9253, %v9259
      %v9269 = vmul.f32 %v9254, %v9259
      %v9271 = vlaneseq
      %v9272 = vshrl.u32 %v9271, 7
      %v9273 = vsub.s32 0, %v9272
      %v9274 = vrot.slane %v9137, %v9273
      %v9276 = vadd.f32 %v9261, %v9274
      %v9277 = vadd.f32 %v9262, %v9274
      %v9278 = vadd.f32 %v9263, %v9274
      %v9279 = vadd.f32 %v9264, %v9274
      %v9280 = vadd.f32 %v9265, %v9274
      %v9281 = vadd.f32 %v9266, %v9274
      %v9282 = vadd.f32 %v9267, %v9274
      %v9283 = vadd.f32 %v9268, %v9274
      %v9284 = vadd.f32 %v9269, %v9274
      %s9285 = scalar_lea.vmem %s13, 32
      %v9286 = vld [vmem:[%s9285] sm:$0xff]
      %v9287 = vld [vmem:[%s9285 + $0x8] sm:$0xff]
      %v9288 = vld [vmem:[%s9285 + $0x10] sm:$0xff]
      %v9289 = vld [vmem:[%s9285 + $0x18] sm:$0xff]
      %s9290 = scalar_lea.vmem %s14, 1
      %v9291 = vld [vmem:[%s9290] sm:$0x1]
      %v9293 = vlaneseq
      %v9294 = vshrl.u32 %v9293, 7
      %v9295 = vsub.s32 0, %v9294
      %v9296 = vrot.slane %v9291, %v9295
      %v9299 = vsel %vm729, %v9276, 0
      %v9302 = vsel %vm729, %v9277, 0
      %v9305 = vsel %vm729, %v9278, 0
      %v9308 = vsel %vm729, %v9279, 0
      %v9311 = vsel %vm729, %v9280, 0
      %v9314 = vsel %vm729, %v9281, 0
      %v9317 = vsel %vm729, %v9282, 0
      %v9320 = vsel %vm729, %v9283, 0
      %v9323 = vsel %vm729, %v9284, 0
      %9325 = vmatprep.subr.mxu0 0.0
      %9326 = vmatpush1.msra.mxu0 %v9286
      %9327 = vmatprep.subr.mxu0 0.0
      %9328 = vmatpush1.msra.mxu0 %v9287
      %9329 = vmatprep.subr.mxu0 0.0
      %9330 = vmatpush1.msra.mxu0 %v9288
      %9331 = vmatprep.subr.mxu0 0.0
      %9332 = vmatpush1.msra.mxu0 %v9289
      %9333 = vmatprep.subr.mxu0 0.0
      %9334 = vmatpush1.msra.mxu0 0.0
      %9335 = vmatprep.subr.mxu0 0.0
      %9336 = vmatpush1.msra.mxu0 0.0
      %9337 = vmatprep.subr.mxu0 0.0
      %9338 = vmatpush1.msra.mxu0 0.0
      %9339 = vmatprep.subr.mxu0 0.0
      %9340 = vmatpush1.msra.mxu0 0.0
      %9341 = vmatprep.subr.mxu0 0.0
      %9342 = vmatpush1.msra.mxu0 0.0
      %9343 = vmatprep.subr.mxu0 0.0
      %9344 = vmatpush1.msra.mxu0 0.0
      %9345 = vmatprep.subr.mxu0 0.0
      %9346 = vmatpush1.msra.mxu0 0.0
      %9347 = vmatprep.subr.mxu0 0.0
      %9348 = vmatpush1.msra.mxu0 0.0
      %9349 = vmatprep.subr.mxu0 0.0
      %9350 = vmatpush1.msra.mxu0 0.0
      %9351 = vmatprep.subr.mxu0 0.0
      %9352 = vmatpush1.msra.mxu0 0.0
      %9353 = vmatprep.subr.mxu0 0.0
      %9354 = vmatpush1.msra.mxu0 0.0
      %9355 = vmatprep.subr.mxu0 0.0
      %9356 = vmatpush1.msra.mxu0 0.0
      %9357 = vmatprep.subr.mxu0 0.0
      %9358 = vmatpush1.msra.mxu0 0.0
      %9359 = vmatprep.subr.mxu0 0.0
      %9360 = vmatpush1.msra.mxu0 0.0
      %9361 = vmatprep.subr.mxu0 0.0
      %9362 = vmatpush1.msra.mxu0 0.0
      %9363 = vmatprep.subr.mxu0 0.0
      %9364 = vmatpush1.msra.mxu0 0.0
      %9365 = vmatprep.subr.mxu0 0.0
      %9366 = vmatpush1.msra.mxu0 0.0
      %9367 = vmatprep.subr.mxu0 0.0
      %9368 = vmatpush1.msra.mxu0 0.0
      %9369 = vmatprep.subr.mxu0 0.0
      %9370 = vmatpush1.msra.mxu0 0.0
      %9371 = vmatprep.subr.mxu0 0.0
      %9372 = vmatpush1.msra.mxu0 0.0
      %9373 = vmatprep.subr.mxu0 0.0
      %9374 = vmatpush1.msra.mxu0 0.0
      %9375 = vmatprep.subr.mxu0 0.0
      %9376 = vmatpush1.msra.mxu0 0.0
      %9377 = vmatprep.subr.mxu0 0.0
      %9378 = vmatpush1.msra.mxu0 0.0
      %9379 = vmatprep.subr.mxu0 0.0
      %9380 = vmatpush1.msra.mxu0 0.0
      %9381 = vmatprep.subr.mxu0 0.0
      %9382 = vmatpush1.msra.mxu0 0.0
      %9383 = vmatprep.subr.mxu0 0.0
      %9384 = vmatpush1.msra.mxu0 0.0
      %9385 = vmatprep.subr.mxu0 0.0
      %9386 = vmatpush1.msra.mxu0 0.0
      %9387 = vmatprep.subr.mxu0 0.0
      %9388 = vmatpush1.msra.mxu0 0.0
      %9389 = vmatprep.mubr.f32.mxu0 0.0
      %9390 = vmatmul.mubr.f32.gmra.mrb[0].mxu0 %v9299
      %v9391 = vpop.f32.mrb[0].mxu0
      %v9392 = vadd.f32 %v9296, %v9391
      %v9393 = vpop.f32.mrb[0].mxu0
      %9394 = vmatprep.mubr.f32.mxu0 0.0
      %9395 = vmatmul.mubr.f32.gmra.mrb[0].mxu0 %v9302
      %v9396 = vpop.f32.mrb[0].mxu0
      %v9397 = vadd.f32 %v9296, %v9396
      %v9398 = vpop.f32.mrb[0].mxu0
      %9399 = vmatprep.mubr.f32.mxu0 0.0
      %9400 = vmatmul.mubr.f32.gmra.mrb[0].mxu0 %v9305
      %v9401 = vpop.f32.mrb[0].mxu0
      %v9402 = vadd.f32 %v9296, %v9401
      %v9403 = vpop.f32.mrb[0].mxu0
      %9404 = vmatprep.mubr.f32.mxu0 0.0
      %9405 = vmatmul.mubr.f32.gmra.mrb[0].mxu0 %v9308
      %v9406 = vpop.f32.mrb[0].mxu0
      %v9407 = vadd.f32 %v9296, %v9406
      %v9408 = vpop.f32.mrb[0].mxu0
      %9409 = vmatprep.mubr.f32.mxu0 0.0
      %9410 = vmatmul.mubr.f32.gmra.mrb[0].mxu0 %v9311
      %v9411 = vpop.f32.mrb[0].mxu0
      %v9412 = vadd.f32 %v9296, %v9411
      %v9413 = vpop.f32.mrb[0].mxu0
      %9414 = vmatprep.mubr.f32.mxu0 0.0
      %9415 = vmatmul.mubr.f32.gmra.mrb[0].mxu0 %v9314
      %v9416 = vpop.f32.mrb[0].mxu0
      %v9417 = vadd.f32 %v9296, %v9416
      %v9418 = vpop.f32.mrb[0].mxu0
      %9419 = vmatprep.mubr.f32.mxu0 0.0
      %9420 = vmatmul.mubr.f32.gmra.mrb[0].mxu0 %v9317
      %v9421 = vpop.f32.mrb[0].mxu0
      %v9422 = vadd.f32 %v9296, %v9421
      %v9423 = vpop.f32.mrb[0].mxu0
      %9424 = vmatprep.mubr.f32.mxu0 0.0
      %9425 = vmatmul.mubr.f32.gmra.mrb[0].mxu0 %v9320
      %v9426 = vpop.f32.mrb[0].mxu0
      %v9427 = vadd.f32 %v9296, %v9426
      %v9428 = vpop.f32.mrb[0].mxu0
      %9429 = vmatprep.mubr.f32.mxu0 0.0
      %9430 = vmatmul.mubr.f32.gmra.mrb[0].mxu0 %v9323
      %v9431 = vpop.f32.mrb[0].mxu0
      %v9432 = vadd.f32 %v9296, %v9431
      %v9433 = vpop.f32.mrb[0].mxu0
      %9434 = vdwg.mxu0
      %v9435 = vmul.f32 %v9392, 0.5
      %v9436 = vmul.f32 %v9397, 0.5
      %v9437 = vmul.f32 %v9402, 0.5
      %v9438 = vmul.f32 %v9407, 0.5
      %v9439 = vmul.f32 %v9412, 0.5
      %v9440 = vmul.f32 %v9417, 0.5
      %v9441 = vmul.f32 %v9422, 0.5
      %v9442 = vmul.f32 %v9427, 0.5
      %v9443 = vmul.f32 %v9432, 0.5
      %v9444 = vmul.f32 %v9392, 0.70710677
      %v9445 = vmul.f32 %v9397, 0.70710677
      %v9446 = vmul.f32 %v9402, 0.70710677
      %v9447 = vmul.f32 %v9407, 0.70710677
      %v9448 = vmul.f32 %v9412, 0.70710677
      %v9449 = vmul.f32 %v9417, 0.70710677
      %v9450 = vmul.f32 %v9422, 0.70710677
      %v9451 = vmul.f32 %v9427, 0.70710677
      %v9452 = vmul.f32 %v9432, 0.70710677
      %v9453 = vmax.f32 %v9444, -4.0
      %v9454 = vmax.f32 %v9445, -4.0
      %v9455 = vmax.f32 %v9446, -4.0
      %v9456 = vmax.f32 %v9447, -4.0
      %v9457 = vmax.f32 %v9448, -4.0
      %v9458 = vmax.f32 %v9449, -4.0
      %v9459 = vmax.f32 %v9450, -4.0
      %v9460 = vmax.f32 %v9451, -4.0
      %v9461 = vmax.f32 %v9452, -4.0
      %v9462 = vmin.f32 %v9453, 4.0
      %v9463 = vmin.f32 %v9454, 4.0
      %v9464 = vmin.f32 %v9455, 4.0
      %v9465 = vmin.f32 %v9456, 4.0
      %v9466 = vmin.f32 %v9457, 4.0
      %v9467 = vmin.f32 %v9458, 4.0
      %v9468 = vmin.f32 %v9459, 4.0
      %v9469 = vmin.f32 %v9460, 4.0
      %v9470 = vmin.f32 %v9461, 4.0
      %v9471 = vmul.f32 %v9462, %v9462
      %v9472 = vmul.f32 %v9463, %v9463
      %v9473 = vmul.f32 %v9464, %v9464
      %v9474 = vmul.f32 %v9465, %v9465
      %v9475 = vmul.f32 %v9466, %v9466
      %v9476 = vmul.f32 %v9467, %v9467
      %v9477 = vmul.f32 %v9468, %v9468
      %v9478 = vmul.f32 %v9469, %v9469
      %v9479 = vmul.f32 %v9470, %v9470
      %v9480 = vmul.f32 %v9471, -2.7261424e-10
      %v9481 = vmul.f32 %v9472, -2.7261424e-10
      %v9482 = vmul.f32 %v9473, -2.7261424e-10
      %v9483 = vmul.f32 %v9474, -2.7261424e-10
      %v9484 = vmul.f32 %v9475, -2.7261424e-10
      %v9485 = vmul.f32 %v9476, -2.7261424e-10
      %v9486 = vmul.f32 %v9477, -2.7261424e-10
      %v9487 = vmul.f32 %v9478, -2.7261424e-10
      %v9488 = vmul.f32 %v9479, -2.7261424e-10
      %v9489 = vadd.f32 %v9480, 2.7706815e-08
      %v9490 = vadd.f32 %v9481, 2.7706815e-08
      %v9491 = vadd.f32 %v9482, 2.7706815e-08
      %v9492 = vadd.f32 %v9483, 2.7706815e-08
      %v9493 = vadd.f32 %v9484, 2.7706815e-08
      %v9494 = vadd.f32 %v9485, 2.7706815e-08
      %v9495 = vadd.f32 %v9486, 2.7706815e-08
      %v9496 = vadd.f32 %v9487, 2.7706815e-08
      %v9497 = vadd.f32 %v9488, 2.7706815e-08
      %v9498 = vmul.f32 %v9489, %v9471
      %v9499 = vmul.f32 %v9490, %v9472
      %v9500 = vmul.f32 %v9491, %v9473
      %v9501 = vmul.f32 %v9492, %v9474
      %v9502 = vmul.f32 %v9493, %v9475
      %v9503 = vmul.f32 %v9494, %v9476
      %v9504 = vmul.f32 %v9495, %v9477
      %v9505 = vmul.f32 %v9496, %v9478
      %v9506 = vmul.f32 %v9497, %v9479
      %v9507 = vadd.f32 %v9498, -2.101024e-06
      %v9508 = vadd.f32 %v9499, -2.101024e-06
      %v9509 = vadd.f32 %v9500, -2.101024e-06
      %v9510 = vadd.f32 %v9501, -2.101024e-06
      %v9511 = vadd.f32 %v9502, -2.101024e-06
      %v9512 = vadd.f32 %v9503, -2.101024e-06
      %v9513 = vadd.f32 %v9504, -2.101024e-06
      %v9514 = vadd.f32 %v9505, -2.101024e-06
      %v9515 = vadd.f32 %v9506, -2.101024e-06
      %v9516 = vmul.f32 %v9507, %v9471
      %v9517 = vmul.f32 %v9508, %v9472
      %v9518 = vmul.f32 %v9509, %v9473
      %v9519 = vmul.f32 %v9510, %v9474
      %v9520 = vmul.f32 %v9511, %v9475
      %v9521 = vmul.f32 %v9512, %v9476
      %v9522 = vmul.f32 %v9513, %v9477
      %v9523 = vmul.f32 %v9514, %v9478
      %v9524 = vmul.f32 %v9515, %v9479
      %v9525 = vadd.f32 %v9516, -5.6925062e-05
      %v9526 = vadd.f32 %v9517, -5.6925062e-05
      %v9527 = vadd.f32 %v9518, -5.6925062e-05
      %v9528 = vadd.f32 %v9519, -5.6925062e-05
      %v9529 = vadd.f32 %v9520, -5.6925062e-05
      %v9530 = vadd.f32 %v9521, -5.6925062e-05
      %v9531 = vadd.f32 %v9522, -5.6925062e-05
      %v9532 = vadd.f32 %v9523, -5.6925062e-05
      %v9533 = vadd.f32 %v9524, -5.6925062e-05
      %v9534 = vmul.f32 %v9525, %v9471
      %v9535 = vmul.f32 %v9526, %v9472
      %v9536 = vmul.f32 %v9527, %v9473
      %v9537 = vmul.f32 %v9528, %v9474
      %v9538 = vmul.f32 %v9529, %v9475
      %v9539 = vmul.f32 %v9530, %v9476
      %v9540 = vmul.f32 %v9531, %v9477
      %v9541 = vmul.f32 %v9532, %v9478
      %v9542 = vmul.f32 %v9533, %v9479
      %v9543 = vadd.f32 %v9534, -0.00073499064
      %v9544 = vadd.f32 %v9535, -0.00073499064
      %v9545 = vadd.f32 %v9536, -0.00073499064
      %v9546 = vadd.f32 %v9537, -0.00073499064
      %v9547 = vadd.f32 %v9538, -0.00073499064
      %v9548 = vadd.f32 %v9539, -0.00073499064
      %v9549 = vadd.f32 %v9540, -0.00073499064
      %v9550 = vadd.f32 %v9541, -0.00073499064
      %v9551 = vadd.f32 %v9542, -0.00073499064
      %v9552 = vmul.f32 %v9543, %v9471
      %v9553 = vmul.f32 %v9544, %v9472
      %v9554 = vmul.f32 %v9545, %v9473
      %v9555 = vmul.f32 %v9546, %v9474
      %v9556 = vmul.f32 %v9547, %v9475
      %v9557 = vmul.f32 %v9548, %v9476
      %v9558 = vmul.f32 %v9549, %v9477
      %v9559 = vmul.f32 %v9550, %v9478
      %v9560 = vmul.f32 %v9551, %v9479
      %v9561 = vadd.f32 %v9552, -0.0029546
      %v9562 = vadd.f32 %v9553, -0.0029546
      %v9563 = vadd.f32 %v9554, -0.0029546
      %v9564 = vadd.f32 %v9555, -0.0029546
      %v9565 = vadd.f32 %v9556, -0.0029546
      %v9566 = vadd.f32 %v9557, -0.0029546
      %v9567 = vadd.f32 %v9558, -0.0029546
      %v9568 = vadd.f32 %v9559, -0.0029546
      %v9569 = vadd.f32 %v9560, -0.0029546
      %v9570 = vmul.f32 %v9561, %v9471
      %v9571 = vmul.f32 %v9562, %v9472
      %v9572 = vmul.f32 %v9563, %v9473
      %v9573 = vmul.f32 %v9564, %v9474
      %v9574 = vmul.f32 %v9565, %v9475
      %v9575 = vmul.f32 %v9566, %v9476
      %v9576 = vmul.f32 %v9567, %v9477
      %v9577 = vmul.f32 %v9568, %v9478
      %v9578 = vmul.f32 %v9569, %v9479
      %v9579 = vadd.f32 %v9570, -0.016096033
      %v9580 = vadd.f32 %v9571, -0.016096033
      %v9581 = vadd.f32 %v9572, -0.016096033
      %v9582 = vadd.f32 %v9573, -0.016096033
      %v9583 = vadd.f32 %v9574, -0.016096033
      %v9584 = vadd.f32 %v9575, -0.016096033
      %v9585 = vadd.f32 %v9576, -0.016096033
      %v9586 = vadd.f32 %v9577, -0.016096033
      %v9587 = vadd.f32 %v9578, -0.016096033
      %v9588 = vmul.f32 %v9471, -1.45660715e-05
      %v9589 = vmul.f32 %v9472, -1.45660715e-05
      %v9590 = vmul.f32 %v9473, -1.45660715e-05
      %v9591 = vmul.f32 %v9474, -1.45660715e-05
      %v9592 = vmul.f32 %v9475, -1.45660715e-05
      %v9593 = vmul.f32 %v9476, -1.45660715e-05
      %v9594 = vmul.f32 %v9477, -1.45660715e-05
      %v9595 = vmul.f32 %v9478, -1.45660715e-05
      %v9596 = vmul.f32 %v9479, -1.45660715e-05
      %v9597 = vadd.f32 %v9588, -0.00021337405
      %v9598 = vadd.f32 %v9589, -0.00021337405
      %v9599 = vadd.f32 %v9590, -0.00021337405
      %v9600 = vadd.f32 %v9591, -0.00021337405
      %v9601 = vadd.f32 %v9592, -0.00021337405
      %v9602 = vadd.f32 %v9593, -0.00021337405
      %v9603 = vadd.f32 %v9594, -0.00021337405
      %v9604 = vadd.f32 %v9595, -0.00021337405
      %v9605 = vadd.f32 %v9596, -0.00021337405
      %v9606 = vmul.f32 %v9597, %v9471
      %v9607 = vmul.f32 %v9598, %v9472
      %v9608 = vmul.f32 %v9599, %v9473
      %v9609 = vmul.f32 %v9600, %v9474
      %v9610 = vmul.f32 %v9601, %v9475
      %v9611 = vmul.f32 %v9602, %v9476
      %v9612 = vmul.f32 %v9603, %v9477
      %v9613 = vmul.f32 %v9604, %v9478
      %v9614 = vmul.f32 %v9605, %v9479
      %v9615 = vadd.f32 %v9606, -0.001682827
      %v9616 = vadd.f32 %v9607, -0.001682827
      %v9617 = vadd.f32 %v9608, -0.001682827
      %v9618 = vadd.f32 %v9609, -0.001682827
      %v9619 = vadd.f32 %v9610, -0.001682827
      %v9620 = vadd.f32 %v9611, -0.001682827
      %v9621 = vadd.f32 %v9612, -0.001682827
      %v9622 = vadd.f32 %v9613, -0.001682827
      %v9623 = vadd.f32 %v9614, -0.001682827
      %v9624 = vmul.f32 %v9615, %v9471
      %v9625 = vmul.f32 %v9616, %v9472
      %v9626 = vmul.f32 %v9617, %v9473
      %v9627 = vmul.f32 %v9618, %v9474
      %v9628 = vmul.f32 %v9619, %v9475
      %v9629 = vmul.f32 %v9620, %v9476
      %v9630 = vmul.f32 %v9621, %v9477
      %v9631 = vmul.f32 %v9622, %v9478
      %v9632 = vmul.f32 %v9623, %v9479
      %v9633 = vadd.f32 %v9624, -0.0073733293
      %v9634 = vadd.f32 %v9625, -0.0073733293
      %v9635 = vadd.f32 %v9626, -0.0073733293
      %v9636 = vadd.f32 %v9627, -0.0073733293
      %v9637 = vadd.f32 %v9628, -0.0073733293
      %v9638 = vadd.f32 %v9629, -0.0073733293
      %v9639 = vadd.f32 %v9630, -0.0073733293
      %v9640 = vadd.f32 %v9631, -0.0073733293
      %v9641 = vadd.f32 %v9632, -0.0073733293
      %v9642 = vmul.f32 %v9633, %v9471
      %v9643 = vmul.f32 %v9634, %v9472
      %v9644 = vmul.f32 %v9635, %v9473
      %v9645 = vmul.f32 %v9636, %v9474
      %v9646 = vmul.f32 %v9637, %v9475
      %v9647 = vmul.f32 %v9638, %v9476
      %v9648 = vmul.f32 %v9639, %v9477
      %v9649 = vmul.f32 %v9640, %v9478
      %v9650 = vmul.f32 %v9641, %v9479
      %v9651 = vadd.f32 %v9642, -0.014264739
      %v9652 = vadd.f32 %v9643, -0.014264739
      %v9653 = vadd.f32 %v9644, -0.014264739
      %v9654 = vadd.f32 %v9645, -0.014264739
      %v9655 = vadd.f32 %v9646, -0.014264739
      %v9656 = vadd.f32 %v9647, -0.014264739
      %v9657 = vadd.f32 %v9648, -0.014264739
      %v9658 = vadd.f32 %v9649, -0.014264739
      %v9659 = vadd.f32 %v9650, -0.014264739
      %v9660 = vmul.f32 %v9462, %v9579
      %v9661 = vmul.f32 %v9463, %v9580
      %v9662 = vmul.f32 %v9464, %v9581
      %v9663 = vmul.f32 %v9465, %v9582
      %v9664 = vmul.f32 %v9466, %v9583
      %v9665 = vmul.f32 %v9467, %v9584
      %v9666 = vmul.f32 %v9468, %v9585
      %v9667 = vmul.f32 %v9469, %v9586
      %v9668 = vmul.f32 %v9470, %v9587
      %v9669 = vrcp.pop %v9651
      %v9670 = vmul.f32 %v9660, %v9669
      %v9671 = vrcp.pop %v9652
      %v9672 = vmul.f32 %v9661, %v9671
      %v9673 = vrcp.pop %v9653
      %v9674 = vmul.f32 %v9662, %v9673
      %v9675 = vrcp.pop %v9654
      %v9676 = vmul.f32 %v9663, %v9675
      %v9677 = vrcp.pop %v9655
      %v9678 = vmul.f32 %v9664, %v9677
      %v9679 = vrcp.pop %v9656
      %v9680 = vmul.f32 %v9665, %v9679
      %v9681 = vrcp.pop %v9657
      %v9682 = vmul.f32 %v9666, %v9681
      %v9683 = vrcp.pop %v9658
      %v9684 = vmul.f32 %v9667, %v9683
      %v9685 = vrcp.pop %v9659
      %v9686 = vmul.f32 %v9668, %v9685
      %v9687 = vadd.f32 %v9670, 1.0
      %v9688 = vadd.f32 %v9672, 1.0
      %v9689 = vadd.f32 %v9674, 1.0
      %v9690 = vadd.f32 %v9676, 1.0
      %v9691 = vadd.f32 %v9678, 1.0
      %v9692 = vadd.f32 %v9680, 1.0
      %v9693 = vadd.f32 %v9682, 1.0
      %v9694 = vadd.f32 %v9684, 1.0
      %v9695 = vadd.f32 %v9686, 1.0
      %v9696 = vmul.f32 %v9435, %v9687
      %v9697 = vmul.f32 %v9436, %v9688
      %v9698 = vmul.f32 %v9437, %v9689
      %v9699 = vmul.f32 %v9438, %v9690
      %v9700 = vmul.f32 %v9439, %v9691
      %v9701 = vmul.f32 %v9440, %v9692
      %v9702 = vmul.f32 %v9441, %v9693
      %v9703 = vmul.f32 %v9442, %v9694
      %v9704 = vmul.f32 %v9443, %v9695
      %s9705 = scalar_lea.vmem %s15, 64
      %v9706 = vld [vmem:[%s9705] sm:$0xff]
      %v9707 = vld [vmem:[%s9705 + $0x8] sm:$0xff]
      %v9708 = vld [vmem:[%s9705 + $0x10] sm:$0xff]
      %v9709 = vld [vmem:[%s9705 + $0x18] sm:$0xff]
      %v9710 = vld [vmem:[%s9705 + $0x20] sm:$0xff]
      %v9711 = vld [vmem:[%s9705 + $0x28] sm:$0xff]
      %v9712 = vld [vmem:[%s9705 + $0x30] sm:$0xff]
      %v9713 = vld [vmem:[%s9705 + $0x38] sm:$0xff]
      %s9714 = scalar_lea.vmem %s16, 1
      %v9715 = vld [vmem:[%s9714] sm:$0x1]
      %v9717 = vlaneseq
      %v9718 = vshrl.u32 %v9717, 7
      %v9719 = vsub.s32 0, %v9718
      %v9720 = vrot.slane %v9715, %v9719
      %v9723 = vsel %vm5148, %v9696, 0
      %v9726 = vsel %vm5148, %v9697, 0
      %v9729 = vsel %vm5148, %v9698, 0
      %v9732 = vsel %vm5148, %v9699, 0
      %v9735 = vsel %vm5148, %v9700, 0
      %v9738 = vsel %vm5148, %v9701, 0
      %v9741 = vsel %vm5148, %v9702, 0
      %v9744 = vsel %vm5148, %v9703, 0
      %v9747 = vsel %vm5148, %v9704, 0
      %9749 = vmatprep.subr.mxu0 0.0
      %9750 = vmatpush1.msra.mxu0 %v9706
      %9751 = vmatprep.subr.mxu0 0.0
      %9752 = vmatpush1.msra.mxu0 %v9707
      %9753 = vmatprep.subr.mxu0 0.0
      %9754 = vmatpush1.msra.mxu0 %v9708
      %9755 = vmatprep.subr.mxu0 0.0
      %9756 = vmatpush1.msra.mxu0 %v9709
      %9757 = vmatprep.subr.mxu0 0.0
      %9758 = vmatpush1.msra.mxu0 %v9710
      %9759 = vmatprep.subr.mxu0 0.0
      %9760 = vmatpush1.msra.mxu0 %v9711
      %9761 = vmatprep.subr.mxu0 0.0
      %9762 = vmatpush1.msra.mxu0 %v9712
      %9763 = vmatprep.subr.mxu0 0.0
      %9764 = vmatpush1.msra.mxu0 %v9713
      %9765 = vmatprep.subr.mxu0 0.0
      %9766 = vmatpush1.msra.mxu0 0.0
      %9767 = vmatprep.subr.mxu0 0.0
      %9768 = vmatpush1.msra.mxu0 0.0
      %9769 = vmatprep.subr.mxu0 0.0
      %9770 = vmatpush1.msra.mxu0 0.0
      %9771 = vmatprep.subr.mxu0 0.0
      %9772 = vmatpush1.msra.mxu0 0.0
      %9773 = vmatprep.subr.mxu0 0.0
      %9774 = vmatpush1.msra.mxu0 0.0
      %9775 = vmatprep.subr.mxu0 0.0
      %9776 = vmatpush1.msra.mxu0 0.0
      %9777 = vmatprep.subr.mxu0 0.0
      %9778 = vmatpush1.msra.mxu0 0.0
      %9779 = vmatprep.subr.mxu0 0.0
      %9780 = vmatpush1.msra.mxu0 0.0
      %9781 = vmatprep.subr.mxu0 0.0
      %9782 = vmatpush1.msra.mxu0 0.0
      %9783 = vmatprep.subr.mxu0 0.0
      %9784 = vmatpush1.msra.mxu0 0.0
      %9785 = vmatprep.subr.mxu0 0.0
      %9786 = vmatpush1.msra.mxu0 0.0
      %9787 = vmatprep.subr.mxu0 0.0
      %9788 = vmatpush1.msra.mxu0 0.0
      %9789 = vmatprep.subr.mxu0 0.0
      %9790 = vmatpush1.msra.mxu0 0.0
      %9791 = vmatprep.subr.mxu0 0.0
      %9792 = vmatpush1.msra.mxu0 0.0
      %9793 = vmatprep.subr.mxu0 0.0
      %9794 = vmatpush1.msra.mxu0 0.0
      %9795 = vmatprep.subr.mxu0 0.0
      %9796 = vmatpush1.msra.mxu0 0.0
      %9797 = vmatprep.subr.mxu0 0.0
      %9798 = vmatpush1.msra.mxu0 0.0
      %9799 = vmatprep.subr.mxu0 0.0
      %9800 = vmatpush1.msra.mxu0 0.0
      %9801 = vmatprep.subr.mxu0 0.0
      %9802 = vmatpush1.msra.mxu0 0.0
      %9803 = vmatprep.subr.mxu0 0.0
      %9804 = vmatpush1.msra.mxu0 0.0
      %9805 = vmatprep.subr.mxu0 0.0
      %9806 = vmatpush1.msra.mxu0 0.0
      %9807 = vmatprep.subr.mxu0 0.0
      %9808 = vmatpush1.msra.mxu0 0.0
      %9809 = vmatprep.subr.mxu0 0.0
      %9810 = vmatpush1.msra.mxu0 0.0
      %9811 = vmatprep.subr.mxu0 0.0
      %9812 = vmatpush1.msra.mxu0 0.0
      %9813 = vmatprep.mubr.f32.mxu0 0.0
      %9814 = vmatmul.mubr.f32.gmra.mrb[0].mxu0 %v9723
      %v9815 = vpop.f32.mrb[0].mxu0
      %v9816 = vadd.f32 %v9720, %v9815
      %v9817 = vpop.f32.mrb[0].mxu0
      %9818 = vmatprep.mubr.f32.mxu0 0.0
      %9819 = vmatmul.mubr.f32.gmra.mrb[0].mxu0 %v9726
      %v9820 = vpop.f32.mrb[0].mxu0
      %v9821 = vadd.f32 %v9720, %v9820
      %v9822 = vpop.f32.mrb[0].mxu0
      %9823 = vmatprep.mubr.f32.mxu0 0.0
      %9824 = vmatmul.mubr.f32.gmra.mrb[0].mxu0 %v9729
      %v9825 = vpop.f32.mrb[0].mxu0
      %v9826 = vadd.f32 %v9720, %v9825
      %v9827 = vpop.f32.mrb[0].mxu0
      %9828 = vmatprep.mubr.f32.mxu0 0.0
      %9829 = vmatmul.mubr.f32.gmra.mrb[0].mxu0 %v9732
      %v9830 = vpop.f32.mrb[0].mxu0
      %v9831 = vadd.f32 %v9720, %v9830
      %v9832 = vpop.f32.mrb[0].mxu0
      %9833 = vmatprep.mubr.f32.mxu0 0.0
      %9834 = vmatmul.mubr.f32.gmra.mrb[0].mxu0 %v9735
      %v9835 = vpop.f32.mrb[0].mxu0
      %v9836 = vadd.f32 %v9720, %v9835
      %v9837 = vpop.f32.mrb[0].mxu0
      %9838 = vmatprep.mubr.f32.mxu0 0.0
      %9839 = vmatmul.mubr.f32.gmra.mrb[0].mxu0 %v9738
      %v9840 = vpop.f32.mrb[0].mxu0
      %v9841 = vadd.f32 %v9720, %v9840
      %v9842 = vpop.f32.mrb[0].mxu0
      %9843 = vmatprep.mubr.f32.mxu0 0.0
      %9844 = vmatmul.mubr.f32.gmra.mrb[0].mxu0 %v9741
      %v9845 = vpop.f32.mrb[0].mxu0
      %v9846 = vadd.f32 %v9720, %v9845
      %v9847 = vpop.f32.mrb[0].mxu0
      %9848 = vmatprep.mubr.f32.mxu0 0.0
      %9849 = vmatmul.mubr.f32.gmra.mrb[0].mxu0 %v9744
      %v9850 = vpop.f32.mrb[0].mxu0
      %v9851 = vadd.f32 %v9720, %v9850
      %v9852 = vpop.f32.mrb[0].mxu0
      %9853 = vmatprep.mubr.f32.mxu0 0.0
      %9854 = vmatmul.mubr.f32.gmra.mrb[0].mxu0 %v9747
      %v9855 = vpop.f32.mrb[0].mxu0
      %v9856 = vadd.f32 %v9720, %v9855
      %v9857 = vpop.f32.mrb[0].mxu0
      %9858 = vdwg.mxu0
      %v9859 = vadd.f32 %v9125, %v9816
      %v9860 = vadd.f32 %v9126, %v9821
      %v9861 = vadd.f32 %v9127, %v9826
      %v9862 = vadd.f32 %v9128, %v9831
      %v9863 = vadd.f32 %v9129, %v9836
      %v9864 = vadd.f32 %v9130, %v9841
      %v9865 = vadd.f32 %v9131, %v9846
      %v9866 = vadd.f32 %v9132, %v9851
      %v9867 = vadd.f32 %v9133, %v9856
      %9868 = vst.msk [vmem:[%s548] sm:$0xff] %vm729, %v9859
      %9869 = vst.msk [vmem:[%s548 + $0x8] sm:$0xff] %vm729, %v9860
      %9870 = vst.msk [vmem:[%s548 + $0x10] sm:$0xff] %vm729, %v9861
      %9871 = vst.msk [vmem:[%s548 + $0x18] sm:$0xff] %vm729, %v9862
      %9872 = vst.msk [vmem:[%s548 + $0x20] sm:$0xff] %vm729, %v9863
      %9873 = vst.msk [vmem:[%s548 + $0x28] sm:$0xff] %vm729, %v9864
      %9874 = vst.msk [vmem:[%s548 + $0x30] sm:$0xff] %vm729, %v9865
      %9875 = vst.msk [vmem:[%s548 + $0x38] sm:$0xff] %vm729, %v9866
      %9876 = vst.msk [vmem:[%s548 + $0x40] sm:$0x1] %vm754, %v9867
      %p9877 = scmp.lt.s32.totalorder %s28, 1
      %s9878 = scalar_select %p9877, %s28, 1
      %s9879 = smul.addr %s9878, 9
      %s9880 = smul.addr %s9879, 8
      %s9881 = scalar_lea.vmem %s17, %s9880
      // Predicated region
      $region89: #{vit_forward.1} parent=87 // pred_check
        %p9882 = pneg %p408
      $region90: #{vit_forward.1} parent=87 // pred_check_branch
        %9884 = sbr.rel (%p9882) target = $region92
      $region91: #{vit_forward.1} parent=87 // pred_region
        _
      $region92: #{vit_forward.1} parent=87 // pred_fallthru
        _
    $region88: #{vit_forward.1} parent=5 // pred_fallthru
      _
    %p9885 = scmp.le.s32.totalorder 2, %s23
    // Predicated region
    $region93: #{vit_forward.1} parent=5 // pred_check
      %p9886 = pneg %p9885
    $region94: #{vit_forward.1} parent=5 // pred_check_branch
      %9888 = sbr.rel (%p9886) target = $region96
    $region95: #{vit_forward.1} parent=5 // pred_region
      %s9889 = ssub.s32 %s23, 2
      // Predicated region
      $region97: #{vit_forward.1} parent=95 // pred_check
        %p9890 = pneg %p414
      $region98: #{vit_forward.1} parent=95 // pred_check_branch
        %9892 = sbr.rel (%p9890) target = $region100
      $region99: #{vit_forward.1} parent=95 // pred_region
        %p9893 = scmp.lt.s32.totalorder %s29, 1
        %s9894 = scalar_select %p9893, %s29, 1
        %s9895 = smul.addr %s9894, 9
        %s9896 = smul.addr %s9895, 8
        %s9897 = scalar_lea.vmem %s17, %s9896
      $region100: #{vit_forward.1} parent=95 // pred_fallthru
        _
    $region96: #{vit_forward.1} parent=5 // pred_fallthru
      _
  $region6: #{vit_forward.1} parent=0 // loop_footer
    %s27 = sadd.s32 1, %s23
  $region7: #{vit_forward.1} parent=0 // loop_footer_branch
    %22 = sbr.rel target = $region3
  $region8: #{vit_forward.1} parent=0 // loop_exit
    _

</llo_original>
